<compile_context>
chip_gen: v7x
topology: tpu7x:2x2x1
jax: 0.10.0
libtpu: 0.0.40
codegen_flags: <defaults>
</compile_context>

<pallas_src>
import functools

import jax
import jax.numpy as jnp
from jax import lax
from jax.experimental import pallas as pl
from jax.experimental.pallas import tpu as pltpu

_EPS = 1e-5  # PyTorch BatchNorm default eps

# ConvTranspose2d(k=4, s=2, p=1) phase taps, expressed as (row offset into the
# 1-padded low-res input, kh) pairs; identical structure for columns.
_UP_TAPS = (((0, 3), (1, 1)), ((1, 2), (2, 0)))

# Polyphase decomposition of the 3x3 / pad=1 conv: for output phase r and kernel
# row kh (= dy+1) the contribution comes from input phase _P3[r][kh] at row
# offset _O3[r][kh] into the 1-padded phase scratch; identical for columns.
_P3 = ((1, 0, 1), (0, 1, 0))
_O3 = ((0, 1, 1), (1, 1, 2))


# -----------------------------------------------------------------------------
# Fused kernel: up-conv + concat + dual 1x1 head + polyphase 3x3 + conv3 +
# residual + relu.  One (batch, row-tile) block per grid step.
# -----------------------------------------------------------------------------
def _up_fused_kernel(TH, W, C1, Cn,
                     x1p_ref,     # (1, H+4, W+2, C1)     zero-padded low-res x1
                     x2p_ref,     # (1, H+2, 2, W, 2*C1)  skip, col pairs on lanes, 1 phase-row pad
                     w_head_ref,  # (2, 2, 5, C1, 2*Cn)   composed head weight per phase/tap
                     b_head_ref,  # (1, 2*Cn) f32
                     w2_ref,      # (9, Cn, Cn)           conv2+bn2 per tap
                     b2_ref,      # (1, Cn) f32
                     w3_ref,      # (Cn, Cn)              conv3+bn3
                     b3_ref,      # (1, Cn) f32
                     o_ref,       # (1, 4, TH, W, Cn)     output phases (ph = 2r+s)
                     tpad_ref,    # (4, TH+2, W+2, Cn)    phase scratch (compute dtype)
                     y2_ref):     # (4, TH+2, W, Cn) f32  ref-backed shortcut
    f32 = jnp.float32
    cdt = tpad_ref.dtype
    tile = pl.program_id(1)
    nt = pl.num_programs(1)
    m0 = tile * TH                      # first output phase-row of this tile
    M1 = (TH + 2) * W                   # pass-1 rows incl. the 1-row halo each side
    M2 = TH * W

    # hoisted small loads (biases + the shared conv3 weight)
    b_head = b_head_ref[...]
    b2 = b2_ref[...]
    b3 = b3_ref[...]
    w3 = w3_ref[...]

    # zero only the thin horizontal padding strips of the phase scratch; the
    # rows are fully rewritten below every step.
    zcol = jnp.zeros((4, TH + 2, 1, Cn), cdt)
    tpad_ref[:, :, 0:1, :] = zcol
    tpad_ref[:, :, W + 1:W + 2, :] = zcol

    # ---- pass 1: ConvTranspose2d + concat + both 1x1 heads, per-tap MXU accum.
    for r in range(2):
        for s in range(2):
            ph = 2 * r + s
            # skip-input tap: x2 at full-res pixel (2m+r, 2k+s)
            acc = jnp.dot(
                x2p_ref[0, pl.ds(m0, TH + 2), r, :, s * C1:(s + 1) * C1]
                .reshape(M1, C1),
                w_head_ref[r, s, 0], preferred_element_type=f32)
            # 2x2 transposed-conv window taps, folded into the heads
            tap = 1
            for (dy, _) in _UP_TAPS[r]:
                for (dx, _) in _UP_TAPS[s]:
                    acc = acc + jnp.dot(
                        x1p_ref[0, pl.ds(m0 + dy, TH + 2), dx:dx + W, :]
                        .reshape(M1, C1),
                        w_head_ref[r, s, tap], preferred_element_type=f32)
                    tap += 1
            hv = acc + b_head                                   # (M1, 2*Cn) f32
            t_ph = jnp.maximum(hv[:, :Cn], 0.0).astype(cdt)     # relu(bn1(conv1(x)))
            tpad_ref[ph, :, 1:1 + W, :] = t_ph.reshape(TH + 2, W, Cn)
            y2_ref[ph] = hv[:, Cn:].reshape(TH + 2, W, Cn)      # bn_(conv_(x)) shortcut

    # tile halo rows that fall outside the image were computed from the
    # zero-extended inputs above -> overwrite with the 3x3 conv's true zero pad.
    @pl.when(tile == 0)
    def _():
        tpad_ref[:, 0:1, :, :] = jnp.zeros((4, 1, W + 2, Cn), cdt)

    @pl.when(tile == nt - 1)
    def _():
        tpad_ref[:, TH + 1:TH + 2, :, :] = jnp.zeros((4, 1, W + 2, Cn), cdt)

    # ---- pass 2: polyphase 3x3 conv + bn2 + relu, conv3 + bn3, residual, relu.
    for r in range(2):
        for s in range(2):
            ph = 2 * r + s
            acc2 = None
            for kh in range(3):
                for kw in range(3):
                    p_in = 2 * _P3[r][kh] + _P3[s][kw]
                    yo = _O3[r][kh]
                    xo = _O3[s][kw]
                    patch = tpad_ref[p_in, yo:yo + TH, xo:xo + W, :].reshape(M2, Cn)
                    d = jnp.dot(patch, w2_ref[kh * 3 + kw],
                                preferred_element_type=f32)
                    acc2 = d if acc2 is None else acc2 + d
            t2 = jnp.maximum(acc2 + b2, 0.0).astype(cdt)
            y1 = jnp.dot(t2, w3, preferred_element_type=f32) + b3
            y2 = y2_ref[ph, 1:1 + TH].reshape(M2, Cn)
            out = jnp.maximum(y1 + y2, 0.0)
            o_ref[0, ph] = out.reshape(TH, W, Cn).astype(o_ref.dtype)


# -----------------------------------------------------------------------------
# Wrapper helpers: VMEM budget / row-tile selection.
# -----------------------------------------------------------------------------
def _vmem_limit_default():
    try:
        info = pltpu.get_tpu_info()
        cap = getattr(info, "vmem_capacity_bytes", None)
        if cap:
            return int(cap * 0.85)
    except Exception:
        pass
    return 48 * 1024 * 1024


def _pick_row_tile(H, W, C1, Cn, itemsize, budget):
    def footprint(th):
        tpad = 4 * (th + 2) * (W + 2) * Cn * itemsize
        y2 = 4 * (th + 2) * W * Cn * 4
        outb = 2 * 4 * th * W * Cn * itemsize            # double-buffered output block
        x1b = 2 * (H + 4) * (W + 2) * C1 * itemsize      # double-buffered inputs
        x2b = 2 * (H + 2) * 2 * W * 2 * C1 * itemsize
        return tpad + y2 + outb + x1b + x2b

    fits = [th for th in range(1, H + 1) if H % th == 0 and footprint(th) <= budget]
    return max(fits) if fits else 1


# -----------------------------------------------------------------------------
# Wrapper: NCHW <-> NHWC phase plumbing, eval-mode BN folding, and algebraic
# composition of the transposed conv into the per-tap dual 1x1 head.
# -----------------------------------------------------------------------------
def up_forward(x1_nchw, x2_nchw, params, compute_dtype=jnp.bfloat16,
               row_tile=None, vmem_limit_bytes=None):
    f32 = jnp.float32
    N, C1, H, W = x1_nchw.shape
    _, C2, H2, W2 = x2_nchw.shape
    assert C2 == C1 and H2 == 2 * H and W2 == 2 * W
    Cn = params["conv1_w"].shape[0]          # out_ch (== neck_chan == out_chan)

    if vmem_limit_bytes is None:
        vmem_limit_bytes = _vmem_limit_default()
    itemsize = jnp.dtype(compute_dtype).itemsize
    if row_tile is None:
        row_tile = _pick_row_tile(H, W, C1, Cn, itemsize,
                                  budget=int(0.75 * vmem_limit_bytes))
    TH = int(row_tile)
    assert H % TH == 0, (H, TH)
    NT = H // TH

    # ---- activations: NCHW -> NHWC, pad x1 (2 rows / 1 col), phase-pack x2 ----
    x1 = jnp.transpose(x1_nchw, (0, 2, 3, 1)).astype(compute_dtype)
    x1p = jnp.pad(x1, ((0, 0), (2, 2), (1, 1), (0, 0)))
    x2 = jnp.transpose(x2_nchw, (0, 2, 3, 1)).astype(compute_dtype)
    # free reshape: x2p[n, m, r, k, s*C1 + c] == x2[n, 2m+r, 2k+s, c]
    x2p = x2.reshape(N, H, 2, W, 2 * C1)
    x2p = jnp.pad(x2p, ((0, 0), (1, 1), (0, 0), (0, 0), (0, 0)))  # 1 phase-row halo

    # ---- fold eval-mode BN into the convs -------------------------------------
    def bn_scale_shift(bn):
        g, be, m, v = bn
        sc = g / jnp.sqrt(v + _EPS)
        return sc, be - sc * m

    def fuse_1x1(w, b, bn):                  # torch (Co, Ci, 1, 1) -> (Ci, Co), (Co,)
        sc, sh = bn_scale_shift(bn)
        return w[:, :, 0, 0].T * sc[None, :], sc * b + sh

    w1, b1 = fuse_1x1(params["conv1_w"], params["conv1_b"], params["bn1"])
    wc, bc = fuse_1x1(params["conv_w"], params["conv_b"], params["bn_"])
    w3, b3 = fuse_1x1(params["conv3_w"], params["conv3_b"], params["bn3"])
    s2, sh2 = bn_scale_shift(params["bn2"])
    w2 = jnp.transpose(params["conv2_w"], (2, 3, 1, 0)) * s2[None, None, None, :]
    b2 = s2 * params["conv2_b"] + sh2
    w2_taps = w2.reshape(9, Cn, Cn)          # tap = kh*3 + kw, matches kernel loop

    # ---- compose ConvTranspose2d into the per-tap dual 1x1 head ---------------
    wup = jnp.transpose(params["up_w"], (2, 3, 0, 1))       # (kh, kw, Ci, Co)
    wh = jnp.concatenate([w1, wc], axis=1)                  # (2*C1, 2*Cn)
    wh_a, wh_b = wh[:C1], wh[C1:]                           # skip block / upsampled block
    b_head = (params["up_b"] @ wh_b + jnp.concatenate([b1, bc]))[None, :]

    def head_w(r, s):                                       # (5, C1, 2*Cn)
        blocks = [wh_a]
        for (_, kh) in _UP_TAPS[r]:
            for (_, kw) in _UP_TAPS[s]:
                blocks.append(wup[kh, kw] @ wh_b)           # fold up-conv tap into head
        return jnp.stack(blocks, axis=0)

    w_head = jnp.stack([jnp.stack([head_w(r, s) for s in range(2)])
                        for r in range(2)])                 # (2, 2, 5, C1, 2*Cn)

    w_head = w_head.astype(compute_dtype)
    w2_taps = w2_taps.astype(compute_dtype)
    w3c = w3.astype(compute_dtype)
    b_head = b_head.astype(f32)
    b2 = b2[None, :].astype(f32)
    b3 = b3[None, :].astype(f32)

    def full(a):
        n = a.ndim
        return pl.BlockSpec(a.shape, lambda b, t: (0,) * n)

    m1 = (TH + 2) * W
    m2 = TH * W
    flops = 2 * N * NT * 4 * (m1 * 5 * C1 * 2 * Cn + m2 * 10 * Cn * Cn)
    bytes_accessed = int(
        x1p.size * itemsize + x2p.size * itemsize + N * 4 * H * W * Cn * itemsize
        + sum(a.size * a.dtype.itemsize
              for a in (w_head, b_head, w2_taps, b2, w3c, b3)))

    kern = functools.partial(_up_fused_kernel, TH, W, C1, Cn)
    out_ph = pl.pallas_call(
        kern,
        grid=(N, NT),
        in_specs=[
            pl.BlockSpec((1, H + 4, W + 2, C1), lambda b, t: (b, 0, 0, 0)),
            pl.BlockSpec((1, H + 2, 2, W, 2 * C1), lambda b, t: (b, 0, 0, 0, 0)),
            full(w_head), full(b_head),
            full(w2_taps), full(b2),
            full(w3c), full(b3),
        ],
        out_specs=pl.BlockSpec((1, 4, TH, W, Cn), lambda b, t: (b, 0, t, 0, 0)),
        out_shape=jax.ShapeDtypeStruct((N, 4, H, W, Cn), compute_dtype),
        scratch_shapes=[pltpu.VMEM((4, TH + 2, W + 2, Cn), compute_dtype),
                        pltpu.VMEM((4, TH + 2, W, Cn), f32)],
        compiler_params=pltpu.CompilerParams(
            dimension_semantics=("parallel", "parallel"),
            vmem_limit_bytes=int(vmem_limit_bytes)),
        cost_estimate=pl.CostEstimate(flops=flops, transcendentals=0,
                                      bytes_accessed=bytes_accessed),
    )(x1p, x2p, w_head, b_head, w2_taps, b2, w3c, b3)

    # un-interleave phases (in the compute dtype) and return NCHW:
    # out_ph[n, 2r+s, m, k, c] -> out[n, c, 2m+r, 2k+s]
    out = (out_ph.reshape(N, 2, 2, H, W, Cn)
                 .transpose(0, 5, 3, 1, 4, 2)
                 .reshape(N, Cn, H2, W2))
    return out


# -----------------------------------------------------------------------------
# Pure-JAX NCHW reference (eval-mode BatchNorm) used for verification.
# -----------------------------------------------------------------------------
def up_reference(x1, x2, params):
    dn = ("NCHW", "OIHW", "NCHW")
    hi = lax.Precision.HIGHEST

    def conv(x, w, b, pad=0):
        y = lax.conv_general_dilated(x, w, (1, 1), [(pad, pad), (pad, pad)],
                                     dimension_numbers=dn, precision=hi)
        return y + b[None, :, None, None]

    def bn(x, p):
        g, be, m, v = p
        s = (g / jnp.sqrt(v + _EPS))[None, :, None, None]
        return s * (x - m[None, :, None, None]) + be[None, :, None, None]

    # ConvTranspose2d(k=4, s=2, p=1) == lhs-dilated conv with flipped kernel
    wt = jnp.transpose(params["up_w"], (1, 0, 2, 3))[:, :, ::-1, ::-1]
    up = lax.conv_general_dilated(x1, wt, (1, 1), [(2, 2), (2, 2)],
                                  lhs_dilation=(2, 2), dimension_numbers=dn,
                                  precision=hi)
    up = up + params["up_b"][None, :, None, None]

    x = jnp.concatenate([x2, up], axis=1)
    y2 = bn(conv(x, params["conv_w"], params["conv_b"]), params["bn_"])
    t = jax.nn.relu(bn(conv(x, params["conv1_w"], params["conv1_b"]), params["bn1"]))
    t = jax.nn.relu(bn(conv(t, params["conv2_w"], params["conv2_b"], pad=1), params["bn2"]))
    y1 = bn(conv(t, params["conv3_w"], params["conv3_b"]), params["bn3"])
    return jax.nn.relu(y1 + y2)


if __name__ == "__main__":
    key = jax.random.PRNGKey(0)
    in_ch, out_ch = 8, 4
    half_in = in_ch // 2
    N, H, W = 2, 8, 8

    keys = iter(jax.random.split(key, 32))
    nrm = lambda shape, s=0.1: s * jax.random.normal(next(keys), shape, jnp.float32)
    bn_init = lambda c: (1.0 + nrm((c,)), nrm((c,)), nrm((c,)),
                         0.5 + jax.random.uniform(next(keys), (c,), jnp.float32))

    params = {
        "up_w": nrm((half_in, half_in, 4, 4), 0.15),     # ConvTranspose2d weight (Ci, Co, kh, kw)
        "up_b": nrm((half_in,), 0.05),
        "conv1_w": nrm((out_ch, in_ch, 1, 1), 0.2),
        "conv1_b": nrm((out_ch,), 0.05),
        "bn1": bn_init(out_ch),
        "conv2_w": nrm((out_ch, out_ch, 3, 3), 0.2),
        "conv2_b": nrm((out_ch,), 0.05),
        "bn2": bn_init(out_ch),
        "conv3_w": nrm((out_ch, out_ch, 1, 1), 0.2),
        "conv3_b": nrm((out_ch,), 0.05),
        "bn3": bn_init(out_ch),
        "conv_w": nrm((out_ch, in_ch, 1, 1), 0.2),       # shortcut 1x1 conv
        "conv_b": nrm((out_ch,), 0.05),
        "bn_": bn_init(out_ch),
    }

    x1 = jax.random.normal(next(keys), (N, half_in, H, W), jnp.float32)
    x2 = jax.random.normal(next(keys), (N, half_in, 2 * H, 2 * W), jnp.float32)

    ref = up_reference(x1, x2, params)

    # f32-operand path with explicit 2-row tiles (4 tiles => interior halo rows
    # exercised): tight tolerance validates phase / composition / halo math.
    out_f32 = jax.block_until_ready(
        up_forward(x1, x2, params, compute_dtype=jnp.float32, row_tile=2))
    assert out_f32.shape == (N, out_ch, 2 * H, 2 * W), out_f32.shape
    err_f32 = float(jnp.max(jnp.abs(out_f32.astype(jnp.float32) - ref)))
    assert err_f32 < 5e-3, f"f32 path max abs error {err_f32}"

    # default bf16-operand path (f32 accumulation, bf16 output), auto row tile
    # (whole image at these shapes): looser tolerance covers operand rounding.
    out = jax.block_until_ready(up_forward(x1, x2, params))
    assert out.shape == (N, out_ch, 2 * H, 2 * W), out.shape
    err_bf16 = float(jnp.max(jnp.abs(out.astype(jnp.float32) - ref)))
    assert err_bf16 < 1e-1, f"bf16 path max abs error {err_bf16}"

    print("KERNEL_OK")
</pallas_src>

<mosaic_0001>
module attributes {stable_mosaic.version = 11 : i64} {
  func.func @_up_fused_kernel(%arg0: i32, %arg1: i32, %arg2: memref<1x12x10x4xf32, #tpu.memory_space<vmem>>, %arg3: memref<1x10x2x8x8xf32, #tpu.memory_space<vmem>>, %arg4: memref<2x2x5x4x8xf32, #tpu.memory_space<vmem>>, %arg5: memref<1x8xf32, #tpu.memory_space<vmem>>, %arg6: memref<9x4x4xf32, #tpu.memory_space<vmem>>, %arg7: memref<1x4xf32, #tpu.memory_space<vmem>>, %arg8: memref<4x4xf32, #tpu.memory_space<vmem>>, %arg9: memref<1x4xf32, #tpu.memory_space<vmem>>, %arg10: memref<1x4x2x8x4xf32, #tpu.memory_space<vmem>>, %arg11: memref<4x4x10x4xf32, #tpu.memory_space<vmem>>, %arg12: memref<4x4x8x4xf32, #tpu.memory_space<vmem>>) attributes {dimension_semantics = [#tpu.dimension_semantics<parallel>, #tpu.dimension_semantics<parallel>], iteration_bounds = array<i64: 2, 4>, scalar_prefetch = 0 : i64, scratch_operands = 2 : i64, tpu.core_type = #tpu.core_type<tc>, window_params = [{transform_indices = @transform_0, window_bounds = array<i64: 1, 12, 10, 4>}, {transform_indices = @transform_1, window_bounds = array<i64: 1, 10, 2, 8, 8>}, {pipeline_mode = #tpu.pipeline_mode<synchronous>, transform_indices = @transform_2, window_bounds = array<i64: 2, 2, 5, 4, 8>}, {pipeline_mode = #tpu.pipeline_mode<synchronous>, transform_indices = @transform_3, window_bounds = array<i64: 1, 8>}, {pipeline_mode = #tpu.pipeline_mode<synchronous>, transform_indices = @transform_4, window_bounds = array<i64: 9, 4, 4>}, {pipeline_mode = #tpu.pipeline_mode<synchronous>, transform_indices = @transform_5, window_bounds = array<i64: 1, 4>}, {pipeline_mode = #tpu.pipeline_mode<synchronous>, transform_indices = @transform_6, window_bounds = array<i64: 4, 4>}, {pipeline_mode = #tpu.pipeline_mode<synchronous>, transform_indices = @transform_7, window_bounds = array<i64: 1, 4>}, {transform_indices = @transform_8, window_bounds = array<i64: 1, 4, 2, 8, 4>}]} {
    %c2_i32 = arith.constant 2 : i32
    %0 = arith.muli %arg1, %c2_i32 : i32
    %c0 = arith.constant 0 : index
    %c0_0 = arith.constant 0 : index
    %1 = vector.load %arg5[%c0, %c0_0] : memref<1x8xf32, #tpu.memory_space<vmem>>, vector<1x8xf32>
    %c0_1 = arith.constant 0 : index
    %c0_2 = arith.constant 0 : index
    %2 = vector.load %arg7[%c0_1, %c0_2] : memref<1x4xf32, #tpu.memory_space<vmem>>, vector<1x4xf32>
    %c0_3 = arith.constant 0 : index
    %c0_4 = arith.constant 0 : index
    %3 = vector.load %arg9[%c0_3, %c0_4] : memref<1x4xf32, #tpu.memory_space<vmem>>, vector<1x4xf32>
    %c0_5 = arith.constant 0 : index
    %c0_6 = arith.constant 0 : index
    %4 = vector.load %arg8[%c0_5, %c0_6] : memref<4x4xf32, #tpu.memory_space<vmem>>, vector<4x4xf32>
    %cst = arith.constant 0.000000e+00 : f32
    %5 = vector.broadcast %cst : f32 to vector<4x4x1x4xf32>
    %c0_7 = arith.constant 0 : index
    %c0_8 = arith.constant 0 : index
    %c0_9 = arith.constant 0 : index
    %c0_10 = arith.constant 0 : index
    %6 = vector.load %arg11[%c0_7, %c0_8, %c0_9, %c0_10] : memref<4x4x10x4xf32, #tpu.memory_space<vmem>>, vector<4x4x1x4xf32>
    tpu.vector_store %arg11[%c0_7, %c0_8, %c0_9, %c0_10], %5 {strides = array<i32>} : memref<4x4x10x4xf32, #tpu.memory_space<vmem>>, vector<4x4x1x4xf32>,
    %c0_11 = arith.constant 0 : index
    %c0_12 = arith.constant 0 : index
    %c9 = arith.constant 9 : index
    %c0_13 = arith.constant 0 : index
    %7 = vector.load %arg11[%c0_11, %c0_12, %c9, %c0_13] : memref<4x4x10x4xf32, #tpu.memory_space<vmem>>, vector<4x4x1x4xf32>
    tpu.vector_store %arg11[%c0_11, %c0_12, %c9, %c0_13], %5 {strides = array<i32>} : memref<4x4x10x4xf32, #tpu.memory_space<vmem>>, vector<4x4x1x4xf32>,
    %c0_14 = arith.constant 0 : index
    %8 = arith.index_cast %0 : i32 to index
    %c0_15 = arith.constant 0 : index
    %c0_16 = arith.constant 0 : index
    %c0_17 = arith.constant 0 : index
    %9 = vector.load %arg3[%c0_14, %8, %c0_15, %c0_16, %c0_17] : memref<1x10x2x8x8xf32, #tpu.memory_space<vmem>>, vector<1x4x1x8x4xf32>
    %10 = vector.shape_cast %9 : vector<1x4x1x8x4xf32> to vector<4x8x4xf32>
    %11 = vector.shape_cast %10 : vector<4x8x4xf32> to vector<32x4xf32>
    %c0_18 = arith.constant 0 : index
    %c0_19 = arith.constant 0 : index
    %c0_20 = arith.constant 0 : index
    %c0_21 = arith.constant 0 : index
    %c0_22 = arith.constant 0 : index
    %12 = vector.load %arg4[%c0_18, %c0_19, %c0_20, %c0_21, %c0_22] : memref<2x2x5x4x8xf32, #tpu.memory_space<vmem>>, vector<1x1x1x4x8xf32>
    %13 = vector.shape_cast %12 : vector<1x1x1x4x8xf32> to vector<4x8xf32>
    %cst_23 = arith.constant dense<0.000000e+00> : vector<32x8xf32>
    %14 = tpu.matmul %11, %13, %cst_23 {dimension_numbers = #tpu.dot_dimension_numbers<[1], [0], [0], [1], [0, 0, 1, 1], [], []>} : vector<32x4xf32>, vector<4x8xf32>, vector<32x8xf32> -> vector<32x8xf32>
    %c0_i32 = arith.constant 0 : i32
    %15 = arith.addi %0, %c0_i32 : i32
    %c0_24 = arith.constant 0 : index
    %16 = arith.index_cast %15 : i32 to index
    %c0_25 = arith.constant 0 : index
    %c0_26 = arith.constant 0 : index
    %17 = vector.load %arg2[%c0_24, %16, %c0_25, %c0_26] : memref<1x12x10x4xf32, #tpu.memory_space<vmem>>, vector<1x4x8x4xf32>
    %18 = vector.shape_cast %17 : vector<1x4x8x4xf32> to vector<4x8x4xf32>
    %19 = vector.shape_cast %18 : vector<4x8x4xf32> to vector<32x4xf32>
    %c0_27 = arith.constant 0 : index
    %c0_28 = arith.constant 0 : index
    %c1 = arith.constant 1 : index
    %c0_29 = arith.constant 0 : index
    %c0_30 = arith.constant 0 : index
    %20 = vector.load %arg4[%c0_27, %c0_28, %c1, %c0_29, %c0_30] : memref<2x2x5x4x8xf32, #tpu.memory_space<vmem>>, vector<1x1x1x4x8xf32>
    %21 = vector.shape_cast %20 : vector<1x1x1x4x8xf32> to vector<4x8xf32>
    %cst_31 = arith.constant dense<0.000000e+00> : vector<32x8xf32>
    %22 = tpu.matmul %19, %21, %cst_31 {dimension_numbers = #tpu.dot_dimension_numbers<[1], [0], [0], [1], [0, 0, 1, 1], [], []>} : vector<32x4xf32>, vector<4x8xf32>, vector<32x8xf32> -> vector<32x8xf32>
    %23 = arith.addf %14, %22 : vector<32x8xf32>
    %c0_i32_32 = arith.constant 0 : i32
    %24 = arith.addi %0, %c0_i32_32 : i32
    %c0_33 = arith.constant 0 : index
    %25 = arith.index_cast %24 : i32 to index
    %c1_34 = arith.constant 1 : index
    %c0_35 = arith.constant 0 : index
    %26 = vector.load %arg2[%c0_33, %25, %c1_34, %c0_35] : memref<1x12x10x4xf32, #tpu.memory_space<vmem>>, vector<1x4x8x4xf32>
    %27 = vector.shape_cast %26 : vector<1x4x8x4xf32> to vector<4x8x4xf32>
    %28 = vector.shape_cast %27 : vector<4x8x4xf32> to vector<32x4xf32>
    %c0_36 = arith.constant 0 : index
    %c0_37 = arith.constant 0 : index
    %c2 = arith.constant 2 : index
    %c0_38 = arith.constant 0 : index
    %c0_39 = arith.constant 0 : index
    %29 = vector.load %arg4[%c0_36, %c0_37, %c2, %c0_38, %c0_39] : memref<2x2x5x4x8xf32, #tpu.memory_space<vmem>>, vector<1x1x1x4x8xf32>
    %30 = vector.shape_cast %29 : vector<1x1x1x4x8xf32> to vector<4x8xf32>
    %cst_40 = arith.constant dense<0.000000e+00> : vector<32x8xf32>
    %31 = tpu.matmul %28, %30, %cst_40 {dimension_numbers = #tpu.dot_dimension_numbers<[1], [0], [0], [1], [0, 0, 1, 1], [], []>} : vector<32x4xf32>, vector<4x8xf32>, vector<32x8xf32> -> vector<32x8xf32>
    %32 = arith.addf %23, %31 : vector<32x8xf32>
    %c1_i32 = arith.constant 1 : i32
    %33 = arith.addi %0, %c1_i32 : i32
    %c0_41 = arith.constant 0 : index
    %34 = arith.index_cast %33 : i32 to index
    %c0_42 = arith.constant 0 : index
    %c0_43 = arith.constant 0 : index
    %35 = vector.load %arg2[%c0_41, %34, %c0_42, %c0_43] : memref<1x12x10x4xf32, #tpu.memory_space<vmem>>, vector<1x4x8x4xf32>
    %36 = vector.shape_cast %35 : vector<1x4x8x4xf32> to vector<4x8x4xf32>
    %37 = vector.shape_cast %36 : vector<4x8x4xf32> to vector<32x4xf32>
    %c0_44 = arith.constant 0 : index
    %c0_45 = arith.constant 0 : index
    %c3 = arith.constant 3 : index
    %c0_46 = arith.constant 0 : index
    %c0_47 = arith.constant 0 : index
    %38 = vector.load %arg4[%c0_44, %c0_45, %c3, %c0_46, %c0_47] : memref<2x2x5x4x8xf32, #tpu.memory_space<vmem>>, vector<1x1x1x4x8xf32>
    %39 = vector.shape_cast %38 : vector<1x1x1x4x8xf32> to vector<4x8xf32>
    %cst_48 = arith.constant dense<0.000000e+00> : vector<32x8xf32>
    %40 = tpu.matmul %37, %39, %cst_48 {dimension_numbers = #tpu.dot_dimension_numbers<[1], [0], [0], [1], [0, 0, 1, 1], [], []>} : vector<32x4xf32>, vector<4x8xf32>, vector<32x8xf32> -> vector<32x8xf32>
    %41 = arith.addf %32, %40 : vector<32x8xf32>
    %c1_i32_49 = arith.constant 1 : i32
    %42 = arith.addi %0, %c1_i32_49 : i32
    %c0_50 = arith.constant 0 : index
    %43 = arith.index_cast %42 : i32 to index
    %c1_51 = arith.constant 1 : index
    %c0_52 = arith.constant 0 : index
    %44 = vector.load %arg2[%c0_50, %43, %c1_51, %c0_52] : memref<1x12x10x4xf32, #tpu.memory_space<vmem>>, vector<1x4x8x4xf32>
    %45 = vector.shape_cast %44 : vector<1x4x8x4xf32> to vector<4x8x4xf32>
    %46 = vector.shape_cast %45 : vector<4x8x4xf32> to vector<32x4xf32>
    %c0_53 = arith.constant 0 : index
    %c0_54 = arith.constant 0 : index
    %c4 = arith.constant 4 : index
    %c0_55 = arith.constant 0 : index
    %c0_56 = arith.constant 0 : index
    %47 = vector.load %arg4[%c0_53, %c0_54, %c4, %c0_55, %c0_56] : memref<2x2x5x4x8xf32, #tpu.memory_space<vmem>>, vector<1x1x1x4x8xf32>
    %48 = vector.shape_cast %47 : vector<1x1x1x4x8xf32> to vector<4x8xf32>
    %cst_57 = arith.constant dense<0.000000e+00> : vector<32x8xf32>
    %49 = tpu.matmul %46, %48, %cst_57 {dimension_numbers = #tpu.dot_dimension_numbers<[1], [0], [0], [1], [0, 0, 1, 1], [], []>} : vector<32x4xf32>, vector<4x8xf32>, vector<32x8xf32> -> vector<32x8xf32>
    %50 = arith.addf %41, %49 : vector<32x8xf32>
    %51 = vector.broadcast %1 : vector<1x8xf32> to vector<32x8xf32>
    %52 = arith.addf %50, %51 : vector<32x8xf32>
    %53 = vector.extract_strided_slice %52 {offsets = [0, 0], sizes = [32, 4], strides = [1, 1]} : vector<32x8xf32> to vector<32x4xf32>
    %cst_58 = arith.constant 0.000000e+00 : f32
    %54 = vector.broadcast %cst_58 : f32 to vector<32x4xf32>
    %55 = arith.maximumf %53, %54 : vector<32x4xf32>
    %56 = vector.shape_cast %55 : vector<32x4xf32> to vector<4x8x4xf32>
    %c0_59 = arith.constant 0 : index
    %c0_60 = arith.constant 0 : index
    %c1_61 = arith.constant 1 : index
    %c0_62 = arith.constant 0 : index
    %57 = vector.load %arg11[%c0_59, %c0_60, %c1_61, %c0_62] : memref<4x4x10x4xf32, #tpu.memory_space<vmem>>, vector<1x4x8x4xf32>
    %58 = vector.shape_cast %57 : vector<1x4x8x4xf32> to vector<4x8x4xf32>
    %59 = vector.shape_cast %56 : vector<4x8x4xf32> to vector<1x4x8x4xf32>
    tpu.vector_store %arg11[%c0_59, %c0_60, %c1_61, %c0_62], %59 {strides = array<i32>} : memref<4x4x10x4xf32, #tpu.memory_space<vmem>>, vector<1x4x8x4xf32>,
    %60 = vector.extract_strided_slice %52 {offsets = [0, 4], sizes = [32, 4], strides = [1, 1]} : vector<32x8xf32> to vector<32x4xf32>
    %61 = vector.shape_cast %60 : vector<32x4xf32> to vector<4x8x4xf32>
    %c0_63 = arith.constant 0 : index
    %c0_64 = arith.constant 0 : index
    %c0_65 = arith.constant 0 : index
    %c0_66 = arith.constant 0 : index
    %62 = vector.load %arg12[%c0_63, %c0_64, %c0_65, %c0_66] : memref<4x4x8x4xf32, #tpu.memory_space<vmem>>, vector<1x4x8x4xf32>
    %63 = vector.shape_cast %62 : vector<1x4x8x4xf32> to vector<4x8x4xf32>
    %64 = vector.shape_cast %61 : vector<4x8x4xf32> to vector<1x4x8x4xf32>
    tpu.vector_store %arg12[%c0_63, %c0_64, %c0_65, %c0_66], %64 {strides = array<i32>} : memref<4x4x8x4xf32, #tpu.memory_space<vmem>>, vector<1x4x8x4xf32>,
    %c0_67 = arith.constant 0 : index
    %65 = arith.index_cast %0 : i32 to index
    %c0_68 = arith.constant 0 : index
    %c0_69 = arith.constant 0 : index
    %c4_70 = arith.constant 4 : index
    %66 = vector.load %arg3[%c0_67, %65, %c0_68, %c0_69, %c4_70] : memref<1x10x2x8x8xf32, #tpu.memory_space<vmem>>, vector<1x4x1x8x4xf32>
    %67 = vector.shape_cast %66 : vector<1x4x1x8x4xf32> to vector<4x8x4xf32>
    %68 = vector.shape_cast %67 : vector<4x8x4xf32> to vector<32x4xf32>
    %c0_71 = arith.constant 0 : index
    %c1_72 = arith.constant 1 : index
    %c0_73 = arith.constant 0 : index
    %c0_74 = arith.constant 0 : index
    %c0_75 = arith.constant 0 : index
    %69 = vector.load %arg4[%c0_71, %c1_72, %c0_73, %c0_74, %c0_75] : memref<2x2x5x4x8xf32, #tpu.memory_space<vmem>>, vector<1x1x1x4x8xf32>
    %70 = vector.shape_cast %69 : vector<1x1x1x4x8xf32> to vector<4x8xf32>
    %cst_76 = arith.constant dense<0.000000e+00> : vector<32x8xf32>
    %71 = tpu.matmul %68, %70, %cst_76 {dimension_numbers = #tpu.dot_dimension_numbers<[1], [0], [0], [1], [0, 0, 1, 1], [], []>} : vector<32x4xf32>, vector<4x8xf32>, vector<32x8xf32> -> vector<32x8xf32>
    %c0_i32_77 = arith.constant 0 : i32
    %72 = arith.addi %0, %c0_i32_77 : i32
    %c0_78 = arith.constant 0 : index
    %73 = arith.index_cast %72 : i32 to index
    %c1_79 = arith.constant 1 : index
    %c0_80 = arith.constant 0 : index
    %74 = vector.load %arg2[%c0_78, %73, %c1_79, %c0_80] : memref<1x12x10x4xf32, #tpu.memory_space<vmem>>, vector<1x4x8x4xf32>
    %75 = vector.shape_cast %74 : vector<1x4x8x4xf32> to vector<4x8x4xf32>
    %76 = vector.shape_cast %75 : vector<4x8x4xf32> to vector<32x4xf32>
    %c0_81 = arith.constant 0 : index
    %c1_82 = arith.constant 1 : index
    %c1_83 = arith.constant 1 : index
    %c0_84 = arith.constant 0 : index
    %c0_85 = arith.constant 0 : index
    %77 = vector.load %arg4[%c0_81, %c1_82, %c1_83, %c0_84, %c0_85] : memref<2x2x5x4x8xf32, #tpu.memory_space<vmem>>, vector<1x1x1x4x8xf32>
    %78 = vector.shape_cast %77 : vector<1x1x1x4x8xf32> to vector<4x8xf32>
    %cst_86 = arith.constant dense<0.000000e+00> : vector<32x8xf32>
    %79 = tpu.matmul %76, %78, %cst_86 {dimension_numbers = #tpu.dot_dimension_numbers<[1], [0], [0], [1], [0, 0, 1, 1], [], []>} : vector<32x4xf32>, vector<4x8xf32>, vector<32x8xf32> -> vector<32x8xf32>
    %80 = arith.addf %71, %79 : vector<32x8xf32>
    %c0_i32_87 = arith.constant 0 : i32
    %81 = arith.addi %0, %c0_i32_87 : i32
    %c0_88 = arith.constant 0 : index
    %82 = arith.index_cast %81 : i32 to index
    %c2_89 = arith.constant 2 : index
    %c0_90 = arith.constant 0 : index
    %83 = vector.load %arg2[%c0_88, %82, %c2_89, %c0_90] : memref<1x12x10x4xf32, #tpu.memory_space<vmem>>, vector<1x4x8x4xf32>
    %84 = vector.shape_cast %83 : vector<1x4x8x4xf32> to vector<4x8x4xf32>
    %85 = vector.shape_cast %84 : vector<4x8x4xf32> to vector<32x4xf32>
    %c0_91 = arith.constant 0 : index
    %c1_92 = arith.constant 1 : index
    %c2_93 = arith.constant 2 : index
    %c0_94 = arith.constant 0 : index
    %c0_95 = arith.constant 0 : index
    %86 = vector.load %arg4[%c0_91, %c1_92, %c2_93, %c0_94, %c0_95] : memref<2x2x5x4x8xf32, #tpu.memory_space<vmem>>, vector<1x1x1x4x8xf32>
    %87 = vector.shape_cast %86 : vector<1x1x1x4x8xf32> to vector<4x8xf32>
    %cst_96 = arith.constant dense<0.000000e+00> : vector<32x8xf32>
    %88 = tpu.matmul %85, %87, %cst_96 {dimension_numbers = #tpu.dot_dimension_numbers<[1], [0], [0], [1], [0, 0, 1, 1], [], []>} : vector<32x4xf32>, vector<4x8xf32>, vector<32x8xf32> -> vector<32x8xf32>
    %89 = arith.addf %80, %88 : vector<32x8xf32>
    %c1_i32_97 = arith.constant 1 : i32
    %90 = arith.addi %0, %c1_i32_97 : i32
    %c0_98 = arith.constant 0 : index
    %91 = arith.index_cast %90 : i32 to index
    %c1_99 = arith.constant 1 : index
    %c0_100 = arith.constant 0 : index
    %92 = vector.load %arg2[%c0_98, %91, %c1_99, %c0_100] : memref<1x12x10x4xf32, #tpu.memory_space<vmem>>, vector<1x4x8x4xf32>
    %93 = vector.shape_cast %92 : vector<1x4x8x4xf32> to vector<4x8x4xf32>
    %94 = vector.shape_cast %93 : vector<4x8x4xf32> to vector<32x4xf32>
    %c0_101 = arith.constant 0 : index
    %c1_102 = arith.constant 1 : index
    %c3_103 = arith.constant 3 : index
    %c0_104 = arith.constant 0 : index
    %c0_105 = arith.constant 0 : index
    %95 = vector.load %arg4[%c0_101, %c1_102, %c3_103, %c0_104, %c0_105] : memref<2x2x5x4x8xf32, #tpu.memory_space<vmem>>, vector<1x1x1x4x8xf32>
    %96 = vector.shape_cast %95 : vector<1x1x1x4x8xf32> to vector<4x8xf32>
    %cst_106 = arith.constant dense<0.000000e+00> : vector<32x8xf32>
    %97 = tpu.matmul %94, %96, %cst_106 {dimension_numbers = #tpu.dot_dimension_numbers<[1], [0], [0], [1], [0, 0, 1, 1], [], []>} : vector<32x4xf32>, vector<4x8xf32>, vector<32x8xf32> -> vector<32x8xf32>
    %98 = arith.addf %89, %97 : vector<32x8xf32>
    %c1_i32_107 = arith.constant 1 : i32
    %99 = arith.addi %0, %c1_i32_107 : i32
    %c0_108 = arith.constant 0 : index
    %100 = arith.index_cast %99 : i32 to index
    %c2_109 = arith.constant 2 : index
    %c0_110 = arith.constant 0 : index
    %101 = vector.load %arg2[%c0_108, %100, %c2_109, %c0_110] : memref<1x12x10x4xf32, #tpu.memory_space<vmem>>, vector<1x4x8x4xf32>
    %102 = vector.shape_cast %101 : vector<1x4x8x4xf32> to vector<4x8x4xf32>
    %103 = vector.shape_cast %102 : vector<4x8x4xf32> to vector<32x4xf32>
    %c0_111 = arith.constant 0 : index
    %c1_112 = arith.constant 1 : index
    %c4_113 = arith.constant 4 : index
    %c0_114 = arith.constant 0 : index
    %c0_115 = arith.constant 0 : index
    %104 = vector.load %arg4[%c0_111, %c1_112, %c4_113, %c0_114, %c0_115] : memref<2x2x5x4x8xf32, #tpu.memory_space<vmem>>, vector<1x1x1x4x8xf32>
    %105 = vector.shape_cast %104 : vector<1x1x1x4x8xf32> to vector<4x8xf32>
    %cst_116 = arith.constant dense<0.000000e+00> : vector<32x8xf32>
    %106 = tpu.matmul %103, %105, %cst_116 {dimension_numbers = #tpu.dot_dimension_numbers<[1], [0], [0], [1], [0, 0, 1, 1], [], []>} : vector<32x4xf32>, vector<4x8xf32>, vector<32x8xf32> -> vector<32x8xf32>
    %107 = arith.addf %98, %106 : vector<32x8xf32>
    %108 = vector.broadcast %1 : vector<1x8xf32> to vector<32x8xf32>
    %109 = arith.addf %107, %108 : vector<32x8xf32>
    %110 = vector.extract_strided_slice %109 {offsets = [0, 0], sizes = [32, 4], strides = [1, 1]} : vector<32x8xf32> to vector<32x4xf32>
    %cst_117 = arith.constant 0.000000e+00 : f32
    %111 = vector.broadcast %cst_117 : f32 to vector<32x4xf32>
    %112 = arith.maximumf %110, %111 : vector<32x4xf32>
    %113 = vector.shape_cast %112 : vector<32x4xf32> to vector<4x8x4xf32>
    %c1_118 = arith.constant 1 : index
    %c0_119 = arith.constant 0 : index
    %c1_120 = arith.constant 1 : index
    %c0_121 = arith.constant 0 : index
    %114 = vector.load %arg11[%c1_118, %c0_119, %c1_120, %c0_121] : memref<4x4x10x4xf32, #tpu.memory_space<vmem>>, vector<1x4x8x4xf32>
    %115 = vector.shape_cast %114 : vector<1x4x8x4xf32> to vector<4x8x4xf32>
    %116 = vector.shape_cast %113 : vector<4x8x4xf32> to vector<1x4x8x4xf32>
    tpu.vector_store %arg11[%c1_118, %c0_119, %c1_120, %c0_121], %116 {strides = array<i32>} : memref<4x4x10x4xf32, #tpu.memory_space<vmem>>, vector<1x4x8x4xf32>,
    %117 = vector.extract_strided_slice %109 {offsets = [0, 4], sizes = [32, 4], strides = [1, 1]} : vector<32x8xf32> to vector<32x4xf32>
    %118 = vector.shape_cast %117 : vector<32x4xf32> to vector<4x8x4xf32>
    %c1_122 = arith.constant 1 : index
    %c0_123 = arith.constant 0 : index
    %c0_124 = arith.constant 0 : index
    %c0_125 = arith.constant 0 : index
    %119 = vector.load %arg12[%c1_122, %c0_123, %c0_124, %c0_125] : memref<4x4x8x4xf32, #tpu.memory_space<vmem>>, vector<1x4x8x4xf32>
    %120 = vector.shape_cast %119 : vector<1x4x8x4xf32> to vector<4x8x4xf32>
    %121 = vector.shape_cast %118 : vector<4x8x4xf32> to vector<1x4x8x4xf32>
    tpu.vector_store %arg12[%c1_122, %c0_123, %c0_124, %c0_125], %121 {strides = array<i32>} : memref<4x4x8x4xf32, #tpu.memory_space<vmem>>, vector<1x4x8x4xf32>,
    %c0_126 = arith.constant 0 : index
    %122 = arith.index_cast %0 : i32 to index
    %c1_127 = arith.constant 1 : index
    %c0_128 = arith.constant 0 : index
    %c0_129 = arith.constant 0 : index
    %123 = vector.load %arg3[%c0_126, %122, %c1_127, %c0_128, %c0_129] : memref<1x10x2x8x8xf32, #tpu.memory_space<vmem>>, vector<1x4x1x8x4xf32>
    %124 = vector.shape_cast %123 : vector<1x4x1x8x4xf32> to vector<4x8x4xf32>
    %125 = vector.shape_cast %124 : vector<4x8x4xf32> to vector<32x4xf32>
    %c1_130 = arith.constant 1 : index
    %c0_131 = arith.constant 0 : index
    %c0_132 = arith.constant 0 : index
    %c0_133 = arith.constant 0 : index
    %c0_134 = arith.constant 0 : index
    %126 = vector.load %arg4[%c1_130, %c0_131, %c0_132, %c0_133, %c0_134] : memref<2x2x5x4x8xf32, #tpu.memory_space<vmem>>, vector<1x1x1x4x8xf32>
    %127 = vector.shape_cast %126 : vector<1x1x1x4x8xf32> to vector<4x8xf32>
    %cst_135 = arith.constant dense<0.000000e+00> : vector<32x8xf32>
    %128 = tpu.matmul %125, %127, %cst_135 {dimension_numbers = #tpu.dot_dimension_numbers<[1], [0], [0], [1], [0, 0, 1, 1], [], []>} : vector<32x4xf32>, vector<4x8xf32>, vector<32x8xf32> -> vector<32x8xf32>
    %c1_i32_136 = arith.constant 1 : i32
    %129 = arith.addi %0, %c1_i32_136 : i32
    %c0_137 = arith.constant 0 : index
    %130 = arith.index_cast %129 : i32 to index
    %c0_138 = arith.constant 0 : index
    %c0_139 = arith.constant 0 : index
    %131 = vector.load %arg2[%c0_137, %130, %c0_138, %c0_139] : memref<1x12x10x4xf32, #tpu.memory_space<vmem>>, vector<1x4x8x4xf32>
    %132 = vector.shape_cast %131 : vector<1x4x8x4xf32> to vector<4x8x4xf32>
    %133 = vector.shape_cast %132 : vector<4x8x4xf32> to vector<32x4xf32>
    %c1_140 = arith.constant 1 : index
    %c0_141 = arith.constant 0 : index
    %c1_142 = arith.constant 1 : index
    %c0_143 = arith.constant 0 : index
    %c0_144 = arith.constant 0 : index
    %134 = vector.load %arg4[%c1_140, %c0_141, %c1_142, %c0_143, %c0_144] : memref<2x2x5x4x8xf32, #tpu.memory_space<vmem>>, vector<1x1x1x4x8xf32>
    %135 = vector.shape_cast %134 : vector<1x1x1x4x8xf32> to vector<4x8xf32>
    %cst_145 = arith.constant dense<0.000000e+00> : vector<32x8xf32>
    %136 = tpu.matmul %133, %135, %cst_145 {dimension_numbers = #tpu.dot_dimension_numbers<[1], [0], [0], [1], [0, 0, 1, 1], [], []>} : vector<32x4xf32>, vector<4x8xf32>, vector<32x8xf32> -> vector<32x8xf32>
    %137 = arith.addf %128, %136 : vector<32x8xf32>
    %c1_i32_146 = arith.constant 1 : i32
    %138 = arith.addi %0, %c1_i32_146 : i32
    %c0_147 = arith.constant 0 : index
    %139 = arith.index_cast %138 : i32 to index
    %c1_148 = arith.constant 1 : index
    %c0_149 = arith.constant 0 : index
    %140 = vector.load %arg2[%c0_147, %139, %c1_148, %c0_149] : memref<1x12x10x4xf32, #tpu.memory_space<vmem>>, vector<1x4x8x4xf32>
    %141 = vector.shape_cast %140 : vector<1x4x8x4xf32> to vector<4x8x4xf32>
    %142 = vector.shape_cast %141 : vector<4x8x4xf32> to vector<32x4xf32>
    %c1_150 = arith.constant 1 : index
    %c0_151 = arith.constant 0 : index
    %c2_152 = arith.constant 2 : index
    %c0_153 = arith.constant 0 : index
    %c0_154 = arith.constant 0 : index
    %143 = vector.load %arg4[%c1_150, %c0_151, %c2_152, %c0_153, %c0_154] : memref<2x2x5x4x8xf32, #tpu.memory_space<vmem>>, vector<1x1x1x4x8xf32>
    %144 = vector.shape_cast %143 : vector<1x1x1x4x8xf32> to vector<4x8xf32>
    %cst_155 = arith.constant dense<0.000000e+00> : vector<32x8xf32>
    %145 = tpu.matmul %142, %144, %cst_155 {dimension_numbers = #tpu.dot_dimension_numbers<[1], [0], [0], [1], [0, 0, 1, 1], [], []>} : vector<32x4xf32>, vector<4x8xf32>, vector<32x8xf32> -> vector<32x8xf32>
    %146 = arith.addf %137, %145 : vector<32x8xf32>
    %c2_i32_156 = arith.constant 2 : i32
    %147 = arith.addi %0, %c2_i32_156 : i32
    %c0_157 = arith.constant 0 : index
    %148 = arith.index_cast %147 : i32 to index
    %c0_158 = arith.constant 0 : index
    %c0_159 = arith.constant 0 : index
    %149 = vector.load %arg2[%c0_157, %148, %c0_158, %c0_159] : memref<1x12x10x4xf32, #tpu.memory_space<vmem>>, vector<1x4x8x4xf32>
    %150 = vector.shape_cast %149 : vector<1x4x8x4xf32> to vector<4x8x4xf32>
    %151 = vector.shape_cast %150 : vector<4x8x4xf32> to vector<32x4xf32>
    %c1_160 = arith.constant 1 : index
    %c0_161 = arith.constant 0 : index
    %c3_162 = arith.constant 3 : index
    %c0_163 = arith.constant 0 : index
    %c0_164 = arith.constant 0 : index
    %152 = vector.load %arg4[%c1_160, %c0_161, %c3_162, %c0_163, %c0_164] : memref<2x2x5x4x8xf32, #tpu.memory_space<vmem>>, vector<1x1x1x4x8xf32>
    %153 = vector.shape_cast %152 : vector<1x1x1x4x8xf32> to vector<4x8xf32>
    %cst_165 = arith.constant dense<0.000000e+00> : vector<32x8xf32>
    %154 = tpu.matmul %151, %153, %cst_165 {dimension_numbers = #tpu.dot_dimension_numbers<[1], [0], [0], [1], [0, 0, 1, 1], [], []>} : vector<32x4xf32>, vector<4x8xf32>, vector<32x8xf32> -> vector<32x8xf32>
    %155 = arith.addf %146, %154 : vector<32x8xf32>
    %c2_i32_166 = arith.constant 2 : i32
    %156 = arith.addi %0, %c2_i32_166 : i32
    %c0_167 = arith.constant 0 : index
    %157 = arith.index_cast %156 : i32 to index
    %c1_168 = arith.constant 1 : index
    %c0_169 = arith.constant 0 : index
    %158 = vector.load %arg2[%c0_167, %157, %c1_168, %c0_169] : memref<1x12x10x4xf32, #tpu.memory_space<vmem>>, vector<1x4x8x4xf32>
    %159 = vector.shape_cast %158 : vector<1x4x8x4xf32> to vector<4x8x4xf32>
    %160 = vector.shape_cast %159 : vector<4x8x4xf32> to vector<32x4xf32>
    %c1_170 = arith.constant 1 : index
    %c0_171 = arith.constant 0 : index
    %c4_172 = arith.constant 4 : index
    %c0_173 = arith.constant 0 : index
    %c0_174 = arith.constant 0 : index
    %161 = vector.load %arg4[%c1_170, %c0_171, %c4_172, %c0_173, %c0_174] : memref<2x2x5x4x8xf32, #tpu.memory_space<vmem>>, vector<1x1x1x4x8xf32>
    %162 = vector.shape_cast %161 : vector<1x1x1x4x8xf32> to vector<4x8xf32>
    %cst_175 = arith.constant dense<0.000000e+00> : vector<32x8xf32>
    %163 = tpu.matmul %160, %162, %cst_175 {dimension_numbers = #tpu.dot_dimension_numbers<[1], [0], [0], [1], [0, 0, 1, 1], [], []>} : vector<32x4xf32>, vector<4x8xf32>, vector<32x8xf32> -> vector<32x8xf32>
    %164 = arith.addf %155, %163 : vector<32x8xf32>
    %165 = vector.broadcast %1 : vector<1x8xf32> to vector<32x8xf32>
    %166 = arith.addf %164, %165 : vector<32x8xf32>
    %167 = vector.extract_strided_slice %166 {offsets = [0, 0], sizes = [32, 4], strides = [1, 1]} : vector<32x8xf32> to vector<32x4xf32>
    %cst_176 = arith.constant 0.000000e+00 : f32
    %168 = vector.broadcast %cst_176 : f32 to vector<32x4xf32>
    %169 = arith.maximumf %167, %168 : vector<32x4xf32>
    %170 = vector.shape_cast %169 : vector<32x4xf32> to vector<4x8x4xf32>
    %c2_177 = arith.constant 2 : index
    %c0_178 = arith.constant 0 : index
    %c1_179 = arith.constant 1 : index
    %c0_180 = arith.constant 0 : index
    %171 = vector.load %arg11[%c2_177, %c0_178, %c1_179, %c0_180] : memref<4x4x10x4xf32, #tpu.memory_space<vmem>>, vector<1x4x8x4xf32>
    %172 = vector.shape_cast %171 : vector<1x4x8x4xf32> to vector<4x8x4xf32>
    %173 = vector.shape_cast %170 : vector<4x8x4xf32> to vector<1x4x8x4xf32>
    tpu.vector_store %arg11[%c2_177, %c0_178, %c1_179, %c0_180], %173 {strides = array<i32>} : memref<4x4x10x4xf32, #tpu.memory_space<vmem>>, vector<1x4x8x4xf32>,
    %174 = vector.extract_strided_slice %166 {offsets = [0, 4], sizes = [32, 4], strides = [1, 1]} : vector<32x8xf32> to vector<32x4xf32>
    %175 = vector.shape_cast %174 : vector<32x4xf32> to vector<4x8x4xf32>
    %c2_181 = arith.constant 2 : index
    %c0_182 = arith.constant 0 : index
    %c0_183 = arith.constant 0 : index
    %c0_184 = arith.constant 0 : index
    %176 = vector.load %arg12[%c2_181, %c0_182, %c0_183, %c0_184] : memref<4x4x8x4xf32, #tpu.memory_space<vmem>>, vector<1x4x8x4xf32>
    %177 = vector.shape_cast %176 : vector<1x4x8x4xf32> to vector<4x8x4xf32>
    %178 = vector.shape_cast %175 : vector<4x8x4xf32> to vector<1x4x8x4xf32>
    tpu.vector_store %arg12[%c2_181, %c0_182, %c0_183, %c0_184], %178 {strides = array<i32>} : memref<4x4x8x4xf32, #tpu.memory_space<vmem>>, vector<1x4x8x4xf32>,
    %c0_185 = arith.constant 0 : index
    %179 = arith.index_cast %0 : i32 to index
    %c1_186 = arith.constant 1 : index
    %c0_187 = arith.constant 0 : index
    %c4_188 = arith.constant 4 : index
    %180 = vector.load %arg3[%c0_185, %179, %c1_186, %c0_187, %c4_188] : memref<1x10x2x8x8xf32, #tpu.memory_space<vmem>>, vector<1x4x1x8x4xf32>
    %181 = vector.shape_cast %180 : vector<1x4x1x8x4xf32> to vector<4x8x4xf32>
    %182 = vector.shape_cast %181 : vector<4x8x4xf32> to vector<32x4xf32>
    %c1_189 = arith.constant 1 : index
    %c1_190 = arith.constant 1 : index
    %c0_191 = arith.constant 0 : index
    %c0_192 = arith.constant 0 : index
    %c0_193 = arith.constant 0 : index
    %183 = vector.load %arg4[%c1_189, %c1_190, %c0_191, %c0_192, %c0_193] : memref<2x2x5x4x8xf32, #tpu.memory_space<vmem>>, vector<1x1x1x4x8xf32>
    %184 = vector.shape_cast %183 : vector<1x1x1x4x8xf32> to vector<4x8xf32>
    %cst_194 = arith.constant dense<0.000000e+00> : vector<32x8xf32>
    %185 = tpu.matmul %182, %184, %cst_194 {dimension_numbers = #tpu.dot_dimension_numbers<[1], [0], [0], [1], [0, 0, 1, 1], [], []>} : vector<32x4xf32>, vector<4x8xf32>, vector<32x8xf32> -> vector<32x8xf32>
    %c1_i32_195 = arith.constant 1 : i32
    %186 = arith.addi %0, %c1_i32_195 : i32
    %c0_196 = arith.constant 0 : index
    %187 = arith.index_cast %186 : i32 to index
    %c1_197 = arith.constant 1 : index
    %c0_198 = arith.constant 0 : index
    %188 = vector.load %arg2[%c0_196, %187, %c1_197, %c0_198] : memref<1x12x10x4xf32, #tpu.memory_space<vmem>>, vector<1x4x8x4xf32>
    %189 = vector.shape_cast %188 : vector<1x4x8x4xf32> to vector<4x8x4xf32>
    %190 = vector.shape_cast %189 : vector<4x8x4xf32> to vector<32x4xf32>
    %c1_199 = arith.constant 1 : index
    %c1_200 = arith.constant 1 : index
    %c1_201 = arith.constant 1 : index
    %c0_202 = arith.constant 0 : index
    %c0_203 = arith.constant 0 : index
    %191 = vector.load %arg4[%c1_199, %c1_200, %c1_201, %c0_202, %c0_203] : memref<2x2x5x4x8xf32, #tpu.memory_space<vmem>>, vector<1x1x1x4x8xf32>
    %192 = vector.shape_cast %191 : vector<1x1x1x4x8xf32> to vector<4x8xf32>
    %cst_204 = arith.constant dense<0.000000e+00> : vector<32x8xf32>
    %193 = tpu.matmul %190, %192, %cst_204 {dimension_numbers = #tpu.dot_dimension_numbers<[1], [0], [0], [1], [0, 0, 1, 1], [], []>} : vector<32x4xf32>, vector<4x8xf32>, vector<32x8xf32> -> vector<32x8xf32>
    %194 = arith.addf %185, %193 : vector<32x8xf32>
    %c1_i32_205 = arith.constant 1 : i32
    %195 = arith.addi %0, %c1_i32_205 : i32
    %c0_206 = arith.constant 0 : index
    %196 = arith.index_cast %195 : i32 to index
    %c2_207 = arith.constant 2 : index
    %c0_208 = arith.constant 0 : index
    %197 = vector.load %arg2[%c0_206, %196, %c2_207, %c0_208] : memref<1x12x10x4xf32, #tpu.memory_space<vmem>>, vector<1x4x8x4xf32>
    %198 = vector.shape_cast %197 : vector<1x4x8x4xf32> to vector<4x8x4xf32>
    %199 = vector.shape_cast %198 : vector<4x8x4xf32> to vector<32x4xf32>
    %c1_209 = arith.constant 1 : index
    %c1_210 = arith.constant 1 : index
    %c2_211 = arith.constant 2 : index
    %c0_212 = arith.constant 0 : index
    %c0_213 = arith.constant 0 : index
    %200 = vector.load %arg4[%c1_209, %c1_210, %c2_211, %c0_212, %c0_213] : memref<2x2x5x4x8xf32, #tpu.memory_space<vmem>>, vector<1x1x1x4x8xf32>
    %201 = vector.shape_cast %200 : vector<1x1x1x4x8xf32> to vector<4x8xf32>
    %cst_214 = arith.constant dense<0.000000e+00> : vector<32x8xf32>
    %202 = tpu.matmul %199, %201, %cst_214 {dimension_numbers = #tpu.dot_dimension_numbers<[1], [0], [0], [1], [0, 0, 1, 1], [], []>} : vector<32x4xf32>, vector<4x8xf32>, vector<32x8xf32> -> vector<32x8xf32>
    %203 = arith.addf %194, %202 : vector<32x8xf32>
    %c2_i32_215 = arith.constant 2 : i32
    %204 = arith.addi %0, %c2_i32_215 : i32
    %c0_216 = arith.constant 0 : index
    %205 = arith.index_cast %204 : i32 to index
    %c1_217 = arith.constant 1 : index
    %c0_218 = arith.constant 0 : index
    %206 = vector.load %arg2[%c0_216, %205, %c1_217, %c0_218] : memref<1x12x10x4xf32, #tpu.memory_space<vmem>>, vector<1x4x8x4xf32>
    %207 = vector.shape_cast %206 : vector<1x4x8x4xf32> to vector<4x8x4xf32>
    %208 = vector.shape_cast %207 : vector<4x8x4xf32> to vector<32x4xf32>
    %c1_219 = arith.constant 1 : index
    %c1_220 = arith.constant 1 : index
    %c3_221 = arith.constant 3 : index
    %c0_222 = arith.constant 0 : index
    %c0_223 = arith.constant 0 : index
    %209 = vector.load %arg4[%c1_219, %c1_220, %c3_221, %c0_222, %c0_223] : memref<2x2x5x4x8xf32, #tpu.memory_space<vmem>>, vector<1x1x1x4x8xf32>
    %210 = vector.shape_cast %209 : vector<1x1x1x4x8xf32> to vector<4x8xf32>
    %cst_224 = arith.constant dense<0.000000e+00> : vector<32x8xf32>
    %211 = tpu.matmul %208, %210, %cst_224 {dimension_numbers = #tpu.dot_dimension_numbers<[1], [0], [0], [1], [0, 0, 1, 1], [], []>} : vector<32x4xf32>, vector<4x8xf32>, vector<32x8xf32> -> vector<32x8xf32>
    %212 = arith.addf %203, %211 : vector<32x8xf32>
    %c2_i32_225 = arith.constant 2 : i32
    %213 = arith.addi %0, %c2_i32_225 : i32
    %c0_226 = arith.constant 0 : index
    %214 = arith.index_cast %213 : i32 to index
    %c2_227 = arith.constant 2 : index
    %c0_228 = arith.constant 0 : index
    %215 = vector.load %arg2[%c0_226, %214, %c2_227, %c0_228] : memref<1x12x10x4xf32, #tpu.memory_space<vmem>>, vector<1x4x8x4xf32>
    %216 = vector.shape_cast %215 : vector<1x4x8x4xf32> to vector<4x8x4xf32>
    %217 = vector.shape_cast %216 : vector<4x8x4xf32> to vector<32x4xf32>
    %c1_229 = arith.constant 1 : index
    %c1_230 = arith.constant 1 : index
    %c4_231 = arith.constant 4 : index
    %c0_232 = arith.constant 0 : index
    %c0_233 = arith.constant 0 : index
    %218 = vector.load %arg4[%c1_229, %c1_230, %c4_231, %c0_232, %c0_233] : memref<2x2x5x4x8xf32, #tpu.memory_space<vmem>>, vector<1x1x1x4x8xf32>
    %219 = vector.shape_cast %218 : vector<1x1x1x4x8xf32> to vector<4x8xf32>
    %cst_234 = arith.constant dense<0.000000e+00> : vector<32x8xf32>
    %220 = tpu.matmul %217, %219, %cst_234 {dimension_numbers = #tpu.dot_dimension_numbers<[1], [0], [0], [1], [0, 0, 1, 1], [], []>} : vector<32x4xf32>, vector<4x8xf32>, vector<32x8xf32> -> vector<32x8xf32>
    %221 = arith.addf %212, %220 : vector<32x8xf32>
    %222 = vector.broadcast %1 : vector<1x8xf32> to vector<32x8xf32>
    %223 = arith.addf %221, %222 : vector<32x8xf32>
    %224 = vector.extract_strided_slice %223 {offsets = [0, 0], sizes = [32, 4], strides = [1, 1]} : vector<32x8xf32> to vector<32x4xf32>
    %cst_235 = arith.constant 0.000000e+00 : f32
    %225 = vector.broadcast %cst_235 : f32 to vector<32x4xf32>
    %226 = arith.maximumf %224, %225 : vector<32x4xf32>
    %227 = vector.shape_cast %226 : vector<32x4xf32> to vector<4x8x4xf32>
    %c3_236 = arith.constant 3 : index
    %c0_237 = arith.constant 0 : index
    %c1_238 = arith.constant 1 : index
    %c0_239 = arith.constant 0 : index
    %228 = vector.load %arg11[%c3_236, %c0_237, %c1_238, %c0_239] : memref<4x4x10x4xf32, #tpu.memory_space<vmem>>, vector<1x4x8x4xf32>
    %229 = vector.shape_cast %228 : vector<1x4x8x4xf32> to vector<4x8x4xf32>
    %230 = vector.shape_cast %227 : vector<4x8x4xf32> to vector<1x4x8x4xf32>
    tpu.vector_store %arg11[%c3_236, %c0_237, %c1_238, %c0_239], %230 {strides = array<i32>} : memref<4x4x10x4xf32, #tpu.memory_space<vmem>>, vector<1x4x8x4xf32>,
    %231 = vector.extract_strided_slice %223 {offsets = [0, 4], sizes = [32, 4], strides = [1, 1]} : vector<32x8xf32> to vector<32x4xf32>
    %232 = vector.shape_cast %231 : vector<32x4xf32> to vector<4x8x4xf32>
    %c3_240 = arith.constant 3 : index
    %c0_241 = arith.constant 0 : index
    %c0_242 = arith.constant 0 : index
    %c0_243 = arith.constant 0 : index
    %233 = vector.load %arg12[%c3_240, %c0_241, %c0_242, %c0_243] : memref<4x4x8x4xf32, #tpu.memory_space<vmem>>, vector<1x4x8x4xf32>
    %234 = vector.shape_cast %233 : vector<1x4x8x4xf32> to vector<4x8x4xf32>
    %235 = vector.shape_cast %232 : vector<4x8x4xf32> to vector<1x4x8x4xf32>
    tpu.vector_store %arg12[%c3_240, %c0_241, %c0_242, %c0_243], %235 {strides = array<i32>} : memref<4x4x8x4xf32, #tpu.memory_space<vmem>>, vector<1x4x8x4xf32>,
    %c0_i32_244 = arith.constant 0 : i32
    %236 = arith.cmpi eq, %arg1, %c0_i32_244 : i32
    %237 = arith.extui %236 : i1 to i32
    %c0_i32_245 = arith.constant 0 : i32
    %238 = arith.cmpi ne, %237, %c0_i32_245 : i32
    scf.if %238 {
      %cst_579 = arith.constant 0.000000e+00 : f32
      %558 = vector.broadcast %cst_579 : f32 to vector<4x1x10x4xf32>
      %c0_580 = arith.constant 0 : index
      %c0_581 = arith.constant 0 : index
      %c0_582 = arith.constant 0 : index
      %c0_583 = arith.constant 0 : index
      %559 = vector.load %arg11[%c0_580, %c0_581, %c0_582, %c0_583] : memref<4x4x10x4xf32, #tpu.memory_space<vmem>>, vector<4x1x10x4xf32>
      tpu.vector_store %arg11[%c0_580, %c0_581, %c0_582, %c0_583], %558 {strides = array<i32>} : memref<4x4x10x4xf32, #tpu.memory_space<vmem>>, vector<4x1x10x4xf32>,
    } else {
    }
    %c3_i32 = arith.constant 3 : i32
    %239 = arith.cmpi eq, %arg1, %c3_i32 : i32
    %240 = arith.extui %239 : i1 to i32
    %c0_i32_246 = arith.constant 0 : i32
    %241 = arith.cmpi ne, %240, %c0_i32_246 : i32
    scf.if %241 {
      %cst_579 = arith.constant 0.000000e+00 : f32
      %558 = vector.broadcast %cst_579 : f32 to vector<4x1x10x4xf32>
      %c0_580 = arith.constant 0 : index
      %c3_581 = arith.constant 3 : index
      %c0_582 = arith.constant 0 : index
      %c0_583 = arith.constant 0 : index
      %559 = vector.load %arg11[%c0_580, %c3_581, %c0_582, %c0_583] : memref<4x4x10x4xf32, #tpu.memory_space<vmem>>, vector<4x1x10x4xf32>
      tpu.vector_store %arg11[%c0_580, %c3_581, %c0_582, %c0_583], %558 {strides = array<i32>} : memref<4x4x10x4xf32, #tpu.memory_space<vmem>>, vector<4x1x10x4xf32>,
    } else {
    }
    %c3_247 = arith.constant 3 : index
    %c0_248 = arith.constant 0 : index
    %c0_249 = arith.constant 0 : index
    %c0_250 = arith.constant 0 : index
    %242 = vector.load %arg11[%c3_247, %c0_248, %c0_249, %c0_250] : memref<4x4x10x4xf32, #tpu.memory_space<vmem>>, vector<1x2x8x4xf32>
    %243 = vector.shape_cast %242 : vector<1x2x8x4xf32> to vector<2x8x4xf32>
    %244 = vector.shape_cast %243 : vector<2x8x4xf32> to vector<16x4xf32>
    %c0_251 = arith.constant 0 : index
    %c0_252 = arith.constant 0 : index
    %c0_253 = arith.constant 0 : index
    %245 = vector.load %arg6[%c0_251, %c0_252, %c0_253] : memref<9x4x4xf32, #tpu.memory_space<vmem>>, vector<1x4x4xf32>
    %246 = vector.shape_cast %245 : vector<1x4x4xf32> to vector<4x4xf32>
    %cst_254 = arith.constant dense<0.000000e+00> : vector<16x4xf32>
    %247 = tpu.matmul %244, %246, %cst_254 {dimension_numbers = #tpu.dot_dimension_numbers<[1], [0], [0], [1], [0, 0, 1, 1], [], []>} : vector<16x4xf32>, vector<4x4xf32>, vector<16x4xf32> -> vector<16x4xf32>
    %c2_255 = arith.constant 2 : index
    %c0_256 = arith.constant 0 : index
    %c1_257 = arith.constant 1 : index
    %c0_258 = arith.constant 0 : index
    %248 = vector.load %arg11[%c2_255, %c0_256, %c1_257, %c0_258] : memref<4x4x10x4xf32, #tpu.memory_space<vmem>>, vector<1x2x8x4xf32>
    %249 = vector.shape_cast %248 : vector<1x2x8x4xf32> to vector<2x8x4xf32>
    %250 = vector.shape_cast %249 : vector<2x8x4xf32> to vector<16x4xf32>
    %c1_259 = arith.constant 1 : index
    %c0_260 = arith.constant 0 : index
    %c0_261 = arith.constant 0 : index
    %251 = vector.load %arg6[%c1_259, %c0_260, %c0_261] : memref<9x4x4xf32, #tpu.memory_space<vmem>>, vector<1x4x4xf32>
    %252 = vector.shape_cast %251 : vector<1x4x4xf32> to vector<4x4xf32>
    %cst_262 = arith.constant dense<0.000000e+00> : vector<16x4xf32>
    %253 = tpu.matmul %250, %252, %cst_262 {dimension_numbers = #tpu.dot_dimension_numbers<[1], [0], [0], [1], [0, 0, 1, 1], [], []>} : vector<16x4xf32>, vector<4x4xf32>, vector<16x4xf32> -> vector<16x4xf32>
    %254 = arith.addf %247, %253 : vector<16x4xf32>
    %c3_263 = arith.constant 3 : index
    %c0_264 = arith.constant 0 : index
    %c1_265 = arith.constant 1 : index
    %c0_266 = arith.constant 0 : index
    %255 = vector.load %arg11[%c3_263, %c0_264, %c1_265, %c0_266] : memref<4x4x10x4xf32, #tpu.memory_space<vmem>>, vector<1x2x8x4xf32>
    %256 = vector.shape_cast %255 : vector<1x2x8x4xf32> to vector<2x8x4xf32>
    %257 = vector.shape_cast %256 : vector<2x8x4xf32> to vector<16x4xf32>
    %c2_267 = arith.constant 2 : index
    %c0_268 = arith.constant 0 : index
    %c0_269 = arith.constant 0 : index
    %258 = vector.load %arg6[%c2_267, %c0_268, %c0_269] : memref<9x4x4xf32, #tpu.memory_space<vmem>>, vector<1x4x4xf32>
    %259 = vector.shape_cast %258 : vector<1x4x4xf32> to vector<4x4xf32>
    %cst_270 = arith.constant dense<0.000000e+00> : vector<16x4xf32>
    %260 = tpu.matmul %257, %259, %cst_270 {dimension_numbers = #tpu.dot_dimension_numbers<[1], [0], [0], [1], [0, 0, 1, 1], [], []>} : vector<16x4xf32>, vector<4x4xf32>, vector<16x4xf32> -> vector<16x4xf32>
    %261 = arith.addf %254, %260 : vector<16x4xf32>
    %c1_271 = arith.constant 1 : index
    %c1_272 = arith.constant 1 : index
    %c0_273 = arith.constant 0 : index
    %c0_274 = arith.constant 0 : index
    %262 = vector.load %arg11[%c1_271, %c1_272, %c0_273, %c0_274] : memref<4x4x10x4xf32, #tpu.memory_space<vmem>>, vector<1x2x8x4xf32>
    %263 = vector.shape_cast %262 : vector<1x2x8x4xf32> to vector<2x8x4xf32>
    %264 = vector.shape_cast %263 : vector<2x8x4xf32> to vector<16x4xf32>
    %c3_275 = arith.constant 3 : index
    %c0_276 = arith.constant 0 : index
    %c0_277 = arith.constant 0 : index
    %265 = vector.load %arg6[%c3_275, %c0_276, %c0_277] : memref<9x4x4xf32, #tpu.memory_space<vmem>>, vector<1x4x4xf32>
    %266 = vector.shape_cast %265 : vector<1x4x4xf32> to vector<4x4xf32>
    %cst_278 = arith.constant dense<0.000000e+00> : vector<16x4xf32>
    %267 = tpu.matmul %264, %266, %cst_278 {dimension_numbers = #tpu.dot_dimension_numbers<[1], [0], [0], [1], [0, 0, 1, 1], [], []>} : vector<16x4xf32>, vector<4x4xf32>, vector<16x4xf32> -> vector<16x4xf32>
    %268 = arith.addf %261, %267 : vector<16x4xf32>
    %c0_279 = arith.constant 0 : index
    %c1_280 = arith.constant 1 : index
    %c1_281 = arith.constant 1 : index
    %c0_282 = arith.constant 0 : index
    %269 = vector.load %arg11[%c0_279, %c1_280, %c1_281, %c0_282] : memref<4x4x10x4xf32, #tpu.memory_space<vmem>>, vector<1x2x8x4xf32>
    %270 = vector.shape_cast %269 : vector<1x2x8x4xf32> to vector<2x8x4xf32>
    %271 = vector.shape_cast %270 : vector<2x8x4xf32> to vector<16x4xf32>
    %c4_283 = arith.constant 4 : index
    %c0_284 = arith.constant 0 : index
    %c0_285 = arith.constant 0 : index
    %272 = vector.load %arg6[%c4_283, %c0_284, %c0_285] : memref<9x4x4xf32, #tpu.memory_space<vmem>>, vector<1x4x4xf32>
    %273 = vector.shape_cast %272 : vector<1x4x4xf32> to vector<4x4xf32>
    %cst_286 = arith.constant dense<0.000000e+00> : vector<16x4xf32>
    %274 = tpu.matmul %271, %273, %cst_286 {dimension_numbers = #tpu.dot_dimension_numbers<[1], [0], [0], [1], [0, 0, 1, 1], [], []>} : vector<16x4xf32>, vector<4x4xf32>, vector<16x4xf32> -> vector<16x4xf32>
    %275 = arith.addf %268, %274 : vector<16x4xf32>
    %c1_287 = arith.constant 1 : index
    %c1_288 = arith.constant 1 : index
    %c1_289 = arith.constant 1 : index
    %c0_290 = arith.constant 0 : index
    %276 = vector.load %arg11[%c1_287, %c1_288, %c1_289, %c0_290] : memref<4x4x10x4xf32, #tpu.memory_space<vmem>>, vector<1x2x8x4xf32>
    %277 = vector.shape_cast %276 : vector<1x2x8x4xf32> to vector<2x8x4xf32>
    %278 = vector.shape_cast %277 : vector<2x8x4xf32> to vector<16x4xf32>
    %c5 = arith.constant 5 : index
    %c0_291 = arith.constant 0 : index
    %c0_292 = arith.constant 0 : index
    %279 = vector.load %arg6[%c5, %c0_291, %c0_292] : memref<9x4x4xf32, #tpu.memory_space<vmem>>, vector<1x4x4xf32>
    %280 = vector.shape_cast %279 : vector<1x4x4xf32> to vector<4x4xf32>
    %cst_293 = arith.constant dense<0.000000e+00> : vector<16x4xf32>
    %281 = tpu.matmul %278, %280, %cst_293 {dimension_numbers = #tpu.dot_dimension_numbers<[1], [0], [0], [1], [0, 0, 1, 1], [], []>} : vector<16x4xf32>, vector<4x4xf32>, vector<16x4xf32> -> vector<16x4xf32>
    %282 = arith.addf %275, %281 : vector<16x4xf32>
    %c3_294 = arith.constant 3 : index
    %c1_295 = arith.constant 1 : index
    %c0_296 = arith.constant 0 : index
    %c0_297 = arith.constant 0 : index
    %283 = vector.load %arg11[%c3_294, %c1_295, %c0_296, %c0_297] : memref<4x4x10x4xf32, #tpu.memory_space<vmem>>, vector<1x2x8x4xf32>
    %284 = vector.shape_cast %283 : vector<1x2x8x4xf32> to vector<2x8x4xf32>
    %285 = vector.shape_cast %284 : vector<2x8x4xf32> to vector<16x4xf32>
    %c6 = arith.constant 6 : index
    %c0_298 = arith.constant 0 : index
    %c0_299 = arith.constant 0 : index
    %286 = vector.load %arg6[%c6, %c0_298, %c0_299] : memref<9x4x4xf32, #tpu.memory_space<vmem>>, vector<1x4x4xf32>
    %287 = vector.shape_cast %286 : vector<1x4x4xf32> to vector<4x4xf32>
    %cst_300 = arith.constant dense<0.000000e+00> : vector<16x4xf32>
    %288 = tpu.matmul %285, %287, %cst_300 {dimension_numbers = #tpu.dot_dimension_numbers<[1], [0], [0], [1], [0, 0, 1, 1], [], []>} : vector<16x4xf32>, vector<4x4xf32>, vector<16x4xf32> -> vector<16x4xf32>
    %289 = arith.addf %282, %288 : vector<16x4xf32>
    %c2_301 = arith.constant 2 : index
    %c1_302 = arith.constant 1 : index
    %c1_303 = arith.constant 1 : index
    %c0_304 = arith.constant 0 : index
    %290 = vector.load %arg11[%c2_301, %c1_302, %c1_303, %c0_304] : memref<4x4x10x4xf32, #tpu.memory_space<vmem>>, vector<1x2x8x4xf32>
    %291 = vector.shape_cast %290 : vector<1x2x8x4xf32> to vector<2x8x4xf32>
    %292 = vector.shape_cast %291 : vector<2x8x4xf32> to vector<16x4xf32>
    %c7 = arith.constant 7 : index
    %c0_305 = arith.constant 0 : index
    %c0_306 = arith.constant 0 : index
    %293 = vector.load %arg6[%c7, %c0_305, %c0_306] : memref<9x4x4xf32, #tpu.memory_space<vmem>>, vector<1x4x4xf32>
    %294 = vector.shape_cast %293 : vector<1x4x4xf32> to vector<4x4xf32>
    %cst_307 = arith.constant dense<0.000000e+00> : vector<16x4xf32>
    %295 = tpu.matmul %292, %294, %cst_307 {dimension_numbers = #tpu.dot_dimension_numbers<[1], [0], [0], [1], [0, 0, 1, 1], [], []>} : vector<16x4xf32>, vector<4x4xf32>, vector<16x4xf32> -> vector<16x4xf32>
    %296 = arith.addf %289, %295 : vector<16x4xf32>
    %c3_308 = arith.constant 3 : index
    %c1_309 = arith.constant 1 : index
    %c1_310 = arith.constant 1 : index
    %c0_311 = arith.constant 0 : index
    %297 = vector.load %arg11[%c3_308, %c1_309, %c1_310, %c0_311] : memref<4x4x10x4xf32, #tpu.memory_space<vmem>>, vector<1x2x8x4xf32>
    %298 = vector.shape_cast %297 : vector<1x2x8x4xf32> to vector<2x8x4xf32>
    %299 = vector.shape_cast %298 : vector<2x8x4xf32> to vector<16x4xf32>
    %c8 = arith.constant 8 : index
    %c0_312 = arith.constant 0 : index
    %c0_313 = arith.constant 0 : index
    %300 = vector.load %arg6[%c8, %c0_312, %c0_313] : memref<9x4x4xf32, #tpu.memory_space<vmem>>, vector<1x4x4xf32>
    %301 = vector.shape_cast %300 : vector<1x4x4xf32> to vector<4x4xf32>
    %cst_314 = arith.constant dense<0.000000e+00> : vector<16x4xf32>
    %302 = tpu.matmul %299, %301, %cst_314 {dimension_numbers = #tpu.dot_dimension_numbers<[1], [0], [0], [1], [0, 0, 1, 1], [], []>} : vector<16x4xf32>, vector<4x4xf32>, vector<16x4xf32> -> vector<16x4xf32>
    %303 = arith.addf %296, %302 : vector<16x4xf32>
    %304 = vector.broadcast %2 : vector<1x4xf32> to vector<16x4xf32>
    %305 = arith.addf %303, %304 : vector<16x4xf32>
    %cst_315 = arith.constant 0.000000e+00 : f32
    %306 = vector.broadcast %cst_315 : f32 to vector<16x4xf32>
    %307 = arith.maximumf %305, %306 : vector<16x4xf32>
    %cst_316 = arith.constant dense<0.000000e+00> : vector<16x4xf32>
    %308 = tpu.matmul %307, %4, %cst_316 {dimension_numbers = #tpu.dot_dimension_numbers<[1], [0], [0], [1], [0, 0, 1, 1], [], []>} : vector<16x4xf32>, vector<4x4xf32>, vector<16x4xf32> -> vector<16x4xf32>
    %309 = vector.broadcast %3 : vector<1x4xf32> to vector<16x4xf32>
    %310 = arith.addf %308, %309 : vector<16x4xf32>
    %c0_317 = arith.constant 0 : index
    %c1_318 = arith.constant 1 : index
    %c0_319 = arith.constant 0 : index
    %c0_320 = arith.constant 0 : index
    %311 = vector.load %arg12[%c0_317, %c1_318, %c0_319, %c0_320] : memref<4x4x8x4xf32, #tpu.memory_space<vmem>>, vector<1x2x8x4xf32>
    %312 = vector.shape_cast %311 : vector<1x2x8x4xf32> to vector<2x8x4xf32>
    %313 = vector.shape_cast %312 : vector<2x8x4xf32> to vector<16x4xf32>
    %314 = arith.addf %310, %313 : vector<16x4xf32>
    %cst_321 = arith.constant 0.000000e+00 : f32
    %315 = vector.broadcast %cst_321 : f32 to vector<16x4xf32>
    %316 = arith.maximumf %314, %315 : vector<16x4xf32>
    %317 = vector.shape_cast %316 : vector<16x4xf32> to vector<2x8x4xf32>
    %c0_322 = arith.constant 0 : index
    %c0_323 = arith.constant 0 : index
    %c0_324 = arith.constant 0 : index
    %c0_325 = arith.constant 0 : index
    %c0_326 = arith.constant 0 : index
    %318 = vector.load %arg10[%c0_322, %c0_323, %c0_324, %c0_325, %c0_326] : memref<1x4x2x8x4xf32, #tpu.memory_space<vmem>>, vector<1x1x2x8x4xf32>
    %319 = vector.shape_cast %318 : vector<1x1x2x8x4xf32> to vector<2x8x4xf32>
    %320 = vector.shape_cast %317 : vector<2x8x4xf32> to vector<1x1x2x8x4xf32>
    tpu.vector_store %arg10[%c0_322, %c0_323, %c0_324, %c0_325, %c0_326], %320 {strides = array<i32>} : memref<1x4x2x8x4xf32, #tpu.memory_space<vmem>>, vector<1x1x2x8x4xf32>,
    %c2_327 = arith.constant 2 : index
    %c0_328 = arith.constant 0 : index
    %c1_329 = arith.constant 1 : index
    %c0_330 = arith.constant 0 : index
    %321 = vector.load %arg11[%c2_327, %c0_328, %c1_329, %c0_330] : memref<4x4x10x4xf32, #tpu.memory_space<vmem>>, vector<1x2x8x4xf32>
    %322 = vector.shape_cast %321 : vector<1x2x8x4xf32> to vector<2x8x4xf32>
    %323 = vector.shape_cast %322 : vector<2x8x4xf32> to vector<16x4xf32>
    %c0_331 = arith.constant 0 : index
    %c0_332 = arith.constant 0 : index
    %c0_333 = arith.constant 0 : index
    %324 = vector.load %arg6[%c0_331, %c0_332, %c0_333] : memref<9x4x4xf32, #tpu.memory_space<vmem>>, vector<1x4x4xf32>
    %325 = vector.shape_cast %324 : vector<1x4x4xf32> to vector<4x4xf32>
    %cst_334 = arith.constant dense<0.000000e+00> : vector<16x4xf32>
    %326 = tpu.matmul %323, %325, %cst_334 {dimension_numbers = #tpu.dot_dimension_numbers<[1], [0], [0], [1], [0, 0, 1, 1], [], []>} : vector<16x4xf32>, vector<4x4xf32>, vector<16x4xf32> -> vector<16x4xf32>
    %c3_335 = arith.constant 3 : index
    %c0_336 = arith.constant 0 : index
    %c1_337 = arith.constant 1 : index
    %c0_338 = arith.constant 0 : index
    %327 = vector.load %arg11[%c3_335, %c0_336, %c1_337, %c0_338] : memref<4x4x10x4xf32, #tpu.memory_space<vmem>>, vector<1x2x8x4xf32>
    %328 = vector.shape_cast %327 : vector<1x2x8x4xf32> to vector<2x8x4xf32>
    %329 = vector.shape_cast %328 : vector<2x8x4xf32> to vector<16x4xf32>
    %c1_339 = arith.constant 1 : index
    %c0_340 = arith.constant 0 : index
    %c0_341 = arith.constant 0 : index
    %330 = vector.load %arg6[%c1_339, %c0_340, %c0_341] : memref<9x4x4xf32, #tpu.memory_space<vmem>>, vector<1x4x4xf32>
    %331 = vector.shape_cast %330 : vector<1x4x4xf32> to vector<4x4xf32>
    %cst_342 = arith.constant dense<0.000000e+00> : vector<16x4xf32>
    %332 = tpu.matmul %329, %331, %cst_342 {dimension_numbers = #tpu.dot_dimension_numbers<[1], [0], [0], [1], [0, 0, 1, 1], [], []>} : vector<16x4xf32>, vector<4x4xf32>, vector<16x4xf32> -> vector<16x4xf32>
    %333 = arith.addf %326, %332 : vector<16x4xf32>
    %c2_343 = arith.constant 2 : index
    %c0_344 = arith.constant 0 : index
    %c2_345 = arith.constant 2 : index
    %c0_346 = arith.constant 0 : index
    %334 = vector.load %arg11[%c2_343, %c0_344, %c2_345, %c0_346] : memref<4x4x10x4xf32, #tpu.memory_space<vmem>>, vector<1x2x8x4xf32>
    %335 = vector.shape_cast %334 : vector<1x2x8x4xf32> to vector<2x8x4xf32>
    %336 = vector.shape_cast %335 : vector<2x8x4xf32> to vector<16x4xf32>
    %c2_347 = arith.constant 2 : index
    %c0_348 = arith.constant 0 : index
    %c0_349 = arith.constant 0 : index
    %337 = vector.load %arg6[%c2_347, %c0_348, %c0_349] : memref<9x4x4xf32, #tpu.memory_space<vmem>>, vector<1x4x4xf32>
    %338 = vector.shape_cast %337 : vector<1x4x4xf32> to vector<4x4xf32>
    %cst_350 = arith.constant dense<0.000000e+00> : vector<16x4xf32>
    %339 = tpu.matmul %336, %338, %cst_350 {dimension_numbers = #tpu.dot_dimension_numbers<[1], [0], [0], [1], [0, 0, 1, 1], [], []>} : vector<16x4xf32>, vector<4x4xf32>, vector<16x4xf32> -> vector<16x4xf32>
    %340 = arith.addf %333, %339 : vector<16x4xf32>
    %c0_351 = arith.constant 0 : index
    %c1_352 = arith.constant 1 : index
    %c1_353 = arith.constant 1 : index
    %c0_354 = arith.constant 0 : index
    %341 = vector.load %arg11[%c0_351, %c1_352, %c1_353, %c0_354] : memref<4x4x10x4xf32, #tpu.memory_space<vmem>>, vector<1x2x8x4xf32>
    %342 = vector.shape_cast %341 : vector<1x2x8x4xf32> to vector<2x8x4xf32>
    %343 = vector.shape_cast %342 : vector<2x8x4xf32> to vector<16x4xf32>
    %c3_355 = arith.constant 3 : index
    %c0_356 = arith.constant 0 : index
    %c0_357 = arith.constant 0 : index
    %344 = vector.load %arg6[%c3_355, %c0_356, %c0_357] : memref<9x4x4xf32, #tpu.memory_space<vmem>>, vector<1x4x4xf32>
    %345 = vector.shape_cast %344 : vector<1x4x4xf32> to vector<4x4xf32>
    %cst_358 = arith.constant dense<0.000000e+00> : vector<16x4xf32>
    %346 = tpu.matmul %343, %345, %cst_358 {dimension_numbers = #tpu.dot_dimension_numbers<[1], [0], [0], [1], [0, 0, 1, 1], [], []>} : vector<16x4xf32>, vector<4x4xf32>, vector<16x4xf32> -> vector<16x4xf32>
    %347 = arith.addf %340, %346 : vector<16x4xf32>
    %c1_359 = arith.constant 1 : index
    %c1_360 = arith.constant 1 : index
    %c1_361 = arith.constant 1 : index
    %c0_362 = arith.constant 0 : index
    %348 = vector.load %arg11[%c1_359, %c1_360, %c1_361, %c0_362] : memref<4x4x10x4xf32, #tpu.memory_space<vmem>>, vector<1x2x8x4xf32>
    %349 = vector.shape_cast %348 : vector<1x2x8x4xf32> to vector<2x8x4xf32>
    %350 = vector.shape_cast %349 : vector<2x8x4xf32> to vector<16x4xf32>
    %c4_363 = arith.constant 4 : index
    %c0_364 = arith.constant 0 : index
    %c0_365 = arith.constant 0 : index
    %351 = vector.load %arg6[%c4_363, %c0_364, %c0_365] : memref<9x4x4xf32, #tpu.memory_space<vmem>>, vector<1x4x4xf32>
    %352 = vector.shape_cast %351 : vector<1x4x4xf32> to vector<4x4xf32>
    %cst_366 = arith.constant dense<0.000000e+00> : vector<16x4xf32>
    %353 = tpu.matmul %350, %352, %cst_366 {dimension_numbers = #tpu.dot_dimension_numbers<[1], [0], [0], [1], [0, 0, 1, 1], [], []>} : vector<16x4xf32>, vector<4x4xf32>, vector<16x4xf32> -> vector<16x4xf32>
    %354 = arith.addf %347, %353 : vector<16x4xf32>
    %c0_367 = arith.constant 0 : index
    %c1_368 = arith.constant 1 : index
    %c2_369 = arith.constant 2 : index
    %c0_370 = arith.constant 0 : index
    %355 = vector.load %arg11[%c0_367, %c1_368, %c2_369, %c0_370] : memref<4x4x10x4xf32, #tpu.memory_space<vmem>>, vector<1x2x8x4xf32>
    %356 = vector.shape_cast %355 : vector<1x2x8x4xf32> to vector<2x8x4xf32>
    %357 = vector.shape_cast %356 : vector<2x8x4xf32> to vector<16x4xf32>
    %c5_371 = arith.constant 5 : index
    %c0_372 = arith.constant 0 : index
    %c0_373 = arith.constant 0 : index
    %358 = vector.load %arg6[%c5_371, %c0_372, %c0_373] : memref<9x4x4xf32, #tpu.memory_space<vmem>>, vector<1x4x4xf32>
    %359 = vector.shape_cast %358 : vector<1x4x4xf32> to vector<4x4xf32>
    %cst_374 = arith.constant dense<0.000000e+00> : vector<16x4xf32>
    %360 = tpu.matmul %357, %359, %cst_374 {dimension_numbers = #tpu.dot_dimension_numbers<[1], [0], [0], [1], [0, 0, 1, 1], [], []>} : vector<16x4xf32>, vector<4x4xf32>, vector<16x4xf32> -> vector<16x4xf32>
    %361 = arith.addf %354, %360 : vector<16x4xf32>
    %c2_375 = arith.constant 2 : index
    %c1_376 = arith.constant 1 : index
    %c1_377 = arith.constant 1 : index
    %c0_378 = arith.constant 0 : index
    %362 = vector.load %arg11[%c2_375, %c1_376, %c1_377, %c0_378] : memref<4x4x10x4xf32, #tpu.memory_space<vmem>>, vector<1x2x8x4xf32>
    %363 = vector.shape_cast %362 : vector<1x2x8x4xf32> to vector<2x8x4xf32>
    %364 = vector.shape_cast %363 : vector<2x8x4xf32> to vector<16x4xf32>
    %c6_379 = arith.constant 6 : index
    %c0_380 = arith.constant 0 : index
    %c0_381 = arith.constant 0 : index
    %365 = vector.load %arg6[%c6_379, %c0_380, %c0_381] : memref<9x4x4xf32, #tpu.memory_space<vmem>>, vector<1x4x4xf32>
    %366 = vector.shape_cast %365 : vector<1x4x4xf32> to vector<4x4xf32>
    %cst_382 = arith.constant dense<0.000000e+00> : vector<16x4xf32>
    %367 = tpu.matmul %364, %366, %cst_382 {dimension_numbers = #tpu.dot_dimension_numbers<[1], [0], [0], [1], [0, 0, 1, 1], [], []>} : vector<16x4xf32>, vector<4x4xf32>, vector<16x4xf32> -> vector<16x4xf32>
    %368 = arith.addf %361, %367 : vector<16x4xf32>
    %c3_383 = arith.constant 3 : index
    %c1_384 = arith.constant 1 : index
    %c1_385 = arith.constant 1 : index
    %c0_386 = arith.constant 0 : index
    %369 = vector.load %arg11[%c3_383, %c1_384, %c1_385, %c0_386] : memref<4x4x10x4xf32, #tpu.memory_space<vmem>>, vector<1x2x8x4xf32>
    %370 = vector.shape_cast %369 : vector<1x2x8x4xf32> to vector<2x8x4xf32>
    %371 = vector.shape_cast %370 : vector<2x8x4xf32> to vector<16x4xf32>
    %c7_387 = arith.constant 7 : index
    %c0_388 = arith.constant 0 : index
    %c0_389 = arith.constant 0 : index
    %372 = vector.load %arg6[%c7_387, %c0_388, %c0_389] : memref<9x4x4xf32, #tpu.memory_space<vmem>>, vector<1x4x4xf32>
    %373 = vector.shape_cast %372 : vector<1x4x4xf32> to vector<4x4xf32>
    %cst_390 = arith.constant dense<0.000000e+00> : vector<16x4xf32>
    %374 = tpu.matmul %371, %373, %cst_390 {dimension_numbers = #tpu.dot_dimension_numbers<[1], [0], [0], [1], [0, 0, 1, 1], [], []>} : vector<16x4xf32>, vector<4x4xf32>, vector<16x4xf32> -> vector<16x4xf32>
    %375 = arith.addf %368, %374 : vector<16x4xf32>
    %c2_391 = arith.constant 2 : index
    %c1_392 = arith.constant 1 : index
    %c2_393 = arith.constant 2 : index
    %c0_394 = arith.constant 0 : index
    %376 = vector.load %arg11[%c2_391, %c1_392, %c2_393, %c0_394] : memref<4x4x10x4xf32, #tpu.memory_space<vmem>>, vector<1x2x8x4xf32>
    %377 = vector.shape_cast %376 : vector<1x2x8x4xf32> to vector<2x8x4xf32>
    %378 = vector.shape_cast %377 : vector<2x8x4xf32> to vector<16x4xf32>
    %c8_395 = arith.constant 8 : index
    %c0_396 = arith.constant 0 : index
    %c0_397 = arith.constant 0 : index
    %379 = vector.load %arg6[%c8_395, %c0_396, %c0_397] : memref<9x4x4xf32, #tpu.memory_space<vmem>>, vector<1x4x4xf32>
    %380 = vector.shape_cast %379 : vector<1x4x4xf32> to vector<4x4xf32>
    %cst_398 = arith.constant dense<0.000000e+00> : vector<16x4xf32>
    %381 = tpu.matmul %378, %380, %cst_398 {dimension_numbers = #tpu.dot_dimension_numbers<[1], [0], [0], [1], [0, 0, 1, 1], [], []>} : vector<16x4xf32>, vector<4x4xf32>, vector<16x4xf32> -> vector<16x4xf32>
    %382 = arith.addf %375, %381 : vector<16x4xf32>
    %383 = vector.broadcast %2 : vector<1x4xf32> to vector<16x4xf32>
    %384 = arith.addf %382, %383 : vector<16x4xf32>
    %cst_399 = arith.constant 0.000000e+00 : f32
    %385 = vector.broadcast %cst_399 : f32 to vector<16x4xf32>
    %386 = arith.maximumf %384, %385 : vector<16x4xf32>
    %cst_400 = arith.constant dense<0.000000e+00> : vector<16x4xf32>
    %387 = tpu.matmul %386, %4, %cst_400 {dimension_numbers = #tpu.dot_dimension_numbers<[1], [0], [0], [1], [0, 0, 1, 1], [], []>} : vector<16x4xf32>, vector<4x4xf32>, vector<16x4xf32> -> vector<16x4xf32>
    %388 = vector.broadcast %3 : vector<1x4xf32> to vector<16x4xf32>
    %389 = arith.addf %387, %388 : vector<16x4xf32>
    %c1_401 = arith.constant 1 : index
    %c1_402 = arith.constant 1 : index
    %c0_403 = arith.constant 0 : index
    %c0_404 = arith.constant 0 : index
    %390 = vector.load %arg12[%c1_401, %c1_402, %c0_403, %c0_404] : memref<4x4x8x4xf32, #tpu.memory_space<vmem>>, vector<1x2x8x4xf32>
    %391 = vector.shape_cast %390 : vector<1x2x8x4xf32> to vector<2x8x4xf32>
    %392 = vector.shape_cast %391 : vector<2x8x4xf32> to vector<16x4xf32>
    %393 = arith.addf %389, %392 : vector<16x4xf32>
    %cst_405 = arith.constant 0.000000e+00 : f32
    %394 = vector.broadcast %cst_405 : f32 to vector<16x4xf32>
    %395 = arith.maximumf %393, %394 : vector<16x4xf32>
    %396 = vector.shape_cast %395 : vector<16x4xf32> to vector<2x8x4xf32>
    %c0_406 = arith.constant 0 : index
    %c1_407 = arith.constant 1 : index
    %c0_408 = arith.constant 0 : index
    %c0_409 = arith.constant 0 : index
    %c0_410 = arith.constant 0 : index
    %397 = vector.load %arg10[%c0_406, %c1_407, %c0_408, %c0_409, %c0_410] : memref<1x4x2x8x4xf32, #tpu.memory_space<vmem>>, vector<1x1x2x8x4xf32>
    %398 = vector.shape_cast %397 : vector<1x1x2x8x4xf32> to vector<2x8x4xf32>
    %399 = vector.shape_cast %396 : vector<2x8x4xf32> to vector<1x1x2x8x4xf32>
    tpu.vector_store %arg10[%c0_406, %c1_407, %c0_408, %c0_409, %c0_410], %399 {strides = array<i32>} : memref<1x4x2x8x4xf32, #tpu.memory_space<vmem>>, vector<1x1x2x8x4xf32>,
    %c1_411 = arith.constant 1 : index
    %c1_412 = arith.constant 1 : index
    %c0_413 = arith.constant 0 : index
    %c0_414 = arith.constant 0 : index
    %400 = vector.load %arg11[%c1_411, %c1_412, %c0_413, %c0_414] : memref<4x4x10x4xf32, #tpu.memory_space<vmem>>, vector<1x2x8x4xf32>
    %401 = vector.shape_cast %400 : vector<1x2x8x4xf32> to vector<2x8x4xf32>
    %402 = vector.shape_cast %401 : vector<2x8x4xf32> to vector<16x4xf32>
    %c0_415 = arith.constant 0 : index
    %c0_416 = arith.constant 0 : index
    %c0_417 = arith.constant 0 : index
    %403 = vector.load %arg6[%c0_415, %c0_416, %c0_417] : memref<9x4x4xf32, #tpu.memory_space<vmem>>, vector<1x4x4xf32>
    %404 = vector.shape_cast %403 : vector<1x4x4xf32> to vector<4x4xf32>
    %cst_418 = arith.constant dense<0.000000e+00> : vector<16x4xf32>
    %405 = tpu.matmul %402, %404, %cst_418 {dimension_numbers = #tpu.dot_dimension_numbers<[1], [0], [0], [1], [0, 0, 1, 1], [], []>} : vector<16x4xf32>, vector<4x4xf32>, vector<16x4xf32> -> vector<16x4xf32>
    %c0_419 = arith.constant 0 : index
    %c1_420 = arith.constant 1 : index
    %c1_421 = arith.constant 1 : index
    %c0_422 = arith.constant 0 : index
    %406 = vector.load %arg11[%c0_419, %c1_420, %c1_421, %c0_422] : memref<4x4x10x4xf32, #tpu.memory_space<vmem>>, vector<1x2x8x4xf32>
    %407 = vector.shape_cast %406 : vector<1x2x8x4xf32> to vector<2x8x4xf32>
    %408 = vector.shape_cast %407 : vector<2x8x4xf32> to vector<16x4xf32>
    %c1_423 = arith.constant 1 : index
    %c0_424 = arith.constant 0 : index
    %c0_425 = arith.constant 0 : index
    %409 = vector.load %arg6[%c1_423, %c0_424, %c0_425] : memref<9x4x4xf32, #tpu.memory_space<vmem>>, vector<1x4x4xf32>
    %410 = vector.shape_cast %409 : vector<1x4x4xf32> to vector<4x4xf32>
    %cst_426 = arith.constant dense<0.000000e+00> : vector<16x4xf32>
    %411 = tpu.matmul %408, %410, %cst_426 {dimension_numbers = #tpu.dot_dimension_numbers<[1], [0], [0], [1], [0, 0, 1, 1], [], []>} : vector<16x4xf32>, vector<4x4xf32>, vector<16x4xf32> -> vector<16x4xf32>
    %412 = arith.addf %405, %411 : vector<16x4xf32>
    %c1_427 = arith.constant 1 : index
    %c1_428 = arith.constant 1 : index
    %c1_429 = arith.constant 1 : index
    %c0_430 = arith.constant 0 : index
    %413 = vector.load %arg11[%c1_427, %c1_428, %c1_429, %c0_430] : memref<4x4x10x4xf32, #tpu.memory_space<vmem>>, vector<1x2x8x4xf32>
    %414 = vector.shape_cast %413 : vector<1x2x8x4xf32> to vector<2x8x4xf32>
    %415 = vector.shape_cast %414 : vector<2x8x4xf32> to vector<16x4xf32>
    %c2_431 = arith.constant 2 : index
    %c0_432 = arith.constant 0 : index
    %c0_433 = arith.constant 0 : index
    %416 = vector.load %arg6[%c2_431, %c0_432, %c0_433] : memref<9x4x4xf32, #tpu.memory_space<vmem>>, vector<1x4x4xf32>
    %417 = vector.shape_cast %416 : vector<1x4x4xf32> to vector<4x4xf32>
    %cst_434 = arith.constant dense<0.000000e+00> : vector<16x4xf32>
    %418 = tpu.matmul %415, %417, %cst_434 {dimension_numbers = #tpu.dot_dimension_numbers<[1], [0], [0], [1], [0, 0, 1, 1], [], []>} : vector<16x4xf32>, vector<4x4xf32>, vector<16x4xf32> -> vector<16x4xf32>
    %419 = arith.addf %412, %418 : vector<16x4xf32>
    %c3_435 = arith.constant 3 : index
    %c1_436 = arith.constant 1 : index
    %c0_437 = arith.constant 0 : index
    %c0_438 = arith.constant 0 : index
    %420 = vector.load %arg11[%c3_435, %c1_436, %c0_437, %c0_438] : memref<4x4x10x4xf32, #tpu.memory_space<vmem>>, vector<1x2x8x4xf32>
    %421 = vector.shape_cast %420 : vector<1x2x8x4xf32> to vector<2x8x4xf32>
    %422 = vector.shape_cast %421 : vector<2x8x4xf32> to vector<16x4xf32>
    %c3_439 = arith.constant 3 : index
    %c0_440 = arith.constant 0 : index
    %c0_441 = arith.constant 0 : index
    %423 = vector.load %arg6[%c3_439, %c0_440, %c0_441] : memref<9x4x4xf32, #tpu.memory_space<vmem>>, vector<1x4x4xf32>
    %424 = vector.shape_cast %423 : vector<1x4x4xf32> to vector<4x4xf32>
    %cst_442 = arith.constant dense<0.000000e+00> : vector<16x4xf32>
    %425 = tpu.matmul %422, %424, %cst_442 {dimension_numbers = #tpu.dot_dimension_numbers<[1], [0], [0], [1], [0, 0, 1, 1], [], []>} : vector<16x4xf32>, vector<4x4xf32>, vector<16x4xf32> -> vector<16x4xf32>
    %426 = arith.addf %419, %425 : vector<16x4xf32>
    %c2_443 = arith.constant 2 : index
    %c1_444 = arith.constant 1 : index
    %c1_445 = arith.constant 1 : index
    %c0_446 = arith.constant 0 : index
    %427 = vector.load %arg11[%c2_443, %c1_444, %c1_445, %c0_446] : memref<4x4x10x4xf32, #tpu.memory_space<vmem>>, vector<1x2x8x4xf32>
    %428 = vector.shape_cast %427 : vector<1x2x8x4xf32> to vector<2x8x4xf32>
    %429 = vector.shape_cast %428 : vector<2x8x4xf32> to vector<16x4xf32>
    %c4_447 = arith.constant 4 : index
    %c0_448 = arith.constant 0 : index
    %c0_449 = arith.constant 0 : index
    %430 = vector.load %arg6[%c4_447, %c0_448, %c0_449] : memref<9x4x4xf32, #tpu.memory_space<vmem>>, vector<1x4x4xf32>
    %431 = vector.shape_cast %430 : vector<1x4x4xf32> to vector<4x4xf32>
    %cst_450 = arith.constant dense<0.000000e+00> : vector<16x4xf32>
    %432 = tpu.matmul %429, %431, %cst_450 {dimension_numbers = #tpu.dot_dimension_numbers<[1], [0], [0], [1], [0, 0, 1, 1], [], []>} : vector<16x4xf32>, vector<4x4xf32>, vector<16x4xf32> -> vector<16x4xf32>
    %433 = arith.addf %426, %432 : vector<16x4xf32>
    %c3_451 = arith.constant 3 : index
    %c1_452 = arith.constant 1 : index
    %c1_453 = arith.constant 1 : index
    %c0_454 = arith.constant 0 : index
    %434 = vector.load %arg11[%c3_451, %c1_452, %c1_453, %c0_454] : memref<4x4x10x4xf32, #tpu.memory_space<vmem>>, vector<1x2x8x4xf32>
    %435 = vector.shape_cast %434 : vector<1x2x8x4xf32> to vector<2x8x4xf32>
    %436 = vector.shape_cast %435 : vector<2x8x4xf32> to vector<16x4xf32>
    %c5_455 = arith.constant 5 : index
    %c0_456 = arith.constant 0 : index
    %c0_457 = arith.constant 0 : index
    %437 = vector.load %arg6[%c5_455, %c0_456, %c0_457] : memref<9x4x4xf32, #tpu.memory_space<vmem>>, vector<1x4x4xf32>
    %438 = vector.shape_cast %437 : vector<1x4x4xf32> to vector<4x4xf32>
    %cst_458 = arith.constant dense<0.000000e+00> : vector<16x4xf32>
    %439 = tpu.matmul %436, %438, %cst_458 {dimension_numbers = #tpu.dot_dimension_numbers<[1], [0], [0], [1], [0, 0, 1, 1], [], []>} : vector<16x4xf32>, vector<4x4xf32>, vector<16x4xf32> -> vector<16x4xf32>
    %440 = arith.addf %433, %439 : vector<16x4xf32>
    %c1_459 = arith.constant 1 : index
    %c2_460 = arith.constant 2 : index
    %c0_461 = arith.constant 0 : index
    %c0_462 = arith.constant 0 : index
    %441 = vector.load %arg11[%c1_459, %c2_460, %c0_461, %c0_462] : memref<4x4x10x4xf32, #tpu.memory_space<vmem>>, vector<1x2x8x4xf32>
    %442 = vector.shape_cast %441 : vector<1x2x8x4xf32> to vector<2x8x4xf32>
    %443 = vector.shape_cast %442 : vector<2x8x4xf32> to vector<16x4xf32>
    %c6_463 = arith.constant 6 : index
    %c0_464 = arith.constant 0 : index
    %c0_465 = arith.constant 0 : index
    %444 = vector.load %arg6[%c6_463, %c0_464, %c0_465] : memref<9x4x4xf32, #tpu.memory_space<vmem>>, vector<1x4x4xf32>
    %445 = vector.shape_cast %444 : vector<1x4x4xf32> to vector<4x4xf32>
    %cst_466 = arith.constant dense<0.000000e+00> : vector<16x4xf32>
    %446 = tpu.matmul %443, %445, %cst_466 {dimension_numbers = #tpu.dot_dimension_numbers<[1], [0], [0], [1], [0, 0, 1, 1], [], []>} : vector<16x4xf32>, vector<4x4xf32>, vector<16x4xf32> -> vector<16x4xf32>
    %447 = arith.addf %440, %446 : vector<16x4xf32>
    %c0_467 = arith.constant 0 : index
    %c2_468 = arith.constant 2 : index
    %c1_469 = arith.constant 1 : index
    %c0_470 = arith.constant 0 : index
    %448 = vector.load %arg11[%c0_467, %c2_468, %c1_469, %c0_470] : memref<4x4x10x4xf32, #tpu.memory_space<vmem>>, vector<1x2x8x4xf32>
    %449 = vector.shape_cast %448 : vector<1x2x8x4xf32> to vector<2x8x4xf32>
    %450 = vector.shape_cast %449 : vector<2x8x4xf32> to vector<16x4xf32>
    %c7_471 = arith.constant 7 : index
    %c0_472 = arith.constant 0 : index
    %c0_473 = arith.constant 0 : index
    %451 = vector.load %arg6[%c7_471, %c0_472, %c0_473] : memref<9x4x4xf32, #tpu.memory_space<vmem>>, vector<1x4x4xf32>
    %452 = vector.shape_cast %451 : vector<1x4x4xf32> to vector<4x4xf32>
    %cst_474 = arith.constant dense<0.000000e+00> : vector<16x4xf32>
    %453 = tpu.matmul %450, %452, %cst_474 {dimension_numbers = #tpu.dot_dimension_numbers<[1], [0], [0], [1], [0, 0, 1, 1], [], []>} : vector<16x4xf32>, vector<4x4xf32>, vector<16x4xf32> -> vector<16x4xf32>
    %454 = arith.addf %447, %453 : vector<16x4xf32>
    %c1_475 = arith.constant 1 : index
    %c2_476 = arith.constant 2 : index
    %c1_477 = arith.constant 1 : index
    %c0_478 = arith.constant 0 : index
    %455 = vector.load %arg11[%c1_475, %c2_476, %c1_477, %c0_478] : memref<4x4x10x4xf32, #tpu.memory_space<vmem>>, vector<1x2x8x4xf32>
    %456 = vector.shape_cast %455 : vector<1x2x8x4xf32> to vector<2x8x4xf32>
    %457 = vector.shape_cast %456 : vector<2x8x4xf32> to vector<16x4xf32>
    %c8_479 = arith.constant 8 : index
    %c0_480 = arith.constant 0 : index
    %c0_481 = arith.constant 0 : index
    %458 = vector.load %arg6[%c8_479, %c0_480, %c0_481] : memref<9x4x4xf32, #tpu.memory_space<vmem>>, vector<1x4x4xf32>
    %459 = vector.shape_cast %458 : vector<1x4x4xf32> to vector<4x4xf32>
    %cst_482 = arith.constant dense<0.000000e+00> : vector<16x4xf32>
    %460 = tpu.matmul %457, %459, %cst_482 {dimension_numbers = #tpu.dot_dimension_numbers<[1], [0], [0], [1], [0, 0, 1, 1], [], []>} : vector<16x4xf32>, vector<4x4xf32>, vector<16x4xf32> -> vector<16x4xf32>
    %461 = arith.addf %454, %460 : vector<16x4xf32>
    %462 = vector.broadcast %2 : vector<1x4xf32> to vector<16x4xf32>
    %463 = arith.addf %461, %462 : vector<16x4xf32>
    %cst_483 = arith.constant 0.000000e+00 : f32
    %464 = vector.broadcast %cst_483 : f32 to vector<16x4xf32>
    %465 = arith.maximumf %463, %464 : vector<16x4xf32>
    %cst_484 = arith.constant dense<0.000000e+00> : vector<16x4xf32>
    %466 = tpu.matmul %465, %4, %cst_484 {dimension_numbers = #tpu.dot_dimension_numbers<[1], [0], [0], [1], [0, 0, 1, 1], [], []>} : vector<16x4xf32>, vector<4x4xf32>, vector<16x4xf32> -> vector<16x4xf32>
    %467 = vector.broadcast %3 : vector<1x4xf32> to vector<16x4xf32>
    %468 = arith.addf %466, %467 : vector<16x4xf32>
    %c2_485 = arith.constant 2 : index
    %c1_486 = arith.constant 1 : index
    %c0_487 = arith.constant 0 : index
    %c0_488 = arith.constant 0 : index
    %469 = vector.load %arg12[%c2_485, %c1_486, %c0_487, %c0_488] : memref<4x4x8x4xf32, #tpu.memory_space<vmem>>, vector<1x2x8x4xf32>
    %470 = vector.shape_cast %469 : vector<1x2x8x4xf32> to vector<2x8x4xf32>
    %471 = vector.shape_cast %470 : vector<2x8x4xf32> to vector<16x4xf32>
    %472 = arith.addf %468, %471 : vector<16x4xf32>
    %cst_489 = arith.constant 0.000000e+00 : f32
    %473 = vector.broadcast %cst_489 : f32 to vector<16x4xf32>
    %474 = arith.maximumf %472, %473 : vector<16x4xf32>
    %475 = vector.shape_cast %474 : vector<16x4xf32> to vector<2x8x4xf32>
    %c0_490 = arith.constant 0 : index
    %c2_491 = arith.constant 2 : index
    %c0_492 = arith.constant 0 : index
    %c0_493 = arith.constant 0 : index
    %c0_494 = arith.constant 0 : index
    %476 = vector.load %arg10[%c0_490, %c2_491, %c0_492, %c0_493, %c0_494] : memref<1x4x2x8x4xf32, #tpu.memory_space<vmem>>, vector<1x1x2x8x4xf32>
    %477 = vector.shape_cast %476 : vector<1x1x2x8x4xf32> to vector<2x8x4xf32>
    %478 = vector.shape_cast %475 : vector<2x8x4xf32> to vector<1x1x2x8x4xf32>
    tpu.vector_store %arg10[%c0_490, %c2_491, %c0_492, %c0_493, %c0_494], %478 {strides = array<i32>} : memref<1x4x2x8x4xf32, #tpu.memory_space<vmem>>, vector<1x1x2x8x4xf32>,
    %c0_495 = arith.constant 0 : index
    %c1_496 = arith.constant 1 : index
    %c1_497 = arith.constant 1 : index
    %c0_498 = arith.constant 0 : index
    %479 = vector.load %arg11[%c0_495, %c1_496, %c1_497, %c0_498] : memref<4x4x10x4xf32, #tpu.memory_space<vmem>>, vector<1x2x8x4xf32>
    %480 = vector.shape_cast %479 : vector<1x2x8x4xf32> to vector<2x8x4xf32>
    %481 = vector.shape_cast %480 : vector<2x8x4xf32> to vector<16x4xf32>
    %c0_499 = arith.constant 0 : index
    %c0_500 = arith.constant 0 : index
    %c0_501 = arith.constant 0 : index
    %482 = vector.load %arg6[%c0_499, %c0_500, %c0_501] : memref<9x4x4xf32, #tpu.memory_space<vmem>>, vector<1x4x4xf32>
    %483 = vector.shape_cast %482 : vector<1x4x4xf32> to vector<4x4xf32>
    %cst_502 = arith.constant dense<0.000000e+00> : vector<16x4xf32>
    %484 = tpu.matmul %481, %483, %cst_502 {dimension_numbers = #tpu.dot_dimension_numbers<[1], [0], [0], [1], [0, 0, 1, 1], [], []>} : vector<16x4xf32>, vector<4x4xf32>, vector<16x4xf32> -> vector<16x4xf32>
    %c1_503 = arith.constant 1 : index
    %c1_504 = arith.constant 1 : index
    %c1_505 = arith.constant 1 : index
    %c0_506 = arith.constant 0 : index
    %485 = vector.load %arg11[%c1_503, %c1_504, %c1_505, %c0_506] : memref<4x4x10x4xf32, #tpu.memory_space<vmem>>, vector<1x2x8x4xf32>
    %486 = vector.shape_cast %485 : vector<1x2x8x4xf32> to vector<2x8x4xf32>
    %487 = vector.shape_cast %486 : vector<2x8x4xf32> to vector<16x4xf32>
    %c1_507 = arith.constant 1 : index
    %c0_508 = arith.constant 0 : index
    %c0_509 = arith.constant 0 : index
    %488 = vector.load %arg6[%c1_507, %c0_508, %c0_509] : memref<9x4x4xf32, #tpu.memory_space<vmem>>, vector<1x4x4xf32>
    %489 = vector.shape_cast %488 : vector<1x4x4xf32> to vector<4x4xf32>
    %cst_510 = arith.constant dense<0.000000e+00> : vector<16x4xf32>
    %490 = tpu.matmul %487, %489, %cst_510 {dimension_numbers = #tpu.dot_dimension_numbers<[1], [0], [0], [1], [0, 0, 1, 1], [], []>} : vector<16x4xf32>, vector<4x4xf32>, vector<16x4xf32> -> vector<16x4xf32>
    %491 = arith.addf %484, %490 : vector<16x4xf32>
    %c0_511 = arith.constant 0 : index
    %c1_512 = arith.constant 1 : index
    %c2_513 = arith.constant 2 : index
    %c0_514 = arith.constant 0 : index
    %492 = vector.load %arg11[%c0_511, %c1_512, %c2_513, %c0_514] : memref<4x4x10x4xf32, #tpu.memory_space<vmem>>, vector<1x2x8x4xf32>
    %493 = vector.shape_cast %492 : vector<1x2x8x4xf32> to vector<2x8x4xf32>
    %494 = vector.shape_cast %493 : vector<2x8x4xf32> to vector<16x4xf32>
    %c2_515 = arith.constant 2 : index
    %c0_516 = arith.constant 0 : index
    %c0_517 = arith.constant 0 : index
    %495 = vector.load %arg6[%c2_515, %c0_516, %c0_517] : memref<9x4x4xf32, #tpu.memory_space<vmem>>, vector<1x4x4xf32>
    %496 = vector.shape_cast %495 : vector<1x4x4xf32> to vector<4x4xf32>
    %cst_518 = arith.constant dense<0.000000e+00> : vector<16x4xf32>
    %497 = tpu.matmul %494, %496, %cst_518 {dimension_numbers = #tpu.dot_dimension_numbers<[1], [0], [0], [1], [0, 0, 1, 1], [], []>} : vector<16x4xf32>, vector<4x4xf32>, vector<16x4xf32> -> vector<16x4xf32>
    %498 = arith.addf %491, %497 : vector<16x4xf32>
    %c2_519 = arith.constant 2 : index
    %c1_520 = arith.constant 1 : index
    %c1_521 = arith.constant 1 : index
    %c0_522 = arith.constant 0 : index
    %499 = vector.load %arg11[%c2_519, %c1_520, %c1_521, %c0_522] : memref<4x4x10x4xf32, #tpu.memory_space<vmem>>, vector<1x2x8x4xf32>
    %500 = vector.shape_cast %499 : vector<1x2x8x4xf32> to vector<2x8x4xf32>
    %501 = vector.shape_cast %500 : vector<2x8x4xf32> to vector<16x4xf32>
    %c3_523 = arith.constant 3 : index
    %c0_524 = arith.constant 0 : index
    %c0_525 = arith.constant 0 : index
    %502 = vector.load %arg6[%c3_523, %c0_524, %c0_525] : memref<9x4x4xf32, #tpu.memory_space<vmem>>, vector<1x4x4xf32>
    %503 = vector.shape_cast %502 : vector<1x4x4xf32> to vector<4x4xf32>
    %cst_526 = arith.constant dense<0.000000e+00> : vector<16x4xf32>
    %504 = tpu.matmul %501, %503, %cst_526 {dimension_numbers = #tpu.dot_dimension_numbers<[1], [0], [0], [1], [0, 0, 1, 1], [], []>} : vector<16x4xf32>, vector<4x4xf32>, vector<16x4xf32> -> vector<16x4xf32>
    %505 = arith.addf %498, %504 : vector<16x4xf32>
    %c3_527 = arith.constant 3 : index
    %c1_528 = arith.constant 1 : index
    %c1_529 = arith.constant 1 : index
    %c0_530 = arith.constant 0 : index
    %506 = vector.load %arg11[%c3_527, %c1_528, %c1_529, %c0_530] : memref<4x4x10x4xf32, #tpu.memory_space<vmem>>, vector<1x2x8x4xf32>
    %507 = vector.shape_cast %506 : vector<1x2x8x4xf32> to vector<2x8x4xf32>
    %508 = vector.shape_cast %507 : vector<2x8x4xf32> to vector<16x4xf32>
    %c4_531 = arith.constant 4 : index
    %c0_532 = arith.constant 0 : index
    %c0_533 = arith.constant 0 : index
    %509 = vector.load %arg6[%c4_531, %c0_532, %c0_533] : memref<9x4x4xf32, #tpu.memory_space<vmem>>, vector<1x4x4xf32>
    %510 = vector.shape_cast %509 : vector<1x4x4xf32> to vector<4x4xf32>
    %cst_534 = arith.constant dense<0.000000e+00> : vector<16x4xf32>
    %511 = tpu.matmul %508, %510, %cst_534 {dimension_numbers = #tpu.dot_dimension_numbers<[1], [0], [0], [1], [0, 0, 1, 1], [], []>} : vector<16x4xf32>, vector<4x4xf32>, vector<16x4xf32> -> vector<16x4xf32>
    %512 = arith.addf %505, %511 : vector<16x4xf32>
    %c2_535 = arith.constant 2 : index
    %c1_536 = arith.constant 1 : index
    %c2_537 = arith.constant 2 : index
    %c0_538 = arith.constant 0 : index
    %513 = vector.load %arg11[%c2_535, %c1_536, %c2_537, %c0_538] : memref<4x4x10x4xf32, #tpu.memory_space<vmem>>, vector<1x2x8x4xf32>
    %514 = vector.shape_cast %513 : vector<1x2x8x4xf32> to vector<2x8x4xf32>
    %515 = vector.shape_cast %514 : vector<2x8x4xf32> to vector<16x4xf32>
    %c5_539 = arith.constant 5 : index
    %c0_540 = arith.constant 0 : index
    %c0_541 = arith.constant 0 : index
    %516 = vector.load %arg6[%c5_539, %c0_540, %c0_541] : memref<9x4x4xf32, #tpu.memory_space<vmem>>, vector<1x4x4xf32>
    %517 = vector.shape_cast %516 : vector<1x4x4xf32> to vector<4x4xf32>
    %cst_542 = arith.constant dense<0.000000e+00> : vector<16x4xf32>
    %518 = tpu.matmul %515, %517, %cst_542 {dimension_numbers = #tpu.dot_dimension_numbers<[1], [0], [0], [1], [0, 0, 1, 1], [], []>} : vector<16x4xf32>, vector<4x4xf32>, vector<16x4xf32> -> vector<16x4xf32>
    %519 = arith.addf %512, %518 : vector<16x4xf32>
    %c0_543 = arith.constant 0 : index
    %c2_544 = arith.constant 2 : index
    %c1_545 = arith.constant 1 : index
    %c0_546 = arith.constant 0 : index
    %520 = vector.load %arg11[%c0_543, %c2_544, %c1_545, %c0_546] : memref<4x4x10x4xf32, #tpu.memory_space<vmem>>, vector<1x2x8x4xf32>
    %521 = vector.shape_cast %520 : vector<1x2x8x4xf32> to vector<2x8x4xf32>
    %522 = vector.shape_cast %521 : vector<2x8x4xf32> to vector<16x4xf32>
    %c6_547 = arith.constant 6 : index
    %c0_548 = arith.constant 0 : index
    %c0_549 = arith.constant 0 : index
    %523 = vector.load %arg6[%c6_547, %c0_548, %c0_549] : memref<9x4x4xf32, #tpu.memory_space<vmem>>, vector<1x4x4xf32>
    %524 = vector.shape_cast %523 : vector<1x4x4xf32> to vector<4x4xf32>
    %cst_550 = arith.constant dense<0.000000e+00> : vector<16x4xf32>
    %525 = tpu.matmul %522, %524, %cst_550 {dimension_numbers = #tpu.dot_dimension_numbers<[1], [0], [0], [1], [0, 0, 1, 1], [], []>} : vector<16x4xf32>, vector<4x4xf32>, vector<16x4xf32> -> vector<16x4xf32>
    %526 = arith.addf %519, %525 : vector<16x4xf32>
    %c1_551 = arith.constant 1 : index
    %c2_552 = arith.constant 2 : index
    %c1_553 = arith.constant 1 : index
    %c0_554 = arith.constant 0 : index
    %527 = vector.load %arg11[%c1_551, %c2_552, %c1_553, %c0_554] : memref<4x4x10x4xf32, #tpu.memory_space<vmem>>, vector<1x2x8x4xf32>
    %528 = vector.shape_cast %527 : vector<1x2x8x4xf32> to vector<2x8x4xf32>
    %529 = vector.shape_cast %528 : vector<2x8x4xf32> to vector<16x4xf32>
    %c7_555 = arith.constant 7 : index
    %c0_556 = arith.constant 0 : index
    %c0_557 = arith.constant 0 : index
    %530 = vector.load %arg6[%c7_555, %c0_556, %c0_557] : memref<9x4x4xf32, #tpu.memory_space<vmem>>, vector<1x4x4xf32>
    %531 = vector.shape_cast %530 : vector<1x4x4xf32> to vector<4x4xf32>
    %cst_558 = arith.constant dense<0.000000e+00> : vector<16x4xf32>
    %532 = tpu.matmul %529, %531, %cst_558 {dimension_numbers = #tpu.dot_dimension_numbers<[1], [0], [0], [1], [0, 0, 1, 1], [], []>} : vector<16x4xf32>, vector<4x4xf32>, vector<16x4xf32> -> vector<16x4xf32>
    %533 = arith.addf %526, %532 : vector<16x4xf32>
    %c0_559 = arith.constant 0 : index
    %c2_560 = arith.constant 2 : index
    %c2_561 = arith.constant 2 : index
    %c0_562 = arith.constant 0 : index
    %534 = vector.load %arg11[%c0_559, %c2_560, %c2_561, %c0_562] : memref<4x4x10x4xf32, #tpu.memory_space<vmem>>, vector<1x2x8x4xf32>
    %535 = vector.shape_cast %534 : vector<1x2x8x4xf32> to vector<2x8x4xf32>
    %536 = vector.shape_cast %535 : vector<2x8x4xf32> to vector<16x4xf32>
    %c8_563 = arith.constant 8 : index
    %c0_564 = arith.constant 0 : index
    %c0_565 = arith.constant 0 : index
    %537 = vector.load %arg6[%c8_563, %c0_564, %c0_565] : memref<9x4x4xf32, #tpu.memory_space<vmem>>, vector<1x4x4xf32>
    %538 = vector.shape_cast %537 : vector<1x4x4xf32> to vector<4x4xf32>
    %cst_566 = arith.constant dense<0.000000e+00> : vector<16x4xf32>
    %539 = tpu.matmul %536, %538, %cst_566 {dimension_numbers = #tpu.dot_dimension_numbers<[1], [0], [0], [1], [0, 0, 1, 1], [], []>} : vector<16x4xf32>, vector<4x4xf32>, vector<16x4xf32> -> vector<16x4xf32>
    %540 = arith.addf %533, %539 : vector<16x4xf32>
    %541 = vector.broadcast %2 : vector<1x4xf32> to vector<16x4xf32>
    %542 = arith.addf %540, %541 : vector<16x4xf32>
    %cst_567 = arith.constant 0.000000e+00 : f32
    %543 = vector.broadcast %cst_567 : f32 to vector<16x4xf32>
    %544 = arith.maximumf %542, %543 : vector<16x4xf32>
    %cst_568 = arith.constant dense<0.000000e+00> : vector<16x4xf32>
    %545 = tpu.matmul %544, %4, %cst_568 {dimension_numbers = #tpu.dot_dimension_numbers<[1], [0], [0], [1], [0, 0, 1, 1], [], []>} : vector<16x4xf32>, vector<4x4xf32>, vector<16x4xf32> -> vector<16x4xf32>
    %546 = vector.broadcast %3 : vector<1x4xf32> to vector<16x4xf32>
    %547 = arith.addf %545, %546 : vector<16x4xf32>
    %c3_569 = arith.constant 3 : index
    %c1_570 = arith.constant 1 : index
    %c0_571 = arith.constant 0 : index
    %c0_572 = arith.constant 0 : index
    %548 = vector.load %arg12[%c3_569, %c1_570, %c0_571, %c0_572] : memref<4x4x8x4xf32, #tpu.memory_space<vmem>>, vector<1x2x8x4xf32>
    %549 = vector.shape_cast %548 : vector<1x2x8x4xf32> to vector<2x8x4xf32>
    %550 = vector.shape_cast %549 : vector<2x8x4xf32> to vector<16x4xf32>
    %551 = arith.addf %547, %550 : vector<16x4xf32>
    %cst_573 = arith.constant 0.000000e+00 : f32
    %552 = vector.broadcast %cst_573 : f32 to vector<16x4xf32>
    %553 = arith.maximumf %551, %552 : vector<16x4xf32>
    %554 = vector.shape_cast %553 : vector<16x4xf32> to vector<2x8x4xf32>
    %c0_574 = arith.constant 0 : index
    %c3_575 = arith.constant 3 : index
    %c0_576 = arith.constant 0 : index
    %c0_577 = arith.constant 0 : index
    %c0_578 = arith.constant 0 : index
    %555 = vector.load %arg10[%c0_574, %c3_575, %c0_576, %c0_577, %c0_578] : memref<1x4x2x8x4xf32, #tpu.memory_space<vmem>>, vector<1x1x2x8x4xf32>
    %556 = vector.shape_cast %555 : vector<1x1x2x8x4xf32> to vector<2x8x4xf32>
    %557 = vector.shape_cast %554 : vector<2x8x4xf32> to vector<1x1x2x8x4xf32>
    tpu.vector_store %arg10[%c0_574, %c3_575, %c0_576, %c0_577, %c0_578], %557 {strides = array<i32>} : memref<1x4x2x8x4xf32, #tpu.memory_space<vmem>>, vector<1x1x2x8x4xf32>,
    return
  }
  func.func @transform_0(%arg0: i32, %arg1: i32) -> (i32, i32, i32, i32) {
    %c0_i32 = arith.constant 0 : i32
    %c0_i32_0 = arith.constant 0 : i32
    %c0_i32_1 = arith.constant 0 : i32
    %c0_i32_2 = arith.constant 0 : i32
    return %arg0, %c0_i32, %c0_i32_0, %c0_i32_1 : i32, i32, i32, i32
  }
  func.func @transform_1(%arg0: i32, %arg1: i32) -> (i32, i32, i32, i32, i32) {
    %c0_i32 = arith.constant 0 : i32
    %c0_i32_0 = arith.constant 0 : i32
    %c0_i32_1 = arith.constant 0 : i32
    %c0_i32_2 = arith.constant 0 : i32
    %c0_i32_3 = arith.constant 0 : i32
    return %arg0, %c0_i32, %c0_i32_0, %c0_i32_1, %c0_i32_2 : i32, i32, i32, i32, i32
  }
  func.func @transform_2(%arg0: i32, %arg1: i32) -> (i32, i32, i32, i32, i32) {
    %c0_i32 = arith.constant 0 : i32
    %c0_i32_0 = arith.constant 0 : i32
    %c0_i32_1 = arith.constant 0 : i32
    %c0_i32_2 = arith.constant 0 : i32
    %c0_i32_3 = arith.constant 0 : i32
    %c0_i32_4 = arith.constant 0 : i32
    return %c0_i32, %c0_i32_0, %c0_i32_1, %c0_i32_2, %c0_i32_3 : i32, i32, i32, i32, i32
  }
  func.func @transform_3(%arg0: i32, %arg1: i32) -> (i32, i32) {
    %c0_i32 = arith.constant 0 : i32
    %c0_i32_0 = arith.constant 0 : i32
    %c0_i32_1 = arith.constant 0 : i32
    return %c0_i32, %c0_i32_0 : i32, i32
  }
  func.func @transform_4(%arg0: i32, %arg1: i32) -> (i32, i32, i32) {
    %c0_i32 = arith.constant 0 : i32
    %c0_i32_0 = arith.constant 0 : i32
    %c0_i32_1 = arith.constant 0 : i32
    %c0_i32_2 = arith.constant 0 : i32
    return %c0_i32, %c0_i32_0, %c0_i32_1 : i32, i32, i32
  }
  func.func @transform_5(%arg0: i32, %arg1: i32) -> (i32, i32) {
    %c0_i32 = arith.constant 0 : i32
    %c0_i32_0 = arith.constant 0 : i32
    %c0_i32_1 = arith.constant 0 : i32
    return %c0_i32, %c0_i32_0 : i32, i32
  }
  func.func @transform_6(%arg0: i32, %arg1: i32) -> (i32, i32) {
    %c0_i32 = arith.constant 0 : i32
    %c0_i32_0 = arith.constant 0 : i32
    %c0_i32_1 = arith.constant 0 : i32
    return %c0_i32, %c0_i32_0 : i32, i32
  }
  func.func @transform_7(%arg0: i32, %arg1: i32) -> (i32, i32) {
    %c0_i32 = arith.constant 0 : i32
    %c0_i32_0 = arith.constant 0 : i32
    %c0_i32_1 = arith.constant 0 : i32
    return %c0_i32, %c0_i32_0 : i32, i32
  }
  func.func @transform_8(%arg0: i32, %arg1: i32) -> (i32, i32, i32, i32, i32) {
    %c0_i32 = arith.constant 0 : i32
    %c0_i32_0 = arith.constant 0 : i32
    %c0_i32_1 = arith.constant 0 : i32
    %c0_i32_2 = arith.constant 0 : i32
    return %arg0, %c0_i32, %arg1, %c0_i32_0, %c0_i32_1 : i32, i32, i32, i32, i32
  }
}

</mosaic_0001>

<llo_original>
// kernel: tpu_custom_call.1
$region0: #{tpu_custom_call.1}
  #allocation0 [shape = 'u32[]', space=smem, size = 0x4, offset = 0x4, fixed_abs, tag = 'smem constant byte address 0x4 - core index']
  #allocation1 [shape = 'u32[144,128]{1,0:T(1,128)}', space=vmem, size = 0x12000, scoped, tag = 'internal scratch']
  #allocation2 [shape = 'f32[4,4,10,4]{3,2,1,0:T(8,128)}', space=vmem, size = 0x20000, scoped, tag = 'scratch operand']
  #allocation3 [shape = 'f32[4,4,8,4]{3,2,1,0:T(8,128)}', space=vmem, size = 0x10000, scoped, tag = 'scratch operand']
  %s0 = inlined_call_operand.vmem [shape: f32[2,12,10,4], index: 0, kind: input, shape index: {}]
  %s1 = inlined_call_operand.vmem [shape: f32[2,10,2,8,8], index: 1, kind: input, shape index: {}]
  %s2 = inlined_call_operand.vmem [shape: f32[2,2,5,4,8], index: 2, kind: input, shape index: {}]
  %s3 = inlined_call_operand.vmem [shape: f32[1,8], index: 3, kind: input, shape index: {}]
  %s4 = inlined_call_operand.vmem [shape: f32[9,4,4], index: 4, kind: input, shape index: {}]
  %s5 = inlined_call_operand.vmem [shape: f32[1,4], index: 5, kind: input, shape index: {}]
  %s6 = inlined_call_operand.vmem [shape: f32[4,4], index: 6, kind: input, shape index: {}]
  %s7 = inlined_call_operand.vmem [shape: f32[1,4], index: 7, kind: input, shape index: {}]
  %s8 = inlined_call_operand.vmem [shape: f32[2,4,8,8,4], index: 8, kind: output, shape index: {}]
  %s9 = sld [smem:[#allocation0]]
  $region107: #{tpu_custom_call.1} parent=0
    _
  %s11 = ssub.s32 1, %s9
  %s12 = scalar_select 0, %s11, %s9
  $region1: #{tpu_custom_call.1} parent=0
    #allocation4 [shape = 'u8[65536]{0}', space=vmem, size = 0x10000, scoped, tag = 'output window, operand 0']
    loop: start=0, step=1, limit=10
    $region2: #{tpu_custom_call.1} parent=1 // loop_pre_header
      _
    $region3: #{tpu_custom_call.1} parent=1 // loop_header
      %s14 = sphi 0, %s18
      %p15 = scmp.ge.s32.totalorder %s14, 10
      %s21 = sphi 0, %s33
      %s22 = sphi 0, %s29
      %s23 = sphi 0, %s21
      %s24 = sphi 0, %s22
      %s25 = sphi 0, %s23
      %s26 = sphi 0, %s24
      %s36 = sphi 0, %s38
      %s39 = sphi 0, %s36
      %s40 = sphi 0, %s39
      %s56 = sphi 0, %s40
      %s62 = sphi 0, %s64
      %s65 = sphi 0, %s62
      %s66 = sphi 0, %s65
      %s82 = sphi 0, %s66
      %s86 = sphi 0, %s86
      %s88 = sphi 0, %s86
      %s89 = sphi 0, %s88
      %s103 = sphi 0, %s89
      %s107 = sphi 0, %s107
      %s109 = sphi 0, %s107
      %s110 = sphi 0, %s109
      %s124 = sphi 0, %s110
      %s128 = sphi 0, %s128
      %s130 = sphi 0, %s128
      %s131 = sphi 0, %s130
      %s145 = sphi 0, %s131
      %s149 = sphi 0, %s149
      %s151 = sphi 0, %s149
      %s152 = sphi 0, %s151
      %s166 = sphi 0, %s152
      %s170 = sphi 0, %s170
      %s172 = sphi 0, %s170
      %s173 = sphi 0, %s172
      %s187 = sphi 0, %s173
      %s191 = sphi 0, %s191
      %s193 = sphi 0, %s191
      %s194 = sphi 0, %s193
      %s208 = sphi 0, %s194
      %s216 = sphi 0, %s218
      %s219 = sphi 0, %s216
      %s220 = sphi 0, %s219
      %s236 = sphi 0, %s220
    $region4: #{tpu_custom_call.1} parent=1 // loop_header_branch
      %17 = sbr.rel (%p15) target = $region8
    $region5: #{tpu_custom_call.1} parent=1 // loop_body
      %s19 = ssub.s32 %s14, 1
      %s20 = ssub.s32 %s14, 2
      %s27 = sadd.s32 1, %s22
      %p28 = scmp.ge.s32.totalorder %s27, 4
      %s29 = scalar_select %p28, 0, %s27
      %s30 = sadd.s32 1, %s21
      %s31 = scalar_select %p28, %s30, %s21
      %p32 = scmp.ge.s32.totalorder %s31, 2
      %s33 = scalar_select %p32, 0, %s31
      %s34 = ssub.s32 %s21, %s33
      %p35 = scmp.eq.s32.totalorder %s34, 0
      %s37 = sadd.s32 %s36, 1
      %s38 = scalar_select %p35, %s36, %s37
      %p41 = pneg %p35
      %p42 = scmp.eq.s32.totalorder %s14, 7
      %p43 = por %p41, %p42
      %p44 = scmp.ne.s32.totalorder %s36, %s39
      %p45 = scmp.eq.s32.totalorder %s14, 0
      %p46 = por %p44, %p45
      %p47 = scmp.ne.s32.totalorder %s36, %s39
      %p48 = scmp.eq.s32.totalorder %s19, 7
      %p49 = por %p47, %p48
      %p50 = scmp.ne.s32.totalorder %s39, %s40
      %p51 = scmp.eq.s32.totalorder %s19, 0
      %p52 = por %p50, %p51
      %p53 = scmp.ne.s32.totalorder %s39, %s40
      %p54 = scmp.eq.s32.totalorder %s20, 7
      %p55 = por %p53, %p54
      %p57 = scmp.ne.s32.totalorder %s40, %s56
      %p58 = scmp.eq.s32.totalorder %s20, 0
      %p59 = por %p57, %p58
      %s60 = ssub.s32 %s21, %s33
      %p61 = scmp.eq.s32.totalorder %s60, 0
      %s63 = sadd.s32 %s62, 1
      %s64 = scalar_select %p61, %s62, %s63
      %p67 = pneg %p61
      %p68 = scmp.eq.s32.totalorder %s14, 7
      %p69 = por %p67, %p68
      %p70 = scmp.ne.s32.totalorder %s62, %s65
      %p71 = scmp.eq.s32.totalorder %s14, 0
      %p72 = por %p70, %p71
      %p73 = scmp.ne.s32.totalorder %s62, %s65
      %p74 = scmp.eq.s32.totalorder %s19, 7
      %p75 = por %p73, %p74
      %p76 = scmp.ne.s32.totalorder %s65, %s66
      %p77 = scmp.eq.s32.totalorder %s19, 0
      %p78 = por %p76, %p77
      %p79 = scmp.ne.s32.totalorder %s65, %s66
      %p80 = scmp.eq.s32.totalorder %s20, 7
      %p81 = por %p79, %p80
      %p83 = scmp.ne.s32.totalorder %s66, %s82
      %p84 = scmp.eq.s32.totalorder %s20, 0
      %p85 = por %p83, %p84
      %s87 = sadd.s32 %s86, 1
      %p90 = scmp.eq.s32.totalorder %s14, 7
      %p91 = scmp.ne.s32.totalorder %s86, %s88
      %p92 = scmp.eq.s32.totalorder %s14, 0
      %p93 = por %p91, %p92
      %p94 = scmp.ne.s32.totalorder %s86, %s88
      %p95 = scmp.eq.s32.totalorder %s19, 7
      %p96 = por %p94, %p95
      %p97 = scmp.ne.s32.totalorder %s88, %s89
      %p98 = scmp.eq.s32.totalorder %s19, 0
      %p99 = por %p97, %p98
      %p100 = scmp.ne.s32.totalorder %s88, %s89
      %p101 = scmp.eq.s32.totalorder %s20, 7
      %p102 = por %p100, %p101
      %p104 = scmp.ne.s32.totalorder %s89, %s103
      %p105 = scmp.eq.s32.totalorder %s20, 0
      %p106 = por %p104, %p105
      %s108 = sadd.s32 %s107, 1
      %p111 = scmp.eq.s32.totalorder %s14, 7
      %p112 = scmp.ne.s32.totalorder %s107, %s109
      %p113 = scmp.eq.s32.totalorder %s14, 0
      %p114 = por %p112, %p113
      %p115 = scmp.ne.s32.totalorder %s107, %s109
      %p116 = scmp.eq.s32.totalorder %s19, 7
      %p117 = por %p115, %p116
      %p118 = scmp.ne.s32.totalorder %s109, %s110
      %p119 = scmp.eq.s32.totalorder %s19, 0
      %p120 = por %p118, %p119
      %p121 = scmp.ne.s32.totalorder %s109, %s110
      %p122 = scmp.eq.s32.totalorder %s20, 7
      %p123 = por %p121, %p122
      %p125 = scmp.ne.s32.totalorder %s110, %s124
      %p126 = scmp.eq.s32.totalorder %s20, 0
      %p127 = por %p125, %p126
      %s129 = sadd.s32 %s128, 1
      %p132 = scmp.eq.s32.totalorder %s14, 7
      %p133 = scmp.ne.s32.totalorder %s128, %s130
      %p134 = scmp.eq.s32.totalorder %s14, 0
      %p135 = por %p133, %p134
      %p136 = scmp.ne.s32.totalorder %s128, %s130
      %p137 = scmp.eq.s32.totalorder %s19, 7
      %p138 = por %p136, %p137
      %p139 = scmp.ne.s32.totalorder %s130, %s131
      %p140 = scmp.eq.s32.totalorder %s19, 0
      %p141 = por %p139, %p140
      %p142 = scmp.ne.s32.totalorder %s130, %s131
      %p143 = scmp.eq.s32.totalorder %s20, 7
      %p144 = por %p142, %p143
      %p146 = scmp.ne.s32.totalorder %s131, %s145
      %p147 = scmp.eq.s32.totalorder %s20, 0
      %p148 = por %p146, %p147
      %s150 = sadd.s32 %s149, 1
      %p153 = scmp.eq.s32.totalorder %s14, 7
      %p154 = scmp.ne.s32.totalorder %s149, %s151
      %p155 = scmp.eq.s32.totalorder %s14, 0
      %p156 = por %p154, %p155
      %p157 = scmp.ne.s32.totalorder %s149, %s151
      %p158 = scmp.eq.s32.totalorder %s19, 7
      %p159 = por %p157, %p158
      %p160 = scmp.ne.s32.totalorder %s151, %s152
      %p161 = scmp.eq.s32.totalorder %s19, 0
      %p162 = por %p160, %p161
      %p163 = scmp.ne.s32.totalorder %s151, %s152
      %p164 = scmp.eq.s32.totalorder %s20, 7
      %p165 = por %p163, %p164
      %p167 = scmp.ne.s32.totalorder %s152, %s166
      %p168 = scmp.eq.s32.totalorder %s20, 0
      %p169 = por %p167, %p168
      %s171 = sadd.s32 %s170, 1
      %p174 = scmp.eq.s32.totalorder %s14, 7
      %p175 = scmp.ne.s32.totalorder %s170, %s172
      %p176 = scmp.eq.s32.totalorder %s14, 0
      %p177 = por %p175, %p176
      %p178 = scmp.ne.s32.totalorder %s170, %s172
      %p179 = scmp.eq.s32.totalorder %s19, 7
      %p180 = por %p178, %p179
      %p181 = scmp.ne.s32.totalorder %s172, %s173
      %p182 = scmp.eq.s32.totalorder %s19, 0
      %p183 = por %p181, %p182
      %p184 = scmp.ne.s32.totalorder %s172, %s173
      %p185 = scmp.eq.s32.totalorder %s20, 7
      %p186 = por %p184, %p185
      %p188 = scmp.ne.s32.totalorder %s173, %s187
      %p189 = scmp.eq.s32.totalorder %s20, 0
      %p190 = por %p188, %p189
      %s192 = sadd.s32 %s191, 1
      %p195 = scmp.eq.s32.totalorder %s14, 7
      %p196 = scmp.ne.s32.totalorder %s191, %s193
      %p197 = scmp.eq.s32.totalorder %s14, 0
      %p198 = por %p196, %p197
      %p199 = scmp.ne.s32.totalorder %s191, %s193
      %p200 = scmp.eq.s32.totalorder %s19, 7
      %p201 = por %p199, %p200
      %p202 = scmp.ne.s32.totalorder %s193, %s194
      %p203 = scmp.eq.s32.totalorder %s19, 0
      %p204 = por %p202, %p203
      %p205 = scmp.ne.s32.totalorder %s193, %s194
      %p206 = scmp.eq.s32.totalorder %s20, 7
      %p207 = por %p205, %p206
      %p209 = scmp.ne.s32.totalorder %s194, %s208
      %p210 = scmp.eq.s32.totalorder %s20, 0
      %p211 = por %p209, %p210
      %s212 = ssub.s32 %s21, %s33
      %s213 = ssub.s32 %s22, %s29
      %s214 = sor.u32 %s212, %s213
      %p215 = scmp.eq.s32.totalorder %s214, 0
      %s217 = sadd.s32 %s216, 1
      %s218 = scalar_select %p215, %s216, %s217
      %p221 = pneg %p215
      %p222 = scmp.eq.s32.totalorder %s14, 7
      %p223 = por %p221, %p222
      %p224 = scmp.ne.s32.totalorder %s216, %s219
      %p225 = scmp.eq.s32.totalorder %s14, 0
      %p226 = por %p224, %p225
      %p227 = scmp.ne.s32.totalorder %s216, %s219
      %p228 = scmp.eq.s32.totalorder %s19, 7
      %p229 = por %p227, %p228
      %p230 = scmp.ne.s32.totalorder %s219, %s220
      %p231 = scmp.eq.s32.totalorder %s19, 0
      %p232 = por %p230, %p231
      %p233 = scmp.ne.s32.totalorder %s219, %s220
      %p234 = scmp.eq.s32.totalorder %s20, 7
      %p235 = por %p233, %p234
      %p237 = scmp.ne.s32.totalorder %s220, %s236
      %p238 = scmp.eq.s32.totalorder %s20, 0
      %p239 = por %p237, %p238
      %p240 = scmp.le.s32.totalorder 1, %s14
      %p241 = scmp.lt.s32.totalorder %s14, 9
      %p242 = pnand %p240, %p241
      %p243 = pneg %p242
      // Predicated region
      $region9: #{tpu_custom_call.1} parent=5 // pred_check
        _
      $region10: #{tpu_custom_call.1} parent=5 // pred_check_branch
        %245 = sbr.rel (%p242) target = $region12
      $region11: #{tpu_custom_call.1} parent=5 // pred_region
        %s246 = ssub.s32 %s14, 1
        // Predicated region
        $region13: #{tpu_custom_call.1} parent=11 // pred_check
          %p247 = pneg %p99
        $region14: #{tpu_custom_call.1} parent=11 // pred_check_branch
          %249 = sbr.rel (%p247) target = $region16
        $region15: #{tpu_custom_call.1} parent=11 // pred_region
          _
        $region16: #{tpu_custom_call.1} parent=11 // pred_fallthru
          _
        // Predicated region
        $region17: #{tpu_custom_call.1} parent=11 // pred_check
          %p250 = pneg %p120
        $region18: #{tpu_custom_call.1} parent=11 // pred_check_branch
          %252 = sbr.rel (%p250) target = $region20
        $region19: #{tpu_custom_call.1} parent=11 // pred_region
          _
        $region20: #{tpu_custom_call.1} parent=11 // pred_fallthru
          _
        // Predicated region
        $region21: #{tpu_custom_call.1} parent=11 // pred_check
          %p253 = pneg %p141
        $region22: #{tpu_custom_call.1} parent=11 // pred_check_branch
          %255 = sbr.rel (%p253) target = $region24
        $region23: #{tpu_custom_call.1} parent=11 // pred_region
          _
        $region24: #{tpu_custom_call.1} parent=11 // pred_fallthru
          _
        // Predicated region
        $region25: #{tpu_custom_call.1} parent=11 // pred_check
          %p256 = pneg %p162
        $region26: #{tpu_custom_call.1} parent=11 // pred_check_branch
          %258 = sbr.rel (%p256) target = $region28
        $region27: #{tpu_custom_call.1} parent=11 // pred_region
          _
        $region28: #{tpu_custom_call.1} parent=11 // pred_fallthru
          _
        // Predicated region
        $region29: #{tpu_custom_call.1} parent=11 // pred_check
          %p259 = pneg %p183
        $region30: #{tpu_custom_call.1} parent=11 // pred_check_branch
          %261 = sbr.rel (%p259) target = $region32
        $region31: #{tpu_custom_call.1} parent=11 // pred_region
          _
        $region32: #{tpu_custom_call.1} parent=11 // pred_fallthru
          _
        // Predicated region
        $region33: #{tpu_custom_call.1} parent=11 // pred_check
          %p262 = pneg %p204
        $region34: #{tpu_custom_call.1} parent=11 // pred_check_branch
          %264 = sbr.rel (%p262) target = $region36
        $region35: #{tpu_custom_call.1} parent=11 // pred_region
          _
        $region36: #{tpu_custom_call.1} parent=11 // pred_fallthru
          _
      $region12: #{tpu_custom_call.1} parent=5 // pred_fallthru
        _
      %p265 = scmp.lt.s32.totalorder %s14, 8
      // Predicated region
      $region37: #{tpu_custom_call.1} parent=5 // pred_check
        %p266 = pneg %p265
      $region38: #{tpu_custom_call.1} parent=5 // pred_check_branch
        %268 = sbr.rel (%p266) target = $region40
      $region39: #{tpu_custom_call.1} parent=5 // pred_region
        // Predicated region
        $region41: #{tpu_custom_call.1} parent=39 // pred_check
          %p269 = pneg %p46
        $region42: #{tpu_custom_call.1} parent=39 // pred_check_branch
          %271 = sbr.rel (%p269) target = $region44
        $region43: #{tpu_custom_call.1} parent=39 // pred_region
          %p272 = scmp.lt.s32.totalorder %s21, 1
          %s273 = scalar_select %p272, %s21, 1
          %s274 = smul.addr %s273, 24
          %s275 = smul.addr %s274, 8
          %s276 = scalar_lea.vmem %s0, %s275
        $region44: #{tpu_custom_call.1} parent=39 // pred_fallthru
          _
        // Predicated region
        $region45: #{tpu_custom_call.1} parent=39 // pred_check
          %p277 = pneg %p72
        $region46: #{tpu_custom_call.1} parent=39 // pred_check_branch
          %279 = sbr.rel (%p277) target = $region48
        $region47: #{tpu_custom_call.1} parent=39 // pred_region
          %p280 = scmp.lt.s32.totalorder %s21, 1
          %s281 = scalar_select %p280, %s21, 1
          %s282 = smul.addr %s281, 20
          %s283 = smul.addr %s282, 8
          %s284 = scalar_lea.vmem %s1, %s283
        $region48: #{tpu_custom_call.1} parent=39 // pred_fallthru
          _
      $region40: #{tpu_custom_call.1} parent=5 // pred_fallthru
        _
      %p285 = scmp.le.s32.totalorder 1, %s14
      %p286 = scmp.lt.s32.totalorder %s14, 9
      %p287 = pnand %p285, %p286
      %p288 = pneg %p287
      // Predicated region
      $region49: #{tpu_custom_call.1} parent=5 // pred_check
        _
      $region50: #{tpu_custom_call.1} parent=5 // pred_check_branch
        %290 = sbr.rel (%p287) target = $region52
      $region51: #{tpu_custom_call.1} parent=5 // pred_region
        %s291 = ssub.s32 %s14, 1
        %p292 = scmp.lt.s32.totalorder %s23, 1
        %s293 = scalar_select %p292, %s23, 1
        %s294 = smul.addr %s293, 24
        %s295 = smul.addr %s294, 8
        %s296 = scalar_lea.vmem %s0, %s295
        %p297 = pneg %p52
        %p298 = pneg %p49
        %p299 = scmp.lt.s32.totalorder %s23, 1
        %s300 = scalar_select %p299, %s23, 1
        %s301 = smul.addr %s300, 20
        %s302 = smul.addr %s301, 8
        %s303 = scalar_lea.vmem %s1, %s302
        %p304 = pneg %p78
        %p305 = pneg %p75
        %p306 = pneg %p99
        %p307 = pneg %p96
        %p308 = pneg %p120
        %p309 = pneg %p117
        %p310 = pneg %p141
        %p311 = pneg %p138
        %p312 = pneg %p162
        %p313 = pneg %p159
        %p314 = pneg %p183
        %p315 = pneg %p180
        %p316 = pneg %p204
        %p317 = pneg %p201
        %p318 = pneg %p232
        %p319 = pneg %p229
        %s320 = sand.u32 %s219, 1
        %s321 = sand.u32 %s219, 1
        %s322 = smul.addr %s321, 64
        %s323 = scalar_lea.vmem [#allocation4], %s322
        %p324 = scmp.lt.s32.totalorder %s23, 1
        %s325 = scalar_select %p324, %s23, 1
        %s326 = smul.addr %s325, 24
        %s327 = smul.addr %s326, 8
        %s328 = scalar_lea.vmem %s0, %s327
        %p329 = scmp.lt.s32.totalorder %s23, 1
        %s330 = scalar_select %p329, %s23, 1
        %s331 = smul.addr %s330, 20
        %s332 = smul.addr %s331, 8
        %s333 = scalar_lea.vmem %s1, %s332
        %s334 = smul.u32 2, %s24
        %s335 = smul.u32 %s24, 2
        %v336 = vld [vmem:[%s3] sm:$0x1]
        %v337 = vld [vmem:[%s5] sm:$0x1]
        %v338 = vld [vmem:[%s7] sm:$0x1]
        %v339 = vld [vmem:[%s6] sm:$0xf]
        %vm340 = vcmask 24576
        %341 = vst.msk [vmem:[#allocation2] sm:$0x1] %vm340, 0.0
        %342 = vst.msk [vmem:[#allocation2 + $0x10] sm:$0x1] %vm340, 0.0
        %343 = vst.msk [vmem:[#allocation2 + $0x20] sm:$0x1] %vm340, 0.0
        %344 = vst.msk [vmem:[#allocation2 + $0x30] sm:$0x1] %vm340, 0.0
        %345 = vst.msk [vmem:[#allocation2 + $0x40] sm:$0x1] %vm340, 0.0
        %346 = vst.msk [vmem:[#allocation2 + $0x50] sm:$0x1] %vm340, 0.0
        %347 = vst.msk [vmem:[#allocation2 + $0x60] sm:$0x1] %vm340, 0.0
        %348 = vst.msk [vmem:[#allocation2 + $0x70] sm:$0x1] %vm340, 0.0
        %349 = vst.msk [vmem:[#allocation2 + $0x80] sm:$0x1] %vm340, 0.0
        %350 = vst.msk [vmem:[#allocation2 + $0x90] sm:$0x1] %vm340, 0.0
        %351 = vst.msk [vmem:[#allocation2 + $0xa0] sm:$0x1] %vm340, 0.0
        %352 = vst.msk [vmem:[#allocation2 + $0xb0] sm:$0x1] %vm340, 0.0
        %353 = vst.msk [vmem:[#allocation2 + $0xc0] sm:$0x1] %vm340, 0.0
        %354 = vst.msk [vmem:[#allocation2 + $0xd0] sm:$0x1] %vm340, 0.0
        %355 = vst.msk [vmem:[#allocation2 + $0xe0] sm:$0x1] %vm340, 0.0
        %356 = vst.msk [vmem:[#allocation2 + $0xf0] sm:$0x1] %vm340, 0.0
        %357 = vst.msk [vmem:[#allocation2 + $0x9] sm:$0x1] %vm340, 0.0
        %358 = vst.msk [vmem:[#allocation2 + $0x19] sm:$0x1] %vm340, 0.0
        %359 = vst.msk [vmem:[#allocation2 + $0x29] sm:$0x1] %vm340, 0.0
        %360 = vst.msk [vmem:[#allocation2 + $0x39] sm:$0x1] %vm340, 0.0
        %361 = vst.msk [vmem:[#allocation2 + $0x49] sm:$0x1] %vm340, 0.0
        %362 = vst.msk [vmem:[#allocation2 + $0x59] sm:$0x1] %vm340, 0.0
        %363 = vst.msk [vmem:[#allocation2 + $0x69] sm:$0x1] %vm340, 0.0
        %364 = vst.msk [vmem:[#allocation2 + $0x79] sm:$0x1] %vm340, 0.0
        %365 = vst.msk [vmem:[#allocation2 + $0x89] sm:$0x1] %vm340, 0.0
        %366 = vst.msk [vmem:[#allocation2 + $0x99] sm:$0x1] %vm340, 0.0
        %367 = vst.msk [vmem:[#allocation2 + $0xa9] sm:$0x1] %vm340, 0.0
        %368 = vst.msk [vmem:[#allocation2 + $0xb9] sm:$0x1] %vm340, 0.0
        %369 = vst.msk [vmem:[#allocation2 + $0xc9] sm:$0x1] %vm340, 0.0
        %370 = vst.msk [vmem:[#allocation2 + $0xd9] sm:$0x1] %vm340, 0.0
        %371 = vst.msk [vmem:[#allocation2 + $0xe9] sm:$0x1] %vm340, 0.0
        %372 = vst.msk [vmem:[#allocation2 + $0xf9] sm:$0x1] %vm340, 0.0
        %s373 = smul.u32 %s335, 16
        %s374 = scalar_lea.vmem %s333, %s373
        %v375 = vld [vmem:[%s374] sm:$0xff]
        %v376 = vld [vmem:[%s374 + $0x10] sm:$0xff]
        %v377 = vld [vmem:[%s374 + $0x20] sm:$0xff]
        %v378 = vld [vmem:[%s374 + $0x30] sm:$0xff]
        %v379 = vld [vmem:[%s2] sm:$0xf]
        %s380 = scalar_lea.vmem %s328, %s373
        %v381 = vld [vmem:[%s380] sm:$0xff]
        %v382 = vld [vmem:[%s380 + $0x10] sm:$0xff]
        %v383 = vld [vmem:[%s380 + $0x20] sm:$0xff]
        %v384 = vld [vmem:[%s380 + $0x30] sm:$0xff]
        %s385 = scalar_lea.vmem %s2, 4
        %v386 = vld [vmem:[%s385] sm:$0xf]
        %vm387 = vcmask 31744
        %v389 = vsel %vm387, %v381, 0
        %v392 = vsel %vm387, %v382, 0
        %v395 = vsel %vm387, %v383, 0
        %v398 = vsel %vm387, %v384, 0
        %vm400 = vcmask 1043456
        %v402 = vsel %vm400, %v386, 0
        %404 = vmatprep.subr.mxu0 0.0
        %405 = vmatpush1.msra.mxu0 %v402
        %406 = vmatprep.subr.mxu0 0.0
        %407 = vmatpush1.msra.mxu0 0.0
        %408 = vmatprep.subr.mxu0 0.0
        %409 = vmatpush1.msra.mxu0 0.0
        %410 = vmatprep.subr.mxu0 0.0
        %411 = vmatpush1.msra.mxu0 0.0
        %412 = vmatprep.subr.mxu0 0.0
        %413 = vmatpush1.msra.mxu0 0.0
        %414 = vmatprep.subr.mxu0 0.0
        %415 = vmatpush1.msra.mxu0 0.0
        %416 = vmatprep.subr.mxu0 0.0
        %417 = vmatpush1.msra.mxu0 0.0
        %418 = vmatprep.subr.mxu0 0.0
        %419 = vmatpush1.msra.mxu0 0.0
        %420 = vmatprep.subr.mxu0 0.0
        %421 = vmatpush1.msra.mxu0 0.0
        %422 = vmatprep.subr.mxu0 0.0
        %423 = vmatpush1.msra.mxu0 0.0
        %424 = vmatprep.subr.mxu0 0.0
        %425 = vmatpush1.msra.mxu0 0.0
        %426 = vmatprep.subr.mxu0 0.0
        %427 = vmatpush1.msra.mxu0 0.0
        %428 = vmatprep.subr.mxu0 0.0
        %429 = vmatpush1.msra.mxu0 0.0
        %430 = vmatprep.subr.mxu0 0.0
        %431 = vmatpush1.msra.mxu0 0.0
        %432 = vmatprep.subr.mxu0 0.0
        %433 = vmatpush1.msra.mxu0 0.0
        %434 = vmatprep.subr.mxu0 0.0
        %435 = vmatpush1.msra.mxu0 0.0
        %436 = vmatprep.subr.mxu0 0.0
        %437 = vmatpush1.msra.mxu0 0.0
        %438 = vmatprep.subr.mxu0 0.0
        %439 = vmatpush1.msra.mxu0 0.0
        %440 = vmatprep.subr.mxu0 0.0
        %441 = vmatpush1.msra.mxu0 0.0
        %442 = vmatprep.subr.mxu0 0.0
        %443 = vmatpush1.msra.mxu0 0.0
        %444 = vmatprep.subr.mxu0 0.0
        %445 = vmatpush1.msra.mxu0 0.0
        %446 = vmatprep.subr.mxu0 0.0
        %447 = vmatpush1.msra.mxu0 0.0
        %448 = vmatprep.subr.mxu0 0.0
        %449 = vmatpush1.msra.mxu0 0.0
        %450 = vmatprep.subr.mxu0 0.0
        %451 = vmatpush1.msra.mxu0 0.0
        %452 = vmatprep.subr.mxu0 0.0
        %453 = vmatpush1.msra.mxu0 0.0
        %454 = vmatprep.subr.mxu0 0.0
        %455 = vmatpush1.msra.mxu0 0.0
        %456 = vmatprep.subr.mxu0 0.0
        %457 = vmatpush1.msra.mxu0 0.0
        %458 = vmatprep.subr.mxu0 0.0
        %459 = vmatpush1.msra.mxu0 0.0
        %460 = vmatprep.subr.mxu0 0.0
        %461 = vmatpush1.msra.mxu0 0.0
        %462 = vmatprep.subr.mxu0 0.0
        %463 = vmatpush1.msra.mxu0 0.0
        %464 = vmatprep.subr.mxu0 0.0
        %465 = vmatpush1.msra.mxu0 0.0
        %466 = vmatprep.subr.mxu0 0.0
        %467 = vmatpush1.msra.mxu0 0.0
        %468 = vmatprep.mubr.f32.mxu0 0.0
        %469 = vmatmul.mubr.f32.gmra.mrb[0].mxu0 %v389
        %v470 = vpop.f32.mrb[0].mxu0
        %v471 = vadd.f32 0.0, %v470
        %v472 = vpop.f32.mrb[0].mxu0
        %473 = vmatprep.mubr.f32.mxu0 0.0
        %474 = vmatmul.mubr.f32.gmra.mrb[0].mxu0 %v392
        %v475 = vpop.f32.mrb[0].mxu0
        %v476 = vadd.f32 0.0, %v475
        %v477 = vpop.f32.mrb[0].mxu0
        %478 = vmatprep.mubr.f32.mxu0 0.0
        %479 = vmatmul.mubr.f32.gmra.mrb[0].mxu0 %v395
        %v480 = vpop.f32.mrb[0].mxu0
        %v481 = vadd.f32 0.0, %v480
        %v482 = vpop.f32.mrb[0].mxu0
        %483 = vmatprep.mubr.f32.mxu0 0.0
        %484 = vmatmul.mubr.f32.gmra.mrb[0].mxu0 %v398
        %v485 = vpop.f32.mrb[0].mxu0
        %v486 = vadd.f32 0.0, %v485
        %v487 = vpop.f32.mrb[0].mxu0
        %488 = vdwg.mxu0
        %v490 = vsel %vm387, %v375, 0
        %v493 = vsel %vm387, %v376, 0
        %v496 = vsel %vm387, %v377, 0
        %v499 = vsel %vm387, %v378, 0
        %v502 = vsel %vm400, %v379, 0
        %504 = vmatprep.subr.mxu0 0.0
        %505 = vmatpush1.msra.mxu0 %v502
        %506 = vmatprep.subr.mxu0 0.0
        %507 = vmatpush1.msra.mxu0 0.0
        %508 = vmatprep.subr.mxu0 0.0
        %509 = vmatpush1.msra.mxu0 0.0
        %510 = vmatprep.subr.mxu0 0.0
        %511 = vmatpush1.msra.mxu0 0.0
        %512 = vmatprep.subr.mxu0 0.0
        %513 = vmatpush1.msra.mxu0 0.0
        %514 = vmatprep.subr.mxu0 0.0
        %515 = vmatpush1.msra.mxu0 0.0
        %516 = vmatprep.subr.mxu0 0.0
        %517 = vmatpush1.msra.mxu0 0.0
        %518 = vmatprep.subr.mxu0 0.0
        %519 = vmatpush1.msra.mxu0 0.0
        %520 = vmatprep.subr.mxu0 0.0
        %521 = vmatpush1.msra.mxu0 0.0
        %522 = vmatprep.subr.mxu0 0.0
        %523 = vmatpush1.msra.mxu0 0.0
        %524 = vmatprep.subr.mxu0 0.0
        %525 = vmatpush1.msra.mxu0 0.0
        %526 = vmatprep.subr.mxu0 0.0
        %527 = vmatpush1.msra.mxu0 0.0
        %528 = vmatprep.subr.mxu0 0.0
        %529 = vmatpush1.msra.mxu0 0.0
        %530 = vmatprep.subr.mxu0 0.0
        %531 = vmatpush1.msra.mxu0 0.0
        %532 = vmatprep.subr.mxu0 0.0
        %533 = vmatpush1.msra.mxu0 0.0
        %534 = vmatprep.subr.mxu0 0.0
        %535 = vmatpush1.msra.mxu0 0.0
        %536 = vmatprep.subr.mxu0 0.0
        %537 = vmatpush1.msra.mxu0 0.0
        %538 = vmatprep.subr.mxu0 0.0
        %539 = vmatpush1.msra.mxu0 0.0
        %540 = vmatprep.subr.mxu0 0.0
        %541 = vmatpush1.msra.mxu0 0.0
        %542 = vmatprep.subr.mxu0 0.0
        %543 = vmatpush1.msra.mxu0 0.0
        %544 = vmatprep.subr.mxu0 0.0
        %545 = vmatpush1.msra.mxu0 0.0
        %546 = vmatprep.subr.mxu0 0.0
        %547 = vmatpush1.msra.mxu0 0.0
        %548 = vmatprep.subr.mxu0 0.0
        %549 = vmatpush1.msra.mxu0 0.0
        %550 = vmatprep.subr.mxu0 0.0
        %551 = vmatpush1.msra.mxu0 0.0
        %552 = vmatprep.subr.mxu0 0.0
        %553 = vmatpush1.msra.mxu0 0.0
        %554 = vmatprep.subr.mxu0 0.0
        %555 = vmatpush1.msra.mxu0 0.0
        %556 = vmatprep.subr.mxu0 0.0
        %557 = vmatpush1.msra.mxu0 0.0
        %558 = vmatprep.subr.mxu0 0.0
        %559 = vmatpush1.msra.mxu0 0.0
        %560 = vmatprep.subr.mxu0 0.0
        %561 = vmatpush1.msra.mxu0 0.0
        %562 = vmatprep.subr.mxu0 0.0
        %563 = vmatpush1.msra.mxu0 0.0
        %564 = vmatprep.subr.mxu0 0.0
        %565 = vmatpush1.msra.mxu0 0.0
        %566 = vmatprep.subr.mxu0 0.0
        %567 = vmatpush1.msra.mxu0 0.0
        %568 = vmatprep.mubr.f32.mxu0 0.0
        %569 = vmatmul.mubr.f32.gmra.mrb[0].mxu0 %v490
        %v570 = vpop.f32.mrb[0].mxu0
        %v571 = vadd.f32 %v471, %v570
        %v572 = vpop.f32.mrb[0].mxu0
        %573 = vmatprep.mubr.f32.mxu0 0.0
        %574 = vmatmul.mubr.f32.gmra.mrb[0].mxu0 %v493
        %v575 = vpop.f32.mrb[0].mxu0
        %v576 = vadd.f32 %v476, %v575
        %v577 = vpop.f32.mrb[0].mxu0
        %578 = vmatprep.mubr.f32.mxu0 0.0
        %579 = vmatmul.mubr.f32.gmra.mrb[0].mxu0 %v496
        %v580 = vpop.f32.mrb[0].mxu0
        %v581 = vadd.f32 %v481, %v580
        %v582 = vpop.f32.mrb[0].mxu0
        %583 = vmatprep.mubr.f32.mxu0 0.0
        %584 = vmatmul.mubr.f32.gmra.mrb[0].mxu0 %v499
        %v585 = vpop.f32.mrb[0].mxu0
        %v586 = vadd.f32 %v486, %v585
        %v587 = vpop.f32.mrb[0].mxu0
        %588 = vdwg.mxu0
        %v589 = vld [vmem:[%s380 + $0x1] sm:$0xff]
        %v590 = vld [vmem:[%s380 + $0x11] sm:$0xff]
        %v591 = vld [vmem:[%s380 + $0x21] sm:$0xff]
        %v592 = vld [vmem:[%s380 + $0x31] sm:$0xff]
        %s593 = scalar_lea.vmem %s2, 8
        %v594 = vld [vmem:[%s593] sm:$0xf]
        %v596 = vsel %vm387, %v589, 0
        %v599 = vsel %vm387, %v590, 0
        %v602 = vsel %vm387, %v591, 0
        %v605 = vsel %vm387, %v592, 0
        %v608 = vsel %vm400, %v594, 0
        %610 = vmatprep.subr.mxu0 0.0
        %611 = vmatpush1.msra.mxu0 %v608
        %612 = vmatprep.subr.mxu0 0.0
        %613 = vmatpush1.msra.mxu0 0.0
        %614 = vmatprep.subr.mxu0 0.0
        %615 = vmatpush1.msra.mxu0 0.0
        %616 = vmatprep.subr.mxu0 0.0
        %617 = vmatpush1.msra.mxu0 0.0
        %618 = vmatprep.subr.mxu0 0.0
        %619 = vmatpush1.msra.mxu0 0.0
        %620 = vmatprep.subr.mxu0 0.0
        %621 = vmatpush1.msra.mxu0 0.0
        %622 = vmatprep.subr.mxu0 0.0
        %623 = vmatpush1.msra.mxu0 0.0
        %624 = vmatprep.subr.mxu0 0.0
        %625 = vmatpush1.msra.mxu0 0.0
        %626 = vmatprep.subr.mxu0 0.0
        %627 = vmatpush1.msra.mxu0 0.0
        %628 = vmatprep.subr.mxu0 0.0
        %629 = vmatpush1.msra.mxu0 0.0
        %630 = vmatprep.subr.mxu0 0.0
        %631 = vmatpush1.msra.mxu0 0.0
        %632 = vmatprep.subr.mxu0 0.0
        %633 = vmatpush1.msra.mxu0 0.0
        %634 = vmatprep.subr.mxu0 0.0
        %635 = vmatpush1.msra.mxu0 0.0
        %636 = vmatprep.subr.mxu0 0.0
        %637 = vmatpush1.msra.mxu0 0.0
        %638 = vmatprep.subr.mxu0 0.0
        %639 = vmatpush1.msra.mxu0 0.0
        %640 = vmatprep.subr.mxu0 0.0
        %641 = vmatpush1.msra.mxu0 0.0
        %642 = vmatprep.subr.mxu0 0.0
        %643 = vmatpush1.msra.mxu0 0.0
        %644 = vmatprep.subr.mxu0 0.0
        %645 = vmatpush1.msra.mxu0 0.0
        %646 = vmatprep.subr.mxu0 0.0
        %647 = vmatpush1.msra.mxu0 0.0
        %648 = vmatprep.subr.mxu0 0.0
        %649 = vmatpush1.msra.mxu0 0.0
        %650 = vmatprep.subr.mxu0 0.0
        %651 = vmatpush1.msra.mxu0 0.0
        %652 = vmatprep.subr.mxu0 0.0
        %653 = vmatpush1.msra.mxu0 0.0
        %654 = vmatprep.subr.mxu0 0.0
        %655 = vmatpush1.msra.mxu0 0.0
        %656 = vmatprep.subr.mxu0 0.0
        %657 = vmatpush1.msra.mxu0 0.0
        %658 = vmatprep.subr.mxu0 0.0
        %659 = vmatpush1.msra.mxu0 0.0
        %660 = vmatprep.subr.mxu0 0.0
        %661 = vmatpush1.msra.mxu0 0.0
        %662 = vmatprep.subr.mxu0 0.0
        %663 = vmatpush1.msra.mxu0 0.0
        %664 = vmatprep.subr.mxu0 0.0
        %665 = vmatpush1.msra.mxu0 0.0
        %666 = vmatprep.subr.mxu0 0.0
        %667 = vmatpush1.msra.mxu0 0.0
        %668 = vmatprep.subr.mxu0 0.0
        %669 = vmatpush1.msra.mxu0 0.0
        %670 = vmatprep.subr.mxu0 0.0
        %671 = vmatpush1.msra.mxu0 0.0
        %672 = vmatprep.subr.mxu0 0.0
        %673 = vmatpush1.msra.mxu0 0.0
        %674 = vmatprep.mubr.f32.mxu0 0.0
        %675 = vmatmul.mubr.f32.gmra.mrb[0].mxu0 %v596
        %v676 = vpop.f32.mrb[0].mxu0
        %v677 = vadd.f32 0.0, %v676
        %v678 = vpop.f32.mrb[0].mxu0
        %679 = vmatprep.mubr.f32.mxu0 0.0
        %680 = vmatmul.mubr.f32.gmra.mrb[0].mxu0 %v599
        %v681 = vpop.f32.mrb[0].mxu0
        %v682 = vadd.f32 0.0, %v681
        %v683 = vpop.f32.mrb[0].mxu0
        %684 = vmatprep.mubr.f32.mxu0 0.0
        %685 = vmatmul.mubr.f32.gmra.mrb[0].mxu0 %v602
        %v686 = vpop.f32.mrb[0].mxu0
        %v687 = vadd.f32 0.0, %v686
        %v688 = vpop.f32.mrb[0].mxu0
        %689 = vmatprep.mubr.f32.mxu0 0.0
        %690 = vmatmul.mubr.f32.gmra.mrb[0].mxu0 %v605
        %v691 = vpop.f32.mrb[0].mxu0
        %v692 = vadd.f32 0.0, %v691
        %v693 = vpop.f32.mrb[0].mxu0
        %694 = vdwg.mxu0
        %v695 = vadd.f32 %v571, %v677
        %v696 = vadd.f32 %v576, %v682
        %v697 = vadd.f32 %v581, %v687
        %v698 = vadd.f32 %v586, %v692
        %s699 = sadd.s32 %s335, 1
        %s700 = smul.u32 %s699, 16
        %s701 = scalar_lea.vmem %s328, %s700
        %v702 = vld [vmem:[%s701] sm:$0xff]
        %v703 = vld [vmem:[%s701 + $0x10] sm:$0xff]
        %v704 = vld [vmem:[%s701 + $0x20] sm:$0xff]
        %v705 = vld [vmem:[%s701 + $0x30] sm:$0xff]
        %s706 = scalar_lea.vmem %s2, 12
        %v707 = vld [vmem:[%s706] sm:$0xf]
        %v709 = vsel %vm387, %v702, 0
        %v712 = vsel %vm387, %v703, 0
        %v715 = vsel %vm387, %v704, 0
        %v718 = vsel %vm387, %v705, 0
        %v721 = vsel %vm400, %v707, 0
        %723 = vmatprep.subr.mxu0 0.0
        %724 = vmatpush1.msra.mxu0 %v721
        %725 = vmatprep.subr.mxu0 0.0
        %726 = vmatpush1.msra.mxu0 0.0
        %727 = vmatprep.subr.mxu0 0.0
        %728 = vmatpush1.msra.mxu0 0.0
        %729 = vmatprep.subr.mxu0 0.0
        %730 = vmatpush1.msra.mxu0 0.0
        %731 = vmatprep.subr.mxu0 0.0
        %732 = vmatpush1.msra.mxu0 0.0
        %733 = vmatprep.subr.mxu0 0.0
        %734 = vmatpush1.msra.mxu0 0.0
        %735 = vmatprep.subr.mxu0 0.0
        %736 = vmatpush1.msra.mxu0 0.0
        %737 = vmatprep.subr.mxu0 0.0
        %738 = vmatpush1.msra.mxu0 0.0
        %739 = vmatprep.subr.mxu0 0.0
        %740 = vmatpush1.msra.mxu0 0.0
        %741 = vmatprep.subr.mxu0 0.0
        %742 = vmatpush1.msra.mxu0 0.0
        %743 = vmatprep.subr.mxu0 0.0
        %744 = vmatpush1.msra.mxu0 0.0
        %745 = vmatprep.subr.mxu0 0.0
        %746 = vmatpush1.msra.mxu0 0.0
        %747 = vmatprep.subr.mxu0 0.0
        %748 = vmatpush1.msra.mxu0 0.0
        %749 = vmatprep.subr.mxu0 0.0
        %750 = vmatpush1.msra.mxu0 0.0
        %751 = vmatprep.subr.mxu0 0.0
        %752 = vmatpush1.msra.mxu0 0.0
        %753 = vmatprep.subr.mxu0 0.0
        %754 = vmatpush1.msra.mxu0 0.0
        %755 = vmatprep.subr.mxu0 0.0
        %756 = vmatpush1.msra.mxu0 0.0
        %757 = vmatprep.subr.mxu0 0.0
        %758 = vmatpush1.msra.mxu0 0.0
        %759 = vmatprep.subr.mxu0 0.0
        %760 = vmatpush1.msra.mxu0 0.0
        %761 = vmatprep.subr.mxu0 0.0
        %762 = vmatpush1.msra.mxu0 0.0
        %763 = vmatprep.subr.mxu0 0.0
        %764 = vmatpush1.msra.mxu0 0.0
        %765 = vmatprep.subr.mxu0 0.0
        %766 = vmatpush1.msra.mxu0 0.0
        %767 = vmatprep.subr.mxu0 0.0
        %768 = vmatpush1.msra.mxu0 0.0
        %769 = vmatprep.subr.mxu0 0.0
        %770 = vmatpush1.msra.mxu0 0.0
        %771 = vmatprep.subr.mxu0 0.0
        %772 = vmatpush1.msra.mxu0 0.0
        %773 = vmatprep.subr.mxu0 0.0
        %774 = vmatpush1.msra.mxu0 0.0
        %775 = vmatprep.subr.mxu0 0.0
        %776 = vmatpush1.msra.mxu0 0.0
        %777 = vmatprep.subr.mxu0 0.0
        %778 = vmatpush1.msra.mxu0 0.0
        %779 = vmatprep.subr.mxu0 0.0
        %780 = vmatpush1.msra.mxu0 0.0
        %781 = vmatprep.subr.mxu0 0.0
        %782 = vmatpush1.msra.mxu0 0.0
        %783 = vmatprep.subr.mxu0 0.0
        %784 = vmatpush1.msra.mxu0 0.0
        %785 = vmatprep.subr.mxu0 0.0
        %786 = vmatpush1.msra.mxu0 0.0
        %787 = vmatprep.mubr.f32.mxu0 0.0
        %788 = vmatmul.mubr.f32.gmra.mrb[0].mxu0 %v709
        %v789 = vpop.f32.mrb[0].mxu0
        %v790 = vadd.f32 0.0, %v789
        %v791 = vpop.f32.mrb[0].mxu0
        %792 = vmatprep.mubr.f32.mxu0 0.0
        %793 = vmatmul.mubr.f32.gmra.mrb[0].mxu0 %v712
        %v794 = vpop.f32.mrb[0].mxu0
        %v795 = vadd.f32 0.0, %v794
        %v796 = vpop.f32.mrb[0].mxu0
        %797 = vmatprep.mubr.f32.mxu0 0.0
        %798 = vmatmul.mubr.f32.gmra.mrb[0].mxu0 %v715
        %v799 = vpop.f32.mrb[0].mxu0
        %v800 = vadd.f32 0.0, %v799
        %v801 = vpop.f32.mrb[0].mxu0
        %802 = vmatprep.mubr.f32.mxu0 0.0
        %803 = vmatmul.mubr.f32.gmra.mrb[0].mxu0 %v718
        %v804 = vpop.f32.mrb[0].mxu0
        %v805 = vadd.f32 0.0, %v804
        %v806 = vpop.f32.mrb[0].mxu0
        %807 = vdwg.mxu0
        %v808 = vadd.f32 %v695, %v790
        %v809 = vadd.f32 %v696, %v795
        %v810 = vadd.f32 %v697, %v800
        %v811 = vadd.f32 %v698, %v805
        %v812 = vld [vmem:[%s701 + $0x1] sm:$0xff]
        %v813 = vld [vmem:[%s701 + $0x11] sm:$0xff]
        %v814 = vld [vmem:[%s701 + $0x21] sm:$0xff]
        %v815 = vld [vmem:[%s701 + $0x31] sm:$0xff]
        %s816 = scalar_lea.vmem %s2, 16
        %v817 = vld [vmem:[%s816] sm:$0xf]
        %v819 = vsel %vm387, %v812, 0
        %v822 = vsel %vm387, %v813, 0
        %v825 = vsel %vm387, %v814, 0
        %v828 = vsel %vm387, %v815, 0
        %v831 = vsel %vm400, %v817, 0
        %833 = vmatprep.subr.mxu0 0.0
        %834 = vmatpush1.msra.mxu0 %v831
        %835 = vmatprep.subr.mxu0 0.0
        %836 = vmatpush1.msra.mxu0 0.0
        %837 = vmatprep.subr.mxu0 0.0
        %838 = vmatpush1.msra.mxu0 0.0
        %839 = vmatprep.subr.mxu0 0.0
        %840 = vmatpush1.msra.mxu0 0.0
        %841 = vmatprep.subr.mxu0 0.0
        %842 = vmatpush1.msra.mxu0 0.0
        %843 = vmatprep.subr.mxu0 0.0
        %844 = vmatpush1.msra.mxu0 0.0
        %845 = vmatprep.subr.mxu0 0.0
        %846 = vmatpush1.msra.mxu0 0.0
        %847 = vmatprep.subr.mxu0 0.0
        %848 = vmatpush1.msra.mxu0 0.0
        %849 = vmatprep.subr.mxu0 0.0
        %850 = vmatpush1.msra.mxu0 0.0
        %851 = vmatprep.subr.mxu0 0.0
        %852 = vmatpush1.msra.mxu0 0.0
        %853 = vmatprep.subr.mxu0 0.0
        %854 = vmatpush1.msra.mxu0 0.0
        %855 = vmatprep.subr.mxu0 0.0
        %856 = vmatpush1.msra.mxu0 0.0
        %857 = vmatprep.subr.mxu0 0.0
        %858 = vmatpush1.msra.mxu0 0.0
        %859 = vmatprep.subr.mxu0 0.0
        %860 = vmatpush1.msra.mxu0 0.0
        %861 = vmatprep.subr.mxu0 0.0
        %862 = vmatpush1.msra.mxu0 0.0
        %863 = vmatprep.subr.mxu0 0.0
        %864 = vmatpush1.msra.mxu0 0.0
        %865 = vmatprep.subr.mxu0 0.0
        %866 = vmatpush1.msra.mxu0 0.0
        %867 = vmatprep.subr.mxu0 0.0
        %868 = vmatpush1.msra.mxu0 0.0
        %869 = vmatprep.subr.mxu0 0.0
        %870 = vmatpush1.msra.mxu0 0.0
        %871 = vmatprep.subr.mxu0 0.0
        %872 = vmatpush1.msra.mxu0 0.0
        %873 = vmatprep.subr.mxu0 0.0
        %874 = vmatpush1.msra.mxu0 0.0
        %875 = vmatprep.subr.mxu0 0.0
        %876 = vmatpush1.msra.mxu0 0.0
        %877 = vmatprep.subr.mxu0 0.0
        %878 = vmatpush1.msra.mxu0 0.0
        %879 = vmatprep.subr.mxu0 0.0
        %880 = vmatpush1.msra.mxu0 0.0
        %881 = vmatprep.subr.mxu0 0.0
        %882 = vmatpush1.msra.mxu0 0.0
        %883 = vmatprep.subr.mxu0 0.0
        %884 = vmatpush1.msra.mxu0 0.0
        %885 = vmatprep.subr.mxu0 0.0
        %886 = vmatpush1.msra.mxu0 0.0
        %887 = vmatprep.subr.mxu0 0.0
        %888 = vmatpush1.msra.mxu0 0.0
        %889 = vmatprep.subr.mxu0 0.0
        %890 = vmatpush1.msra.mxu0 0.0
        %891 = vmatprep.subr.mxu0 0.0
        %892 = vmatpush1.msra.mxu0 0.0
        %893 = vmatprep.subr.mxu0 0.0
        %894 = vmatpush1.msra.mxu0 0.0
        %895 = vmatprep.subr.mxu0 0.0
        %896 = vmatpush1.msra.mxu0 0.0
        %897 = vmatprep.mubr.f32.mxu0 0.0
        %898 = vmatmul.mubr.f32.gmra.mrb[0].mxu0 %v819
        %v899 = vpop.f32.mrb[0].mxu0
        %v900 = vadd.f32 0.0, %v899
        %v901 = vpop.f32.mrb[0].mxu0
        %902 = vmatprep.mubr.f32.mxu0 0.0
        %903 = vmatmul.mubr.f32.gmra.mrb[0].mxu0 %v822
        %v904 = vpop.f32.mrb[0].mxu0
        %v905 = vadd.f32 0.0, %v904
        %v906 = vpop.f32.mrb[0].mxu0
        %907 = vmatprep.mubr.f32.mxu0 0.0
        %908 = vmatmul.mubr.f32.gmra.mrb[0].mxu0 %v825
        %v909 = vpop.f32.mrb[0].mxu0
        %v910 = vadd.f32 0.0, %v909
        %v911 = vpop.f32.mrb[0].mxu0
        %912 = vmatprep.mubr.f32.mxu0 0.0
        %913 = vmatmul.mubr.f32.gmra.mrb[0].mxu0 %v828
        %v914 = vpop.f32.mrb[0].mxu0
        %v915 = vadd.f32 0.0, %v914
        %v916 = vpop.f32.mrb[0].mxu0
        %917 = vdwg.mxu0
        %v918 = vadd.f32 %v808, %v900
        %v919 = vadd.f32 %v809, %v905
        %v920 = vadd.f32 %v810, %v910
        %v921 = vadd.f32 %v811, %v915
        %v923 = vlaneseq
        %v924 = vshrl.u32 %v923, 7
        %v925 = vsub.s32 0, %v924
        %v926 = vrot.slane %v336, %v925
        %v928 = vadd.f32 %v918, %v926
        %v929 = vadd.f32 %v919, %v926
        %v930 = vadd.f32 %v920, %v926
        %v931 = vadd.f32 %v921, %v926
        %v932 = vmax.f32 %v928, 0.0
        %v933 = vmax.f32 %v929, 0.0
        %v934 = vmax.f32 %v930, 0.0
        %v935 = vmax.f32 %v931, 0.0
        %936 = vst.msk [vmem:[#allocation2 + $0x1] sm:$0xff] %vm387, %v932
        %937 = vst.msk [vmem:[#allocation2 + $0x11] sm:$0xff] %vm387, %v933
        %938 = vst.msk [vmem:[#allocation2 + $0x21] sm:$0xff] %vm387, %v934
        %939 = vst.msk [vmem:[#allocation2 + $0x31] sm:$0xff] %vm387, %v935
        %944 = vrot.lane.b32.xlu0 %v928, 124
        %v945 = vpop.permute.xlu0 %944
        %946 = vrot.lane.b32.xlu0 %v929, 124
        %v947 = vpop.permute.xlu0 %946
        %948 = vrot.lane.b32.xlu0 %v930, 124
        %v949 = vpop.permute.xlu0 %948
        %950 = vrot.lane.b32.xlu0 %v931, 124
        %v951 = vpop.permute.xlu0 %950
        %956 = vst.msk [vmem:[#allocation3] sm:$0xff] %vm387, %v945
        %957 = vst.msk [vmem:[#allocation3 + $0x8] sm:$0xff] %vm387, %v947
        %958 = vst.msk [vmem:[#allocation3 + $0x10] sm:$0xff] %vm387, %v949
        %959 = vst.msk [vmem:[#allocation3 + $0x18] sm:$0xff] %vm387, %v951
        %v960 = vld [vmem:[%s374] sm:$0xff]
        %v961 = vld [vmem:[%s374 + $0x10] sm:$0xff]
        %v962 = vld [vmem:[%s374 + $0x20] sm:$0xff]
        %v963 = vld [vmem:[%s374 + $0x30] sm:$0xff]
        %s964 = scalar_lea.vmem %s2, 20
        %v965 = vld [vmem:[%s964] sm:$0xf]
        %v966 = vld [vmem:[%s380 + $0x1] sm:$0xff]
        %v967 = vld [vmem:[%s380 + $0x11] sm:$0xff]
        %v968 = vld [vmem:[%s380 + $0x21] sm:$0xff]
        %v969 = vld [vmem:[%s380 + $0x31] sm:$0xff]
        %s970 = scalar_lea.vmem %s2, 24
        %v971 = vld [vmem:[%s970] sm:$0xf]
        %v973 = vsel %vm387, %v966, 0
        %v976 = vsel %vm387, %v967, 0
        %v979 = vsel %vm387, %v968, 0
        %v982 = vsel %vm387, %v969, 0
        %v985 = vsel %vm400, %v971, 0
        %987 = vmatprep.subr.mxu0 0.0
        %988 = vmatpush1.msra.mxu0 %v985
        %989 = vmatprep.subr.mxu0 0.0
        %990 = vmatpush1.msra.mxu0 0.0
        %991 = vmatprep.subr.mxu0 0.0
        %992 = vmatpush1.msra.mxu0 0.0
        %993 = vmatprep.subr.mxu0 0.0
        %994 = vmatpush1.msra.mxu0 0.0
        %995 = vmatprep.subr.mxu0 0.0
        %996 = vmatpush1.msra.mxu0 0.0
        %997 = vmatprep.subr.mxu0 0.0
        %998 = vmatpush1.msra.mxu0 0.0
        %999 = vmatprep.subr.mxu0 0.0
        %1000 = vmatpush1.msra.mxu0 0.0
        %1001 = vmatprep.subr.mxu0 0.0
        %1002 = vmatpush1.msra.mxu0 0.0
        %1003 = vmatprep.subr.mxu0 0.0
        %1004 = vmatpush1.msra.mxu0 0.0
        %1005 = vmatprep.subr.mxu0 0.0
        %1006 = vmatpush1.msra.mxu0 0.0
        %1007 = vmatprep.subr.mxu0 0.0
        %1008 = vmatpush1.msra.mxu0 0.0
        %1009 = vmatprep.subr.mxu0 0.0
        %1010 = vmatpush1.msra.mxu0 0.0
        %1011 = vmatprep.subr.mxu0 0.0
        %1012 = vmatpush1.msra.mxu0 0.0
        %1013 = vmatprep.subr.mxu0 0.0
        %1014 = vmatpush1.msra.mxu0 0.0
        %1015 = vmatprep.subr.mxu0 0.0
        %1016 = vmatpush1.msra.mxu0 0.0
        %1017 = vmatprep.subr.mxu0 0.0
        %1018 = vmatpush1.msra.mxu0 0.0
        %1019 = vmatprep.subr.mxu0 0.0
        %1020 = vmatpush1.msra.mxu0 0.0
        %1021 = vmatprep.subr.mxu0 0.0
        %1022 = vmatpush1.msra.mxu0 0.0
        %1023 = vmatprep.subr.mxu0 0.0
        %1024 = vmatpush1.msra.mxu0 0.0
        %1025 = vmatprep.subr.mxu0 0.0
        %1026 = vmatpush1.msra.mxu0 0.0
        %1027 = vmatprep.subr.mxu0 0.0
        %1028 = vmatpush1.msra.mxu0 0.0
        %1029 = vmatprep.subr.mxu0 0.0
        %1030 = vmatpush1.msra.mxu0 0.0
        %1031 = vmatprep.subr.mxu0 0.0
        %1032 = vmatpush1.msra.mxu0 0.0
        %1033 = vmatprep.subr.mxu0 0.0
        %1034 = vmatpush1.msra.mxu0 0.0
        %1035 = vmatprep.subr.mxu0 0.0
        %1036 = vmatpush1.msra.mxu0 0.0
        %1037 = vmatprep.subr.mxu0 0.0
        %1038 = vmatpush1.msra.mxu0 0.0
        %1039 = vmatprep.subr.mxu0 0.0
        %1040 = vmatpush1.msra.mxu0 0.0
        %1041 = vmatprep.subr.mxu0 0.0
        %1042 = vmatpush1.msra.mxu0 0.0
        %1043 = vmatprep.subr.mxu0 0.0
        %1044 = vmatpush1.msra.mxu0 0.0
        %1045 = vmatprep.subr.mxu0 0.0
        %1046 = vmatpush1.msra.mxu0 0.0
        %1047 = vmatprep.subr.mxu0 0.0
        %1048 = vmatpush1.msra.mxu0 0.0
        %1049 = vmatprep.subr.mxu0 0.0
        %1050 = vmatpush1.msra.mxu0 0.0
        %1051 = vmatprep.mubr.f32.mxu0 0.0
        %1052 = vmatmul.mubr.f32.gmra.mrb[0].mxu0 %v973
        %v1053 = vpop.f32.mrb[0].mxu0
        %v1054 = vadd.f32 0.0, %v1053
        %v1055 = vpop.f32.mrb[0].mxu0
        %1056 = vmatprep.mubr.f32.mxu0 0.0
        %1057 = vmatmul.mubr.f32.gmra.mrb[0].mxu0 %v976
        %v1058 = vpop.f32.mrb[0].mxu0
        %v1059 = vadd.f32 0.0, %v1058
        %v1060 = vpop.f32.mrb[0].mxu0
        %1061 = vmatprep.mubr.f32.mxu0 0.0
        %1062 = vmatmul.mubr.f32.gmra.mrb[0].mxu0 %v979
        %v1063 = vpop.f32.mrb[0].mxu0
        %v1064 = vadd.f32 0.0, %v1063
        %v1065 = vpop.f32.mrb[0].mxu0
        %1066 = vmatprep.mubr.f32.mxu0 0.0
        %1067 = vmatmul.mubr.f32.gmra.mrb[0].mxu0 %v982
        %v1068 = vpop.f32.mrb[0].mxu0
        %v1069 = vadd.f32 0.0, %v1068
        %v1070 = vpop.f32.mrb[0].mxu0
        %1071 = vdwg.mxu0
        %1076 = vrot.lane.b32.xlu0 %v960, 124
        %v1077 = vpop.permute.xlu0 %1076
        %1078 = vrot.lane.b32.xlu0 %v961, 124
        %v1079 = vpop.permute.xlu0 %1078
        %1080 = vrot.lane.b32.xlu0 %v962, 124
        %v1081 = vpop.permute.xlu0 %1080
        %1082 = vrot.lane.b32.xlu0 %v963, 124
        %v1083 = vpop.permute.xlu0 %1082
        %v1084 = vsel %vm387, %v1077, 0
        %v1086 = vsel %vm387, %v1079, 0
        %v1088 = vsel %vm387, %v1081, 0
        %v1090 = vsel %vm387, %v1083, 0
        %v1093 = vsel %vm400, %v965, 0
        %1095 = vmatprep.subr.mxu0 0.0
        %1096 = vmatpush1.msra.mxu0 %v1093
        %1097 = vmatprep.subr.mxu0 0.0
        %1098 = vmatpush1.msra.mxu0 0.0
        %1099 = vmatprep.subr.mxu0 0.0
        %1100 = vmatpush1.msra.mxu0 0.0
        %1101 = vmatprep.subr.mxu0 0.0
        %1102 = vmatpush1.msra.mxu0 0.0
        %1103 = vmatprep.subr.mxu0 0.0
        %1104 = vmatpush1.msra.mxu0 0.0
        %1105 = vmatprep.subr.mxu0 0.0
        %1106 = vmatpush1.msra.mxu0 0.0
        %1107 = vmatprep.subr.mxu0 0.0
        %1108 = vmatpush1.msra.mxu0 0.0
        %1109 = vmatprep.subr.mxu0 0.0
        %1110 = vmatpush1.msra.mxu0 0.0
        %1111 = vmatprep.subr.mxu0 0.0
        %1112 = vmatpush1.msra.mxu0 0.0
        %1113 = vmatprep.subr.mxu0 0.0
        %1114 = vmatpush1.msra.mxu0 0.0
        %1115 = vmatprep.subr.mxu0 0.0
        %1116 = vmatpush1.msra.mxu0 0.0
        %1117 = vmatprep.subr.mxu0 0.0
        %1118 = vmatpush1.msra.mxu0 0.0
        %1119 = vmatprep.subr.mxu0 0.0
        %1120 = vmatpush1.msra.mxu0 0.0
        %1121 = vmatprep.subr.mxu0 0.0
        %1122 = vmatpush1.msra.mxu0 0.0
        %1123 = vmatprep.subr.mxu0 0.0
        %1124 = vmatpush1.msra.mxu0 0.0
        %1125 = vmatprep.subr.mxu0 0.0
        %1126 = vmatpush1.msra.mxu0 0.0
        %1127 = vmatprep.subr.mxu0 0.0
        %1128 = vmatpush1.msra.mxu0 0.0
        %1129 = vmatprep.subr.mxu0 0.0
        %1130 = vmatpush1.msra.mxu0 0.0
        %1131 = vmatprep.subr.mxu0 0.0
        %1132 = vmatpush1.msra.mxu0 0.0
        %1133 = vmatprep.subr.mxu0 0.0
        %1134 = vmatpush1.msra.mxu0 0.0
        %1135 = vmatprep.subr.mxu0 0.0
        %1136 = vmatpush1.msra.mxu0 0.0
        %1137 = vmatprep.subr.mxu0 0.0
        %1138 = vmatpush1.msra.mxu0 0.0
        %1139 = vmatprep.subr.mxu0 0.0
        %1140 = vmatpush1.msra.mxu0 0.0
        %1141 = vmatprep.subr.mxu0 0.0
        %1142 = vmatpush1.msra.mxu0 0.0
        %1143 = vmatprep.subr.mxu0 0.0
        %1144 = vmatpush1.msra.mxu0 0.0
        %1145 = vmatprep.subr.mxu0 0.0
        %1146 = vmatpush1.msra.mxu0 0.0
        %1147 = vmatprep.subr.mxu0 0.0
        %1148 = vmatpush1.msra.mxu0 0.0
        %1149 = vmatprep.subr.mxu0 0.0
        %1150 = vmatpush1.msra.mxu0 0.0
        %1151 = vmatprep.subr.mxu0 0.0
        %1152 = vmatpush1.msra.mxu0 0.0
        %1153 = vmatprep.subr.mxu0 0.0
        %1154 = vmatpush1.msra.mxu0 0.0
        %1155 = vmatprep.subr.mxu0 0.0
        %1156 = vmatpush1.msra.mxu0 0.0
        %1157 = vmatprep.subr.mxu0 0.0
        %1158 = vmatpush1.msra.mxu0 0.0
        %1159 = vmatprep.mubr.f32.mxu0 0.0
        %1160 = vmatmul.mubr.f32.gmra.mrb[0].mxu0 %v1084
        %v1161 = vpop.f32.mrb[0].mxu0
        %v1162 = vadd.f32 %v1054, %v1161
        %v1163 = vpop.f32.mrb[0].mxu0
        %1164 = vmatprep.mubr.f32.mxu0 0.0
        %1165 = vmatmul.mubr.f32.gmra.mrb[0].mxu0 %v1086
        %v1166 = vpop.f32.mrb[0].mxu0
        %v1167 = vadd.f32 %v1059, %v1166
        %v1168 = vpop.f32.mrb[0].mxu0
        %1169 = vmatprep.mubr.f32.mxu0 0.0
        %1170 = vmatmul.mubr.f32.gmra.mrb[0].mxu0 %v1088
        %v1171 = vpop.f32.mrb[0].mxu0
        %v1172 = vadd.f32 %v1064, %v1171
        %v1173 = vpop.f32.mrb[0].mxu0
        %1174 = vmatprep.mubr.f32.mxu0 0.0
        %1175 = vmatmul.mubr.f32.gmra.mrb[0].mxu0 %v1090
        %v1176 = vpop.f32.mrb[0].mxu0
        %v1177 = vadd.f32 %v1069, %v1176
        %v1178 = vpop.f32.mrb[0].mxu0
        %1179 = vdwg.mxu0
        %v1180 = vld [vmem:[%s380 + $0x2] sm:$0xff]
        %v1181 = vld [vmem:[%s380 + $0x12] sm:$0xff]
        %v1182 = vld [vmem:[%s380 + $0x22] sm:$0xff]
        %v1183 = vld [vmem:[%s380 + $0x32] sm:$0xff]
        %s1184 = scalar_lea.vmem %s2, 28
        %v1185 = vld [vmem:[%s1184] sm:$0xf]
        %v1187 = vsel %vm387, %v1180, 0
        %v1190 = vsel %vm387, %v1181, 0
        %v1193 = vsel %vm387, %v1182, 0
        %v1196 = vsel %vm387, %v1183, 0
        %v1199 = vsel %vm400, %v1185, 0
        %1201 = vmatprep.subr.mxu0 0.0
        %1202 = vmatpush1.msra.mxu0 %v1199
        %1203 = vmatprep.subr.mxu0 0.0
        %1204 = vmatpush1.msra.mxu0 0.0
        %1205 = vmatprep.subr.mxu0 0.0
        %1206 = vmatpush1.msra.mxu0 0.0
        %1207 = vmatprep.subr.mxu0 0.0
        %1208 = vmatpush1.msra.mxu0 0.0
        %1209 = vmatprep.subr.mxu0 0.0
        %1210 = vmatpush1.msra.mxu0 0.0
        %1211 = vmatprep.subr.mxu0 0.0
        %1212 = vmatpush1.msra.mxu0 0.0
        %1213 = vmatprep.subr.mxu0 0.0
        %1214 = vmatpush1.msra.mxu0 0.0
        %1215 = vmatprep.subr.mxu0 0.0
        %1216 = vmatpush1.msra.mxu0 0.0
        %1217 = vmatprep.subr.mxu0 0.0
        %1218 = vmatpush1.msra.mxu0 0.0
        %1219 = vmatprep.subr.mxu0 0.0
        %1220 = vmatpush1.msra.mxu0 0.0
        %1221 = vmatprep.subr.mxu0 0.0
        %1222 = vmatpush1.msra.mxu0 0.0
        %1223 = vmatprep.subr.mxu0 0.0
        %1224 = vmatpush1.msra.mxu0 0.0
        %1225 = vmatprep.subr.mxu0 0.0
        %1226 = vmatpush1.msra.mxu0 0.0
        %1227 = vmatprep.subr.mxu0 0.0
        %1228 = vmatpush1.msra.mxu0 0.0
        %1229 = vmatprep.subr.mxu0 0.0
        %1230 = vmatpush1.msra.mxu0 0.0
        %1231 = vmatprep.subr.mxu0 0.0
        %1232 = vmatpush1.msra.mxu0 0.0
        %1233 = vmatprep.subr.mxu0 0.0
        %1234 = vmatpush1.msra.mxu0 0.0
        %1235 = vmatprep.subr.mxu0 0.0
        %1236 = vmatpush1.msra.mxu0 0.0
        %1237 = vmatprep.subr.mxu0 0.0
        %1238 = vmatpush1.msra.mxu0 0.0
        %1239 = vmatprep.subr.mxu0 0.0
        %1240 = vmatpush1.msra.mxu0 0.0
        %1241 = vmatprep.subr.mxu0 0.0
        %1242 = vmatpush1.msra.mxu0 0.0
        %1243 = vmatprep.subr.mxu0 0.0
        %1244 = vmatpush1.msra.mxu0 0.0
        %1245 = vmatprep.subr.mxu0 0.0
        %1246 = vmatpush1.msra.mxu0 0.0
        %1247 = vmatprep.subr.mxu0 0.0
        %1248 = vmatpush1.msra.mxu0 0.0
        %1249 = vmatprep.subr.mxu0 0.0
        %1250 = vmatpush1.msra.mxu0 0.0
        %1251 = vmatprep.subr.mxu0 0.0
        %1252 = vmatpush1.msra.mxu0 0.0
        %1253 = vmatprep.subr.mxu0 0.0
        %1254 = vmatpush1.msra.mxu0 0.0
        %1255 = vmatprep.subr.mxu0 0.0
        %1256 = vmatpush1.msra.mxu0 0.0
        %1257 = vmatprep.subr.mxu0 0.0
        %1258 = vmatpush1.msra.mxu0 0.0
        %1259 = vmatprep.subr.mxu0 0.0
        %1260 = vmatpush1.msra.mxu0 0.0
        %1261 = vmatprep.subr.mxu0 0.0
        %1262 = vmatpush1.msra.mxu0 0.0
        %1263 = vmatprep.subr.mxu0 0.0
        %1264 = vmatpush1.msra.mxu0 0.0
        %1265 = vmatprep.mubr.f32.mxu0 0.0
        %1266 = vmatmul.mubr.f32.gmra.mrb[0].mxu0 %v1187
        %v1267 = vpop.f32.mrb[0].mxu0
        %v1268 = vadd.f32 0.0, %v1267
        %v1269 = vpop.f32.mrb[0].mxu0
        %1270 = vmatprep.mubr.f32.mxu0 0.0
        %1271 = vmatmul.mubr.f32.gmra.mrb[0].mxu0 %v1190
        %v1272 = vpop.f32.mrb[0].mxu0
        %v1273 = vadd.f32 0.0, %v1272
        %v1274 = vpop.f32.mrb[0].mxu0
        %1275 = vmatprep.mubr.f32.mxu0 0.0
        %1276 = vmatmul.mubr.f32.gmra.mrb[0].mxu0 %v1193
        %v1277 = vpop.f32.mrb[0].mxu0
        %v1278 = vadd.f32 0.0, %v1277
        %v1279 = vpop.f32.mrb[0].mxu0
        %1280 = vmatprep.mubr.f32.mxu0 0.0
        %1281 = vmatmul.mubr.f32.gmra.mrb[0].mxu0 %v1196
        %v1282 = vpop.f32.mrb[0].mxu0
        %v1283 = vadd.f32 0.0, %v1282
        %v1284 = vpop.f32.mrb[0].mxu0
        %1285 = vdwg.mxu0
        %v1286 = vadd.f32 %v1162, %v1268
        %v1287 = vadd.f32 %v1167, %v1273
        %v1288 = vadd.f32 %v1172, %v1278
        %v1289 = vadd.f32 %v1177, %v1283
        %v1290 = vld [vmem:[%s701 + $0x1] sm:$0xff]
        %v1291 = vld [vmem:[%s701 + $0x11] sm:$0xff]
        %v1292 = vld [vmem:[%s701 + $0x21] sm:$0xff]
        %v1293 = vld [vmem:[%s701 + $0x31] sm:$0xff]
        %s1294 = scalar_lea.vmem %s2, 32
        %v1295 = vld [vmem:[%s1294] sm:$0xf]
        %v1297 = vsel %vm387, %v1290, 0
        %v1300 = vsel %vm387, %v1291, 0
        %v1303 = vsel %vm387, %v1292, 0
        %v1306 = vsel %vm387, %v1293, 0
        %v1309 = vsel %vm400, %v1295, 0
        %1311 = vmatprep.subr.mxu0 0.0
        %1312 = vmatpush1.msra.mxu0 %v1309
        %1313 = vmatprep.subr.mxu0 0.0
        %1314 = vmatpush1.msra.mxu0 0.0
        %1315 = vmatprep.subr.mxu0 0.0
        %1316 = vmatpush1.msra.mxu0 0.0
        %1317 = vmatprep.subr.mxu0 0.0
        %1318 = vmatpush1.msra.mxu0 0.0
        %1319 = vmatprep.subr.mxu0 0.0
        %1320 = vmatpush1.msra.mxu0 0.0
        %1321 = vmatprep.subr.mxu0 0.0
        %1322 = vmatpush1.msra.mxu0 0.0
        %1323 = vmatprep.subr.mxu0 0.0
        %1324 = vmatpush1.msra.mxu0 0.0
        %1325 = vmatprep.subr.mxu0 0.0
        %1326 = vmatpush1.msra.mxu0 0.0
        %1327 = vmatprep.subr.mxu0 0.0
        %1328 = vmatpush1.msra.mxu0 0.0
        %1329 = vmatprep.subr.mxu0 0.0
        %1330 = vmatpush1.msra.mxu0 0.0
        %1331 = vmatprep.subr.mxu0 0.0
        %1332 = vmatpush1.msra.mxu0 0.0
        %1333 = vmatprep.subr.mxu0 0.0
        %1334 = vmatpush1.msra.mxu0 0.0
        %1335 = vmatprep.subr.mxu0 0.0
        %1336 = vmatpush1.msra.mxu0 0.0
        %1337 = vmatprep.subr.mxu0 0.0
        %1338 = vmatpush1.msra.mxu0 0.0
        %1339 = vmatprep.subr.mxu0 0.0
        %1340 = vmatpush1.msra.mxu0 0.0
        %1341 = vmatprep.subr.mxu0 0.0
        %1342 = vmatpush1.msra.mxu0 0.0
        %1343 = vmatprep.subr.mxu0 0.0
        %1344 = vmatpush1.msra.mxu0 0.0
        %1345 = vmatprep.subr.mxu0 0.0
        %1346 = vmatpush1.msra.mxu0 0.0
        %1347 = vmatprep.subr.mxu0 0.0
        %1348 = vmatpush1.msra.mxu0 0.0
        %1349 = vmatprep.subr.mxu0 0.0
        %1350 = vmatpush1.msra.mxu0 0.0
        %1351 = vmatprep.subr.mxu0 0.0
        %1352 = vmatpush1.msra.mxu0 0.0
        %1353 = vmatprep.subr.mxu0 0.0
        %1354 = vmatpush1.msra.mxu0 0.0
        %1355 = vmatprep.subr.mxu0 0.0
        %1356 = vmatpush1.msra.mxu0 0.0
        %1357 = vmatprep.subr.mxu0 0.0
        %1358 = vmatpush1.msra.mxu0 0.0
        %1359 = vmatprep.subr.mxu0 0.0
        %1360 = vmatpush1.msra.mxu0 0.0
        %1361 = vmatprep.subr.mxu0 0.0
        %1362 = vmatpush1.msra.mxu0 0.0
        %1363 = vmatprep.subr.mxu0 0.0
        %1364 = vmatpush1.msra.mxu0 0.0
        %1365 = vmatprep.subr.mxu0 0.0
        %1366 = vmatpush1.msra.mxu0 0.0
        %1367 = vmatprep.subr.mxu0 0.0
        %1368 = vmatpush1.msra.mxu0 0.0
        %1369 = vmatprep.subr.mxu0 0.0
        %1370 = vmatpush1.msra.mxu0 0.0
        %1371 = vmatprep.subr.mxu0 0.0
        %1372 = vmatpush1.msra.mxu0 0.0
        %1373 = vmatprep.subr.mxu0 0.0
        %1374 = vmatpush1.msra.mxu0 0.0
        %1375 = vmatprep.mubr.f32.mxu0 0.0
        %1376 = vmatmul.mubr.f32.gmra.mrb[0].mxu0 %v1297
        %v1377 = vpop.f32.mrb[0].mxu0
        %v1378 = vadd.f32 0.0, %v1377
        %v1379 = vpop.f32.mrb[0].mxu0
        %1380 = vmatprep.mubr.f32.mxu0 0.0
        %1381 = vmatmul.mubr.f32.gmra.mrb[0].mxu0 %v1300
        %v1382 = vpop.f32.mrb[0].mxu0
        %v1383 = vadd.f32 0.0, %v1382
        %v1384 = vpop.f32.mrb[0].mxu0
        %1385 = vmatprep.mubr.f32.mxu0 0.0
        %1386 = vmatmul.mubr.f32.gmra.mrb[0].mxu0 %v1303
        %v1387 = vpop.f32.mrb[0].mxu0
        %v1388 = vadd.f32 0.0, %v1387
        %v1389 = vpop.f32.mrb[0].mxu0
        %1390 = vmatprep.mubr.f32.mxu0 0.0
        %1391 = vmatmul.mubr.f32.gmra.mrb[0].mxu0 %v1306
        %v1392 = vpop.f32.mrb[0].mxu0
        %v1393 = vadd.f32 0.0, %v1392
        %v1394 = vpop.f32.mrb[0].mxu0
        %1395 = vdwg.mxu0
        %v1396 = vadd.f32 %v1286, %v1378
        %v1397 = vadd.f32 %v1287, %v1383
        %v1398 = vadd.f32 %v1288, %v1388
        %v1399 = vadd.f32 %v1289, %v1393
        %v1400 = vld [vmem:[%s701 + $0x2] sm:$0xff]
        %v1401 = vld [vmem:[%s701 + $0x12] sm:$0xff]
        %v1402 = vld [vmem:[%s701 + $0x22] sm:$0xff]
        %v1403 = vld [vmem:[%s701 + $0x32] sm:$0xff]
        %s1404 = scalar_lea.vmem %s2, 36
        %v1405 = vld [vmem:[%s1404] sm:$0xf]
        %v1407 = vsel %vm387, %v1400, 0
        %v1410 = vsel %vm387, %v1401, 0
        %v1413 = vsel %vm387, %v1402, 0
        %v1416 = vsel %vm387, %v1403, 0
        %v1419 = vsel %vm400, %v1405, 0
        %1421 = vmatprep.subr.mxu0 0.0
        %1422 = vmatpush1.msra.mxu0 %v1419
        %1423 = vmatprep.subr.mxu0 0.0
        %1424 = vmatpush1.msra.mxu0 0.0
        %1425 = vmatprep.subr.mxu0 0.0
        %1426 = vmatpush1.msra.mxu0 0.0
        %1427 = vmatprep.subr.mxu0 0.0
        %1428 = vmatpush1.msra.mxu0 0.0
        %1429 = vmatprep.subr.mxu0 0.0
        %1430 = vmatpush1.msra.mxu0 0.0
        %1431 = vmatprep.subr.mxu0 0.0
        %1432 = vmatpush1.msra.mxu0 0.0
        %1433 = vmatprep.subr.mxu0 0.0
        %1434 = vmatpush1.msra.mxu0 0.0
        %1435 = vmatprep.subr.mxu0 0.0
        %1436 = vmatpush1.msra.mxu0 0.0
        %1437 = vmatprep.subr.mxu0 0.0
        %1438 = vmatpush1.msra.mxu0 0.0
        %1439 = vmatprep.subr.mxu0 0.0
        %1440 = vmatpush1.msra.mxu0 0.0
        %1441 = vmatprep.subr.mxu0 0.0
        %1442 = vmatpush1.msra.mxu0 0.0
        %1443 = vmatprep.subr.mxu0 0.0
        %1444 = vmatpush1.msra.mxu0 0.0
        %1445 = vmatprep.subr.mxu0 0.0
        %1446 = vmatpush1.msra.mxu0 0.0
        %1447 = vmatprep.subr.mxu0 0.0
        %1448 = vmatpush1.msra.mxu0 0.0
        %1449 = vmatprep.subr.mxu0 0.0
        %1450 = vmatpush1.msra.mxu0 0.0
        %1451 = vmatprep.subr.mxu0 0.0
        %1452 = vmatpush1.msra.mxu0 0.0
        %1453 = vmatprep.subr.mxu0 0.0
        %1454 = vmatpush1.msra.mxu0 0.0
        %1455 = vmatprep.subr.mxu0 0.0
        %1456 = vmatpush1.msra.mxu0 0.0
        %1457 = vmatprep.subr.mxu0 0.0
        %1458 = vmatpush1.msra.mxu0 0.0
        %1459 = vmatprep.subr.mxu0 0.0
        %1460 = vmatpush1.msra.mxu0 0.0
        %1461 = vmatprep.subr.mxu0 0.0
        %1462 = vmatpush1.msra.mxu0 0.0
        %1463 = vmatprep.subr.mxu0 0.0
        %1464 = vmatpush1.msra.mxu0 0.0
        %1465 = vmatprep.subr.mxu0 0.0
        %1466 = vmatpush1.msra.mxu0 0.0
        %1467 = vmatprep.subr.mxu0 0.0
        %1468 = vmatpush1.msra.mxu0 0.0
        %1469 = vmatprep.subr.mxu0 0.0
        %1470 = vmatpush1.msra.mxu0 0.0
        %1471 = vmatprep.subr.mxu0 0.0
        %1472 = vmatpush1.msra.mxu0 0.0
        %1473 = vmatprep.subr.mxu0 0.0
        %1474 = vmatpush1.msra.mxu0 0.0
        %1475 = vmatprep.subr.mxu0 0.0
        %1476 = vmatpush1.msra.mxu0 0.0
        %1477 = vmatprep.subr.mxu0 0.0
        %1478 = vmatpush1.msra.mxu0 0.0
        %1479 = vmatprep.subr.mxu0 0.0
        %1480 = vmatpush1.msra.mxu0 0.0
        %1481 = vmatprep.subr.mxu0 0.0
        %1482 = vmatpush1.msra.mxu0 0.0
        %1483 = vmatprep.subr.mxu0 0.0
        %1484 = vmatpush1.msra.mxu0 0.0
        %1485 = vmatprep.mubr.f32.mxu0 0.0
        %1486 = vmatmul.mubr.f32.gmra.mrb[0].mxu0 %v1407
        %v1487 = vpop.f32.mrb[0].mxu0
        %v1488 = vadd.f32 0.0, %v1487
        %v1489 = vpop.f32.mrb[0].mxu0
        %1490 = vmatprep.mubr.f32.mxu0 0.0
        %1491 = vmatmul.mubr.f32.gmra.mrb[0].mxu0 %v1410
        %v1492 = vpop.f32.mrb[0].mxu0
        %v1493 = vadd.f32 0.0, %v1492
        %v1494 = vpop.f32.mrb[0].mxu0
        %1495 = vmatprep.mubr.f32.mxu0 0.0
        %1496 = vmatmul.mubr.f32.gmra.mrb[0].mxu0 %v1413
        %v1497 = vpop.f32.mrb[0].mxu0
        %v1498 = vadd.f32 0.0, %v1497
        %v1499 = vpop.f32.mrb[0].mxu0
        %1500 = vmatprep.mubr.f32.mxu0 0.0
        %1501 = vmatmul.mubr.f32.gmra.mrb[0].mxu0 %v1416
        %v1502 = vpop.f32.mrb[0].mxu0
        %v1503 = vadd.f32 0.0, %v1502
        %v1504 = vpop.f32.mrb[0].mxu0
        %1505 = vdwg.mxu0
        %v1506 = vadd.f32 %v1396, %v1488
        %v1507 = vadd.f32 %v1397, %v1493
        %v1508 = vadd.f32 %v1398, %v1498
        %v1509 = vadd.f32 %v1399, %v1503
        %v1510 = vadd.f32 %v1506, %v926
        %v1511 = vadd.f32 %v1507, %v926
        %v1512 = vadd.f32 %v1508, %v926
        %v1513 = vadd.f32 %v1509, %v926
        %v1514 = vmax.f32 %v1510, 0.0
        %v1515 = vmax.f32 %v1511, 0.0
        %v1516 = vmax.f32 %v1512, 0.0
        %v1517 = vmax.f32 %v1513, 0.0
        %s1518 = scalar_lea.vmem [#allocation2], 64
        %1519 = vst.msk [vmem:[%s1518 + $0x1] sm:$0xff] %vm387, %v1514
        %1520 = vst.msk [vmem:[%s1518 + $0x11] sm:$0xff] %vm387, %v1515
        %1521 = vst.msk [vmem:[%s1518 + $0x21] sm:$0xff] %vm387, %v1516
        %1522 = vst.msk [vmem:[%s1518 + $0x31] sm:$0xff] %vm387, %v1517
        %1527 = vrot.lane.b32.xlu0 %v1510, 124
        %v1528 = vpop.permute.xlu0 %1527
        %1529 = vrot.lane.b32.xlu0 %v1511, 124
        %v1530 = vpop.permute.xlu0 %1529
        %1531 = vrot.lane.b32.xlu0 %v1512, 124
        %v1532 = vpop.permute.xlu0 %1531
        %1533 = vrot.lane.b32.xlu0 %v1513, 124
        %v1534 = vpop.permute.xlu0 %1533
        %s1539 = scalar_lea.vmem [#allocation3], 32
        %1540 = vst.msk [vmem:[%s1539] sm:$0xff] %vm387, %v1528
        %1541 = vst.msk [vmem:[%s1539 + $0x8] sm:$0xff] %vm387, %v1530
        %1542 = vst.msk [vmem:[%s1539 + $0x10] sm:$0xff] %vm387, %v1532
        %1543 = vst.msk [vmem:[%s1539 + $0x18] sm:$0xff] %vm387, %v1534
        %s1544 = sadd.s32 8, %s373
        %s1545 = scalar_lea.vmem %s333, %s1544
        %v1546 = vld [vmem:[%s1545] sm:$0xff]
        %v1547 = vld [vmem:[%s1545 + $0x10] sm:$0xff]
        %v1548 = vld [vmem:[%s1545 + $0x20] sm:$0xff]
        %v1549 = vld [vmem:[%s1545 + $0x30] sm:$0xff]
        %s1550 = scalar_lea.vmem %s2, 40
        %v1551 = vld [vmem:[%s1550] sm:$0xf]
        %v1552 = vld [vmem:[%s701] sm:$0xff]
        %v1553 = vld [vmem:[%s701 + $0x10] sm:$0xff]
        %v1554 = vld [vmem:[%s701 + $0x20] sm:$0xff]
        %v1555 = vld [vmem:[%s701 + $0x30] sm:$0xff]
        %s1556 = scalar_lea.vmem %s2, 44
        %v1557 = vld [vmem:[%s1556] sm:$0xf]
        %v1559 = vsel %vm387, %v1552, 0
        %v1562 = vsel %vm387, %v1553, 0
        %v1565 = vsel %vm387, %v1554, 0
        %v1568 = vsel %vm387, %v1555, 0
        %v1571 = vsel %vm400, %v1557, 0
        %1573 = vmatprep.subr.mxu0 0.0
        %1574 = vmatpush1.msra.mxu0 %v1571
        %1575 = vmatprep.subr.mxu0 0.0
        %1576 = vmatpush1.msra.mxu0 0.0
        %1577 = vmatprep.subr.mxu0 0.0
        %1578 = vmatpush1.msra.mxu0 0.0
        %1579 = vmatprep.subr.mxu0 0.0
        %1580 = vmatpush1.msra.mxu0 0.0
        %1581 = vmatprep.subr.mxu0 0.0
        %1582 = vmatpush1.msra.mxu0 0.0
        %1583 = vmatprep.subr.mxu0 0.0
        %1584 = vmatpush1.msra.mxu0 0.0
        %1585 = vmatprep.subr.mxu0 0.0
        %1586 = vmatpush1.msra.mxu0 0.0
        %1587 = vmatprep.subr.mxu0 0.0
        %1588 = vmatpush1.msra.mxu0 0.0
        %1589 = vmatprep.subr.mxu0 0.0
        %1590 = vmatpush1.msra.mxu0 0.0
        %1591 = vmatprep.subr.mxu0 0.0
        %1592 = vmatpush1.msra.mxu0 0.0
        %1593 = vmatprep.subr.mxu0 0.0
        %1594 = vmatpush1.msra.mxu0 0.0
        %1595 = vmatprep.subr.mxu0 0.0
        %1596 = vmatpush1.msra.mxu0 0.0
        %1597 = vmatprep.subr.mxu0 0.0
        %1598 = vmatpush1.msra.mxu0 0.0
        %1599 = vmatprep.subr.mxu0 0.0
        %1600 = vmatpush1.msra.mxu0 0.0
        %1601 = vmatprep.subr.mxu0 0.0
        %1602 = vmatpush1.msra.mxu0 0.0
        %1603 = vmatprep.subr.mxu0 0.0
        %1604 = vmatpush1.msra.mxu0 0.0
        %1605 = vmatprep.subr.mxu0 0.0
        %1606 = vmatpush1.msra.mxu0 0.0
        %1607 = vmatprep.subr.mxu0 0.0
        %1608 = vmatpush1.msra.mxu0 0.0
        %1609 = vmatprep.subr.mxu0 0.0
        %1610 = vmatpush1.msra.mxu0 0.0
        %1611 = vmatprep.subr.mxu0 0.0
        %1612 = vmatpush1.msra.mxu0 0.0
        %1613 = vmatprep.subr.mxu0 0.0
        %1614 = vmatpush1.msra.mxu0 0.0
        %1615 = vmatprep.subr.mxu0 0.0
        %1616 = vmatpush1.msra.mxu0 0.0
        %1617 = vmatprep.subr.mxu0 0.0
        %1618 = vmatpush1.msra.mxu0 0.0
        %1619 = vmatprep.subr.mxu0 0.0
        %1620 = vmatpush1.msra.mxu0 0.0
        %1621 = vmatprep.subr.mxu0 0.0
        %1622 = vmatpush1.msra.mxu0 0.0
        %1623 = vmatprep.subr.mxu0 0.0
        %1624 = vmatpush1.msra.mxu0 0.0
        %1625 = vmatprep.subr.mxu0 0.0
        %1626 = vmatpush1.msra.mxu0 0.0
        %1627 = vmatprep.subr.mxu0 0.0
        %1628 = vmatpush1.msra.mxu0 0.0
        %1629 = vmatprep.subr.mxu0 0.0
        %1630 = vmatpush1.msra.mxu0 0.0
        %1631 = vmatprep.subr.mxu0 0.0
        %1632 = vmatpush1.msra.mxu0 0.0
        %1633 = vmatprep.subr.mxu0 0.0
        %1634 = vmatpush1.msra.mxu0 0.0
        %1635 = vmatprep.subr.mxu0 0.0
        %1636 = vmatpush1.msra.mxu0 0.0
        %1637 = vmatprep.mubr.f32.mxu0 0.0
        %1638 = vmatmul.mubr.f32.gmra.mrb[0].mxu0 %v1559
        %v1639 = vpop.f32.mrb[0].mxu0
        %v1640 = vadd.f32 0.0, %v1639
        %v1641 = vpop.f32.mrb[0].mxu0
        %1642 = vmatprep.mubr.f32.mxu0 0.0
        %1643 = vmatmul.mubr.f32.gmra.mrb[0].mxu0 %v1562
        %v1644 = vpop.f32.mrb[0].mxu0
        %v1645 = vadd.f32 0.0, %v1644
        %v1646 = vpop.f32.mrb[0].mxu0
        %1647 = vmatprep.mubr.f32.mxu0 0.0
        %1648 = vmatmul.mubr.f32.gmra.mrb[0].mxu0 %v1565
        %v1649 = vpop.f32.mrb[0].mxu0
        %v1650 = vadd.f32 0.0, %v1649
        %v1651 = vpop.f32.mrb[0].mxu0
        %1652 = vmatprep.mubr.f32.mxu0 0.0
        %1653 = vmatmul.mubr.f32.gmra.mrb[0].mxu0 %v1568
        %v1654 = vpop.f32.mrb[0].mxu0
        %v1655 = vadd.f32 0.0, %v1654
        %v1656 = vpop.f32.mrb[0].mxu0
        %1657 = vdwg.mxu0
        %v1659 = vsel %vm387, %v1546, 0
        %v1662 = vsel %vm387, %v1547, 0
        %v1665 = vsel %vm387, %v1548, 0
        %v1668 = vsel %vm387, %v1549, 0
        %v1671 = vsel %vm400, %v1551, 0
        %1673 = vmatprep.subr.mxu0 0.0
        %1674 = vmatpush1.msra.mxu0 %v1671
        %1675 = vmatprep.subr.mxu0 0.0
        %1676 = vmatpush1.msra.mxu0 0.0
        %1677 = vmatprep.subr.mxu0 0.0
        %1678 = vmatpush1.msra.mxu0 0.0
        %1679 = vmatprep.subr.mxu0 0.0
        %1680 = vmatpush1.msra.mxu0 0.0
        %1681 = vmatprep.subr.mxu0 0.0
        %1682 = vmatpush1.msra.mxu0 0.0
        %1683 = vmatprep.subr.mxu0 0.0
        %1684 = vmatpush1.msra.mxu0 0.0
        %1685 = vmatprep.subr.mxu0 0.0
        %1686 = vmatpush1.msra.mxu0 0.0
        %1687 = vmatprep.subr.mxu0 0.0
        %1688 = vmatpush1.msra.mxu0 0.0
        %1689 = vmatprep.subr.mxu0 0.0
        %1690 = vmatpush1.msra.mxu0 0.0
        %1691 = vmatprep.subr.mxu0 0.0
        %1692 = vmatpush1.msra.mxu0 0.0
        %1693 = vmatprep.subr.mxu0 0.0
        %1694 = vmatpush1.msra.mxu0 0.0
        %1695 = vmatprep.subr.mxu0 0.0
        %1696 = vmatpush1.msra.mxu0 0.0
        %1697 = vmatprep.subr.mxu0 0.0
        %1698 = vmatpush1.msra.mxu0 0.0
        %1699 = vmatprep.subr.mxu0 0.0
        %1700 = vmatpush1.msra.mxu0 0.0
        %1701 = vmatprep.subr.mxu0 0.0
        %1702 = vmatpush1.msra.mxu0 0.0
        %1703 = vmatprep.subr.mxu0 0.0
        %1704 = vmatpush1.msra.mxu0 0.0
        %1705 = vmatprep.subr.mxu0 0.0
        %1706 = vmatpush1.msra.mxu0 0.0
        %1707 = vmatprep.subr.mxu0 0.0
        %1708 = vmatpush1.msra.mxu0 0.0
        %1709 = vmatprep.subr.mxu0 0.0
        %1710 = vmatpush1.msra.mxu0 0.0
        %1711 = vmatprep.subr.mxu0 0.0
        %1712 = vmatpush1.msra.mxu0 0.0
        %1713 = vmatprep.subr.mxu0 0.0
        %1714 = vmatpush1.msra.mxu0 0.0
        %1715 = vmatprep.subr.mxu0 0.0
        %1716 = vmatpush1.msra.mxu0 0.0
        %1717 = vmatprep.subr.mxu0 0.0
        %1718 = vmatpush1.msra.mxu0 0.0
        %1719 = vmatprep.subr.mxu0 0.0
        %1720 = vmatpush1.msra.mxu0 0.0
        %1721 = vmatprep.subr.mxu0 0.0
        %1722 = vmatpush1.msra.mxu0 0.0
        %1723 = vmatprep.subr.mxu0 0.0
        %1724 = vmatpush1.msra.mxu0 0.0
        %1725 = vmatprep.subr.mxu0 0.0
        %1726 = vmatpush1.msra.mxu0 0.0
        %1727 = vmatprep.subr.mxu0 0.0
        %1728 = vmatpush1.msra.mxu0 0.0
        %1729 = vmatprep.subr.mxu0 0.0
        %1730 = vmatpush1.msra.mxu0 0.0
        %1731 = vmatprep.subr.mxu0 0.0
        %1732 = vmatpush1.msra.mxu0 0.0
        %1733 = vmatprep.subr.mxu0 0.0
        %1734 = vmatpush1.msra.mxu0 0.0
        %1735 = vmatprep.subr.mxu0 0.0
        %1736 = vmatpush1.msra.mxu0 0.0
        %1737 = vmatprep.mubr.f32.mxu0 0.0
        %1738 = vmatmul.mubr.f32.gmra.mrb[0].mxu0 %v1659
        %v1739 = vpop.f32.mrb[0].mxu0
        %v1740 = vadd.f32 %v1640, %v1739
        %v1741 = vpop.f32.mrb[0].mxu0
        %1742 = vmatprep.mubr.f32.mxu0 0.0
        %1743 = vmatmul.mubr.f32.gmra.mrb[0].mxu0 %v1662
        %v1744 = vpop.f32.mrb[0].mxu0
        %v1745 = vadd.f32 %v1645, %v1744
        %v1746 = vpop.f32.mrb[0].mxu0
        %1747 = vmatprep.mubr.f32.mxu0 0.0
        %1748 = vmatmul.mubr.f32.gmra.mrb[0].mxu0 %v1665
        %v1749 = vpop.f32.mrb[0].mxu0
        %v1750 = vadd.f32 %v1650, %v1749
        %v1751 = vpop.f32.mrb[0].mxu0
        %1752 = vmatprep.mubr.f32.mxu0 0.0
        %1753 = vmatmul.mubr.f32.gmra.mrb[0].mxu0 %v1668
        %v1754 = vpop.f32.mrb[0].mxu0
        %v1755 = vadd.f32 %v1655, %v1754
        %v1756 = vpop.f32.mrb[0].mxu0
        %1757 = vdwg.mxu0
        %v1758 = vld [vmem:[%s701 + $0x1] sm:$0xff]
        %v1759 = vld [vmem:[%s701 + $0x11] sm:$0xff]
        %v1760 = vld [vmem:[%s701 + $0x21] sm:$0xff]
        %v1761 = vld [vmem:[%s701 + $0x31] sm:$0xff]
        %s1762 = scalar_lea.vmem %s2, 48
        %v1763 = vld [vmem:[%s1762] sm:$0xf]
        %v1765 = vsel %vm387, %v1758, 0
        %v1768 = vsel %vm387, %v1759, 0
        %v1771 = vsel %vm387, %v1760, 0
        %v1774 = vsel %vm387, %v1761, 0
        %v1777 = vsel %vm400, %v1763, 0
        %1779 = vmatprep.subr.mxu0 0.0
        %1780 = vmatpush1.msra.mxu0 %v1777
        %1781 = vmatprep.subr.mxu0 0.0
        %1782 = vmatpush1.msra.mxu0 0.0
        %1783 = vmatprep.subr.mxu0 0.0
        %1784 = vmatpush1.msra.mxu0 0.0
        %1785 = vmatprep.subr.mxu0 0.0
        %1786 = vmatpush1.msra.mxu0 0.0
        %1787 = vmatprep.subr.mxu0 0.0
        %1788 = vmatpush1.msra.mxu0 0.0
        %1789 = vmatprep.subr.mxu0 0.0
        %1790 = vmatpush1.msra.mxu0 0.0
        %1791 = vmatprep.subr.mxu0 0.0
        %1792 = vmatpush1.msra.mxu0 0.0
        %1793 = vmatprep.subr.mxu0 0.0
        %1794 = vmatpush1.msra.mxu0 0.0
        %1795 = vmatprep.subr.mxu0 0.0
        %1796 = vmatpush1.msra.mxu0 0.0
        %1797 = vmatprep.subr.mxu0 0.0
        %1798 = vmatpush1.msra.mxu0 0.0
        %1799 = vmatprep.subr.mxu0 0.0
        %1800 = vmatpush1.msra.mxu0 0.0
        %1801 = vmatprep.subr.mxu0 0.0
        %1802 = vmatpush1.msra.mxu0 0.0
        %1803 = vmatprep.subr.mxu0 0.0
        %1804 = vmatpush1.msra.mxu0 0.0
        %1805 = vmatprep.subr.mxu0 0.0
        %1806 = vmatpush1.msra.mxu0 0.0
        %1807 = vmatprep.subr.mxu0 0.0
        %1808 = vmatpush1.msra.mxu0 0.0
        %1809 = vmatprep.subr.mxu0 0.0
        %1810 = vmatpush1.msra.mxu0 0.0
        %1811 = vmatprep.subr.mxu0 0.0
        %1812 = vmatpush1.msra.mxu0 0.0
        %1813 = vmatprep.subr.mxu0 0.0
        %1814 = vmatpush1.msra.mxu0 0.0
        %1815 = vmatprep.subr.mxu0 0.0
        %1816 = vmatpush1.msra.mxu0 0.0
        %1817 = vmatprep.subr.mxu0 0.0
        %1818 = vmatpush1.msra.mxu0 0.0
        %1819 = vmatprep.subr.mxu0 0.0
        %1820 = vmatpush1.msra.mxu0 0.0
        %1821 = vmatprep.subr.mxu0 0.0
        %1822 = vmatpush1.msra.mxu0 0.0
        %1823 = vmatprep.subr.mxu0 0.0
        %1824 = vmatpush1.msra.mxu0 0.0
        %1825 = vmatprep.subr.mxu0 0.0
        %1826 = vmatpush1.msra.mxu0 0.0
        %1827 = vmatprep.subr.mxu0 0.0
        %1828 = vmatpush1.msra.mxu0 0.0
        %1829 = vmatprep.subr.mxu0 0.0
        %1830 = vmatpush1.msra.mxu0 0.0
        %1831 = vmatprep.subr.mxu0 0.0
        %1832 = vmatpush1.msra.mxu0 0.0
        %1833 = vmatprep.subr.mxu0 0.0
        %1834 = vmatpush1.msra.mxu0 0.0
        %1835 = vmatprep.subr.mxu0 0.0
        %1836 = vmatpush1.msra.mxu0 0.0
        %1837 = vmatprep.subr.mxu0 0.0
        %1838 = vmatpush1.msra.mxu0 0.0
        %1839 = vmatprep.subr.mxu0 0.0
        %1840 = vmatpush1.msra.mxu0 0.0
        %1841 = vmatprep.subr.mxu0 0.0
        %1842 = vmatpush1.msra.mxu0 0.0
        %1843 = vmatprep.mubr.f32.mxu0 0.0
        %1844 = vmatmul.mubr.f32.gmra.mrb[0].mxu0 %v1765
        %v1845 = vpop.f32.mrb[0].mxu0
        %v1846 = vadd.f32 0.0, %v1845
        %v1847 = vpop.f32.mrb[0].mxu0
        %1848 = vmatprep.mubr.f32.mxu0 0.0
        %1849 = vmatmul.mubr.f32.gmra.mrb[0].mxu0 %v1768
        %v1850 = vpop.f32.mrb[0].mxu0
        %v1851 = vadd.f32 0.0, %v1850
        %v1852 = vpop.f32.mrb[0].mxu0
        %1853 = vmatprep.mubr.f32.mxu0 0.0
        %1854 = vmatmul.mubr.f32.gmra.mrb[0].mxu0 %v1771
        %v1855 = vpop.f32.mrb[0].mxu0
        %v1856 = vadd.f32 0.0, %v1855
        %v1857 = vpop.f32.mrb[0].mxu0
        %1858 = vmatprep.mubr.f32.mxu0 0.0
        %1859 = vmatmul.mubr.f32.gmra.mrb[0].mxu0 %v1774
        %v1860 = vpop.f32.mrb[0].mxu0
        %v1861 = vadd.f32 0.0, %v1860
        %v1862 = vpop.f32.mrb[0].mxu0
        %1863 = vdwg.mxu0
        %v1864 = vadd.f32 %v1740, %v1846
        %v1865 = vadd.f32 %v1745, %v1851
        %v1866 = vadd.f32 %v1750, %v1856
        %v1867 = vadd.f32 %v1755, %v1861
        %s1868 = sadd.s32 %s335, 2
        %s1869 = smul.u32 %s1868, 16
        %s1870 = scalar_lea.vmem %s328, %s1869
        %v1871 = vld [vmem:[%s1870] sm:$0xff]
        %v1872 = vld [vmem:[%s1870 + $0x10] sm:$0xff]
        %v1873 = vld [vmem:[%s1870 + $0x20] sm:$0xff]
        %v1874 = vld [vmem:[%s1870 + $0x30] sm:$0xff]
        %s1875 = scalar_lea.vmem %s2, 52
        %v1876 = vld [vmem:[%s1875] sm:$0xf]
        %v1878 = vsel %vm387, %v1871, 0
        %v1881 = vsel %vm387, %v1872, 0
        %v1884 = vsel %vm387, %v1873, 0
        %v1887 = vsel %vm387, %v1874, 0
        %v1890 = vsel %vm400, %v1876, 0
        %1892 = vmatprep.subr.mxu0 0.0
        %1893 = vmatpush1.msra.mxu0 %v1890
        %1894 = vmatprep.subr.mxu0 0.0
        %1895 = vmatpush1.msra.mxu0 0.0
        %1896 = vmatprep.subr.mxu0 0.0
        %1897 = vmatpush1.msra.mxu0 0.0
        %1898 = vmatprep.subr.mxu0 0.0
        %1899 = vmatpush1.msra.mxu0 0.0
        %1900 = vmatprep.subr.mxu0 0.0
        %1901 = vmatpush1.msra.mxu0 0.0
        %1902 = vmatprep.subr.mxu0 0.0
        %1903 = vmatpush1.msra.mxu0 0.0
        %1904 = vmatprep.subr.mxu0 0.0
        %1905 = vmatpush1.msra.mxu0 0.0
        %1906 = vmatprep.subr.mxu0 0.0
        %1907 = vmatpush1.msra.mxu0 0.0
        %1908 = vmatprep.subr.mxu0 0.0
        %1909 = vmatpush1.msra.mxu0 0.0
        %1910 = vmatprep.subr.mxu0 0.0
        %1911 = vmatpush1.msra.mxu0 0.0
        %1912 = vmatprep.subr.mxu0 0.0
        %1913 = vmatpush1.msra.mxu0 0.0
        %1914 = vmatprep.subr.mxu0 0.0
        %1915 = vmatpush1.msra.mxu0 0.0
        %1916 = vmatprep.subr.mxu0 0.0
        %1917 = vmatpush1.msra.mxu0 0.0
        %1918 = vmatprep.subr.mxu0 0.0
        %1919 = vmatpush1.msra.mxu0 0.0
        %1920 = vmatprep.subr.mxu0 0.0
        %1921 = vmatpush1.msra.mxu0 0.0
        %1922 = vmatprep.subr.mxu0 0.0
        %1923 = vmatpush1.msra.mxu0 0.0
        %1924 = vmatprep.subr.mxu0 0.0
        %1925 = vmatpush1.msra.mxu0 0.0
        %1926 = vmatprep.subr.mxu0 0.0
        %1927 = vmatpush1.msra.mxu0 0.0
        %1928 = vmatprep.subr.mxu0 0.0
        %1929 = vmatpush1.msra.mxu0 0.0
        %1930 = vmatprep.subr.mxu0 0.0
        %1931 = vmatpush1.msra.mxu0 0.0
        %1932 = vmatprep.subr.mxu0 0.0
        %1933 = vmatpush1.msra.mxu0 0.0
        %1934 = vmatprep.subr.mxu0 0.0
        %1935 = vmatpush1.msra.mxu0 0.0
        %1936 = vmatprep.subr.mxu0 0.0
        %1937 = vmatpush1.msra.mxu0 0.0
        %1938 = vmatprep.subr.mxu0 0.0
        %1939 = vmatpush1.msra.mxu0 0.0
        %1940 = vmatprep.subr.mxu0 0.0
        %1941 = vmatpush1.msra.mxu0 0.0
        %1942 = vmatprep.subr.mxu0 0.0
        %1943 = vmatpush1.msra.mxu0 0.0
        %1944 = vmatprep.subr.mxu0 0.0
        %1945 = vmatpush1.msra.mxu0 0.0
        %1946 = vmatprep.subr.mxu0 0.0
        %1947 = vmatpush1.msra.mxu0 0.0
        %1948 = vmatprep.subr.mxu0 0.0
        %1949 = vmatpush1.msra.mxu0 0.0
        %1950 = vmatprep.subr.mxu0 0.0
        %1951 = vmatpush1.msra.mxu0 0.0
        %1952 = vmatprep.subr.mxu0 0.0
        %1953 = vmatpush1.msra.mxu0 0.0
        %1954 = vmatprep.subr.mxu0 0.0
        %1955 = vmatpush1.msra.mxu0 0.0
        %1956 = vmatprep.mubr.f32.mxu0 0.0
        %1957 = vmatmul.mubr.f32.gmra.mrb[0].mxu0 %v1878
        %v1958 = vpop.f32.mrb[0].mxu0
        %v1959 = vadd.f32 0.0, %v1958
        %v1960 = vpop.f32.mrb[0].mxu0
        %1961 = vmatprep.mubr.f32.mxu0 0.0
        %1962 = vmatmul.mubr.f32.gmra.mrb[0].mxu0 %v1881
        %v1963 = vpop.f32.mrb[0].mxu0
        %v1964 = vadd.f32 0.0, %v1963
        %v1965 = vpop.f32.mrb[0].mxu0
        %1966 = vmatprep.mubr.f32.mxu0 0.0
        %1967 = vmatmul.mubr.f32.gmra.mrb[0].mxu0 %v1884
        %v1968 = vpop.f32.mrb[0].mxu0
        %v1969 = vadd.f32 0.0, %v1968
        %v1970 = vpop.f32.mrb[0].mxu0
        %1971 = vmatprep.mubr.f32.mxu0 0.0
        %1972 = vmatmul.mubr.f32.gmra.mrb[0].mxu0 %v1887
        %v1973 = vpop.f32.mrb[0].mxu0
        %v1974 = vadd.f32 0.0, %v1973
        %v1975 = vpop.f32.mrb[0].mxu0
        %1976 = vdwg.mxu0
        %v1977 = vadd.f32 %v1864, %v1959
        %v1978 = vadd.f32 %v1865, %v1964
        %v1979 = vadd.f32 %v1866, %v1969
        %v1980 = vadd.f32 %v1867, %v1974
        %v1981 = vld [vmem:[%s1870 + $0x1] sm:$0xff]
        %v1982 = vld [vmem:[%s1870 + $0x11] sm:$0xff]
        %v1983 = vld [vmem:[%s1870 + $0x21] sm:$0xff]
        %v1984 = vld [vmem:[%s1870 + $0x31] sm:$0xff]
        %s1985 = scalar_lea.vmem %s2, 56
        %v1986 = vld [vmem:[%s1985] sm:$0xf]
        %v1988 = vsel %vm387, %v1981, 0
        %v1991 = vsel %vm387, %v1982, 0
        %v1994 = vsel %vm387, %v1983, 0
        %v1997 = vsel %vm387, %v1984, 0
        %v2000 = vsel %vm400, %v1986, 0
        %2002 = vmatprep.subr.mxu0 0.0
        %2003 = vmatpush1.msra.mxu0 %v2000
        %2004 = vmatprep.subr.mxu0 0.0
        %2005 = vmatpush1.msra.mxu0 0.0
        %2006 = vmatprep.subr.mxu0 0.0
        %2007 = vmatpush1.msra.mxu0 0.0
        %2008 = vmatprep.subr.mxu0 0.0
        %2009 = vmatpush1.msra.mxu0 0.0
        %2010 = vmatprep.subr.mxu0 0.0
        %2011 = vmatpush1.msra.mxu0 0.0
        %2012 = vmatprep.subr.mxu0 0.0
        %2013 = vmatpush1.msra.mxu0 0.0
        %2014 = vmatprep.subr.mxu0 0.0
        %2015 = vmatpush1.msra.mxu0 0.0
        %2016 = vmatprep.subr.mxu0 0.0
        %2017 = vmatpush1.msra.mxu0 0.0
        %2018 = vmatprep.subr.mxu0 0.0
        %2019 = vmatpush1.msra.mxu0 0.0
        %2020 = vmatprep.subr.mxu0 0.0
        %2021 = vmatpush1.msra.mxu0 0.0
        %2022 = vmatprep.subr.mxu0 0.0
        %2023 = vmatpush1.msra.mxu0 0.0
        %2024 = vmatprep.subr.mxu0 0.0
        %2025 = vmatpush1.msra.mxu0 0.0
        %2026 = vmatprep.subr.mxu0 0.0
        %2027 = vmatpush1.msra.mxu0 0.0
        %2028 = vmatprep.subr.mxu0 0.0
        %2029 = vmatpush1.msra.mxu0 0.0
        %2030 = vmatprep.subr.mxu0 0.0
        %2031 = vmatpush1.msra.mxu0 0.0
        %2032 = vmatprep.subr.mxu0 0.0
        %2033 = vmatpush1.msra.mxu0 0.0
        %2034 = vmatprep.subr.mxu0 0.0
        %2035 = vmatpush1.msra.mxu0 0.0
        %2036 = vmatprep.subr.mxu0 0.0
        %2037 = vmatpush1.msra.mxu0 0.0
        %2038 = vmatprep.subr.mxu0 0.0
        %2039 = vmatpush1.msra.mxu0 0.0
        %2040 = vmatprep.subr.mxu0 0.0
        %2041 = vmatpush1.msra.mxu0 0.0
        %2042 = vmatprep.subr.mxu0 0.0
        %2043 = vmatpush1.msra.mxu0 0.0
        %2044 = vmatprep.subr.mxu0 0.0
        %2045 = vmatpush1.msra.mxu0 0.0
        %2046 = vmatprep.subr.mxu0 0.0
        %2047 = vmatpush1.msra.mxu0 0.0
        %2048 = vmatprep.subr.mxu0 0.0
        %2049 = vmatpush1.msra.mxu0 0.0
        %2050 = vmatprep.subr.mxu0 0.0
        %2051 = vmatpush1.msra.mxu0 0.0
        %2052 = vmatprep.subr.mxu0 0.0
        %2053 = vmatpush1.msra.mxu0 0.0
        %2054 = vmatprep.subr.mxu0 0.0
        %2055 = vmatpush1.msra.mxu0 0.0
        %2056 = vmatprep.subr.mxu0 0.0
        %2057 = vmatpush1.msra.mxu0 0.0
        %2058 = vmatprep.subr.mxu0 0.0
        %2059 = vmatpush1.msra.mxu0 0.0
        %2060 = vmatprep.subr.mxu0 0.0
        %2061 = vmatpush1.msra.mxu0 0.0
        %2062 = vmatprep.subr.mxu0 0.0
        %2063 = vmatpush1.msra.mxu0 0.0
        %2064 = vmatprep.subr.mxu0 0.0
        %2065 = vmatpush1.msra.mxu0 0.0
        %2066 = vmatprep.mubr.f32.mxu0 0.0
        %2067 = vmatmul.mubr.f32.gmra.mrb[0].mxu0 %v1988
        %v2068 = vpop.f32.mrb[0].mxu0
        %v2069 = vadd.f32 0.0, %v2068
        %v2070 = vpop.f32.mrb[0].mxu0
        %2071 = vmatprep.mubr.f32.mxu0 0.0
        %2072 = vmatmul.mubr.f32.gmra.mrb[0].mxu0 %v1991
        %v2073 = vpop.f32.mrb[0].mxu0
        %v2074 = vadd.f32 0.0, %v2073
        %v2075 = vpop.f32.mrb[0].mxu0
        %2076 = vmatprep.mubr.f32.mxu0 0.0
        %2077 = vmatmul.mubr.f32.gmra.mrb[0].mxu0 %v1994
        %v2078 = vpop.f32.mrb[0].mxu0
        %v2079 = vadd.f32 0.0, %v2078
        %v2080 = vpop.f32.mrb[0].mxu0
        %2081 = vmatprep.mubr.f32.mxu0 0.0
        %2082 = vmatmul.mubr.f32.gmra.mrb[0].mxu0 %v1997
        %v2083 = vpop.f32.mrb[0].mxu0
        %v2084 = vadd.f32 0.0, %v2083
        %v2085 = vpop.f32.mrb[0].mxu0
        %2086 = vdwg.mxu0
        %v2087 = vadd.f32 %v1977, %v2069
        %v2088 = vadd.f32 %v1978, %v2074
        %v2089 = vadd.f32 %v1979, %v2079
        %v2090 = vadd.f32 %v1980, %v2084
        %v2091 = vadd.f32 %v2087, %v926
        %v2092 = vadd.f32 %v2088, %v926
        %v2093 = vadd.f32 %v2089, %v926
        %v2094 = vadd.f32 %v2090, %v926
        %v2095 = vmax.f32 %v2091, 0.0
        %v2096 = vmax.f32 %v2092, 0.0
        %v2097 = vmax.f32 %v2093, 0.0
        %v2098 = vmax.f32 %v2094, 0.0
        %s2099 = scalar_lea.vmem [#allocation2], 128
        %2100 = vst.msk [vmem:[%s2099 + $0x1] sm:$0xff] %vm387, %v2095
        %2101 = vst.msk [vmem:[%s2099 + $0x11] sm:$0xff] %vm387, %v2096
        %2102 = vst.msk [vmem:[%s2099 + $0x21] sm:$0xff] %vm387, %v2097
        %2103 = vst.msk [vmem:[%s2099 + $0x31] sm:$0xff] %vm387, %v2098
        %2108 = vrot.lane.b32.xlu0 %v2091, 124
        %v2109 = vpop.permute.xlu0 %2108
        %2110 = vrot.lane.b32.xlu0 %v2092, 124
        %v2111 = vpop.permute.xlu0 %2110
        %2112 = vrot.lane.b32.xlu0 %v2093, 124
        %v2113 = vpop.permute.xlu0 %2112
        %2114 = vrot.lane.b32.xlu0 %v2094, 124
        %v2115 = vpop.permute.xlu0 %2114
        %s2120 = scalar_lea.vmem [#allocation3], 64
        %2121 = vst.msk [vmem:[%s2120] sm:$0xff] %vm387, %v2109
        %2122 = vst.msk [vmem:[%s2120 + $0x8] sm:$0xff] %vm387, %v2111
        %2123 = vst.msk [vmem:[%s2120 + $0x10] sm:$0xff] %vm387, %v2113
        %2124 = vst.msk [vmem:[%s2120 + $0x18] sm:$0xff] %vm387, %v2115
        %v2125 = vld [vmem:[%s1545] sm:$0xff]
        %v2126 = vld [vmem:[%s1545 + $0x10] sm:$0xff]
        %v2127 = vld [vmem:[%s1545 + $0x20] sm:$0xff]
        %v2128 = vld [vmem:[%s1545 + $0x30] sm:$0xff]
        %s2129 = scalar_lea.vmem %s2, 60
        %v2130 = vld [vmem:[%s2129] sm:$0xf]
        %v2131 = vld [vmem:[%s701 + $0x1] sm:$0xff]
        %v2132 = vld [vmem:[%s701 + $0x11] sm:$0xff]
        %v2133 = vld [vmem:[%s701 + $0x21] sm:$0xff]
        %v2134 = vld [vmem:[%s701 + $0x31] sm:$0xff]
        %s2135 = scalar_lea.vmem %s2, 64
        %v2136 = vld [vmem:[%s2135] sm:$0xf]
        %v2138 = vsel %vm387, %v2131, 0
        %v2141 = vsel %vm387, %v2132, 0
        %v2144 = vsel %vm387, %v2133, 0
        %v2147 = vsel %vm387, %v2134, 0
        %v2150 = vsel %vm400, %v2136, 0
        %2152 = vmatprep.subr.mxu0 0.0
        %2153 = vmatpush1.msra.mxu0 %v2150
        %2154 = vmatprep.subr.mxu0 0.0
        %2155 = vmatpush1.msra.mxu0 0.0
        %2156 = vmatprep.subr.mxu0 0.0
        %2157 = vmatpush1.msra.mxu0 0.0
        %2158 = vmatprep.subr.mxu0 0.0
        %2159 = vmatpush1.msra.mxu0 0.0
        %2160 = vmatprep.subr.mxu0 0.0
        %2161 = vmatpush1.msra.mxu0 0.0
        %2162 = vmatprep.subr.mxu0 0.0
        %2163 = vmatpush1.msra.mxu0 0.0
        %2164 = vmatprep.subr.mxu0 0.0
        %2165 = vmatpush1.msra.mxu0 0.0
        %2166 = vmatprep.subr.mxu0 0.0
        %2167 = vmatpush1.msra.mxu0 0.0
        %2168 = vmatprep.subr.mxu0 0.0
        %2169 = vmatpush1.msra.mxu0 0.0
        %2170 = vmatprep.subr.mxu0 0.0
        %2171 = vmatpush1.msra.mxu0 0.0
        %2172 = vmatprep.subr.mxu0 0.0
        %2173 = vmatpush1.msra.mxu0 0.0
        %2174 = vmatprep.subr.mxu0 0.0
        %2175 = vmatpush1.msra.mxu0 0.0
        %2176 = vmatprep.subr.mxu0 0.0
        %2177 = vmatpush1.msra.mxu0 0.0
        %2178 = vmatprep.subr.mxu0 0.0
        %2179 = vmatpush1.msra.mxu0 0.0
        %2180 = vmatprep.subr.mxu0 0.0
        %2181 = vmatpush1.msra.mxu0 0.0
        %2182 = vmatprep.subr.mxu0 0.0
        %2183 = vmatpush1.msra.mxu0 0.0
        %2184 = vmatprep.subr.mxu0 0.0
        %2185 = vmatpush1.msra.mxu0 0.0
        %2186 = vmatprep.subr.mxu0 0.0
        %2187 = vmatpush1.msra.mxu0 0.0
        %2188 = vmatprep.subr.mxu0 0.0
        %2189 = vmatpush1.msra.mxu0 0.0
        %2190 = vmatprep.subr.mxu0 0.0
        %2191 = vmatpush1.msra.mxu0 0.0
        %2192 = vmatprep.subr.mxu0 0.0
        %2193 = vmatpush1.msra.mxu0 0.0
        %2194 = vmatprep.subr.mxu0 0.0
        %2195 = vmatpush1.msra.mxu0 0.0
        %2196 = vmatprep.subr.mxu0 0.0
        %2197 = vmatpush1.msra.mxu0 0.0
        %2198 = vmatprep.subr.mxu0 0.0
        %2199 = vmatpush1.msra.mxu0 0.0
        %2200 = vmatprep.subr.mxu0 0.0
        %2201 = vmatpush1.msra.mxu0 0.0
        %2202 = vmatprep.subr.mxu0 0.0
        %2203 = vmatpush1.msra.mxu0 0.0
        %2204 = vmatprep.subr.mxu0 0.0
        %2205 = vmatpush1.msra.mxu0 0.0
        %2206 = vmatprep.subr.mxu0 0.0
        %2207 = vmatpush1.msra.mxu0 0.0
        %2208 = vmatprep.subr.mxu0 0.0
        %2209 = vmatpush1.msra.mxu0 0.0
        %2210 = vmatprep.subr.mxu0 0.0
        %2211 = vmatpush1.msra.mxu0 0.0
        %2212 = vmatprep.subr.mxu0 0.0
        %2213 = vmatpush1.msra.mxu0 0.0
        %2214 = vmatprep.subr.mxu0 0.0
        %2215 = vmatpush1.msra.mxu0 0.0
        %2216 = vmatprep.mubr.f32.mxu0 0.0
        %2217 = vmatmul.mubr.f32.gmra.mrb[0].mxu0 %v2138
        %v2218 = vpop.f32.mrb[0].mxu0
        %v2219 = vadd.f32 0.0, %v2218
        %v2220 = vpop.f32.mrb[0].mxu0
        %2221 = vmatprep.mubr.f32.mxu0 0.0
        %2222 = vmatmul.mubr.f32.gmra.mrb[0].mxu0 %v2141
        %v2223 = vpop.f32.mrb[0].mxu0
        %v2224 = vadd.f32 0.0, %v2223
        %v2225 = vpop.f32.mrb[0].mxu0
        %2226 = vmatprep.mubr.f32.mxu0 0.0
        %2227 = vmatmul.mubr.f32.gmra.mrb[0].mxu0 %v2144
        %v2228 = vpop.f32.mrb[0].mxu0
        %v2229 = vadd.f32 0.0, %v2228
        %v2230 = vpop.f32.mrb[0].mxu0
        %2231 = vmatprep.mubr.f32.mxu0 0.0
        %2232 = vmatmul.mubr.f32.gmra.mrb[0].mxu0 %v2147
        %v2233 = vpop.f32.mrb[0].mxu0
        %v2234 = vadd.f32 0.0, %v2233
        %v2235 = vpop.f32.mrb[0].mxu0
        %2236 = vdwg.mxu0
        %2241 = vrot.lane.b32.xlu0 %v2125, 124
        %v2242 = vpop.permute.xlu0 %2241
        %2243 = vrot.lane.b32.xlu0 %v2126, 124
        %v2244 = vpop.permute.xlu0 %2243
        %2245 = vrot.lane.b32.xlu0 %v2127, 124
        %v2246 = vpop.permute.xlu0 %2245
        %2247 = vrot.lane.b32.xlu0 %v2128, 124
        %v2248 = vpop.permute.xlu0 %2247
        %v2249 = vsel %vm387, %v2242, 0
        %v2251 = vsel %vm387, %v2244, 0
        %v2253 = vsel %vm387, %v2246, 0
        %v2255 = vsel %vm387, %v2248, 0
        %v2258 = vsel %vm400, %v2130, 0
        %2260 = vmatprep.subr.mxu0 0.0
        %2261 = vmatpush1.msra.mxu0 %v2258
        %2262 = vmatprep.subr.mxu0 0.0
        %2263 = vmatpush1.msra.mxu0 0.0
        %2264 = vmatprep.subr.mxu0 0.0
        %2265 = vmatpush1.msra.mxu0 0.0
        %2266 = vmatprep.subr.mxu0 0.0
        %2267 = vmatpush1.msra.mxu0 0.0
        %2268 = vmatprep.subr.mxu0 0.0
        %2269 = vmatpush1.msra.mxu0 0.0
        %2270 = vmatprep.subr.mxu0 0.0
        %2271 = vmatpush1.msra.mxu0 0.0
        %2272 = vmatprep.subr.mxu0 0.0
        %2273 = vmatpush1.msra.mxu0 0.0
        %2274 = vmatprep.subr.mxu0 0.0
        %2275 = vmatpush1.msra.mxu0 0.0
        %2276 = vmatprep.subr.mxu0 0.0
        %2277 = vmatpush1.msra.mxu0 0.0
        %2278 = vmatprep.subr.mxu0 0.0
        %2279 = vmatpush1.msra.mxu0 0.0
        %2280 = vmatprep.subr.mxu0 0.0
        %2281 = vmatpush1.msra.mxu0 0.0
        %2282 = vmatprep.subr.mxu0 0.0
        %2283 = vmatpush1.msra.mxu0 0.0
        %2284 = vmatprep.subr.mxu0 0.0
        %2285 = vmatpush1.msra.mxu0 0.0
        %2286 = vmatprep.subr.mxu0 0.0
        %2287 = vmatpush1.msra.mxu0 0.0
        %2288 = vmatprep.subr.mxu0 0.0
        %2289 = vmatpush1.msra.mxu0 0.0
        %2290 = vmatprep.subr.mxu0 0.0
        %2291 = vmatpush1.msra.mxu0 0.0
        %2292 = vmatprep.subr.mxu0 0.0
        %2293 = vmatpush1.msra.mxu0 0.0
        %2294 = vmatprep.subr.mxu0 0.0
        %2295 = vmatpush1.msra.mxu0 0.0
        %2296 = vmatprep.subr.mxu0 0.0
        %2297 = vmatpush1.msra.mxu0 0.0
        %2298 = vmatprep.subr.mxu0 0.0
        %2299 = vmatpush1.msra.mxu0 0.0
        %2300 = vmatprep.subr.mxu0 0.0
        %2301 = vmatpush1.msra.mxu0 0.0
        %2302 = vmatprep.subr.mxu0 0.0
        %2303 = vmatpush1.msra.mxu0 0.0
        %2304 = vmatprep.subr.mxu0 0.0
        %2305 = vmatpush1.msra.mxu0 0.0
        %2306 = vmatprep.subr.mxu0 0.0
        %2307 = vmatpush1.msra.mxu0 0.0
        %2308 = vmatprep.subr.mxu0 0.0
        %2309 = vmatpush1.msra.mxu0 0.0
        %2310 = vmatprep.subr.mxu0 0.0
        %2311 = vmatpush1.msra.mxu0 0.0
        %2312 = vmatprep.subr.mxu0 0.0
        %2313 = vmatpush1.msra.mxu0 0.0
        %2314 = vmatprep.subr.mxu0 0.0
        %2315 = vmatpush1.msra.mxu0 0.0
        %2316 = vmatprep.subr.mxu0 0.0
        %2317 = vmatpush1.msra.mxu0 0.0
        %2318 = vmatprep.subr.mxu0 0.0
        %2319 = vmatpush1.msra.mxu0 0.0
        %2320 = vmatprep.subr.mxu0 0.0
        %2321 = vmatpush1.msra.mxu0 0.0
        %2322 = vmatprep.subr.mxu0 0.0
        %2323 = vmatpush1.msra.mxu0 0.0
        %2324 = vmatprep.mubr.f32.mxu0 0.0
        %2325 = vmatmul.mubr.f32.gmra.mrb[0].mxu0 %v2249
        %v2326 = vpop.f32.mrb[0].mxu0
        %v2327 = vadd.f32 %v2219, %v2326
        %v2328 = vpop.f32.mrb[0].mxu0
        %2329 = vmatprep.mubr.f32.mxu0 0.0
        %2330 = vmatmul.mubr.f32.gmra.mrb[0].mxu0 %v2251
        %v2331 = vpop.f32.mrb[0].mxu0
        %v2332 = vadd.f32 %v2224, %v2331
        %v2333 = vpop.f32.mrb[0].mxu0
        %2334 = vmatprep.mubr.f32.mxu0 0.0
        %2335 = vmatmul.mubr.f32.gmra.mrb[0].mxu0 %v2253
        %v2336 = vpop.f32.mrb[0].mxu0
        %v2337 = vadd.f32 %v2229, %v2336
        %v2338 = vpop.f32.mrb[0].mxu0
        %2339 = vmatprep.mubr.f32.mxu0 0.0
        %2340 = vmatmul.mubr.f32.gmra.mrb[0].mxu0 %v2255
        %v2341 = vpop.f32.mrb[0].mxu0
        %v2342 = vadd.f32 %v2234, %v2341
        %v2343 = vpop.f32.mrb[0].mxu0
        %2344 = vdwg.mxu0
        %v2345 = vld [vmem:[%s701 + $0x2] sm:$0xff]
        %v2346 = vld [vmem:[%s701 + $0x12] sm:$0xff]
        %v2347 = vld [vmem:[%s701 + $0x22] sm:$0xff]
        %v2348 = vld [vmem:[%s701 + $0x32] sm:$0xff]
        %s2349 = scalar_lea.vmem %s2, 68
        %v2350 = vld [vmem:[%s2349] sm:$0xf]
        %v2352 = vsel %vm387, %v2345, 0
        %v2355 = vsel %vm387, %v2346, 0
        %v2358 = vsel %vm387, %v2347, 0
        %v2361 = vsel %vm387, %v2348, 0
        %v2364 = vsel %vm400, %v2350, 0
        %2366 = vmatprep.subr.mxu0 0.0
        %2367 = vmatpush1.msra.mxu0 %v2364
        %2368 = vmatprep.subr.mxu0 0.0
        %2369 = vmatpush1.msra.mxu0 0.0
        %2370 = vmatprep.subr.mxu0 0.0
        %2371 = vmatpush1.msra.mxu0 0.0
        %2372 = vmatprep.subr.mxu0 0.0
        %2373 = vmatpush1.msra.mxu0 0.0
        %2374 = vmatprep.subr.mxu0 0.0
        %2375 = vmatpush1.msra.mxu0 0.0
        %2376 = vmatprep.subr.mxu0 0.0
        %2377 = vmatpush1.msra.mxu0 0.0
        %2378 = vmatprep.subr.mxu0 0.0
        %2379 = vmatpush1.msra.mxu0 0.0
        %2380 = vmatprep.subr.mxu0 0.0
        %2381 = vmatpush1.msra.mxu0 0.0
        %2382 = vmatprep.subr.mxu0 0.0
        %2383 = vmatpush1.msra.mxu0 0.0
        %2384 = vmatprep.subr.mxu0 0.0
        %2385 = vmatpush1.msra.mxu0 0.0
        %2386 = vmatprep.subr.mxu0 0.0
        %2387 = vmatpush1.msra.mxu0 0.0
        %2388 = vmatprep.subr.mxu0 0.0
        %2389 = vmatpush1.msra.mxu0 0.0
        %2390 = vmatprep.subr.mxu0 0.0
        %2391 = vmatpush1.msra.mxu0 0.0
        %2392 = vmatprep.subr.mxu0 0.0
        %2393 = vmatpush1.msra.mxu0 0.0
        %2394 = vmatprep.subr.mxu0 0.0
        %2395 = vmatpush1.msra.mxu0 0.0
        %2396 = vmatprep.subr.mxu0 0.0
        %2397 = vmatpush1.msra.mxu0 0.0
        %2398 = vmatprep.subr.mxu0 0.0
        %2399 = vmatpush1.msra.mxu0 0.0
        %2400 = vmatprep.subr.mxu0 0.0
        %2401 = vmatpush1.msra.mxu0 0.0
        %2402 = vmatprep.subr.mxu0 0.0
        %2403 = vmatpush1.msra.mxu0 0.0
        %2404 = vmatprep.subr.mxu0 0.0
        %2405 = vmatpush1.msra.mxu0 0.0
        %2406 = vmatprep.subr.mxu0 0.0
        %2407 = vmatpush1.msra.mxu0 0.0
        %2408 = vmatprep.subr.mxu0 0.0
        %2409 = vmatpush1.msra.mxu0 0.0
        %2410 = vmatprep.subr.mxu0 0.0
        %2411 = vmatpush1.msra.mxu0 0.0
        %2412 = vmatprep.subr.mxu0 0.0
        %2413 = vmatpush1.msra.mxu0 0.0
        %2414 = vmatprep.subr.mxu0 0.0
        %2415 = vmatpush1.msra.mxu0 0.0
        %2416 = vmatprep.subr.mxu0 0.0
        %2417 = vmatpush1.msra.mxu0 0.0
        %2418 = vmatprep.subr.mxu0 0.0
        %2419 = vmatpush1.msra.mxu0 0.0
        %2420 = vmatprep.subr.mxu0 0.0
        %2421 = vmatpush1.msra.mxu0 0.0
        %2422 = vmatprep.subr.mxu0 0.0
        %2423 = vmatpush1.msra.mxu0 0.0
        %2424 = vmatprep.subr.mxu0 0.0
        %2425 = vmatpush1.msra.mxu0 0.0
        %2426 = vmatprep.subr.mxu0 0.0
        %2427 = vmatpush1.msra.mxu0 0.0
        %2428 = vmatprep.subr.mxu0 0.0
        %2429 = vmatpush1.msra.mxu0 0.0
        %2430 = vmatprep.mubr.f32.mxu0 0.0
        %2431 = vmatmul.mubr.f32.gmra.mrb[0].mxu0 %v2352
        %v2432 = vpop.f32.mrb[0].mxu0
        %v2433 = vadd.f32 0.0, %v2432
        %v2434 = vpop.f32.mrb[0].mxu0
        %2435 = vmatprep.mubr.f32.mxu0 0.0
        %2436 = vmatmul.mubr.f32.gmra.mrb[0].mxu0 %v2355
        %v2437 = vpop.f32.mrb[0].mxu0
        %v2438 = vadd.f32 0.0, %v2437
        %v2439 = vpop.f32.mrb[0].mxu0
        %2440 = vmatprep.mubr.f32.mxu0 0.0
        %2441 = vmatmul.mubr.f32.gmra.mrb[0].mxu0 %v2358
        %v2442 = vpop.f32.mrb[0].mxu0
        %v2443 = vadd.f32 0.0, %v2442
        %v2444 = vpop.f32.mrb[0].mxu0
        %2445 = vmatprep.mubr.f32.mxu0 0.0
        %2446 = vmatmul.mubr.f32.gmra.mrb[0].mxu0 %v2361
        %v2447 = vpop.f32.mrb[0].mxu0
        %v2448 = vadd.f32 0.0, %v2447
        %v2449 = vpop.f32.mrb[0].mxu0
        %2450 = vdwg.mxu0
        %v2451 = vadd.f32 %v2327, %v2433
        %v2452 = vadd.f32 %v2332, %v2438
        %v2453 = vadd.f32 %v2337, %v2443
        %v2454 = vadd.f32 %v2342, %v2448
        %v2455 = vld [vmem:[%s1870 + $0x1] sm:$0xff]
        %v2456 = vld [vmem:[%s1870 + $0x11] sm:$0xff]
        %v2457 = vld [vmem:[%s1870 + $0x21] sm:$0xff]
        %v2458 = vld [vmem:[%s1870 + $0x31] sm:$0xff]
        %s2459 = scalar_lea.vmem %s2, 72
        %v2460 = vld [vmem:[%s2459] sm:$0xf]
        %v2462 = vsel %vm387, %v2455, 0
        %v2465 = vsel %vm387, %v2456, 0
        %v2468 = vsel %vm387, %v2457, 0
        %v2471 = vsel %vm387, %v2458, 0
        %v2474 = vsel %vm400, %v2460, 0
        %2476 = vmatprep.subr.mxu0 0.0
        %2477 = vmatpush1.msra.mxu0 %v2474
        %2478 = vmatprep.subr.mxu0 0.0
        %2479 = vmatpush1.msra.mxu0 0.0
        %2480 = vmatprep.subr.mxu0 0.0
        %2481 = vmatpush1.msra.mxu0 0.0
        %2482 = vmatprep.subr.mxu0 0.0
        %2483 = vmatpush1.msra.mxu0 0.0
        %2484 = vmatprep.subr.mxu0 0.0
        %2485 = vmatpush1.msra.mxu0 0.0
        %2486 = vmatprep.subr.mxu0 0.0
        %2487 = vmatpush1.msra.mxu0 0.0
        %2488 = vmatprep.subr.mxu0 0.0
        %2489 = vmatpush1.msra.mxu0 0.0
        %2490 = vmatprep.subr.mxu0 0.0
        %2491 = vmatpush1.msra.mxu0 0.0
        %2492 = vmatprep.subr.mxu0 0.0
        %2493 = vmatpush1.msra.mxu0 0.0
        %2494 = vmatprep.subr.mxu0 0.0
        %2495 = vmatpush1.msra.mxu0 0.0
        %2496 = vmatprep.subr.mxu0 0.0
        %2497 = vmatpush1.msra.mxu0 0.0
        %2498 = vmatprep.subr.mxu0 0.0
        %2499 = vmatpush1.msra.mxu0 0.0
        %2500 = vmatprep.subr.mxu0 0.0
        %2501 = vmatpush1.msra.mxu0 0.0
        %2502 = vmatprep.subr.mxu0 0.0
        %2503 = vmatpush1.msra.mxu0 0.0
        %2504 = vmatprep.subr.mxu0 0.0
        %2505 = vmatpush1.msra.mxu0 0.0
        %2506 = vmatprep.subr.mxu0 0.0
        %2507 = vmatpush1.msra.mxu0 0.0
        %2508 = vmatprep.subr.mxu0 0.0
        %2509 = vmatpush1.msra.mxu0 0.0
        %2510 = vmatprep.subr.mxu0 0.0
        %2511 = vmatpush1.msra.mxu0 0.0
        %2512 = vmatprep.subr.mxu0 0.0
        %2513 = vmatpush1.msra.mxu0 0.0
        %2514 = vmatprep.subr.mxu0 0.0
        %2515 = vmatpush1.msra.mxu0 0.0
        %2516 = vmatprep.subr.mxu0 0.0
        %2517 = vmatpush1.msra.mxu0 0.0
        %2518 = vmatprep.subr.mxu0 0.0
        %2519 = vmatpush1.msra.mxu0 0.0
        %2520 = vmatprep.subr.mxu0 0.0
        %2521 = vmatpush1.msra.mxu0 0.0
        %2522 = vmatprep.subr.mxu0 0.0
        %2523 = vmatpush1.msra.mxu0 0.0
        %2524 = vmatprep.subr.mxu0 0.0
        %2525 = vmatpush1.msra.mxu0 0.0
        %2526 = vmatprep.subr.mxu0 0.0
        %2527 = vmatpush1.msra.mxu0 0.0
        %2528 = vmatprep.subr.mxu0 0.0
        %2529 = vmatpush1.msra.mxu0 0.0
        %2530 = vmatprep.subr.mxu0 0.0
        %2531 = vmatpush1.msra.mxu0 0.0
        %2532 = vmatprep.subr.mxu0 0.0
        %2533 = vmatpush1.msra.mxu0 0.0
        %2534 = vmatprep.subr.mxu0 0.0
        %2535 = vmatpush1.msra.mxu0 0.0
        %2536 = vmatprep.subr.mxu0 0.0
        %2537 = vmatpush1.msra.mxu0 0.0
        %2538 = vmatprep.subr.mxu0 0.0
        %2539 = vmatpush1.msra.mxu0 0.0
        %2540 = vmatprep.mubr.f32.mxu0 0.0
        %2541 = vmatmul.mubr.f32.gmra.mrb[0].mxu0 %v2462
        %v2542 = vpop.f32.mrb[0].mxu0
        %v2543 = vadd.f32 0.0, %v2542
        %v2544 = vpop.f32.mrb[0].mxu0
        %2545 = vmatprep.mubr.f32.mxu0 0.0
        %2546 = vmatmul.mubr.f32.gmra.mrb[0].mxu0 %v2465
        %v2547 = vpop.f32.mrb[0].mxu0
        %v2548 = vadd.f32 0.0, %v2547
        %v2549 = vpop.f32.mrb[0].mxu0
        %2550 = vmatprep.mubr.f32.mxu0 0.0
        %2551 = vmatmul.mubr.f32.gmra.mrb[0].mxu0 %v2468
        %v2552 = vpop.f32.mrb[0].mxu0
        %v2553 = vadd.f32 0.0, %v2552
        %v2554 = vpop.f32.mrb[0].mxu0
        %2555 = vmatprep.mubr.f32.mxu0 0.0
        %2556 = vmatmul.mubr.f32.gmra.mrb[0].mxu0 %v2471
        %v2557 = vpop.f32.mrb[0].mxu0
        %v2558 = vadd.f32 0.0, %v2557
        %v2559 = vpop.f32.mrb[0].mxu0
        %2560 = vdwg.mxu0
        %v2561 = vadd.f32 %v2451, %v2543
        %v2562 = vadd.f32 %v2452, %v2548
        %v2563 = vadd.f32 %v2453, %v2553
        %v2564 = vadd.f32 %v2454, %v2558
        %v2565 = vld [vmem:[%s1870 + $0x2] sm:$0xff]
        %v2566 = vld [vmem:[%s1870 + $0x12] sm:$0xff]
        %v2567 = vld [vmem:[%s1870 + $0x22] sm:$0xff]
        %v2568 = vld [vmem:[%s1870 + $0x32] sm:$0xff]
        %s2569 = scalar_lea.vmem %s2, 76
        %v2570 = vld [vmem:[%s2569] sm:$0xf]
        %v2572 = vsel %vm387, %v2565, 0
        %v2575 = vsel %vm387, %v2566, 0
        %v2578 = vsel %vm387, %v2567, 0
        %v2581 = vsel %vm387, %v2568, 0
        %v2584 = vsel %vm400, %v2570, 0
        %2586 = vmatprep.subr.mxu0 0.0
        %2587 = vmatpush1.msra.mxu0 %v2584
        %2588 = vmatprep.subr.mxu0 0.0
        %2589 = vmatpush1.msra.mxu0 0.0
        %2590 = vmatprep.subr.mxu0 0.0
        %2591 = vmatpush1.msra.mxu0 0.0
        %2592 = vmatprep.subr.mxu0 0.0
        %2593 = vmatpush1.msra.mxu0 0.0
        %2594 = vmatprep.subr.mxu0 0.0
        %2595 = vmatpush1.msra.mxu0 0.0
        %2596 = vmatprep.subr.mxu0 0.0
        %2597 = vmatpush1.msra.mxu0 0.0
        %2598 = vmatprep.subr.mxu0 0.0
        %2599 = vmatpush1.msra.mxu0 0.0
        %2600 = vmatprep.subr.mxu0 0.0
        %2601 = vmatpush1.msra.mxu0 0.0
        %2602 = vmatprep.subr.mxu0 0.0
        %2603 = vmatpush1.msra.mxu0 0.0
        %2604 = vmatprep.subr.mxu0 0.0
        %2605 = vmatpush1.msra.mxu0 0.0
        %2606 = vmatprep.subr.mxu0 0.0
        %2607 = vmatpush1.msra.mxu0 0.0
        %2608 = vmatprep.subr.mxu0 0.0
        %2609 = vmatpush1.msra.mxu0 0.0
        %2610 = vmatprep.subr.mxu0 0.0
        %2611 = vmatpush1.msra.mxu0 0.0
        %2612 = vmatprep.subr.mxu0 0.0
        %2613 = vmatpush1.msra.mxu0 0.0
        %2614 = vmatprep.subr.mxu0 0.0
        %2615 = vmatpush1.msra.mxu0 0.0
        %2616 = vmatprep.subr.mxu0 0.0
        %2617 = vmatpush1.msra.mxu0 0.0
        %2618 = vmatprep.subr.mxu0 0.0
        %2619 = vmatpush1.msra.mxu0 0.0
        %2620 = vmatprep.subr.mxu0 0.0
        %2621 = vmatpush1.msra.mxu0 0.0
        %2622 = vmatprep.subr.mxu0 0.0
        %2623 = vmatpush1.msra.mxu0 0.0
        %2624 = vmatprep.subr.mxu0 0.0
        %2625 = vmatpush1.msra.mxu0 0.0
        %2626 = vmatprep.subr.mxu0 0.0
        %2627 = vmatpush1.msra.mxu0 0.0
        %2628 = vmatprep.subr.mxu0 0.0
        %2629 = vmatpush1.msra.mxu0 0.0
        %2630 = vmatprep.subr.mxu0 0.0
        %2631 = vmatpush1.msra.mxu0 0.0
        %2632 = vmatprep.subr.mxu0 0.0
        %2633 = vmatpush1.msra.mxu0 0.0
        %2634 = vmatprep.subr.mxu0 0.0
        %2635 = vmatpush1.msra.mxu0 0.0
        %2636 = vmatprep.subr.mxu0 0.0
        %2637 = vmatpush1.msra.mxu0 0.0
        %2638 = vmatprep.subr.mxu0 0.0
        %2639 = vmatpush1.msra.mxu0 0.0
        %2640 = vmatprep.subr.mxu0 0.0
        %2641 = vmatpush1.msra.mxu0 0.0
        %2642 = vmatprep.subr.mxu0 0.0
        %2643 = vmatpush1.msra.mxu0 0.0
        %2644 = vmatprep.subr.mxu0 0.0
        %2645 = vmatpush1.msra.mxu0 0.0
        %2646 = vmatprep.subr.mxu0 0.0
        %2647 = vmatpush1.msra.mxu0 0.0
        %2648 = vmatprep.subr.mxu0 0.0
        %2649 = vmatpush1.msra.mxu0 0.0
        %2650 = vmatprep.mubr.f32.mxu0 0.0
        %2651 = vmatmul.mubr.f32.gmra.mrb[0].mxu0 %v2572
        %v2652 = vpop.f32.mrb[0].mxu0
        %v2653 = vadd.f32 0.0, %v2652
        %v2654 = vpop.f32.mrb[0].mxu0
        %2655 = vmatprep.mubr.f32.mxu0 0.0
        %2656 = vmatmul.mubr.f32.gmra.mrb[0].mxu0 %v2575
        %v2657 = vpop.f32.mrb[0].mxu0
        %v2658 = vadd.f32 0.0, %v2657
        %v2659 = vpop.f32.mrb[0].mxu0
        %2660 = vmatprep.mubr.f32.mxu0 0.0
        %2661 = vmatmul.mubr.f32.gmra.mrb[0].mxu0 %v2578
        %v2662 = vpop.f32.mrb[0].mxu0
        %v2663 = vadd.f32 0.0, %v2662
        %v2664 = vpop.f32.mrb[0].mxu0
        %2665 = vmatprep.mubr.f32.mxu0 0.0
        %2666 = vmatmul.mubr.f32.gmra.mrb[0].mxu0 %v2581
        %v2667 = vpop.f32.mrb[0].mxu0
        %v2668 = vadd.f32 0.0, %v2667
        %v2669 = vpop.f32.mrb[0].mxu0
        %2670 = vdwg.mxu0
        %v2671 = vadd.f32 %v2561, %v2653
        %v2672 = vadd.f32 %v2562, %v2658
        %v2673 = vadd.f32 %v2563, %v2663
        %v2674 = vadd.f32 %v2564, %v2668
        %v2675 = vadd.f32 %v2671, %v926
        %v2676 = vadd.f32 %v2672, %v926
        %v2677 = vadd.f32 %v2673, %v926
        %v2678 = vadd.f32 %v2674, %v926
        %v2679 = vmax.f32 %v2675, 0.0
        %v2680 = vmax.f32 %v2676, 0.0
        %v2681 = vmax.f32 %v2677, 0.0
        %v2682 = vmax.f32 %v2678, 0.0
        %s2683 = scalar_lea.vmem [#allocation2], 192
        %2684 = vst.msk [vmem:[%s2683 + $0x1] sm:$0xff] %vm387, %v2679
        %2685 = vst.msk [vmem:[%s2683 + $0x11] sm:$0xff] %vm387, %v2680
        %2686 = vst.msk [vmem:[%s2683 + $0x21] sm:$0xff] %vm387, %v2681
        %2687 = vst.msk [vmem:[%s2683 + $0x31] sm:$0xff] %vm387, %v2682
        %2692 = vrot.lane.b32.xlu0 %v2675, 124
        %v2693 = vpop.permute.xlu0 %2692
        %2694 = vrot.lane.b32.xlu0 %v2676, 124
        %v2695 = vpop.permute.xlu0 %2694
        %2696 = vrot.lane.b32.xlu0 %v2677, 124
        %v2697 = vpop.permute.xlu0 %2696
        %2698 = vrot.lane.b32.xlu0 %v2678, 124
        %v2699 = vpop.permute.xlu0 %2698
        %s2704 = scalar_lea.vmem [#allocation3], 96
        %2705 = vst.msk [vmem:[%s2704] sm:$0xff] %vm387, %v2693
        %2706 = vst.msk [vmem:[%s2704 + $0x8] sm:$0xff] %vm387, %v2695
        %2707 = vst.msk [vmem:[%s2704 + $0x10] sm:$0xff] %vm387, %v2697
        %2708 = vst.msk [vmem:[%s2704 + $0x18] sm:$0xff] %vm387, %v2699
        %p2709 = scmp.eq.s32.totalorder %s24, 0
        // Predicated region
        $region53: #{tpu_custom_call.1} parent=51 // pred_check
          %p2710 = pneg %p2709
        $region54: #{tpu_custom_call.1} parent=51 // pred_check_branch
          %2712 = sbr.rel (%p2710) target = $region56
        $region55: #{tpu_custom_call.1} parent=51 // pred_region
          %2713 = vst.msk [vmem:[#allocation2] sm:$0xff] %vm387, 0.0
          %vm2714 = vcmask 25600
          %2715 = vst.msk [vmem:[#allocation2 + $0x8] sm:$0x3] %vm2714, 0.0
          %2716 = vst.msk [vmem:[#allocation2 + $0x40] sm:$0xff] %vm387, 0.0
          %2717 = vst.msk [vmem:[#allocation2 + $0x48] sm:$0x3] %vm2714, 0.0
          %2718 = vst.msk [vmem:[#allocation2 + $0x80] sm:$0xff] %vm387, 0.0
          %2719 = vst.msk [vmem:[#allocation2 + $0x88] sm:$0x3] %vm2714, 0.0
          %2720 = vst.msk [vmem:[#allocation2 + $0xc0] sm:$0xff] %vm387, 0.0
          %2721 = vst.msk [vmem:[#allocation2 + $0xc8] sm:$0x3] %vm2714, 0.0
        $region56: #{tpu_custom_call.1} parent=51 // pred_fallthru
          _
        %p2722 = scmp.eq.s32.totalorder %s24, 3
        // Predicated region
        $region57: #{tpu_custom_call.1} parent=51 // pred_check
          %p2723 = pneg %p2722
        $region58: #{tpu_custom_call.1} parent=51 // pred_check_branch
          %2725 = sbr.rel (%p2723) target = $region60
        $region59: #{tpu_custom_call.1} parent=51 // pred_region
          %s2726 = scalar_lea.vmem [#allocation2], 48
          %2727 = vst.msk [vmem:[%s2726] sm:$0xff] %vm387, 0.0
          %vm2728 = vcmask 25600
          %2729 = vst.msk [vmem:[%s2726 + $0x8] sm:$0x3] %vm2728, 0.0
          %2730 = vst.msk [vmem:[%s2726 + $0x40] sm:$0xff] %vm387, 0.0
          %2731 = vst.msk [vmem:[%s2726 + $0x48] sm:$0x3] %vm2728, 0.0
          %2732 = vst.msk [vmem:[%s2726 + $0x80] sm:$0xff] %vm387, 0.0
          %2733 = vst.msk [vmem:[%s2726 + $0x88] sm:$0x3] %vm2728, 0.0
          %2734 = vst.msk [vmem:[%s2726 + $0xc0] sm:$0xff] %vm387, 0.0
          %2735 = vst.msk [vmem:[%s2726 + $0xc8] sm:$0x3] %vm2728, 0.0
        $region60: #{tpu_custom_call.1} parent=51 // pred_fallthru
          _
        %v2736 = vld [vmem:[%s2683] sm:$0xff]
        %v2737 = vld [vmem:[%s2683 + $0x10] sm:$0xff]
        %v2738 = vld [vmem:[%s4] sm:$0xf]
        %v2739 = vld [vmem:[%s2099 + $0x1] sm:$0xff]
        %v2740 = vld [vmem:[%s2099 + $0x11] sm:$0xff]
        %s2741 = scalar_lea.vmem %s4, 4
        %v2742 = vld [vmem:[%s2741] sm:$0xf]
        %v2744 = vsel %vm387, %v2739, 0
        %v2747 = vsel %vm387, %v2740, 0
        %v2750 = vsel %vm400, %v2742, 0
        %2752 = vmatprep.subr.mxu0 0.0
        %2753 = vmatpush1.msra.mxu0 %v2750
        %2754 = vmatprep.subr.mxu0 0.0
        %2755 = vmatpush1.msra.mxu0 0.0
        %2756 = vmatprep.subr.mxu0 0.0
        %2757 = vmatpush1.msra.mxu0 0.0
        %2758 = vmatprep.subr.mxu0 0.0
        %2759 = vmatpush1.msra.mxu0 0.0
        %2760 = vmatprep.subr.mxu0 0.0
        %2761 = vmatpush1.msra.mxu0 0.0
        %2762 = vmatprep.subr.mxu0 0.0
        %2763 = vmatpush1.msra.mxu0 0.0
        %2764 = vmatprep.subr.mxu0 0.0
        %2765 = vmatpush1.msra.mxu0 0.0
        %2766 = vmatprep.subr.mxu0 0.0
        %2767 = vmatpush1.msra.mxu0 0.0
        %2768 = vmatprep.subr.mxu0 0.0
        %2769 = vmatpush1.msra.mxu0 0.0
        %2770 = vmatprep.subr.mxu0 0.0
        %2771 = vmatpush1.msra.mxu0 0.0
        %2772 = vmatprep.subr.mxu0 0.0
        %2773 = vmatpush1.msra.mxu0 0.0
        %2774 = vmatprep.subr.mxu0 0.0
        %2775 = vmatpush1.msra.mxu0 0.0
        %2776 = vmatprep.subr.mxu0 0.0
        %2777 = vmatpush1.msra.mxu0 0.0
        %2778 = vmatprep.subr.mxu0 0.0
        %2779 = vmatpush1.msra.mxu0 0.0
        %2780 = vmatprep.subr.mxu0 0.0
        %2781 = vmatpush1.msra.mxu0 0.0
        %2782 = vmatprep.subr.mxu0 0.0
        %2783 = vmatpush1.msra.mxu0 0.0
        %2784 = vmatprep.subr.mxu0 0.0
        %2785 = vmatpush1.msra.mxu0 0.0
        %2786 = vmatprep.subr.mxu0 0.0
        %2787 = vmatpush1.msra.mxu0 0.0
        %2788 = vmatprep.subr.mxu0 0.0
        %2789 = vmatpush1.msra.mxu0 0.0
        %2790 = vmatprep.subr.mxu0 0.0
        %2791 = vmatpush1.msra.mxu0 0.0
        %2792 = vmatprep.subr.mxu0 0.0
        %2793 = vmatpush1.msra.mxu0 0.0
        %2794 = vmatprep.subr.mxu0 0.0
        %2795 = vmatpush1.msra.mxu0 0.0
        %2796 = vmatprep.subr.mxu0 0.0
        %2797 = vmatpush1.msra.mxu0 0.0
        %2798 = vmatprep.subr.mxu0 0.0
        %2799 = vmatpush1.msra.mxu0 0.0
        %2800 = vmatprep.subr.mxu0 0.0
        %2801 = vmatpush1.msra.mxu0 0.0
        %2802 = vmatprep.subr.mxu0 0.0
        %2803 = vmatpush1.msra.mxu0 0.0
        %2804 = vmatprep.subr.mxu0 0.0
        %2805 = vmatpush1.msra.mxu0 0.0
        %2806 = vmatprep.subr.mxu0 0.0
        %2807 = vmatpush1.msra.mxu0 0.0
        %2808 = vmatprep.subr.mxu0 0.0
        %2809 = vmatpush1.msra.mxu0 0.0
        %2810 = vmatprep.subr.mxu0 0.0
        %2811 = vmatpush1.msra.mxu0 0.0
        %2812 = vmatprep.subr.mxu0 0.0
        %2813 = vmatpush1.msra.mxu0 0.0
        %2814 = vmatprep.subr.mxu0 0.0
        %2815 = vmatpush1.msra.mxu0 0.0
        %2816 = vmatprep.mubr.f32.mxu0 0.0
        %2817 = vmatmul.mubr.f32.gmra.mrb[0].mxu0 %v2744
        %v2818 = vpop.f32.mrb[0].mxu0
        %v2819 = vadd.f32 0.0, %v2818
        %v2820 = vpop.f32.mrb[0].mxu0
        %2821 = vmatprep.mubr.f32.mxu0 0.0
        %2822 = vmatmul.mubr.f32.gmra.mrb[0].mxu0 %v2747
        %v2823 = vpop.f32.mrb[0].mxu0
        %v2824 = vadd.f32 0.0, %v2823
        %v2825 = vpop.f32.mrb[0].mxu0
        %2826 = vdwg.mxu0
        %v2828 = vsel %vm387, %v2736, 0
        %v2831 = vsel %vm387, %v2737, 0
        %v2834 = vsel %vm400, %v2738, 0
        %2836 = vmatprep.subr.mxu0 0.0
        %2837 = vmatpush1.msra.mxu0 %v2834
        %2838 = vmatprep.subr.mxu0 0.0
        %2839 = vmatpush1.msra.mxu0 0.0
        %2840 = vmatprep.subr.mxu0 0.0
        %2841 = vmatpush1.msra.mxu0 0.0
        %2842 = vmatprep.subr.mxu0 0.0
        %2843 = vmatpush1.msra.mxu0 0.0
        %2844 = vmatprep.subr.mxu0 0.0
        %2845 = vmatpush1.msra.mxu0 0.0
        %2846 = vmatprep.subr.mxu0 0.0
        %2847 = vmatpush1.msra.mxu0 0.0
        %2848 = vmatprep.subr.mxu0 0.0
        %2849 = vmatpush1.msra.mxu0 0.0
        %2850 = vmatprep.subr.mxu0 0.0
        %2851 = vmatpush1.msra.mxu0 0.0
        %2852 = vmatprep.subr.mxu0 0.0
        %2853 = vmatpush1.msra.mxu0 0.0
        %2854 = vmatprep.subr.mxu0 0.0
        %2855 = vmatpush1.msra.mxu0 0.0
        %2856 = vmatprep.subr.mxu0 0.0
        %2857 = vmatpush1.msra.mxu0 0.0
        %2858 = vmatprep.subr.mxu0 0.0
        %2859 = vmatpush1.msra.mxu0 0.0
        %2860 = vmatprep.subr.mxu0 0.0
        %2861 = vmatpush1.msra.mxu0 0.0
        %2862 = vmatprep.subr.mxu0 0.0
        %2863 = vmatpush1.msra.mxu0 0.0
        %2864 = vmatprep.subr.mxu0 0.0
        %2865 = vmatpush1.msra.mxu0 0.0
        %2866 = vmatprep.subr.mxu0 0.0
        %2867 = vmatpush1.msra.mxu0 0.0
        %2868 = vmatprep.subr.mxu0 0.0
        %2869 = vmatpush1.msra.mxu0 0.0
        %2870 = vmatprep.subr.mxu0 0.0
        %2871 = vmatpush1.msra.mxu0 0.0
        %2872 = vmatprep.subr.mxu0 0.0
        %2873 = vmatpush1.msra.mxu0 0.0
        %2874 = vmatprep.subr.mxu0 0.0
        %2875 = vmatpush1.msra.mxu0 0.0
        %2876 = vmatprep.subr.mxu0 0.0
        %2877 = vmatpush1.msra.mxu0 0.0
        %2878 = vmatprep.subr.mxu0 0.0
        %2879 = vmatpush1.msra.mxu0 0.0
        %2880 = vmatprep.subr.mxu0 0.0
        %2881 = vmatpush1.msra.mxu0 0.0
        %2882 = vmatprep.subr.mxu0 0.0
        %2883 = vmatpush1.msra.mxu0 0.0
        %2884 = vmatprep.subr.mxu0 0.0
        %2885 = vmatpush1.msra.mxu0 0.0
        %2886 = vmatprep.subr.mxu0 0.0
        %2887 = vmatpush1.msra.mxu0 0.0
        %2888 = vmatprep.subr.mxu0 0.0
        %2889 = vmatpush1.msra.mxu0 0.0
        %2890 = vmatprep.subr.mxu0 0.0
        %2891 = vmatpush1.msra.mxu0 0.0
        %2892 = vmatprep.subr.mxu0 0.0
        %2893 = vmatpush1.msra.mxu0 0.0
        %2894 = vmatprep.subr.mxu0 0.0
        %2895 = vmatpush1.msra.mxu0 0.0
        %2896 = vmatprep.subr.mxu0 0.0
        %2897 = vmatpush1.msra.mxu0 0.0
        %2898 = vmatprep.subr.mxu0 0.0
        %2899 = vmatpush1.msra.mxu0 0.0
        %2900 = vmatprep.mubr.f32.mxu0 0.0
        %2901 = vmatmul.mubr.f32.gmra.mrb[0].mxu0 %v2828
        %v2902 = vpop.f32.mrb[0].mxu0
        %v2903 = vadd.f32 %v2819, %v2902
        %v2904 = vpop.f32.mrb[0].mxu0
        %2905 = vmatprep.mubr.f32.mxu0 0.0
        %2906 = vmatmul.mubr.f32.gmra.mrb[0].mxu0 %v2831
        %v2907 = vpop.f32.mrb[0].mxu0
        %v2908 = vadd.f32 %v2824, %v2907
        %v2909 = vpop.f32.mrb[0].mxu0
        %2910 = vdwg.mxu0
        %v2911 = vld [vmem:[%s2683 + $0x1] sm:$0xff]
        %v2912 = vld [vmem:[%s2683 + $0x11] sm:$0xff]
        %s2913 = scalar_lea.vmem %s4, 8
        %v2914 = vld [vmem:[%s2913] sm:$0xf]
        %v2916 = vsel %vm387, %v2911, 0
        %v2919 = vsel %vm387, %v2912, 0
        %v2922 = vsel %vm400, %v2914, 0
        %2924 = vmatprep.subr.mxu0 0.0
        %2925 = vmatpush1.msra.mxu0 %v2922
        %2926 = vmatprep.subr.mxu0 0.0
        %2927 = vmatpush1.msra.mxu0 0.0
        %2928 = vmatprep.subr.mxu0 0.0
        %2929 = vmatpush1.msra.mxu0 0.0
        %2930 = vmatprep.subr.mxu0 0.0
        %2931 = vmatpush1.msra.mxu0 0.0
        %2932 = vmatprep.subr.mxu0 0.0
        %2933 = vmatpush1.msra.mxu0 0.0
        %2934 = vmatprep.subr.mxu0 0.0
        %2935 = vmatpush1.msra.mxu0 0.0
        %2936 = vmatprep.subr.mxu0 0.0
        %2937 = vmatpush1.msra.mxu0 0.0
        %2938 = vmatprep.subr.mxu0 0.0
        %2939 = vmatpush1.msra.mxu0 0.0
        %2940 = vmatprep.subr.mxu0 0.0
        %2941 = vmatpush1.msra.mxu0 0.0
        %2942 = vmatprep.subr.mxu0 0.0
        %2943 = vmatpush1.msra.mxu0 0.0
        %2944 = vmatprep.subr.mxu0 0.0
        %2945 = vmatpush1.msra.mxu0 0.0
        %2946 = vmatprep.subr.mxu0 0.0
        %2947 = vmatpush1.msra.mxu0 0.0
        %2948 = vmatprep.subr.mxu0 0.0
        %2949 = vmatpush1.msra.mxu0 0.0
        %2950 = vmatprep.subr.mxu0 0.0
        %2951 = vmatpush1.msra.mxu0 0.0
        %2952 = vmatprep.subr.mxu0 0.0
        %2953 = vmatpush1.msra.mxu0 0.0
        %2954 = vmatprep.subr.mxu0 0.0
        %2955 = vmatpush1.msra.mxu0 0.0
        %2956 = vmatprep.subr.mxu0 0.0
        %2957 = vmatpush1.msra.mxu0 0.0
        %2958 = vmatprep.subr.mxu0 0.0
        %2959 = vmatpush1.msra.mxu0 0.0
        %2960 = vmatprep.subr.mxu0 0.0
        %2961 = vmatpush1.msra.mxu0 0.0
        %2962 = vmatprep.subr.mxu0 0.0
        %2963 = vmatpush1.msra.mxu0 0.0
        %2964 = vmatprep.subr.mxu0 0.0
        %2965 = vmatpush1.msra.mxu0 0.0
        %2966 = vmatprep.subr.mxu0 0.0
        %2967 = vmatpush1.msra.mxu0 0.0
        %2968 = vmatprep.subr.mxu0 0.0
        %2969 = vmatpush1.msra.mxu0 0.0
        %2970 = vmatprep.subr.mxu0 0.0
        %2971 = vmatpush1.msra.mxu0 0.0
        %2972 = vmatprep.subr.mxu0 0.0
        %2973 = vmatpush1.msra.mxu0 0.0
        %2974 = vmatprep.subr.mxu0 0.0
        %2975 = vmatpush1.msra.mxu0 0.0
        %2976 = vmatprep.subr.mxu0 0.0
        %2977 = vmatpush1.msra.mxu0 0.0
        %2978 = vmatprep.subr.mxu0 0.0
        %2979 = vmatpush1.msra.mxu0 0.0
        %2980 = vmatprep.subr.mxu0 0.0
        %2981 = vmatpush1.msra.mxu0 0.0
        %2982 = vmatprep.subr.mxu0 0.0
        %2983 = vmatpush1.msra.mxu0 0.0
        %2984 = vmatprep.subr.mxu0 0.0
        %2985 = vmatpush1.msra.mxu0 0.0
        %2986 = vmatprep.subr.mxu0 0.0
        %2987 = vmatpush1.msra.mxu0 0.0
        %2988 = vmatprep.mubr.f32.mxu0 0.0
        %2989 = vmatmul.mubr.f32.gmra.mrb[0].mxu0 %v2916
        %v2990 = vpop.f32.mrb[0].mxu0
        %v2991 = vadd.f32 0.0, %v2990
        %v2992 = vpop.f32.mrb[0].mxu0
        %2993 = vmatprep.mubr.f32.mxu0 0.0
        %2994 = vmatmul.mubr.f32.gmra.mrb[0].mxu0 %v2919
        %v2995 = vpop.f32.mrb[0].mxu0
        %v2996 = vadd.f32 0.0, %v2995
        %v2997 = vpop.f32.mrb[0].mxu0
        %2998 = vdwg.mxu0
        %v2999 = vadd.f32 %v2903, %v2991
        %v3000 = vadd.f32 %v2908, %v2996
        %s3001 = scalar_lea.vmem [#allocation2], 80
        %v3002 = vld [vmem:[%s3001] sm:$0xff]
        %v3003 = vld [vmem:[%s3001 + $0x10] sm:$0xff]
        %s3004 = scalar_lea.vmem %s4, 12
        %v3005 = vld [vmem:[%s3004] sm:$0xf]
        %v3007 = vsel %vm387, %v3002, 0
        %v3010 = vsel %vm387, %v3003, 0
        %v3013 = vsel %vm400, %v3005, 0
        %3015 = vmatprep.subr.mxu0 0.0
        %3016 = vmatpush1.msra.mxu0 %v3013
        %3017 = vmatprep.subr.mxu0 0.0
        %3018 = vmatpush1.msra.mxu0 0.0
        %3019 = vmatprep.subr.mxu0 0.0
        %3020 = vmatpush1.msra.mxu0 0.0
        %3021 = vmatprep.subr.mxu0 0.0
        %3022 = vmatpush1.msra.mxu0 0.0
        %3023 = vmatprep.subr.mxu0 0.0
        %3024 = vmatpush1.msra.mxu0 0.0
        %3025 = vmatprep.subr.mxu0 0.0
        %3026 = vmatpush1.msra.mxu0 0.0
        %3027 = vmatprep.subr.mxu0 0.0
        %3028 = vmatpush1.msra.mxu0 0.0
        %3029 = vmatprep.subr.mxu0 0.0
        %3030 = vmatpush1.msra.mxu0 0.0
        %3031 = vmatprep.subr.mxu0 0.0
        %3032 = vmatpush1.msra.mxu0 0.0
        %3033 = vmatprep.subr.mxu0 0.0
        %3034 = vmatpush1.msra.mxu0 0.0
        %3035 = vmatprep.subr.mxu0 0.0
        %3036 = vmatpush1.msra.mxu0 0.0
        %3037 = vmatprep.subr.mxu0 0.0
        %3038 = vmatpush1.msra.mxu0 0.0
        %3039 = vmatprep.subr.mxu0 0.0
        %3040 = vmatpush1.msra.mxu0 0.0
        %3041 = vmatprep.subr.mxu0 0.0
        %3042 = vmatpush1.msra.mxu0 0.0
        %3043 = vmatprep.subr.mxu0 0.0
        %3044 = vmatpush1.msra.mxu0 0.0
        %3045 = vmatprep.subr.mxu0 0.0
        %3046 = vmatpush1.msra.mxu0 0.0
        %3047 = vmatprep.subr.mxu0 0.0
        %3048 = vmatpush1.msra.mxu0 0.0
        %3049 = vmatprep.subr.mxu0 0.0
        %3050 = vmatpush1.msra.mxu0 0.0
        %3051 = vmatprep.subr.mxu0 0.0
        %3052 = vmatpush1.msra.mxu0 0.0
        %3053 = vmatprep.subr.mxu0 0.0
        %3054 = vmatpush1.msra.mxu0 0.0
        %3055 = vmatprep.subr.mxu0 0.0
        %3056 = vmatpush1.msra.mxu0 0.0
        %3057 = vmatprep.subr.mxu0 0.0
        %3058 = vmatpush1.msra.mxu0 0.0
        %3059 = vmatprep.subr.mxu0 0.0
        %3060 = vmatpush1.msra.mxu0 0.0
        %3061 = vmatprep.subr.mxu0 0.0
        %3062 = vmatpush1.msra.mxu0 0.0
        %3063 = vmatprep.subr.mxu0 0.0
        %3064 = vmatpush1.msra.mxu0 0.0
        %3065 = vmatprep.subr.mxu0 0.0
        %3066 = vmatpush1.msra.mxu0 0.0
        %3067 = vmatprep.subr.mxu0 0.0
        %3068 = vmatpush1.msra.mxu0 0.0
        %3069 = vmatprep.subr.mxu0 0.0
        %3070 = vmatpush1.msra.mxu0 0.0
        %3071 = vmatprep.subr.mxu0 0.0
        %3072 = vmatpush1.msra.mxu0 0.0
        %3073 = vmatprep.subr.mxu0 0.0
        %3074 = vmatpush1.msra.mxu0 0.0
        %3075 = vmatprep.subr.mxu0 0.0
        %3076 = vmatpush1.msra.mxu0 0.0
        %3077 = vmatprep.subr.mxu0 0.0
        %3078 = vmatpush1.msra.mxu0 0.0
        %3079 = vmatprep.mubr.f32.mxu0 0.0
        %3080 = vmatmul.mubr.f32.gmra.mrb[0].mxu0 %v3007
        %v3081 = vpop.f32.mrb[0].mxu0
        %v3082 = vadd.f32 0.0, %v3081
        %v3083 = vpop.f32.mrb[0].mxu0
        %3084 = vmatprep.mubr.f32.mxu0 0.0
        %3085 = vmatmul.mubr.f32.gmra.mrb[0].mxu0 %v3010
        %v3086 = vpop.f32.mrb[0].mxu0
        %v3087 = vadd.f32 0.0, %v3086
        %v3088 = vpop.f32.mrb[0].mxu0
        %3089 = vdwg.mxu0
        %v3090 = vadd.f32 %v2999, %v3082
        %v3091 = vadd.f32 %v3000, %v3087
        %s3092 = scalar_lea.vmem [#allocation2], 16
        %v3093 = vld [vmem:[%s3092 + $0x1] sm:$0xff]
        %v3094 = vld [vmem:[%s3092 + $0x11] sm:$0xff]
        %s3095 = scalar_lea.vmem %s4, 16
        %v3096 = vld [vmem:[%s3095] sm:$0xf]
        %v3098 = vsel %vm387, %v3093, 0
        %v3101 = vsel %vm387, %v3094, 0
        %v3104 = vsel %vm400, %v3096, 0
        %3106 = vmatprep.subr.mxu0 0.0
        %3107 = vmatpush1.msra.mxu0 %v3104
        %3108 = vmatprep.subr.mxu0 0.0
        %3109 = vmatpush1.msra.mxu0 0.0
        %3110 = vmatprep.subr.mxu0 0.0
        %3111 = vmatpush1.msra.mxu0 0.0
        %3112 = vmatprep.subr.mxu0 0.0
        %3113 = vmatpush1.msra.mxu0 0.0
        %3114 = vmatprep.subr.mxu0 0.0
        %3115 = vmatpush1.msra.mxu0 0.0
        %3116 = vmatprep.subr.mxu0 0.0
        %3117 = vmatpush1.msra.mxu0 0.0
        %3118 = vmatprep.subr.mxu0 0.0
        %3119 = vmatpush1.msra.mxu0 0.0
        %3120 = vmatprep.subr.mxu0 0.0
        %3121 = vmatpush1.msra.mxu0 0.0
        %3122 = vmatprep.subr.mxu0 0.0
        %3123 = vmatpush1.msra.mxu0 0.0
        %3124 = vmatprep.subr.mxu0 0.0
        %3125 = vmatpush1.msra.mxu0 0.0
        %3126 = vmatprep.subr.mxu0 0.0
        %3127 = vmatpush1.msra.mxu0 0.0
        %3128 = vmatprep.subr.mxu0 0.0
        %3129 = vmatpush1.msra.mxu0 0.0
        %3130 = vmatprep.subr.mxu0 0.0
        %3131 = vmatpush1.msra.mxu0 0.0
        %3132 = vmatprep.subr.mxu0 0.0
        %3133 = vmatpush1.msra.mxu0 0.0
        %3134 = vmatprep.subr.mxu0 0.0
        %3135 = vmatpush1.msra.mxu0 0.0
        %3136 = vmatprep.subr.mxu0 0.0
        %3137 = vmatpush1.msra.mxu0 0.0
        %3138 = vmatprep.subr.mxu0 0.0
        %3139 = vmatpush1.msra.mxu0 0.0
        %3140 = vmatprep.subr.mxu0 0.0
        %3141 = vmatpush1.msra.mxu0 0.0
        %3142 = vmatprep.subr.mxu0 0.0
        %3143 = vmatpush1.msra.mxu0 0.0
        %3144 = vmatprep.subr.mxu0 0.0
        %3145 = vmatpush1.msra.mxu0 0.0
        %3146 = vmatprep.subr.mxu0 0.0
        %3147 = vmatpush1.msra.mxu0 0.0
        %3148 = vmatprep.subr.mxu0 0.0
        %3149 = vmatpush1.msra.mxu0 0.0
        %3150 = vmatprep.subr.mxu0 0.0
        %3151 = vmatpush1.msra.mxu0 0.0
        %3152 = vmatprep.subr.mxu0 0.0
        %3153 = vmatpush1.msra.mxu0 0.0
        %3154 = vmatprep.subr.mxu0 0.0
        %3155 = vmatpush1.msra.mxu0 0.0
        %3156 = vmatprep.subr.mxu0 0.0
        %3157 = vmatpush1.msra.mxu0 0.0
        %3158 = vmatprep.subr.mxu0 0.0
        %3159 = vmatpush1.msra.mxu0 0.0
        %3160 = vmatprep.subr.mxu0 0.0
        %3161 = vmatpush1.msra.mxu0 0.0
        %3162 = vmatprep.subr.mxu0 0.0
        %3163 = vmatpush1.msra.mxu0 0.0
        %3164 = vmatprep.subr.mxu0 0.0
        %3165 = vmatpush1.msra.mxu0 0.0
        %3166 = vmatprep.subr.mxu0 0.0
        %3167 = vmatpush1.msra.mxu0 0.0
        %3168 = vmatprep.subr.mxu0 0.0
        %3169 = vmatpush1.msra.mxu0 0.0
        %3170 = vmatprep.mubr.f32.mxu0 0.0
        %3171 = vmatmul.mubr.f32.gmra.mrb[0].mxu0 %v3098
        %v3172 = vpop.f32.mrb[0].mxu0
        %v3173 = vadd.f32 0.0, %v3172
        %v3174 = vpop.f32.mrb[0].mxu0
        %3175 = vmatprep.mubr.f32.mxu0 0.0
        %3176 = vmatmul.mubr.f32.gmra.mrb[0].mxu0 %v3101
        %v3177 = vpop.f32.mrb[0].mxu0
        %v3178 = vadd.f32 0.0, %v3177
        %v3179 = vpop.f32.mrb[0].mxu0
        %3180 = vdwg.mxu0
        %v3181 = vadd.f32 %v3090, %v3173
        %v3182 = vadd.f32 %v3091, %v3178
        %v3183 = vld [vmem:[%s3001 + $0x1] sm:$0xff]
        %v3184 = vld [vmem:[%s3001 + $0x11] sm:$0xff]
        %s3185 = scalar_lea.vmem %s4, 20
        %v3186 = vld [vmem:[%s3185] sm:$0xf]
        %v3188 = vsel %vm387, %v3183, 0
        %v3191 = vsel %vm387, %v3184, 0
        %v3194 = vsel %vm400, %v3186, 0
        %3196 = vmatprep.subr.mxu0 0.0
        %3197 = vmatpush1.msra.mxu0 %v3194
        %3198 = vmatprep.subr.mxu0 0.0
        %3199 = vmatpush1.msra.mxu0 0.0
        %3200 = vmatprep.subr.mxu0 0.0
        %3201 = vmatpush1.msra.mxu0 0.0
        %3202 = vmatprep.subr.mxu0 0.0
        %3203 = vmatpush1.msra.mxu0 0.0
        %3204 = vmatprep.subr.mxu0 0.0
        %3205 = vmatpush1.msra.mxu0 0.0
        %3206 = vmatprep.subr.mxu0 0.0
        %3207 = vmatpush1.msra.mxu0 0.0
        %3208 = vmatprep.subr.mxu0 0.0
        %3209 = vmatpush1.msra.mxu0 0.0
        %3210 = vmatprep.subr.mxu0 0.0
        %3211 = vmatpush1.msra.mxu0 0.0
        %3212 = vmatprep.subr.mxu0 0.0
        %3213 = vmatpush1.msra.mxu0 0.0
        %3214 = vmatprep.subr.mxu0 0.0
        %3215 = vmatpush1.msra.mxu0 0.0
        %3216 = vmatprep.subr.mxu0 0.0
        %3217 = vmatpush1.msra.mxu0 0.0
        %3218 = vmatprep.subr.mxu0 0.0
        %3219 = vmatpush1.msra.mxu0 0.0
        %3220 = vmatprep.subr.mxu0 0.0
        %3221 = vmatpush1.msra.mxu0 0.0
        %3222 = vmatprep.subr.mxu0 0.0
        %3223 = vmatpush1.msra.mxu0 0.0
        %3224 = vmatprep.subr.mxu0 0.0
        %3225 = vmatpush1.msra.mxu0 0.0
        %3226 = vmatprep.subr.mxu0 0.0
        %3227 = vmatpush1.msra.mxu0 0.0
        %3228 = vmatprep.subr.mxu0 0.0
        %3229 = vmatpush1.msra.mxu0 0.0
        %3230 = vmatprep.subr.mxu0 0.0
        %3231 = vmatpush1.msra.mxu0 0.0
        %3232 = vmatprep.subr.mxu0 0.0
        %3233 = vmatpush1.msra.mxu0 0.0
        %3234 = vmatprep.subr.mxu0 0.0
        %3235 = vmatpush1.msra.mxu0 0.0
        %3236 = vmatprep.subr.mxu0 0.0
        %3237 = vmatpush1.msra.mxu0 0.0
        %3238 = vmatprep.subr.mxu0 0.0
        %3239 = vmatpush1.msra.mxu0 0.0
        %3240 = vmatprep.subr.mxu0 0.0
        %3241 = vmatpush1.msra.mxu0 0.0
        %3242 = vmatprep.subr.mxu0 0.0
        %3243 = vmatpush1.msra.mxu0 0.0
        %3244 = vmatprep.subr.mxu0 0.0
        %3245 = vmatpush1.msra.mxu0 0.0
        %3246 = vmatprep.subr.mxu0 0.0
        %3247 = vmatpush1.msra.mxu0 0.0
        %3248 = vmatprep.subr.mxu0 0.0
        %3249 = vmatpush1.msra.mxu0 0.0
        %3250 = vmatprep.subr.mxu0 0.0
        %3251 = vmatpush1.msra.mxu0 0.0
        %3252 = vmatprep.subr.mxu0 0.0
        %3253 = vmatpush1.msra.mxu0 0.0
        %3254 = vmatprep.subr.mxu0 0.0
        %3255 = vmatpush1.msra.mxu0 0.0
        %3256 = vmatprep.subr.mxu0 0.0
        %3257 = vmatpush1.msra.mxu0 0.0
        %3258 = vmatprep.subr.mxu0 0.0
        %3259 = vmatpush1.msra.mxu0 0.0
        %3260 = vmatprep.mubr.f32.mxu0 0.0
        %3261 = vmatmul.mubr.f32.gmra.mrb[0].mxu0 %v3188
        %v3262 = vpop.f32.mrb[0].mxu0
        %v3263 = vadd.f32 0.0, %v3262
        %v3264 = vpop.f32.mrb[0].mxu0
        %3265 = vmatprep.mubr.f32.mxu0 0.0
        %3266 = vmatmul.mubr.f32.gmra.mrb[0].mxu0 %v3191
        %v3267 = vpop.f32.mrb[0].mxu0
        %v3268 = vadd.f32 0.0, %v3267
        %v3269 = vpop.f32.mrb[0].mxu0
        %3270 = vdwg.mxu0
        %v3271 = vadd.f32 %v3181, %v3263
        %v3272 = vadd.f32 %v3182, %v3268
        %s3273 = scalar_lea.vmem [#allocation2], 208
        %v3274 = vld [vmem:[%s3273] sm:$0xff]
        %v3275 = vld [vmem:[%s3273 + $0x10] sm:$0xff]
        %s3276 = scalar_lea.vmem %s4, 24
        %v3277 = vld [vmem:[%s3276] sm:$0xf]
        %v3279 = vsel %vm387, %v3274, 0
        %v3282 = vsel %vm387, %v3275, 0
        %v3285 = vsel %vm400, %v3277, 0
        %3287 = vmatprep.subr.mxu0 0.0
        %3288 = vmatpush1.msra.mxu0 %v3285
        %3289 = vmatprep.subr.mxu0 0.0
        %3290 = vmatpush1.msra.mxu0 0.0
        %3291 = vmatprep.subr.mxu0 0.0
        %3292 = vmatpush1.msra.mxu0 0.0
        %3293 = vmatprep.subr.mxu0 0.0
        %3294 = vmatpush1.msra.mxu0 0.0
        %3295 = vmatprep.subr.mxu0 0.0
        %3296 = vmatpush1.msra.mxu0 0.0
        %3297 = vmatprep.subr.mxu0 0.0
        %3298 = vmatpush1.msra.mxu0 0.0
        %3299 = vmatprep.subr.mxu0 0.0
        %3300 = vmatpush1.msra.mxu0 0.0
        %3301 = vmatprep.subr.mxu0 0.0
        %3302 = vmatpush1.msra.mxu0 0.0
        %3303 = vmatprep.subr.mxu0 0.0
        %3304 = vmatpush1.msra.mxu0 0.0
        %3305 = vmatprep.subr.mxu0 0.0
        %3306 = vmatpush1.msra.mxu0 0.0
        %3307 = vmatprep.subr.mxu0 0.0
        %3308 = vmatpush1.msra.mxu0 0.0
        %3309 = vmatprep.subr.mxu0 0.0
        %3310 = vmatpush1.msra.mxu0 0.0
        %3311 = vmatprep.subr.mxu0 0.0
        %3312 = vmatpush1.msra.mxu0 0.0
        %3313 = vmatprep.subr.mxu0 0.0
        %3314 = vmatpush1.msra.mxu0 0.0
        %3315 = vmatprep.subr.mxu0 0.0
        %3316 = vmatpush1.msra.mxu0 0.0
        %3317 = vmatprep.subr.mxu0 0.0
        %3318 = vmatpush1.msra.mxu0 0.0
        %3319 = vmatprep.subr.mxu0 0.0
        %3320 = vmatpush1.msra.mxu0 0.0
        %3321 = vmatprep.subr.mxu0 0.0
        %3322 = vmatpush1.msra.mxu0 0.0
        %3323 = vmatprep.subr.mxu0 0.0
        %3324 = vmatpush1.msra.mxu0 0.0
        %3325 = vmatprep.subr.mxu0 0.0
        %3326 = vmatpush1.msra.mxu0 0.0
        %3327 = vmatprep.subr.mxu0 0.0
        %3328 = vmatpush1.msra.mxu0 0.0
        %3329 = vmatprep.subr.mxu0 0.0
        %3330 = vmatpush1.msra.mxu0 0.0
        %3331 = vmatprep.subr.mxu0 0.0
        %3332 = vmatpush1.msra.mxu0 0.0
        %3333 = vmatprep.subr.mxu0 0.0
        %3334 = vmatpush1.msra.mxu0 0.0
        %3335 = vmatprep.subr.mxu0 0.0
        %3336 = vmatpush1.msra.mxu0 0.0
        %3337 = vmatprep.subr.mxu0 0.0
        %3338 = vmatpush1.msra.mxu0 0.0
        %3339 = vmatprep.subr.mxu0 0.0
        %3340 = vmatpush1.msra.mxu0 0.0
        %3341 = vmatprep.subr.mxu0 0.0
        %3342 = vmatpush1.msra.mxu0 0.0
        %3343 = vmatprep.subr.mxu0 0.0
        %3344 = vmatpush1.msra.mxu0 0.0
        %3345 = vmatprep.subr.mxu0 0.0
        %3346 = vmatpush1.msra.mxu0 0.0
        %3347 = vmatprep.subr.mxu0 0.0
        %3348 = vmatpush1.msra.mxu0 0.0
        %3349 = vmatprep.subr.mxu0 0.0
        %3350 = vmatpush1.msra.mxu0 0.0
        %3351 = vmatprep.mubr.f32.mxu0 0.0
        %3352 = vmatmul.mubr.f32.gmra.mrb[0].mxu0 %v3279
        %v3353 = vpop.f32.mrb[0].mxu0
        %v3354 = vadd.f32 0.0, %v3353
        %v3355 = vpop.f32.mrb[0].mxu0
        %3356 = vmatprep.mubr.f32.mxu0 0.0
        %3357 = vmatmul.mubr.f32.gmra.mrb[0].mxu0 %v3282
        %v3358 = vpop.f32.mrb[0].mxu0
        %v3359 = vadd.f32 0.0, %v3358
        %v3360 = vpop.f32.mrb[0].mxu0
        %3361 = vdwg.mxu0
        %v3362 = vadd.f32 %v3271, %v3354
        %v3363 = vadd.f32 %v3272, %v3359
        %s3364 = scalar_lea.vmem [#allocation2], 144
        %v3365 = vld [vmem:[%s3364 + $0x1] sm:$0xff]
        %v3366 = vld [vmem:[%s3364 + $0x11] sm:$0xff]
        %s3367 = scalar_lea.vmem %s4, 28
        %v3368 = vld [vmem:[%s3367] sm:$0xf]
        %v3370 = vsel %vm387, %v3365, 0
        %v3373 = vsel %vm387, %v3366, 0
        %v3376 = vsel %vm400, %v3368, 0
        %3378 = vmatprep.subr.mxu0 0.0
        %3379 = vmatpush1.msra.mxu0 %v3376
        %3380 = vmatprep.subr.mxu0 0.0
        %3381 = vmatpush1.msra.mxu0 0.0
        %3382 = vmatprep.subr.mxu0 0.0
        %3383 = vmatpush1.msra.mxu0 0.0
        %3384 = vmatprep.subr.mxu0 0.0
        %3385 = vmatpush1.msra.mxu0 0.0
        %3386 = vmatprep.subr.mxu0 0.0
        %3387 = vmatpush1.msra.mxu0 0.0
        %3388 = vmatprep.subr.mxu0 0.0
        %3389 = vmatpush1.msra.mxu0 0.0
        %3390 = vmatprep.subr.mxu0 0.0
        %3391 = vmatpush1.msra.mxu0 0.0
        %3392 = vmatprep.subr.mxu0 0.0
        %3393 = vmatpush1.msra.mxu0 0.0
        %3394 = vmatprep.subr.mxu0 0.0
        %3395 = vmatpush1.msra.mxu0 0.0
        %3396 = vmatprep.subr.mxu0 0.0
        %3397 = vmatpush1.msra.mxu0 0.0
        %3398 = vmatprep.subr.mxu0 0.0
        %3399 = vmatpush1.msra.mxu0 0.0
        %3400 = vmatprep.subr.mxu0 0.0
        %3401 = vmatpush1.msra.mxu0 0.0
        %3402 = vmatprep.subr.mxu0 0.0
        %3403 = vmatpush1.msra.mxu0 0.0
        %3404 = vmatprep.subr.mxu0 0.0
        %3405 = vmatpush1.msra.mxu0 0.0
        %3406 = vmatprep.subr.mxu0 0.0
        %3407 = vmatpush1.msra.mxu0 0.0
        %3408 = vmatprep.subr.mxu0 0.0
        %3409 = vmatpush1.msra.mxu0 0.0
        %3410 = vmatprep.subr.mxu0 0.0
        %3411 = vmatpush1.msra.mxu0 0.0
        %3412 = vmatprep.subr.mxu0 0.0
        %3413 = vmatpush1.msra.mxu0 0.0
        %3414 = vmatprep.subr.mxu0 0.0
        %3415 = vmatpush1.msra.mxu0 0.0
        %3416 = vmatprep.subr.mxu0 0.0
        %3417 = vmatpush1.msra.mxu0 0.0
        %3418 = vmatprep.subr.mxu0 0.0
        %3419 = vmatpush1.msra.mxu0 0.0
        %3420 = vmatprep.subr.mxu0 0.0
        %3421 = vmatpush1.msra.mxu0 0.0
        %3422 = vmatprep.subr.mxu0 0.0
        %3423 = vmatpush1.msra.mxu0 0.0
        %3424 = vmatprep.subr.mxu0 0.0
        %3425 = vmatpush1.msra.mxu0 0.0
        %3426 = vmatprep.subr.mxu0 0.0
        %3427 = vmatpush1.msra.mxu0 0.0
        %3428 = vmatprep.subr.mxu0 0.0
        %3429 = vmatpush1.msra.mxu0 0.0
        %3430 = vmatprep.subr.mxu0 0.0
        %3431 = vmatpush1.msra.mxu0 0.0
        %3432 = vmatprep.subr.mxu0 0.0
        %3433 = vmatpush1.msra.mxu0 0.0
        %3434 = vmatprep.subr.mxu0 0.0
        %3435 = vmatpush1.msra.mxu0 0.0
        %3436 = vmatprep.subr.mxu0 0.0
        %3437 = vmatpush1.msra.mxu0 0.0
        %3438 = vmatprep.subr.mxu0 0.0
        %3439 = vmatpush1.msra.mxu0 0.0
        %3440 = vmatprep.subr.mxu0 0.0
        %3441 = vmatpush1.msra.mxu0 0.0
        %3442 = vmatprep.mubr.f32.mxu0 0.0
        %3443 = vmatmul.mubr.f32.gmra.mrb[0].mxu0 %v3370
        %v3444 = vpop.f32.mrb[0].mxu0
        %v3445 = vadd.f32 0.0, %v3444
        %v3446 = vpop.f32.mrb[0].mxu0
        %3447 = vmatprep.mubr.f32.mxu0 0.0
        %3448 = vmatmul.mubr.f32.gmra.mrb[0].mxu0 %v3373
        %v3449 = vpop.f32.mrb[0].mxu0
        %v3450 = vadd.f32 0.0, %v3449
        %v3451 = vpop.f32.mrb[0].mxu0
        %3452 = vdwg.mxu0
        %v3453 = vadd.f32 %v3362, %v3445
        %v3454 = vadd.f32 %v3363, %v3450
        %v3455 = vld [vmem:[%s3273 + $0x1] sm:$0xff]
        %v3456 = vld [vmem:[%s3273 + $0x11] sm:$0xff]
        %s3457 = scalar_lea.vmem %s4, 32
        %v3458 = vld [vmem:[%s3457] sm:$0xf]
        %v3460 = vsel %vm387, %v3455, 0
        %v3463 = vsel %vm387, %v3456, 0
        %v3466 = vsel %vm400, %v3458, 0
        %3468 = vmatprep.subr.mxu0 0.0
        %3469 = vmatpush1.msra.mxu0 %v3466
        %3470 = vmatprep.subr.mxu0 0.0
        %3471 = vmatpush1.msra.mxu0 0.0
        %3472 = vmatprep.subr.mxu0 0.0
        %3473 = vmatpush1.msra.mxu0 0.0
        %3474 = vmatprep.subr.mxu0 0.0
        %3475 = vmatpush1.msra.mxu0 0.0
        %3476 = vmatprep.subr.mxu0 0.0
        %3477 = vmatpush1.msra.mxu0 0.0
        %3478 = vmatprep.subr.mxu0 0.0
        %3479 = vmatpush1.msra.mxu0 0.0
        %3480 = vmatprep.subr.mxu0 0.0
        %3481 = vmatpush1.msra.mxu0 0.0
        %3482 = vmatprep.subr.mxu0 0.0
        %3483 = vmatpush1.msra.mxu0 0.0
        %3484 = vmatprep.subr.mxu0 0.0
        %3485 = vmatpush1.msra.mxu0 0.0
        %3486 = vmatprep.subr.mxu0 0.0
        %3487 = vmatpush1.msra.mxu0 0.0
        %3488 = vmatprep.subr.mxu0 0.0
        %3489 = vmatpush1.msra.mxu0 0.0
        %3490 = vmatprep.subr.mxu0 0.0
        %3491 = vmatpush1.msra.mxu0 0.0
        %3492 = vmatprep.subr.mxu0 0.0
        %3493 = vmatpush1.msra.mxu0 0.0
        %3494 = vmatprep.subr.mxu0 0.0
        %3495 = vmatpush1.msra.mxu0 0.0
        %3496 = vmatprep.subr.mxu0 0.0
        %3497 = vmatpush1.msra.mxu0 0.0
        %3498 = vmatprep.subr.mxu0 0.0
        %3499 = vmatpush1.msra.mxu0 0.0
        %3500 = vmatprep.subr.mxu0 0.0
        %3501 = vmatpush1.msra.mxu0 0.0
        %3502 = vmatprep.subr.mxu0 0.0
        %3503 = vmatpush1.msra.mxu0 0.0
        %3504 = vmatprep.subr.mxu0 0.0
        %3505 = vmatpush1.msra.mxu0 0.0
        %3506 = vmatprep.subr.mxu0 0.0
        %3507 = vmatpush1.msra.mxu0 0.0
        %3508 = vmatprep.subr.mxu0 0.0
        %3509 = vmatpush1.msra.mxu0 0.0
        %3510 = vmatprep.subr.mxu0 0.0
        %3511 = vmatpush1.msra.mxu0 0.0
        %3512 = vmatprep.subr.mxu0 0.0
        %3513 = vmatpush1.msra.mxu0 0.0
        %3514 = vmatprep.subr.mxu0 0.0
        %3515 = vmatpush1.msra.mxu0 0.0
        %3516 = vmatprep.subr.mxu0 0.0
        %3517 = vmatpush1.msra.mxu0 0.0
        %3518 = vmatprep.subr.mxu0 0.0
        %3519 = vmatpush1.msra.mxu0 0.0
        %3520 = vmatprep.subr.mxu0 0.0
        %3521 = vmatpush1.msra.mxu0 0.0
        %3522 = vmatprep.subr.mxu0 0.0
        %3523 = vmatpush1.msra.mxu0 0.0
        %3524 = vmatprep.subr.mxu0 0.0
        %3525 = vmatpush1.msra.mxu0 0.0
        %3526 = vmatprep.subr.mxu0 0.0
        %3527 = vmatpush1.msra.mxu0 0.0
        %3528 = vmatprep.subr.mxu0 0.0
        %3529 = vmatpush1.msra.mxu0 0.0
        %3530 = vmatprep.subr.mxu0 0.0
        %3531 = vmatpush1.msra.mxu0 0.0
        %3532 = vmatprep.mubr.f32.mxu0 0.0
        %3533 = vmatmul.mubr.f32.gmra.mrb[0].mxu0 %v3460
        %v3534 = vpop.f32.mrb[0].mxu0
        %v3535 = vadd.f32 0.0, %v3534
        %v3536 = vpop.f32.mrb[0].mxu0
        %3537 = vmatprep.mubr.f32.mxu0 0.0
        %3538 = vmatmul.mubr.f32.gmra.mrb[0].mxu0 %v3463
        %v3539 = vpop.f32.mrb[0].mxu0
        %v3540 = vadd.f32 0.0, %v3539
        %v3541 = vpop.f32.mrb[0].mxu0
        %3542 = vdwg.mxu0
        %v3543 = vadd.f32 %v3453, %v3535
        %v3544 = vadd.f32 %v3454, %v3540
        %v3546 = vlaneseq
        %v3547 = vshrl.u32 %v3546, 7
        %v3548 = vsub.s32 0, %v3547
        %v3549 = vrot.slane %v337, %v3548
        %v3551 = vadd.f32 %v3543, %v3549
        %v3552 = vadd.f32 %v3544, %v3549
        %v3553 = vmax.f32 %v3551, 0.0
        %v3554 = vmax.f32 %v3552, 0.0
        %v3556 = vlaneseq
        %v3557 = vshrl.u32 %v3556, 7
        %v3558 = vsub.s32 0, %v3557
        %v3559 = vrot.slane %v338, %v3558
        %v3562 = vsel %vm387, %v3553, 0
        %v3565 = vsel %vm387, %v3554, 0
        %v3568 = vsel %vm400, %v339, 0
        %3570 = vmatprep.subr.mxu0 0.0
        %3571 = vmatpush1.msra.mxu0 %v3568
        %3572 = vmatprep.subr.mxu0 0.0
        %3573 = vmatpush1.msra.mxu0 0.0
        %3574 = vmatprep.subr.mxu0 0.0
        %3575 = vmatpush1.msra.mxu0 0.0
        %3576 = vmatprep.subr.mxu0 0.0
        %3577 = vmatpush1.msra.mxu0 0.0
        %3578 = vmatprep.subr.mxu0 0.0
        %3579 = vmatpush1.msra.mxu0 0.0
        %3580 = vmatprep.subr.mxu0 0.0
        %3581 = vmatpush1.msra.mxu0 0.0
        %3582 = vmatprep.subr.mxu0 0.0
        %3583 = vmatpush1.msra.mxu0 0.0
        %3584 = vmatprep.subr.mxu0 0.0
        %3585 = vmatpush1.msra.mxu0 0.0
        %3586 = vmatprep.subr.mxu0 0.0
        %3587 = vmatpush1.msra.mxu0 0.0
        %3588 = vmatprep.subr.mxu0 0.0
        %3589 = vmatpush1.msra.mxu0 0.0
        %3590 = vmatprep.subr.mxu0 0.0
        %3591 = vmatpush1.msra.mxu0 0.0
        %3592 = vmatprep.subr.mxu0 0.0
        %3593 = vmatpush1.msra.mxu0 0.0
        %3594 = vmatprep.subr.mxu0 0.0
        %3595 = vmatpush1.msra.mxu0 0.0
        %3596 = vmatprep.subr.mxu0 0.0
        %3597 = vmatpush1.msra.mxu0 0.0
        %3598 = vmatprep.subr.mxu0 0.0
        %3599 = vmatpush1.msra.mxu0 0.0
        %3600 = vmatprep.subr.mxu0 0.0
        %3601 = vmatpush1.msra.mxu0 0.0
        %3602 = vmatprep.subr.mxu0 0.0
        %3603 = vmatpush1.msra.mxu0 0.0
        %3604 = vmatprep.subr.mxu0 0.0
        %3605 = vmatpush1.msra.mxu0 0.0
        %3606 = vmatprep.subr.mxu0 0.0
        %3607 = vmatpush1.msra.mxu0 0.0
        %3608 = vmatprep.subr.mxu0 0.0
        %3609 = vmatpush1.msra.mxu0 0.0
        %3610 = vmatprep.subr.mxu0 0.0
        %3611 = vmatpush1.msra.mxu0 0.0
        %3612 = vmatprep.subr.mxu0 0.0
        %3613 = vmatpush1.msra.mxu0 0.0
        %3614 = vmatprep.subr.mxu0 0.0
        %3615 = vmatpush1.msra.mxu0 0.0
        %3616 = vmatprep.subr.mxu0 0.0
        %3617 = vmatpush1.msra.mxu0 0.0
        %3618 = vmatprep.subr.mxu0 0.0
        %3619 = vmatpush1.msra.mxu0 0.0
        %3620 = vmatprep.subr.mxu0 0.0
        %3621 = vmatpush1.msra.mxu0 0.0
        %3622 = vmatprep.subr.mxu0 0.0
        %3623 = vmatpush1.msra.mxu0 0.0
        %3624 = vmatprep.subr.mxu0 0.0
        %3625 = vmatpush1.msra.mxu0 0.0
        %3626 = vmatprep.subr.mxu0 0.0
        %3627 = vmatpush1.msra.mxu0 0.0
        %3628 = vmatprep.subr.mxu0 0.0
        %3629 = vmatpush1.msra.mxu0 0.0
        %3630 = vmatprep.subr.mxu0 0.0
        %3631 = vmatpush1.msra.mxu0 0.0
        %3632 = vmatprep.subr.mxu0 0.0
        %3633 = vmatpush1.msra.mxu0 0.0
        %3634 = vmatprep.mubr.f32.mxu0 0.0
        %3635 = vmatmul.mubr.f32.gmra.mrb[0].mxu0 %v3562
        %v3636 = vpop.f32.mrb[0].mxu0
        %v3637 = vadd.f32 %v3559, %v3636
        %v3638 = vpop.f32.mrb[0].mxu0
        %3639 = vmatprep.mubr.f32.mxu0 0.0
        %3640 = vmatmul.mubr.f32.gmra.mrb[0].mxu0 %v3565
        %v3641 = vpop.f32.mrb[0].mxu0
        %v3642 = vadd.f32 %v3559, %v3641
        %v3643 = vpop.f32.mrb[0].mxu0
        %3644 = vdwg.mxu0
        %s3645 = scalar_lea.vmem [#allocation3], 8
        %v3646 = vld [vmem:[%s3645] sm:$0xff]
        %v3647 = vld [vmem:[%s3645 + $0x8] sm:$0xff]
        %v3648 = vadd.f32 %v3637, %v3646
        %v3649 = vadd.f32 %v3642, %v3647
        %v3650 = vmax.f32 %v3648, 0.0
        %v3651 = vmax.f32 %v3649, 0.0
        %3652 = vst.msk [vmem:[%s323] sm:$0xff] %vm387, %v3650
        %3653 = vst.msk [vmem:[%s323 + $0x8] sm:$0xff] %vm387, %v3651
        %v3654 = vld [vmem:[%s2099 + $0x1] sm:$0xff]
        %v3655 = vld [vmem:[%s2099 + $0x11] sm:$0xff]
        %v3656 = vld [vmem:[%s4] sm:$0xf]
        %v3657 = vld [vmem:[%s2683 + $0x1] sm:$0xff]
        %v3658 = vld [vmem:[%s2683 + $0x11] sm:$0xff]
        %v3659 = vld [vmem:[%s2741] sm:$0xf]
        %v3661 = vsel %vm387, %v3657, 0
        %v3664 = vsel %vm387, %v3658, 0
        %v3667 = vsel %vm400, %v3659, 0
        %3669 = vmatprep.subr.mxu0 0.0
        %3670 = vmatpush1.msra.mxu0 %v3667
        %3671 = vmatprep.subr.mxu0 0.0
        %3672 = vmatpush1.msra.mxu0 0.0
        %3673 = vmatprep.subr.mxu0 0.0
        %3674 = vmatpush1.msra.mxu0 0.0
        %3675 = vmatprep.subr.mxu0 0.0
        %3676 = vmatpush1.msra.mxu0 0.0
        %3677 = vmatprep.subr.mxu0 0.0
        %3678 = vmatpush1.msra.mxu0 0.0
        %3679 = vmatprep.subr.mxu0 0.0
        %3680 = vmatpush1.msra.mxu0 0.0
        %3681 = vmatprep.subr.mxu0 0.0
        %3682 = vmatpush1.msra.mxu0 0.0
        %3683 = vmatprep.subr.mxu0 0.0
        %3684 = vmatpush1.msra.mxu0 0.0
        %3685 = vmatprep.subr.mxu0 0.0
        %3686 = vmatpush1.msra.mxu0 0.0
        %3687 = vmatprep.subr.mxu0 0.0
        %3688 = vmatpush1.msra.mxu0 0.0
        %3689 = vmatprep.subr.mxu0 0.0
        %3690 = vmatpush1.msra.mxu0 0.0
        %3691 = vmatprep.subr.mxu0 0.0
        %3692 = vmatpush1.msra.mxu0 0.0
        %3693 = vmatprep.subr.mxu0 0.0
        %3694 = vmatpush1.msra.mxu0 0.0
        %3695 = vmatprep.subr.mxu0 0.0
        %3696 = vmatpush1.msra.mxu0 0.0
        %3697 = vmatprep.subr.mxu0 0.0
        %3698 = vmatpush1.msra.mxu0 0.0
        %3699 = vmatprep.subr.mxu0 0.0
        %3700 = vmatpush1.msra.mxu0 0.0
        %3701 = vmatprep.subr.mxu0 0.0
        %3702 = vmatpush1.msra.mxu0 0.0
        %3703 = vmatprep.subr.mxu0 0.0
        %3704 = vmatpush1.msra.mxu0 0.0
        %3705 = vmatprep.subr.mxu0 0.0
        %3706 = vmatpush1.msra.mxu0 0.0
        %3707 = vmatprep.subr.mxu0 0.0
        %3708 = vmatpush1.msra.mxu0 0.0
        %3709 = vmatprep.subr.mxu0 0.0
        %3710 = vmatpush1.msra.mxu0 0.0
        %3711 = vmatprep.subr.mxu0 0.0
        %3712 = vmatpush1.msra.mxu0 0.0
        %3713 = vmatprep.subr.mxu0 0.0
        %3714 = vmatpush1.msra.mxu0 0.0
        %3715 = vmatprep.subr.mxu0 0.0
        %3716 = vmatpush1.msra.mxu0 0.0
        %3717 = vmatprep.subr.mxu0 0.0
        %3718 = vmatpush1.msra.mxu0 0.0
        %3719 = vmatprep.subr.mxu0 0.0
        %3720 = vmatpush1.msra.mxu0 0.0
        %3721 = vmatprep.subr.mxu0 0.0
        %3722 = vmatpush1.msra.mxu0 0.0
        %3723 = vmatprep.subr.mxu0 0.0
        %3724 = vmatpush1.msra.mxu0 0.0
        %3725 = vmatprep.subr.mxu0 0.0
        %3726 = vmatpush1.msra.mxu0 0.0
        %3727 = vmatprep.subr.mxu0 0.0
        %3728 = vmatpush1.msra.mxu0 0.0
        %3729 = vmatprep.subr.mxu0 0.0
        %3730 = vmatpush1.msra.mxu0 0.0
        %3731 = vmatprep.subr.mxu0 0.0
        %3732 = vmatpush1.msra.mxu0 0.0
        %3733 = vmatprep.mubr.f32.mxu0 0.0
        %3734 = vmatmul.mubr.f32.gmra.mrb[0].mxu0 %v3661
        %v3735 = vpop.f32.mrb[0].mxu0
        %v3736 = vadd.f32 0.0, %v3735
        %v3737 = vpop.f32.mrb[0].mxu0
        %3738 = vmatprep.mubr.f32.mxu0 0.0
        %3739 = vmatmul.mubr.f32.gmra.mrb[0].mxu0 %v3664
        %v3740 = vpop.f32.mrb[0].mxu0
        %v3741 = vadd.f32 0.0, %v3740
        %v3742 = vpop.f32.mrb[0].mxu0
        %3743 = vdwg.mxu0
        %v3745 = vsel %vm387, %v3654, 0
        %v3748 = vsel %vm387, %v3655, 0
        %v3751 = vsel %vm400, %v3656, 0
        %3753 = vmatprep.subr.mxu0 0.0
        %3754 = vmatpush1.msra.mxu0 %v3751
        %3755 = vmatprep.subr.mxu0 0.0
        %3756 = vmatpush1.msra.mxu0 0.0
        %3757 = vmatprep.subr.mxu0 0.0
        %3758 = vmatpush1.msra.mxu0 0.0
        %3759 = vmatprep.subr.mxu0 0.0
        %3760 = vmatpush1.msra.mxu0 0.0
        %3761 = vmatprep.subr.mxu0 0.0
        %3762 = vmatpush1.msra.mxu0 0.0
        %3763 = vmatprep.subr.mxu0 0.0
        %3764 = vmatpush1.msra.mxu0 0.0
        %3765 = vmatprep.subr.mxu0 0.0
        %3766 = vmatpush1.msra.mxu0 0.0
        %3767 = vmatprep.subr.mxu0 0.0
        %3768 = vmatpush1.msra.mxu0 0.0
        %3769 = vmatprep.subr.mxu0 0.0
        %3770 = vmatpush1.msra.mxu0 0.0
        %3771 = vmatprep.subr.mxu0 0.0
        %3772 = vmatpush1.msra.mxu0 0.0
        %3773 = vmatprep.subr.mxu0 0.0
        %3774 = vmatpush1.msra.mxu0 0.0
        %3775 = vmatprep.subr.mxu0 0.0
        %3776 = vmatpush1.msra.mxu0 0.0
        %3777 = vmatprep.subr.mxu0 0.0
        %3778 = vmatpush1.msra.mxu0 0.0
        %3779 = vmatprep.subr.mxu0 0.0
        %3780 = vmatpush1.msra.mxu0 0.0
        %3781 = vmatprep.subr.mxu0 0.0
        %3782 = vmatpush1.msra.mxu0 0.0
        %3783 = vmatprep.subr.mxu0 0.0
        %3784 = vmatpush1.msra.mxu0 0.0
        %3785 = vmatprep.subr.mxu0 0.0
        %3786 = vmatpush1.msra.mxu0 0.0
        %3787 = vmatprep.subr.mxu0 0.0
        %3788 = vmatpush1.msra.mxu0 0.0
        %3789 = vmatprep.subr.mxu0 0.0
        %3790 = vmatpush1.msra.mxu0 0.0
        %3791 = vmatprep.subr.mxu0 0.0
        %3792 = vmatpush1.msra.mxu0 0.0
        %3793 = vmatprep.subr.mxu0 0.0
        %3794 = vmatpush1.msra.mxu0 0.0
        %3795 = vmatprep.subr.mxu0 0.0
        %3796 = vmatpush1.msra.mxu0 0.0
        %3797 = vmatprep.subr.mxu0 0.0
        %3798 = vmatpush1.msra.mxu0 0.0
        %3799 = vmatprep.subr.mxu0 0.0
        %3800 = vmatpush1.msra.mxu0 0.0
        %3801 = vmatprep.subr.mxu0 0.0
        %3802 = vmatpush1.msra.mxu0 0.0
        %3803 = vmatprep.subr.mxu0 0.0
        %3804 = vmatpush1.msra.mxu0 0.0
        %3805 = vmatprep.subr.mxu0 0.0
        %3806 = vmatpush1.msra.mxu0 0.0
        %3807 = vmatprep.subr.mxu0 0.0
        %3808 = vmatpush1.msra.mxu0 0.0
        %3809 = vmatprep.subr.mxu0 0.0
        %3810 = vmatpush1.msra.mxu0 0.0
        %3811 = vmatprep.subr.mxu0 0.0
        %3812 = vmatpush1.msra.mxu0 0.0
        %3813 = vmatprep.subr.mxu0 0.0
        %3814 = vmatpush1.msra.mxu0 0.0
        %3815 = vmatprep.subr.mxu0 0.0
        %3816 = vmatpush1.msra.mxu0 0.0
        %3817 = vmatprep.mubr.f32.mxu0 0.0
        %3818 = vmatmul.mubr.f32.gmra.mrb[0].mxu0 %v3745
        %v3819 = vpop.f32.mrb[0].mxu0
        %v3820 = vadd.f32 %v3736, %v3819
        %v3821 = vpop.f32.mrb[0].mxu0
        %3822 = vmatprep.mubr.f32.mxu0 0.0
        %3823 = vmatmul.mubr.f32.gmra.mrb[0].mxu0 %v3748
        %v3824 = vpop.f32.mrb[0].mxu0
        %v3825 = vadd.f32 %v3741, %v3824
        %v3826 = vpop.f32.mrb[0].mxu0
        %3827 = vdwg.mxu0
        %v3828 = vld [vmem:[%s2099 + $0x2] sm:$0xff]
        %v3829 = vld [vmem:[%s2099 + $0x12] sm:$0xff]
        %v3830 = vld [vmem:[%s2913] sm:$0xf]
        %v3832 = vsel %vm387, %v3828, 0
        %v3835 = vsel %vm387, %v3829, 0
        %v3838 = vsel %vm400, %v3830, 0
        %3840 = vmatprep.subr.mxu0 0.0
        %3841 = vmatpush1.msra.mxu0 %v3838
        %3842 = vmatprep.subr.mxu0 0.0
        %3843 = vmatpush1.msra.mxu0 0.0
        %3844 = vmatprep.subr.mxu0 0.0
        %3845 = vmatpush1.msra.mxu0 0.0
        %3846 = vmatprep.subr.mxu0 0.0
        %3847 = vmatpush1.msra.mxu0 0.0
        %3848 = vmatprep.subr.mxu0 0.0
        %3849 = vmatpush1.msra.mxu0 0.0
        %3850 = vmatprep.subr.mxu0 0.0
        %3851 = vmatpush1.msra.mxu0 0.0
        %3852 = vmatprep.subr.mxu0 0.0
        %3853 = vmatpush1.msra.mxu0 0.0
        %3854 = vmatprep.subr.mxu0 0.0
        %3855 = vmatpush1.msra.mxu0 0.0
        %3856 = vmatprep.subr.mxu0 0.0
        %3857 = vmatpush1.msra.mxu0 0.0
        %3858 = vmatprep.subr.mxu0 0.0
        %3859 = vmatpush1.msra.mxu0 0.0
        %3860 = vmatprep.subr.mxu0 0.0
        %3861 = vmatpush1.msra.mxu0 0.0
        %3862 = vmatprep.subr.mxu0 0.0
        %3863 = vmatpush1.msra.mxu0 0.0
        %3864 = vmatprep.subr.mxu0 0.0
        %3865 = vmatpush1.msra.mxu0 0.0
        %3866 = vmatprep.subr.mxu0 0.0
        %3867 = vmatpush1.msra.mxu0 0.0
        %3868 = vmatprep.subr.mxu0 0.0
        %3869 = vmatpush1.msra.mxu0 0.0
        %3870 = vmatprep.subr.mxu0 0.0
        %3871 = vmatpush1.msra.mxu0 0.0
        %3872 = vmatprep.subr.mxu0 0.0
        %3873 = vmatpush1.msra.mxu0 0.0
        %3874 = vmatprep.subr.mxu0 0.0
        %3875 = vmatpush1.msra.mxu0 0.0
        %3876 = vmatprep.subr.mxu0 0.0
        %3877 = vmatpush1.msra.mxu0 0.0
        %3878 = vmatprep.subr.mxu0 0.0
        %3879 = vmatpush1.msra.mxu0 0.0
        %3880 = vmatprep.subr.mxu0 0.0
        %3881 = vmatpush1.msra.mxu0 0.0
        %3882 = vmatprep.subr.mxu0 0.0
        %3883 = vmatpush1.msra.mxu0 0.0
        %3884 = vmatprep.subr.mxu0 0.0
        %3885 = vmatpush1.msra.mxu0 0.0
        %3886 = vmatprep.subr.mxu0 0.0
        %3887 = vmatpush1.msra.mxu0 0.0
        %3888 = vmatprep.subr.mxu0 0.0
        %3889 = vmatpush1.msra.mxu0 0.0
        %3890 = vmatprep.subr.mxu0 0.0
        %3891 = vmatpush1.msra.mxu0 0.0
        %3892 = vmatprep.subr.mxu0 0.0
        %3893 = vmatpush1.msra.mxu0 0.0
        %3894 = vmatprep.subr.mxu0 0.0
        %3895 = vmatpush1.msra.mxu0 0.0
        %3896 = vmatprep.subr.mxu0 0.0
        %3897 = vmatpush1.msra.mxu0 0.0
        %3898 = vmatprep.subr.mxu0 0.0
        %3899 = vmatpush1.msra.mxu0 0.0
        %3900 = vmatprep.subr.mxu0 0.0
        %3901 = vmatpush1.msra.mxu0 0.0
        %3902 = vmatprep.subr.mxu0 0.0
        %3903 = vmatpush1.msra.mxu0 0.0
        %3904 = vmatprep.mubr.f32.mxu0 0.0
        %3905 = vmatmul.mubr.f32.gmra.mrb[0].mxu0 %v3832
        %v3906 = vpop.f32.mrb[0].mxu0
        %v3907 = vadd.f32 0.0, %v3906
        %v3908 = vpop.f32.mrb[0].mxu0
        %3909 = vmatprep.mubr.f32.mxu0 0.0
        %3910 = vmatmul.mubr.f32.gmra.mrb[0].mxu0 %v3835
        %v3911 = vpop.f32.mrb[0].mxu0
        %v3912 = vadd.f32 0.0, %v3911
        %v3913 = vpop.f32.mrb[0].mxu0
        %3914 = vdwg.mxu0
        %v3915 = vadd.f32 %v3820, %v3907
        %v3916 = vadd.f32 %v3825, %v3912
        %v3917 = vld [vmem:[%s3092 + $0x1] sm:$0xff]
        %v3918 = vld [vmem:[%s3092 + $0x11] sm:$0xff]
        %v3919 = vld [vmem:[%s3004] sm:$0xf]
        %v3921 = vsel %vm387, %v3917, 0
        %v3924 = vsel %vm387, %v3918, 0
        %v3927 = vsel %vm400, %v3919, 0
        %3929 = vmatprep.subr.mxu0 0.0
        %3930 = vmatpush1.msra.mxu0 %v3927
        %3931 = vmatprep.subr.mxu0 0.0
        %3932 = vmatpush1.msra.mxu0 0.0
        %3933 = vmatprep.subr.mxu0 0.0
        %3934 = vmatpush1.msra.mxu0 0.0
        %3935 = vmatprep.subr.mxu0 0.0
        %3936 = vmatpush1.msra.mxu0 0.0
        %3937 = vmatprep.subr.mxu0 0.0
        %3938 = vmatpush1.msra.mxu0 0.0
        %3939 = vmatprep.subr.mxu0 0.0
        %3940 = vmatpush1.msra.mxu0 0.0
        %3941 = vmatprep.subr.mxu0 0.0
        %3942 = vmatpush1.msra.mxu0 0.0
        %3943 = vmatprep.subr.mxu0 0.0
        %3944 = vmatpush1.msra.mxu0 0.0
        %3945 = vmatprep.subr.mxu0 0.0
        %3946 = vmatpush1.msra.mxu0 0.0
        %3947 = vmatprep.subr.mxu0 0.0
        %3948 = vmatpush1.msra.mxu0 0.0
        %3949 = vmatprep.subr.mxu0 0.0
        %3950 = vmatpush1.msra.mxu0 0.0
        %3951 = vmatprep.subr.mxu0 0.0
        %3952 = vmatpush1.msra.mxu0 0.0
        %3953 = vmatprep.subr.mxu0 0.0
        %3954 = vmatpush1.msra.mxu0 0.0
        %3955 = vmatprep.subr.mxu0 0.0
        %3956 = vmatpush1.msra.mxu0 0.0
        %3957 = vmatprep.subr.mxu0 0.0
        %3958 = vmatpush1.msra.mxu0 0.0
        %3959 = vmatprep.subr.mxu0 0.0
        %3960 = vmatpush1.msra.mxu0 0.0
        %3961 = vmatprep.subr.mxu0 0.0
        %3962 = vmatpush1.msra.mxu0 0.0
        %3963 = vmatprep.subr.mxu0 0.0
        %3964 = vmatpush1.msra.mxu0 0.0
        %3965 = vmatprep.subr.mxu0 0.0
        %3966 = vmatpush1.msra.mxu0 0.0
        %3967 = vmatprep.subr.mxu0 0.0
        %3968 = vmatpush1.msra.mxu0 0.0
        %3969 = vmatprep.subr.mxu0 0.0
        %3970 = vmatpush1.msra.mxu0 0.0
        %3971 = vmatprep.subr.mxu0 0.0
        %3972 = vmatpush1.msra.mxu0 0.0
        %3973 = vmatprep.subr.mxu0 0.0
        %3974 = vmatpush1.msra.mxu0 0.0
        %3975 = vmatprep.subr.mxu0 0.0
        %3976 = vmatpush1.msra.mxu0 0.0
        %3977 = vmatprep.subr.mxu0 0.0
        %3978 = vmatpush1.msra.mxu0 0.0
        %3979 = vmatprep.subr.mxu0 0.0
        %3980 = vmatpush1.msra.mxu0 0.0
        %3981 = vmatprep.subr.mxu0 0.0
        %3982 = vmatpush1.msra.mxu0 0.0
        %3983 = vmatprep.subr.mxu0 0.0
        %3984 = vmatpush1.msra.mxu0 0.0
        %3985 = vmatprep.subr.mxu0 0.0
        %3986 = vmatpush1.msra.mxu0 0.0
        %3987 = vmatprep.subr.mxu0 0.0
        %3988 = vmatpush1.msra.mxu0 0.0
        %3989 = vmatprep.subr.mxu0 0.0
        %3990 = vmatpush1.msra.mxu0 0.0
        %3991 = vmatprep.subr.mxu0 0.0
        %3992 = vmatpush1.msra.mxu0 0.0
        %3993 = vmatprep.mubr.f32.mxu0 0.0
        %3994 = vmatmul.mubr.f32.gmra.mrb[0].mxu0 %v3921
        %v3995 = vpop.f32.mrb[0].mxu0
        %v3996 = vadd.f32 0.0, %v3995
        %v3997 = vpop.f32.mrb[0].mxu0
        %3998 = vmatprep.mubr.f32.mxu0 0.0
        %3999 = vmatmul.mubr.f32.gmra.mrb[0].mxu0 %v3924
        %v4000 = vpop.f32.mrb[0].mxu0
        %v4001 = vadd.f32 0.0, %v4000
        %v4002 = vpop.f32.mrb[0].mxu0
        %4003 = vdwg.mxu0
        %v4004 = vadd.f32 %v3915, %v3996
        %v4005 = vadd.f32 %v3916, %v4001
        %v4006 = vld [vmem:[%s3001 + $0x1] sm:$0xff]
        %v4007 = vld [vmem:[%s3001 + $0x11] sm:$0xff]
        %v4008 = vld [vmem:[%s3095] sm:$0xf]
        %v4010 = vsel %vm387, %v4006, 0
        %v4013 = vsel %vm387, %v4007, 0
        %v4016 = vsel %vm400, %v4008, 0
        %4018 = vmatprep.subr.mxu0 0.0
        %4019 = vmatpush1.msra.mxu0 %v4016
        %4020 = vmatprep.subr.mxu0 0.0
        %4021 = vmatpush1.msra.mxu0 0.0
        %4022 = vmatprep.subr.mxu0 0.0
        %4023 = vmatpush1.msra.mxu0 0.0
        %4024 = vmatprep.subr.mxu0 0.0
        %4025 = vmatpush1.msra.mxu0 0.0
        %4026 = vmatprep.subr.mxu0 0.0
        %4027 = vmatpush1.msra.mxu0 0.0
        %4028 = vmatprep.subr.mxu0 0.0
        %4029 = vmatpush1.msra.mxu0 0.0
        %4030 = vmatprep.subr.mxu0 0.0
        %4031 = vmatpush1.msra.mxu0 0.0
        %4032 = vmatprep.subr.mxu0 0.0
        %4033 = vmatpush1.msra.mxu0 0.0
        %4034 = vmatprep.subr.mxu0 0.0
        %4035 = vmatpush1.msra.mxu0 0.0
        %4036 = vmatprep.subr.mxu0 0.0
        %4037 = vmatpush1.msra.mxu0 0.0
        %4038 = vmatprep.subr.mxu0 0.0
        %4039 = vmatpush1.msra.mxu0 0.0
        %4040 = vmatprep.subr.mxu0 0.0
        %4041 = vmatpush1.msra.mxu0 0.0
        %4042 = vmatprep.subr.mxu0 0.0
        %4043 = vmatpush1.msra.mxu0 0.0
        %4044 = vmatprep.subr.mxu0 0.0
        %4045 = vmatpush1.msra.mxu0 0.0
        %4046 = vmatprep.subr.mxu0 0.0
        %4047 = vmatpush1.msra.mxu0 0.0
        %4048 = vmatprep.subr.mxu0 0.0
        %4049 = vmatpush1.msra.mxu0 0.0
        %4050 = vmatprep.subr.mxu0 0.0
        %4051 = vmatpush1.msra.mxu0 0.0
        %4052 = vmatprep.subr.mxu0 0.0
        %4053 = vmatpush1.msra.mxu0 0.0
        %4054 = vmatprep.subr.mxu0 0.0
        %4055 = vmatpush1.msra.mxu0 0.0
        %4056 = vmatprep.subr.mxu0 0.0
        %4057 = vmatpush1.msra.mxu0 0.0
        %4058 = vmatprep.subr.mxu0 0.0
        %4059 = vmatpush1.msra.mxu0 0.0
        %4060 = vmatprep.subr.mxu0 0.0
        %4061 = vmatpush1.msra.mxu0 0.0
        %4062 = vmatprep.subr.mxu0 0.0
        %4063 = vmatpush1.msra.mxu0 0.0
        %4064 = vmatprep.subr.mxu0 0.0
        %4065 = vmatpush1.msra.mxu0 0.0
        %4066 = vmatprep.subr.mxu0 0.0
        %4067 = vmatpush1.msra.mxu0 0.0
        %4068 = vmatprep.subr.mxu0 0.0
        %4069 = vmatpush1.msra.mxu0 0.0
        %4070 = vmatprep.subr.mxu0 0.0
        %4071 = vmatpush1.msra.mxu0 0.0
        %4072 = vmatprep.subr.mxu0 0.0
        %4073 = vmatpush1.msra.mxu0 0.0
        %4074 = vmatprep.subr.mxu0 0.0
        %4075 = vmatpush1.msra.mxu0 0.0
        %4076 = vmatprep.subr.mxu0 0.0
        %4077 = vmatpush1.msra.mxu0 0.0
        %4078 = vmatprep.subr.mxu0 0.0
        %4079 = vmatpush1.msra.mxu0 0.0
        %4080 = vmatprep.subr.mxu0 0.0
        %4081 = vmatpush1.msra.mxu0 0.0
        %4082 = vmatprep.mubr.f32.mxu0 0.0
        %4083 = vmatmul.mubr.f32.gmra.mrb[0].mxu0 %v4010
        %v4084 = vpop.f32.mrb[0].mxu0
        %v4085 = vadd.f32 0.0, %v4084
        %v4086 = vpop.f32.mrb[0].mxu0
        %4087 = vmatprep.mubr.f32.mxu0 0.0
        %4088 = vmatmul.mubr.f32.gmra.mrb[0].mxu0 %v4013
        %v4089 = vpop.f32.mrb[0].mxu0
        %v4090 = vadd.f32 0.0, %v4089
        %v4091 = vpop.f32.mrb[0].mxu0
        %4092 = vdwg.mxu0
        %v4093 = vadd.f32 %v4004, %v4085
        %v4094 = vadd.f32 %v4005, %v4090
        %v4095 = vld [vmem:[%s3092 + $0x2] sm:$0xff]
        %v4096 = vld [vmem:[%s3092 + $0x12] sm:$0xff]
        %v4097 = vld [vmem:[%s3185] sm:$0xf]
        %v4099 = vsel %vm387, %v4095, 0
        %v4102 = vsel %vm387, %v4096, 0
        %v4105 = vsel %vm400, %v4097, 0
        %4107 = vmatprep.subr.mxu0 0.0
        %4108 = vmatpush1.msra.mxu0 %v4105
        %4109 = vmatprep.subr.mxu0 0.0
        %4110 = vmatpush1.msra.mxu0 0.0
        %4111 = vmatprep.subr.mxu0 0.0
        %4112 = vmatpush1.msra.mxu0 0.0
        %4113 = vmatprep.subr.mxu0 0.0
        %4114 = vmatpush1.msra.mxu0 0.0
        %4115 = vmatprep.subr.mxu0 0.0
        %4116 = vmatpush1.msra.mxu0 0.0
        %4117 = vmatprep.subr.mxu0 0.0
        %4118 = vmatpush1.msra.mxu0 0.0
        %4119 = vmatprep.subr.mxu0 0.0
        %4120 = vmatpush1.msra.mxu0 0.0
        %4121 = vmatprep.subr.mxu0 0.0
        %4122 = vmatpush1.msra.mxu0 0.0
        %4123 = vmatprep.subr.mxu0 0.0
        %4124 = vmatpush1.msra.mxu0 0.0
        %4125 = vmatprep.subr.mxu0 0.0
        %4126 = vmatpush1.msra.mxu0 0.0
        %4127 = vmatprep.subr.mxu0 0.0
        %4128 = vmatpush1.msra.mxu0 0.0
        %4129 = vmatprep.subr.mxu0 0.0
        %4130 = vmatpush1.msra.mxu0 0.0
        %4131 = vmatprep.subr.mxu0 0.0
        %4132 = vmatpush1.msra.mxu0 0.0
        %4133 = vmatprep.subr.mxu0 0.0
        %4134 = vmatpush1.msra.mxu0 0.0
        %4135 = vmatprep.subr.mxu0 0.0
        %4136 = vmatpush1.msra.mxu0 0.0
        %4137 = vmatprep.subr.mxu0 0.0
        %4138 = vmatpush1.msra.mxu0 0.0
        %4139 = vmatprep.subr.mxu0 0.0
        %4140 = vmatpush1.msra.mxu0 0.0
        %4141 = vmatprep.subr.mxu0 0.0
        %4142 = vmatpush1.msra.mxu0 0.0
        %4143 = vmatprep.subr.mxu0 0.0
        %4144 = vmatpush1.msra.mxu0 0.0
        %4145 = vmatprep.subr.mxu0 0.0
        %4146 = vmatpush1.msra.mxu0 0.0
        %4147 = vmatprep.subr.mxu0 0.0
        %4148 = vmatpush1.msra.mxu0 0.0
        %4149 = vmatprep.subr.mxu0 0.0
        %4150 = vmatpush1.msra.mxu0 0.0
        %4151 = vmatprep.subr.mxu0 0.0
        %4152 = vmatpush1.msra.mxu0 0.0
        %4153 = vmatprep.subr.mxu0 0.0
        %4154 = vmatpush1.msra.mxu0 0.0
        %4155 = vmatprep.subr.mxu0 0.0
        %4156 = vmatpush1.msra.mxu0 0.0
        %4157 = vmatprep.subr.mxu0 0.0
        %4158 = vmatpush1.msra.mxu0 0.0
        %4159 = vmatprep.subr.mxu0 0.0
        %4160 = vmatpush1.msra.mxu0 0.0
        %4161 = vmatprep.subr.mxu0 0.0
        %4162 = vmatpush1.msra.mxu0 0.0
        %4163 = vmatprep.subr.mxu0 0.0
        %4164 = vmatpush1.msra.mxu0 0.0
        %4165 = vmatprep.subr.mxu0 0.0
        %4166 = vmatpush1.msra.mxu0 0.0
        %4167 = vmatprep.subr.mxu0 0.0
        %4168 = vmatpush1.msra.mxu0 0.0
        %4169 = vmatprep.subr.mxu0 0.0
        %4170 = vmatpush1.msra.mxu0 0.0
        %4171 = vmatprep.mubr.f32.mxu0 0.0
        %4172 = vmatmul.mubr.f32.gmra.mrb[0].mxu0 %v4099
        %v4173 = vpop.f32.mrb[0].mxu0
        %v4174 = vadd.f32 0.0, %v4173
        %v4175 = vpop.f32.mrb[0].mxu0
        %4176 = vmatprep.mubr.f32.mxu0 0.0
        %4177 = vmatmul.mubr.f32.gmra.mrb[0].mxu0 %v4102
        %v4178 = vpop.f32.mrb[0].mxu0
        %v4179 = vadd.f32 0.0, %v4178
        %v4180 = vpop.f32.mrb[0].mxu0
        %4181 = vdwg.mxu0
        %v4182 = vadd.f32 %v4093, %v4174
        %v4183 = vadd.f32 %v4094, %v4179
        %v4184 = vld [vmem:[%s3364 + $0x1] sm:$0xff]
        %v4185 = vld [vmem:[%s3364 + $0x11] sm:$0xff]
        %v4186 = vld [vmem:[%s3276] sm:$0xf]
        %v4188 = vsel %vm387, %v4184, 0
        %v4191 = vsel %vm387, %v4185, 0
        %v4194 = vsel %vm400, %v4186, 0
        %4196 = vmatprep.subr.mxu0 0.0
        %4197 = vmatpush1.msra.mxu0 %v4194
        %4198 = vmatprep.subr.mxu0 0.0
        %4199 = vmatpush1.msra.mxu0 0.0
        %4200 = vmatprep.subr.mxu0 0.0
        %4201 = vmatpush1.msra.mxu0 0.0
        %4202 = vmatprep.subr.mxu0 0.0
        %4203 = vmatpush1.msra.mxu0 0.0
        %4204 = vmatprep.subr.mxu0 0.0
        %4205 = vmatpush1.msra.mxu0 0.0
        %4206 = vmatprep.subr.mxu0 0.0
        %4207 = vmatpush1.msra.mxu0 0.0
        %4208 = vmatprep.subr.mxu0 0.0
        %4209 = vmatpush1.msra.mxu0 0.0
        %4210 = vmatprep.subr.mxu0 0.0
        %4211 = vmatpush1.msra.mxu0 0.0
        %4212 = vmatprep.subr.mxu0 0.0
        %4213 = vmatpush1.msra.mxu0 0.0
        %4214 = vmatprep.subr.mxu0 0.0
        %4215 = vmatpush1.msra.mxu0 0.0
        %4216 = vmatprep.subr.mxu0 0.0
        %4217 = vmatpush1.msra.mxu0 0.0
        %4218 = vmatprep.subr.mxu0 0.0
        %4219 = vmatpush1.msra.mxu0 0.0
        %4220 = vmatprep.subr.mxu0 0.0
        %4221 = vmatpush1.msra.mxu0 0.0
        %4222 = vmatprep.subr.mxu0 0.0
        %4223 = vmatpush1.msra.mxu0 0.0
        %4224 = vmatprep.subr.mxu0 0.0
        %4225 = vmatpush1.msra.mxu0 0.0
        %4226 = vmatprep.subr.mxu0 0.0
        %4227 = vmatpush1.msra.mxu0 0.0
        %4228 = vmatprep.subr.mxu0 0.0
        %4229 = vmatpush1.msra.mxu0 0.0
        %4230 = vmatprep.subr.mxu0 0.0
        %4231 = vmatpush1.msra.mxu0 0.0
        %4232 = vmatprep.subr.mxu0 0.0
        %4233 = vmatpush1.msra.mxu0 0.0
        %4234 = vmatprep.subr.mxu0 0.0
        %4235 = vmatpush1.msra.mxu0 0.0
        %4236 = vmatprep.subr.mxu0 0.0
        %4237 = vmatpush1.msra.mxu0 0.0
        %4238 = vmatprep.subr.mxu0 0.0
        %4239 = vmatpush1.msra.mxu0 0.0
        %4240 = vmatprep.subr.mxu0 0.0
        %4241 = vmatpush1.msra.mxu0 0.0
        %4242 = vmatprep.subr.mxu0 0.0
        %4243 = vmatpush1.msra.mxu0 0.0
        %4244 = vmatprep.subr.mxu0 0.0
        %4245 = vmatpush1.msra.mxu0 0.0
        %4246 = vmatprep.subr.mxu0 0.0
        %4247 = vmatpush1.msra.mxu0 0.0
        %4248 = vmatprep.subr.mxu0 0.0
        %4249 = vmatpush1.msra.mxu0 0.0
        %4250 = vmatprep.subr.mxu0 0.0
        %4251 = vmatpush1.msra.mxu0 0.0
        %4252 = vmatprep.subr.mxu0 0.0
        %4253 = vmatpush1.msra.mxu0 0.0
        %4254 = vmatprep.subr.mxu0 0.0
        %4255 = vmatpush1.msra.mxu0 0.0
        %4256 = vmatprep.subr.mxu0 0.0
        %4257 = vmatpush1.msra.mxu0 0.0
        %4258 = vmatprep.subr.mxu0 0.0
        %4259 = vmatpush1.msra.mxu0 0.0
        %4260 = vmatprep.mubr.f32.mxu0 0.0
        %4261 = vmatmul.mubr.f32.gmra.mrb[0].mxu0 %v4188
        %v4262 = vpop.f32.mrb[0].mxu0
        %v4263 = vadd.f32 0.0, %v4262
        %v4264 = vpop.f32.mrb[0].mxu0
        %4265 = vmatprep.mubr.f32.mxu0 0.0
        %4266 = vmatmul.mubr.f32.gmra.mrb[0].mxu0 %v4191
        %v4267 = vpop.f32.mrb[0].mxu0
        %v4268 = vadd.f32 0.0, %v4267
        %v4269 = vpop.f32.mrb[0].mxu0
        %4270 = vdwg.mxu0
        %v4271 = vadd.f32 %v4182, %v4263
        %v4272 = vadd.f32 %v4183, %v4268
        %v4273 = vld [vmem:[%s3273 + $0x1] sm:$0xff]
        %v4274 = vld [vmem:[%s3273 + $0x11] sm:$0xff]
        %v4275 = vld [vmem:[%s3367] sm:$0xf]
        %v4277 = vsel %vm387, %v4273, 0
        %v4280 = vsel %vm387, %v4274, 0
        %v4283 = vsel %vm400, %v4275, 0
        %4285 = vmatprep.subr.mxu0 0.0
        %4286 = vmatpush1.msra.mxu0 %v4283
        %4287 = vmatprep.subr.mxu0 0.0
        %4288 = vmatpush1.msra.mxu0 0.0
        %4289 = vmatprep.subr.mxu0 0.0
        %4290 = vmatpush1.msra.mxu0 0.0
        %4291 = vmatprep.subr.mxu0 0.0
        %4292 = vmatpush1.msra.mxu0 0.0
        %4293 = vmatprep.subr.mxu0 0.0
        %4294 = vmatpush1.msra.mxu0 0.0
        %4295 = vmatprep.subr.mxu0 0.0
        %4296 = vmatpush1.msra.mxu0 0.0
        %4297 = vmatprep.subr.mxu0 0.0
        %4298 = vmatpush1.msra.mxu0 0.0
        %4299 = vmatprep.subr.mxu0 0.0
        %4300 = vmatpush1.msra.mxu0 0.0
        %4301 = vmatprep.subr.mxu0 0.0
        %4302 = vmatpush1.msra.mxu0 0.0
        %4303 = vmatprep.subr.mxu0 0.0
        %4304 = vmatpush1.msra.mxu0 0.0
        %4305 = vmatprep.subr.mxu0 0.0
        %4306 = vmatpush1.msra.mxu0 0.0
        %4307 = vmatprep.subr.mxu0 0.0
        %4308 = vmatpush1.msra.mxu0 0.0
        %4309 = vmatprep.subr.mxu0 0.0
        %4310 = vmatpush1.msra.mxu0 0.0
        %4311 = vmatprep.subr.mxu0 0.0
        %4312 = vmatpush1.msra.mxu0 0.0
        %4313 = vmatprep.subr.mxu0 0.0
        %4314 = vmatpush1.msra.mxu0 0.0
        %4315 = vmatprep.subr.mxu0 0.0
        %4316 = vmatpush1.msra.mxu0 0.0
        %4317 = vmatprep.subr.mxu0 0.0
        %4318 = vmatpush1.msra.mxu0 0.0
        %4319 = vmatprep.subr.mxu0 0.0
        %4320 = vmatpush1.msra.mxu0 0.0
        %4321 = vmatprep.subr.mxu0 0.0
        %4322 = vmatpush1.msra.mxu0 0.0
        %4323 = vmatprep.subr.mxu0 0.0
        %4324 = vmatpush1.msra.mxu0 0.0
        %4325 = vmatprep.subr.mxu0 0.0
        %4326 = vmatpush1.msra.mxu0 0.0
        %4327 = vmatprep.subr.mxu0 0.0
        %4328 = vmatpush1.msra.mxu0 0.0
        %4329 = vmatprep.subr.mxu0 0.0
        %4330 = vmatpush1.msra.mxu0 0.0
        %4331 = vmatprep.subr.mxu0 0.0
        %4332 = vmatpush1.msra.mxu0 0.0
        %4333 = vmatprep.subr.mxu0 0.0
        %4334 = vmatpush1.msra.mxu0 0.0
        %4335 = vmatprep.subr.mxu0 0.0
        %4336 = vmatpush1.msra.mxu0 0.0
        %4337 = vmatprep.subr.mxu0 0.0
        %4338 = vmatpush1.msra.mxu0 0.0
        %4339 = vmatprep.subr.mxu0 0.0
        %4340 = vmatpush1.msra.mxu0 0.0
        %4341 = vmatprep.subr.mxu0 0.0
        %4342 = vmatpush1.msra.mxu0 0.0
        %4343 = vmatprep.subr.mxu0 0.0
        %4344 = vmatpush1.msra.mxu0 0.0
        %4345 = vmatprep.subr.mxu0 0.0
        %4346 = vmatpush1.msra.mxu0 0.0
        %4347 = vmatprep.subr.mxu0 0.0
        %4348 = vmatpush1.msra.mxu0 0.0
        %4349 = vmatprep.mubr.f32.mxu0 0.0
        %4350 = vmatmul.mubr.f32.gmra.mrb[0].mxu0 %v4277
        %v4351 = vpop.f32.mrb[0].mxu0
        %v4352 = vadd.f32 0.0, %v4351
        %v4353 = vpop.f32.mrb[0].mxu0
        %4354 = vmatprep.mubr.f32.mxu0 0.0
        %4355 = vmatmul.mubr.f32.gmra.mrb[0].mxu0 %v4280
        %v4356 = vpop.f32.mrb[0].mxu0
        %v4357 = vadd.f32 0.0, %v4356
        %v4358 = vpop.f32.mrb[0].mxu0
        %4359 = vdwg.mxu0
        %v4360 = vadd.f32 %v4271, %v4352
        %v4361 = vadd.f32 %v4272, %v4357
        %v4362 = vld [vmem:[%s3364 + $0x2] sm:$0xff]
        %v4363 = vld [vmem:[%s3364 + $0x12] sm:$0xff]
        %v4364 = vld [vmem:[%s3457] sm:$0xf]
        %v4366 = vsel %vm387, %v4362, 0
        %v4369 = vsel %vm387, %v4363, 0
        %v4372 = vsel %vm400, %v4364, 0
        %4374 = vmatprep.subr.mxu0 0.0
        %4375 = vmatpush1.msra.mxu0 %v4372
        %4376 = vmatprep.subr.mxu0 0.0
        %4377 = vmatpush1.msra.mxu0 0.0
        %4378 = vmatprep.subr.mxu0 0.0
        %4379 = vmatpush1.msra.mxu0 0.0
        %4380 = vmatprep.subr.mxu0 0.0
        %4381 = vmatpush1.msra.mxu0 0.0
        %4382 = vmatprep.subr.mxu0 0.0
        %4383 = vmatpush1.msra.mxu0 0.0
        %4384 = vmatprep.subr.mxu0 0.0
        %4385 = vmatpush1.msra.mxu0 0.0
        %4386 = vmatprep.subr.mxu0 0.0
        %4387 = vmatpush1.msra.mxu0 0.0
        %4388 = vmatprep.subr.mxu0 0.0
        %4389 = vmatpush1.msra.mxu0 0.0
        %4390 = vmatprep.subr.mxu0 0.0
        %4391 = vmatpush1.msra.mxu0 0.0
        %4392 = vmatprep.subr.mxu0 0.0
        %4393 = vmatpush1.msra.mxu0 0.0
        %4394 = vmatprep.subr.mxu0 0.0
        %4395 = vmatpush1.msra.mxu0 0.0
        %4396 = vmatprep.subr.mxu0 0.0
        %4397 = vmatpush1.msra.mxu0 0.0
        %4398 = vmatprep.subr.mxu0 0.0
        %4399 = vmatpush1.msra.mxu0 0.0
        %4400 = vmatprep.subr.mxu0 0.0
        %4401 = vmatpush1.msra.mxu0 0.0
        %4402 = vmatprep.subr.mxu0 0.0
        %4403 = vmatpush1.msra.mxu0 0.0
        %4404 = vmatprep.subr.mxu0 0.0
        %4405 = vmatpush1.msra.mxu0 0.0
        %4406 = vmatprep.subr.mxu0 0.0
        %4407 = vmatpush1.msra.mxu0 0.0
        %4408 = vmatprep.subr.mxu0 0.0
        %4409 = vmatpush1.msra.mxu0 0.0
        %4410 = vmatprep.subr.mxu0 0.0
        %4411 = vmatpush1.msra.mxu0 0.0
        %4412 = vmatprep.subr.mxu0 0.0
        %4413 = vmatpush1.msra.mxu0 0.0
        %4414 = vmatprep.subr.mxu0 0.0
        %4415 = vmatpush1.msra.mxu0 0.0
        %4416 = vmatprep.subr.mxu0 0.0
        %4417 = vmatpush1.msra.mxu0 0.0
        %4418 = vmatprep.subr.mxu0 0.0
        %4419 = vmatpush1.msra.mxu0 0.0
        %4420 = vmatprep.subr.mxu0 0.0
        %4421 = vmatpush1.msra.mxu0 0.0
        %4422 = vmatprep.subr.mxu0 0.0
        %4423 = vmatpush1.msra.mxu0 0.0
        %4424 = vmatprep.subr.mxu0 0.0
        %4425 = vmatpush1.msra.mxu0 0.0
        %4426 = vmatprep.subr.mxu0 0.0
        %4427 = vmatpush1.msra.mxu0 0.0
        %4428 = vmatprep.subr.mxu0 0.0
        %4429 = vmatpush1.msra.mxu0 0.0
        %4430 = vmatprep.subr.mxu0 0.0
        %4431 = vmatpush1.msra.mxu0 0.0
        %4432 = vmatprep.subr.mxu0 0.0
        %4433 = vmatpush1.msra.mxu0 0.0
        %4434 = vmatprep.subr.mxu0 0.0
        %4435 = vmatpush1.msra.mxu0 0.0
        %4436 = vmatprep.subr.mxu0 0.0
        %4437 = vmatpush1.msra.mxu0 0.0
        %4438 = vmatprep.mubr.f32.mxu0 0.0
        %4439 = vmatmul.mubr.f32.gmra.mrb[0].mxu0 %v4366
        %v4440 = vpop.f32.mrb[0].mxu0
        %v4441 = vadd.f32 0.0, %v4440
        %v4442 = vpop.f32.mrb[0].mxu0
        %4443 = vmatprep.mubr.f32.mxu0 0.0
        %4444 = vmatmul.mubr.f32.gmra.mrb[0].mxu0 %v4369
        %v4445 = vpop.f32.mrb[0].mxu0
        %v4446 = vadd.f32 0.0, %v4445
        %v4447 = vpop.f32.mrb[0].mxu0
        %4448 = vdwg.mxu0
        %v4449 = vadd.f32 %v4360, %v4441
        %v4450 = vadd.f32 %v4361, %v4446
        %v4451 = vadd.f32 %v4449, %v3549
        %v4452 = vadd.f32 %v4450, %v3549
        %v4453 = vmax.f32 %v4451, 0.0
        %v4454 = vmax.f32 %v4452, 0.0
        %v4456 = vsel %vm387, %v4453, 0
        %v4459 = vsel %vm387, %v4454, 0
        %4461 = vmatprep.subr.mxu0 0.0
        %4462 = vmatpush1.msra.mxu0 %v3568
        %4463 = vmatprep.subr.mxu0 0.0
        %4464 = vmatpush1.msra.mxu0 0.0
        %4465 = vmatprep.subr.mxu0 0.0
        %4466 = vmatpush1.msra.mxu0 0.0
        %4467 = vmatprep.subr.mxu0 0.0
        %4468 = vmatpush1.msra.mxu0 0.0
        %4469 = vmatprep.subr.mxu0 0.0
        %4470 = vmatpush1.msra.mxu0 0.0
        %4471 = vmatprep.subr.mxu0 0.0
        %4472 = vmatpush1.msra.mxu0 0.0
        %4473 = vmatprep.subr.mxu0 0.0
        %4474 = vmatpush1.msra.mxu0 0.0
        %4475 = vmatprep.subr.mxu0 0.0
        %4476 = vmatpush1.msra.mxu0 0.0
        %4477 = vmatprep.subr.mxu0 0.0
        %4478 = vmatpush1.msra.mxu0 0.0
        %4479 = vmatprep.subr.mxu0 0.0
        %4480 = vmatpush1.msra.mxu0 0.0
        %4481 = vmatprep.subr.mxu0 0.0
        %4482 = vmatpush1.msra.mxu0 0.0
        %4483 = vmatprep.subr.mxu0 0.0
        %4484 = vmatpush1.msra.mxu0 0.0
        %4485 = vmatprep.subr.mxu0 0.0
        %4486 = vmatpush1.msra.mxu0 0.0
        %4487 = vmatprep.subr.mxu0 0.0
        %4488 = vmatpush1.msra.mxu0 0.0
        %4489 = vmatprep.subr.mxu0 0.0
        %4490 = vmatpush1.msra.mxu0 0.0
        %4491 = vmatprep.subr.mxu0 0.0
        %4492 = vmatpush1.msra.mxu0 0.0
        %4493 = vmatprep.subr.mxu0 0.0
        %4494 = vmatpush1.msra.mxu0 0.0
        %4495 = vmatprep.subr.mxu0 0.0
        %4496 = vmatpush1.msra.mxu0 0.0
        %4497 = vmatprep.subr.mxu0 0.0
        %4498 = vmatpush1.msra.mxu0 0.0
        %4499 = vmatprep.subr.mxu0 0.0
        %4500 = vmatpush1.msra.mxu0 0.0
        %4501 = vmatprep.subr.mxu0 0.0
        %4502 = vmatpush1.msra.mxu0 0.0
        %4503 = vmatprep.subr.mxu0 0.0
        %4504 = vmatpush1.msra.mxu0 0.0
        %4505 = vmatprep.subr.mxu0 0.0
        %4506 = vmatpush1.msra.mxu0 0.0
        %4507 = vmatprep.subr.mxu0 0.0
        %4508 = vmatpush1.msra.mxu0 0.0
        %4509 = vmatprep.subr.mxu0 0.0
        %4510 = vmatpush1.msra.mxu0 0.0
        %4511 = vmatprep.subr.mxu0 0.0
        %4512 = vmatpush1.msra.mxu0 0.0
        %4513 = vmatprep.subr.mxu0 0.0
        %4514 = vmatpush1.msra.mxu0 0.0
        %4515 = vmatprep.subr.mxu0 0.0
        %4516 = vmatpush1.msra.mxu0 0.0
        %4517 = vmatprep.subr.mxu0 0.0
        %4518 = vmatpush1.msra.mxu0 0.0
        %4519 = vmatprep.subr.mxu0 0.0
        %4520 = vmatpush1.msra.mxu0 0.0
        %4521 = vmatprep.subr.mxu0 0.0
        %4522 = vmatpush1.msra.mxu0 0.0
        %4523 = vmatprep.subr.mxu0 0.0
        %4524 = vmatpush1.msra.mxu0 0.0
        %4525 = vmatprep.mubr.f32.mxu0 0.0
        %4526 = vmatmul.mubr.f32.gmra.mrb[0].mxu0 %v4456
        %v4527 = vpop.f32.mrb[0].mxu0
        %v4528 = vadd.f32 %v3559, %v4527
        %v4529 = vpop.f32.mrb[0].mxu0
        %4530 = vmatprep.mubr.f32.mxu0 0.0
        %4531 = vmatmul.mubr.f32.gmra.mrb[0].mxu0 %v4459
        %v4532 = vpop.f32.mrb[0].mxu0
        %v4533 = vadd.f32 %v3559, %v4532
        %v4534 = vpop.f32.mrb[0].mxu0
        %4535 = vdwg.mxu0
        %s4536 = scalar_lea.vmem [#allocation3], 40
        %v4537 = vld [vmem:[%s4536] sm:$0xff]
        %v4538 = vld [vmem:[%s4536 + $0x8] sm:$0xff]
        %v4539 = vadd.f32 %v4528, %v4537
        %v4540 = vadd.f32 %v4533, %v4538
        %v4541 = vmax.f32 %v4539, 0.0
        %v4542 = vmax.f32 %v4540, 0.0
        %s4543 = scalar_lea.vmem %s323, 16 [#allocation4]
        %4544 = vst.msk [vmem:[%s4543] sm:$0xff] %vm387, %v4541
        %4545 = vst.msk [vmem:[%s4543 + $0x8] sm:$0xff] %vm387, %v4542
        %v4546 = vld [vmem:[%s3001] sm:$0xff]
        %v4547 = vld [vmem:[%s3001 + $0x10] sm:$0xff]
        %v4548 = vld [vmem:[%s4] sm:$0xf]
        %v4549 = vld [vmem:[%s3092 + $0x1] sm:$0xff]
        %v4550 = vld [vmem:[%s3092 + $0x11] sm:$0xff]
        %v4551 = vld [vmem:[%s2741] sm:$0xf]
        %v4553 = vsel %vm387, %v4549, 0
        %v4556 = vsel %vm387, %v4550, 0
        %v4559 = vsel %vm400, %v4551, 0
        %4561 = vmatprep.subr.mxu0 0.0
        %4562 = vmatpush1.msra.mxu0 %v4559
        %4563 = vmatprep.subr.mxu0 0.0
        %4564 = vmatpush1.msra.mxu0 0.0
        %4565 = vmatprep.subr.mxu0 0.0
        %4566 = vmatpush1.msra.mxu0 0.0
        %4567 = vmatprep.subr.mxu0 0.0
        %4568 = vmatpush1.msra.mxu0 0.0
        %4569 = vmatprep.subr.mxu0 0.0
        %4570 = vmatpush1.msra.mxu0 0.0
        %4571 = vmatprep.subr.mxu0 0.0
        %4572 = vmatpush1.msra.mxu0 0.0
        %4573 = vmatprep.subr.mxu0 0.0
        %4574 = vmatpush1.msra.mxu0 0.0
        %4575 = vmatprep.subr.mxu0 0.0
        %4576 = vmatpush1.msra.mxu0 0.0
        %4577 = vmatprep.subr.mxu0 0.0
        %4578 = vmatpush1.msra.mxu0 0.0
        %4579 = vmatprep.subr.mxu0 0.0
        %4580 = vmatpush1.msra.mxu0 0.0
        %4581 = vmatprep.subr.mxu0 0.0
        %4582 = vmatpush1.msra.mxu0 0.0
        %4583 = vmatprep.subr.mxu0 0.0
        %4584 = vmatpush1.msra.mxu0 0.0
        %4585 = vmatprep.subr.mxu0 0.0
        %4586 = vmatpush1.msra.mxu0 0.0
        %4587 = vmatprep.subr.mxu0 0.0
        %4588 = vmatpush1.msra.mxu0 0.0
        %4589 = vmatprep.subr.mxu0 0.0
        %4590 = vmatpush1.msra.mxu0 0.0
        %4591 = vmatprep.subr.mxu0 0.0
        %4592 = vmatpush1.msra.mxu0 0.0
        %4593 = vmatprep.subr.mxu0 0.0
        %4594 = vmatpush1.msra.mxu0 0.0
        %4595 = vmatprep.subr.mxu0 0.0
        %4596 = vmatpush1.msra.mxu0 0.0
        %4597 = vmatprep.subr.mxu0 0.0
        %4598 = vmatpush1.msra.mxu0 0.0
        %4599 = vmatprep.subr.mxu0 0.0
        %4600 = vmatpush1.msra.mxu0 0.0
        %4601 = vmatprep.subr.mxu0 0.0
        %4602 = vmatpush1.msra.mxu0 0.0
        %4603 = vmatprep.subr.mxu0 0.0
        %4604 = vmatpush1.msra.mxu0 0.0
        %4605 = vmatprep.subr.mxu0 0.0
        %4606 = vmatpush1.msra.mxu0 0.0
        %4607 = vmatprep.subr.mxu0 0.0
        %4608 = vmatpush1.msra.mxu0 0.0
        %4609 = vmatprep.subr.mxu0 0.0
        %4610 = vmatpush1.msra.mxu0 0.0
        %4611 = vmatprep.subr.mxu0 0.0
        %4612 = vmatpush1.msra.mxu0 0.0
        %4613 = vmatprep.subr.mxu0 0.0
        %4614 = vmatpush1.msra.mxu0 0.0
        %4615 = vmatprep.subr.mxu0 0.0
        %4616 = vmatpush1.msra.mxu0 0.0
        %4617 = vmatprep.subr.mxu0 0.0
        %4618 = vmatpush1.msra.mxu0 0.0
        %4619 = vmatprep.subr.mxu0 0.0
        %4620 = vmatpush1.msra.mxu0 0.0
        %4621 = vmatprep.subr.mxu0 0.0
        %4622 = vmatpush1.msra.mxu0 0.0
        %4623 = vmatprep.subr.mxu0 0.0
        %4624 = vmatpush1.msra.mxu0 0.0
        %4625 = vmatprep.mubr.f32.mxu0 0.0
        %4626 = vmatmul.mubr.f32.gmra.mrb[0].mxu0 %v4553
        %v4627 = vpop.f32.mrb[0].mxu0
        %v4628 = vadd.f32 0.0, %v4627
        %v4629 = vpop.f32.mrb[0].mxu0
        %4630 = vmatprep.mubr.f32.mxu0 0.0
        %4631 = vmatmul.mubr.f32.gmra.mrb[0].mxu0 %v4556
        %v4632 = vpop.f32.mrb[0].mxu0
        %v4633 = vadd.f32 0.0, %v4632
        %v4634 = vpop.f32.mrb[0].mxu0
        %4635 = vdwg.mxu0
        %v4637 = vsel %vm387, %v4546, 0
        %v4640 = vsel %vm387, %v4547, 0
        %v4643 = vsel %vm400, %v4548, 0
        %4645 = vmatprep.subr.mxu0 0.0
        %4646 = vmatpush1.msra.mxu0 %v4643
        %4647 = vmatprep.subr.mxu0 0.0
        %4648 = vmatpush1.msra.mxu0 0.0
        %4649 = vmatprep.subr.mxu0 0.0
        %4650 = vmatpush1.msra.mxu0 0.0
        %4651 = vmatprep.subr.mxu0 0.0
        %4652 = vmatpush1.msra.mxu0 0.0
        %4653 = vmatprep.subr.mxu0 0.0
        %4654 = vmatpush1.msra.mxu0 0.0
        %4655 = vmatprep.subr.mxu0 0.0
        %4656 = vmatpush1.msra.mxu0 0.0
        %4657 = vmatprep.subr.mxu0 0.0
        %4658 = vmatpush1.msra.mxu0 0.0
        %4659 = vmatprep.subr.mxu0 0.0
        %4660 = vmatpush1.msra.mxu0 0.0
        %4661 = vmatprep.subr.mxu0 0.0
        %4662 = vmatpush1.msra.mxu0 0.0
        %4663 = vmatprep.subr.mxu0 0.0
        %4664 = vmatpush1.msra.mxu0 0.0
        %4665 = vmatprep.subr.mxu0 0.0
        %4666 = vmatpush1.msra.mxu0 0.0
        %4667 = vmatprep.subr.mxu0 0.0
        %4668 = vmatpush1.msra.mxu0 0.0
        %4669 = vmatprep.subr.mxu0 0.0
        %4670 = vmatpush1.msra.mxu0 0.0
        %4671 = vmatprep.subr.mxu0 0.0
        %4672 = vmatpush1.msra.mxu0 0.0
        %4673 = vmatprep.subr.mxu0 0.0
        %4674 = vmatpush1.msra.mxu0 0.0
        %4675 = vmatprep.subr.mxu0 0.0
        %4676 = vmatpush1.msra.mxu0 0.0
        %4677 = vmatprep.subr.mxu0 0.0
        %4678 = vmatpush1.msra.mxu0 0.0
        %4679 = vmatprep.subr.mxu0 0.0
        %4680 = vmatpush1.msra.mxu0 0.0
        %4681 = vmatprep.subr.mxu0 0.0
        %4682 = vmatpush1.msra.mxu0 0.0
        %4683 = vmatprep.subr.mxu0 0.0
        %4684 = vmatpush1.msra.mxu0 0.0
        %4685 = vmatprep.subr.mxu0 0.0
        %4686 = vmatpush1.msra.mxu0 0.0
        %4687 = vmatprep.subr.mxu0 0.0
        %4688 = vmatpush1.msra.mxu0 0.0
        %4689 = vmatprep.subr.mxu0 0.0
        %4690 = vmatpush1.msra.mxu0 0.0
        %4691 = vmatprep.subr.mxu0 0.0
        %4692 = vmatpush1.msra.mxu0 0.0
        %4693 = vmatprep.subr.mxu0 0.0
        %4694 = vmatpush1.msra.mxu0 0.0
        %4695 = vmatprep.subr.mxu0 0.0
        %4696 = vmatpush1.msra.mxu0 0.0
        %4697 = vmatprep.subr.mxu0 0.0
        %4698 = vmatpush1.msra.mxu0 0.0
        %4699 = vmatprep.subr.mxu0 0.0
        %4700 = vmatpush1.msra.mxu0 0.0
        %4701 = vmatprep.subr.mxu0 0.0
        %4702 = vmatpush1.msra.mxu0 0.0
        %4703 = vmatprep.subr.mxu0 0.0
        %4704 = vmatpush1.msra.mxu0 0.0
        %4705 = vmatprep.subr.mxu0 0.0
        %4706 = vmatpush1.msra.mxu0 0.0
        %4707 = vmatprep.subr.mxu0 0.0
        %4708 = vmatpush1.msra.mxu0 0.0
        %4709 = vmatprep.mubr.f32.mxu0 0.0
        %4710 = vmatmul.mubr.f32.gmra.mrb[0].mxu0 %v4637
        %v4711 = vpop.f32.mrb[0].mxu0
        %v4712 = vadd.f32 %v4628, %v4711
        %v4713 = vpop.f32.mrb[0].mxu0
        %4714 = vmatprep.mubr.f32.mxu0 0.0
        %4715 = vmatmul.mubr.f32.gmra.mrb[0].mxu0 %v4640
        %v4716 = vpop.f32.mrb[0].mxu0
        %v4717 = vadd.f32 %v4633, %v4716
        %v4718 = vpop.f32.mrb[0].mxu0
        %4719 = vdwg.mxu0
        %v4720 = vld [vmem:[%s3001 + $0x1] sm:$0xff]
        %v4721 = vld [vmem:[%s3001 + $0x11] sm:$0xff]
        %v4722 = vld [vmem:[%s2913] sm:$0xf]
        %v4724 = vsel %vm387, %v4720, 0
        %v4727 = vsel %vm387, %v4721, 0
        %v4730 = vsel %vm400, %v4722, 0
        %4732 = vmatprep.subr.mxu0 0.0
        %4733 = vmatpush1.msra.mxu0 %v4730
        %4734 = vmatprep.subr.mxu0 0.0
        %4735 = vmatpush1.msra.mxu0 0.0
        %4736 = vmatprep.subr.mxu0 0.0
        %4737 = vmatpush1.msra.mxu0 0.0
        %4738 = vmatprep.subr.mxu0 0.0
        %4739 = vmatpush1.msra.mxu0 0.0
        %4740 = vmatprep.subr.mxu0 0.0
        %4741 = vmatpush1.msra.mxu0 0.0
        %4742 = vmatprep.subr.mxu0 0.0
        %4743 = vmatpush1.msra.mxu0 0.0
        %4744 = vmatprep.subr.mxu0 0.0
        %4745 = vmatpush1.msra.mxu0 0.0
        %4746 = vmatprep.subr.mxu0 0.0
        %4747 = vmatpush1.msra.mxu0 0.0
        %4748 = vmatprep.subr.mxu0 0.0
        %4749 = vmatpush1.msra.mxu0 0.0
        %4750 = vmatprep.subr.mxu0 0.0
        %4751 = vmatpush1.msra.mxu0 0.0
        %4752 = vmatprep.subr.mxu0 0.0
        %4753 = vmatpush1.msra.mxu0 0.0
        %4754 = vmatprep.subr.mxu0 0.0
        %4755 = vmatpush1.msra.mxu0 0.0
        %4756 = vmatprep.subr.mxu0 0.0
        %4757 = vmatpush1.msra.mxu0 0.0
        %4758 = vmatprep.subr.mxu0 0.0
        %4759 = vmatpush1.msra.mxu0 0.0
        %4760 = vmatprep.subr.mxu0 0.0
        %4761 = vmatpush1.msra.mxu0 0.0
        %4762 = vmatprep.subr.mxu0 0.0
        %4763 = vmatpush1.msra.mxu0 0.0
        %4764 = vmatprep.subr.mxu0 0.0
        %4765 = vmatpush1.msra.mxu0 0.0
        %4766 = vmatprep.subr.mxu0 0.0
        %4767 = vmatpush1.msra.mxu0 0.0
        %4768 = vmatprep.subr.mxu0 0.0
        %4769 = vmatpush1.msra.mxu0 0.0
        %4770 = vmatprep.subr.mxu0 0.0
        %4771 = vmatpush1.msra.mxu0 0.0
        %4772 = vmatprep.subr.mxu0 0.0
        %4773 = vmatpush1.msra.mxu0 0.0
        %4774 = vmatprep.subr.mxu0 0.0
        %4775 = vmatpush1.msra.mxu0 0.0
        %4776 = vmatprep.subr.mxu0 0.0
        %4777 = vmatpush1.msra.mxu0 0.0
        %4778 = vmatprep.subr.mxu0 0.0
        %4779 = vmatpush1.msra.mxu0 0.0
        %4780 = vmatprep.subr.mxu0 0.0
        %4781 = vmatpush1.msra.mxu0 0.0
        %4782 = vmatprep.subr.mxu0 0.0
        %4783 = vmatpush1.msra.mxu0 0.0
        %4784 = vmatprep.subr.mxu0 0.0
        %4785 = vmatpush1.msra.mxu0 0.0
        %4786 = vmatprep.subr.mxu0 0.0
        %4787 = vmatpush1.msra.mxu0 0.0
        %4788 = vmatprep.subr.mxu0 0.0
        %4789 = vmatpush1.msra.mxu0 0.0
        %4790 = vmatprep.subr.mxu0 0.0
        %4791 = vmatpush1.msra.mxu0 0.0
        %4792 = vmatprep.subr.mxu0 0.0
        %4793 = vmatpush1.msra.mxu0 0.0
        %4794 = vmatprep.subr.mxu0 0.0
        %4795 = vmatpush1.msra.mxu0 0.0
        %4796 = vmatprep.mubr.f32.mxu0 0.0
        %4797 = vmatmul.mubr.f32.gmra.mrb[0].mxu0 %v4724
        %v4798 = vpop.f32.mrb[0].mxu0
        %v4799 = vadd.f32 0.0, %v4798
        %v4800 = vpop.f32.mrb[0].mxu0
        %4801 = vmatprep.mubr.f32.mxu0 0.0
        %4802 = vmatmul.mubr.f32.gmra.mrb[0].mxu0 %v4727
        %v4803 = vpop.f32.mrb[0].mxu0
        %v4804 = vadd.f32 0.0, %v4803
        %v4805 = vpop.f32.mrb[0].mxu0
        %4806 = vdwg.mxu0
        %v4807 = vadd.f32 %v4712, %v4799
        %v4808 = vadd.f32 %v4717, %v4804
        %v4809 = vld [vmem:[%s3273] sm:$0xff]
        %v4810 = vld [vmem:[%s3273 + $0x10] sm:$0xff]
        %v4811 = vld [vmem:[%s3004] sm:$0xf]
        %v4813 = vsel %vm387, %v4809, 0
        %v4816 = vsel %vm387, %v4810, 0
        %v4819 = vsel %vm400, %v4811, 0
        %4821 = vmatprep.subr.mxu0 0.0
        %4822 = vmatpush1.msra.mxu0 %v4819
        %4823 = vmatprep.subr.mxu0 0.0
        %4824 = vmatpush1.msra.mxu0 0.0
        %4825 = vmatprep.subr.mxu0 0.0
        %4826 = vmatpush1.msra.mxu0 0.0
        %4827 = vmatprep.subr.mxu0 0.0
        %4828 = vmatpush1.msra.mxu0 0.0
        %4829 = vmatprep.subr.mxu0 0.0
        %4830 = vmatpush1.msra.mxu0 0.0
        %4831 = vmatprep.subr.mxu0 0.0
        %4832 = vmatpush1.msra.mxu0 0.0
        %4833 = vmatprep.subr.mxu0 0.0
        %4834 = vmatpush1.msra.mxu0 0.0
        %4835 = vmatprep.subr.mxu0 0.0
        %4836 = vmatpush1.msra.mxu0 0.0
        %4837 = vmatprep.subr.mxu0 0.0
        %4838 = vmatpush1.msra.mxu0 0.0
        %4839 = vmatprep.subr.mxu0 0.0
        %4840 = vmatpush1.msra.mxu0 0.0
        %4841 = vmatprep.subr.mxu0 0.0
        %4842 = vmatpush1.msra.mxu0 0.0
        %4843 = vmatprep.subr.mxu0 0.0
        %4844 = vmatpush1.msra.mxu0 0.0
        %4845 = vmatprep.subr.mxu0 0.0
        %4846 = vmatpush1.msra.mxu0 0.0
        %4847 = vmatprep.subr.mxu0 0.0
        %4848 = vmatpush1.msra.mxu0 0.0
        %4849 = vmatprep.subr.mxu0 0.0
        %4850 = vmatpush1.msra.mxu0 0.0
        %4851 = vmatprep.subr.mxu0 0.0
        %4852 = vmatpush1.msra.mxu0 0.0
        %4853 = vmatprep.subr.mxu0 0.0
        %4854 = vmatpush1.msra.mxu0 0.0
        %4855 = vmatprep.subr.mxu0 0.0
        %4856 = vmatpush1.msra.mxu0 0.0
        %4857 = vmatprep.subr.mxu0 0.0
        %4858 = vmatpush1.msra.mxu0 0.0
        %4859 = vmatprep.subr.mxu0 0.0
        %4860 = vmatpush1.msra.mxu0 0.0
        %4861 = vmatprep.subr.mxu0 0.0
        %4862 = vmatpush1.msra.mxu0 0.0
        %4863 = vmatprep.subr.mxu0 0.0
        %4864 = vmatpush1.msra.mxu0 0.0
        %4865 = vmatprep.subr.mxu0 0.0
        %4866 = vmatpush1.msra.mxu0 0.0
        %4867 = vmatprep.subr.mxu0 0.0
        %4868 = vmatpush1.msra.mxu0 0.0
        %4869 = vmatprep.subr.mxu0 0.0
        %4870 = vmatpush1.msra.mxu0 0.0
        %4871 = vmatprep.subr.mxu0 0.0
        %4872 = vmatpush1.msra.mxu0 0.0
        %4873 = vmatprep.subr.mxu0 0.0
        %4874 = vmatpush1.msra.mxu0 0.0
        %4875 = vmatprep.subr.mxu0 0.0
        %4876 = vmatpush1.msra.mxu0 0.0
        %4877 = vmatprep.subr.mxu0 0.0
        %4878 = vmatpush1.msra.mxu0 0.0
        %4879 = vmatprep.subr.mxu0 0.0
        %4880 = vmatpush1.msra.mxu0 0.0
        %4881 = vmatprep.subr.mxu0 0.0
        %4882 = vmatpush1.msra.mxu0 0.0
        %4883 = vmatprep.subr.mxu0 0.0
        %4884 = vmatpush1.msra.mxu0 0.0
        %4885 = vmatprep.mubr.f32.mxu0 0.0
        %4886 = vmatmul.mubr.f32.gmra.mrb[0].mxu0 %v4813
        %v4887 = vpop.f32.mrb[0].mxu0
        %v4888 = vadd.f32 0.0, %v4887
        %v4889 = vpop.f32.mrb[0].mxu0
        %4890 = vmatprep.mubr.f32.mxu0 0.0
        %4891 = vmatmul.mubr.f32.gmra.mrb[0].mxu0 %v4816
        %v4892 = vpop.f32.mrb[0].mxu0
        %v4893 = vadd.f32 0.0, %v4892
        %v4894 = vpop.f32.mrb[0].mxu0
        %4895 = vdwg.mxu0
        %v4896 = vadd.f32 %v4807, %v4888
        %v4897 = vadd.f32 %v4808, %v4893
        %v4898 = vld [vmem:[%s3364 + $0x1] sm:$0xff]
        %v4899 = vld [vmem:[%s3364 + $0x11] sm:$0xff]
        %v4900 = vld [vmem:[%s3095] sm:$0xf]
        %v4902 = vsel %vm387, %v4898, 0
        %v4905 = vsel %vm387, %v4899, 0
        %v4908 = vsel %vm400, %v4900, 0
        %4910 = vmatprep.subr.mxu0 0.0
        %4911 = vmatpush1.msra.mxu0 %v4908
        %4912 = vmatprep.subr.mxu0 0.0
        %4913 = vmatpush1.msra.mxu0 0.0
        %4914 = vmatprep.subr.mxu0 0.0
        %4915 = vmatpush1.msra.mxu0 0.0
        %4916 = vmatprep.subr.mxu0 0.0
        %4917 = vmatpush1.msra.mxu0 0.0
        %4918 = vmatprep.subr.mxu0 0.0
        %4919 = vmatpush1.msra.mxu0 0.0
        %4920 = vmatprep.subr.mxu0 0.0
        %4921 = vmatpush1.msra.mxu0 0.0
        %4922 = vmatprep.subr.mxu0 0.0
        %4923 = vmatpush1.msra.mxu0 0.0
        %4924 = vmatprep.subr.mxu0 0.0
        %4925 = vmatpush1.msra.mxu0 0.0
        %4926 = vmatprep.subr.mxu0 0.0
        %4927 = vmatpush1.msra.mxu0 0.0
        %4928 = vmatprep.subr.mxu0 0.0
        %4929 = vmatpush1.msra.mxu0 0.0
        %4930 = vmatprep.subr.mxu0 0.0
        %4931 = vmatpush1.msra.mxu0 0.0
        %4932 = vmatprep.subr.mxu0 0.0
        %4933 = vmatpush1.msra.mxu0 0.0
        %4934 = vmatprep.subr.mxu0 0.0
        %4935 = vmatpush1.msra.mxu0 0.0
        %4936 = vmatprep.subr.mxu0 0.0
        %4937 = vmatpush1.msra.mxu0 0.0
        %4938 = vmatprep.subr.mxu0 0.0
        %4939 = vmatpush1.msra.mxu0 0.0
        %4940 = vmatprep.subr.mxu0 0.0
        %4941 = vmatpush1.msra.mxu0 0.0
        %4942 = vmatprep.subr.mxu0 0.0
        %4943 = vmatpush1.msra.mxu0 0.0
        %4944 = vmatprep.subr.mxu0 0.0
        %4945 = vmatpush1.msra.mxu0 0.0
        %4946 = vmatprep.subr.mxu0 0.0
        %4947 = vmatpush1.msra.mxu0 0.0
        %4948 = vmatprep.subr.mxu0 0.0
        %4949 = vmatpush1.msra.mxu0 0.0
        %4950 = vmatprep.subr.mxu0 0.0
        %4951 = vmatpush1.msra.mxu0 0.0
        %4952 = vmatprep.subr.mxu0 0.0
        %4953 = vmatpush1.msra.mxu0 0.0
        %4954 = vmatprep.subr.mxu0 0.0
        %4955 = vmatpush1.msra.mxu0 0.0
        %4956 = vmatprep.subr.mxu0 0.0
        %4957 = vmatpush1.msra.mxu0 0.0
        %4958 = vmatprep.subr.mxu0 0.0
        %4959 = vmatpush1.msra.mxu0 0.0
        %4960 = vmatprep.subr.mxu0 0.0
        %4961 = vmatpush1.msra.mxu0 0.0
        %4962 = vmatprep.subr.mxu0 0.0
        %4963 = vmatpush1.msra.mxu0 0.0
        %4964 = vmatprep.subr.mxu0 0.0
        %4965 = vmatpush1.msra.mxu0 0.0
        %4966 = vmatprep.subr.mxu0 0.0
        %4967 = vmatpush1.msra.mxu0 0.0
        %4968 = vmatprep.subr.mxu0 0.0
        %4969 = vmatpush1.msra.mxu0 0.0
        %4970 = vmatprep.subr.mxu0 0.0
        %4971 = vmatpush1.msra.mxu0 0.0
        %4972 = vmatprep.subr.mxu0 0.0
        %4973 = vmatpush1.msra.mxu0 0.0
        %4974 = vmatprep.mubr.f32.mxu0 0.0
        %4975 = vmatmul.mubr.f32.gmra.mrb[0].mxu0 %v4902
        %v4976 = vpop.f32.mrb[0].mxu0
        %v4977 = vadd.f32 0.0, %v4976
        %v4978 = vpop.f32.mrb[0].mxu0
        %4979 = vmatprep.mubr.f32.mxu0 0.0
        %4980 = vmatmul.mubr.f32.gmra.mrb[0].mxu0 %v4905
        %v4981 = vpop.f32.mrb[0].mxu0
        %v4982 = vadd.f32 0.0, %v4981
        %v4983 = vpop.f32.mrb[0].mxu0
        %4984 = vdwg.mxu0
        %v4985 = vadd.f32 %v4896, %v4977
        %v4986 = vadd.f32 %v4897, %v4982
        %v4987 = vld [vmem:[%s3273 + $0x1] sm:$0xff]
        %v4988 = vld [vmem:[%s3273 + $0x11] sm:$0xff]
        %v4989 = vld [vmem:[%s3185] sm:$0xf]
        %v4991 = vsel %vm387, %v4987, 0
        %v4994 = vsel %vm387, %v4988, 0
        %v4997 = vsel %vm400, %v4989, 0
        %4999 = vmatprep.subr.mxu0 0.0
        %5000 = vmatpush1.msra.mxu0 %v4997
        %5001 = vmatprep.subr.mxu0 0.0
        %5002 = vmatpush1.msra.mxu0 0.0
        %5003 = vmatprep.subr.mxu0 0.0
        %5004 = vmatpush1.msra.mxu0 0.0
        %5005 = vmatprep.subr.mxu0 0.0
        %5006 = vmatpush1.msra.mxu0 0.0
        %5007 = vmatprep.subr.mxu0 0.0
        %5008 = vmatpush1.msra.mxu0 0.0
        %5009 = vmatprep.subr.mxu0 0.0
        %5010 = vmatpush1.msra.mxu0 0.0
        %5011 = vmatprep.subr.mxu0 0.0
        %5012 = vmatpush1.msra.mxu0 0.0
        %5013 = vmatprep.subr.mxu0 0.0
        %5014 = vmatpush1.msra.mxu0 0.0
        %5015 = vmatprep.subr.mxu0 0.0
        %5016 = vmatpush1.msra.mxu0 0.0
        %5017 = vmatprep.subr.mxu0 0.0
        %5018 = vmatpush1.msra.mxu0 0.0
        %5019 = vmatprep.subr.mxu0 0.0
        %5020 = vmatpush1.msra.mxu0 0.0
        %5021 = vmatprep.subr.mxu0 0.0
        %5022 = vmatpush1.msra.mxu0 0.0
        %5023 = vmatprep.subr.mxu0 0.0
        %5024 = vmatpush1.msra.mxu0 0.0
        %5025 = vmatprep.subr.mxu0 0.0
        %5026 = vmatpush1.msra.mxu0 0.0
        %5027 = vmatprep.subr.mxu0 0.0
        %5028 = vmatpush1.msra.mxu0 0.0
        %5029 = vmatprep.subr.mxu0 0.0
        %5030 = vmatpush1.msra.mxu0 0.0
        %5031 = vmatprep.subr.mxu0 0.0
        %5032 = vmatpush1.msra.mxu0 0.0
        %5033 = vmatprep.subr.mxu0 0.0
        %5034 = vmatpush1.msra.mxu0 0.0
        %5035 = vmatprep.subr.mxu0 0.0
        %5036 = vmatpush1.msra.mxu0 0.0
        %5037 = vmatprep.subr.mxu0 0.0
        %5038 = vmatpush1.msra.mxu0 0.0
        %5039 = vmatprep.subr.mxu0 0.0
        %5040 = vmatpush1.msra.mxu0 0.0
        %5041 = vmatprep.subr.mxu0 0.0
        %5042 = vmatpush1.msra.mxu0 0.0
        %5043 = vmatprep.subr.mxu0 0.0
        %5044 = vmatpush1.msra.mxu0 0.0
        %5045 = vmatprep.subr.mxu0 0.0
        %5046 = vmatpush1.msra.mxu0 0.0
        %5047 = vmatprep.subr.mxu0 0.0
        %5048 = vmatpush1.msra.mxu0 0.0
        %5049 = vmatprep.subr.mxu0 0.0
        %5050 = vmatpush1.msra.mxu0 0.0
        %5051 = vmatprep.subr.mxu0 0.0
        %5052 = vmatpush1.msra.mxu0 0.0
        %5053 = vmatprep.subr.mxu0 0.0
        %5054 = vmatpush1.msra.mxu0 0.0
        %5055 = vmatprep.subr.mxu0 0.0
        %5056 = vmatpush1.msra.mxu0 0.0
        %5057 = vmatprep.subr.mxu0 0.0
        %5058 = vmatpush1.msra.mxu0 0.0
        %5059 = vmatprep.subr.mxu0 0.0
        %5060 = vmatpush1.msra.mxu0 0.0
        %5061 = vmatprep.subr.mxu0 0.0
        %5062 = vmatpush1.msra.mxu0 0.0
        %5063 = vmatprep.mubr.f32.mxu0 0.0
        %5064 = vmatmul.mubr.f32.gmra.mrb[0].mxu0 %v4991
        %v5065 = vpop.f32.mrb[0].mxu0
        %v5066 = vadd.f32 0.0, %v5065
        %v5067 = vpop.f32.mrb[0].mxu0
        %5068 = vmatprep.mubr.f32.mxu0 0.0
        %5069 = vmatmul.mubr.f32.gmra.mrb[0].mxu0 %v4994
        %v5070 = vpop.f32.mrb[0].mxu0
        %v5071 = vadd.f32 0.0, %v5070
        %v5072 = vpop.f32.mrb[0].mxu0
        %5073 = vdwg.mxu0
        %v5074 = vadd.f32 %v4985, %v5066
        %v5075 = vadd.f32 %v4986, %v5071
        %s5076 = scalar_lea.vmem [#allocation2], 96
        %v5077 = vld [vmem:[%s5076] sm:$0xff]
        %v5078 = vld [vmem:[%s5076 + $0x10] sm:$0xff]
        %v5079 = vld [vmem:[%s3276] sm:$0xf]
        %v5081 = vsel %vm387, %v5077, 0
        %v5084 = vsel %vm387, %v5078, 0
        %v5087 = vsel %vm400, %v5079, 0
        %5089 = vmatprep.subr.mxu0 0.0
        %5090 = vmatpush1.msra.mxu0 %v5087
        %5091 = vmatprep.subr.mxu0 0.0
        %5092 = vmatpush1.msra.mxu0 0.0
        %5093 = vmatprep.subr.mxu0 0.0
        %5094 = vmatpush1.msra.mxu0 0.0
        %5095 = vmatprep.subr.mxu0 0.0
        %5096 = vmatpush1.msra.mxu0 0.0
        %5097 = vmatprep.subr.mxu0 0.0
        %5098 = vmatpush1.msra.mxu0 0.0
        %5099 = vmatprep.subr.mxu0 0.0
        %5100 = vmatpush1.msra.mxu0 0.0
        %5101 = vmatprep.subr.mxu0 0.0
        %5102 = vmatpush1.msra.mxu0 0.0
        %5103 = vmatprep.subr.mxu0 0.0
        %5104 = vmatpush1.msra.mxu0 0.0
        %5105 = vmatprep.subr.mxu0 0.0
        %5106 = vmatpush1.msra.mxu0 0.0
        %5107 = vmatprep.subr.mxu0 0.0
        %5108 = vmatpush1.msra.mxu0 0.0
        %5109 = vmatprep.subr.mxu0 0.0
        %5110 = vmatpush1.msra.mxu0 0.0
        %5111 = vmatprep.subr.mxu0 0.0
        %5112 = vmatpush1.msra.mxu0 0.0
        %5113 = vmatprep.subr.mxu0 0.0
        %5114 = vmatpush1.msra.mxu0 0.0
        %5115 = vmatprep.subr.mxu0 0.0
        %5116 = vmatpush1.msra.mxu0 0.0
        %5117 = vmatprep.subr.mxu0 0.0
        %5118 = vmatpush1.msra.mxu0 0.0
        %5119 = vmatprep.subr.mxu0 0.0
        %5120 = vmatpush1.msra.mxu0 0.0
        %5121 = vmatprep.subr.mxu0 0.0
        %5122 = vmatpush1.msra.mxu0 0.0
        %5123 = vmatprep.subr.mxu0 0.0
        %5124 = vmatpush1.msra.mxu0 0.0
        %5125 = vmatprep.subr.mxu0 0.0
        %5126 = vmatpush1.msra.mxu0 0.0
        %5127 = vmatprep.subr.mxu0 0.0
        %5128 = vmatpush1.msra.mxu0 0.0
        %5129 = vmatprep.subr.mxu0 0.0
        %5130 = vmatpush1.msra.mxu0 0.0
        %5131 = vmatprep.subr.mxu0 0.0
        %5132 = vmatpush1.msra.mxu0 0.0
        %5133 = vmatprep.subr.mxu0 0.0
        %5134 = vmatpush1.msra.mxu0 0.0
        %5135 = vmatprep.subr.mxu0 0.0
        %5136 = vmatpush1.msra.mxu0 0.0
        %5137 = vmatprep.subr.mxu0 0.0
        %5138 = vmatpush1.msra.mxu0 0.0
        %5139 = vmatprep.subr.mxu0 0.0
        %5140 = vmatpush1.msra.mxu0 0.0
        %5141 = vmatprep.subr.mxu0 0.0
        %5142 = vmatpush1.msra.mxu0 0.0
        %5143 = vmatprep.subr.mxu0 0.0
        %5144 = vmatpush1.msra.mxu0 0.0
        %5145 = vmatprep.subr.mxu0 0.0
        %5146 = vmatpush1.msra.mxu0 0.0
        %5147 = vmatprep.subr.mxu0 0.0
        %5148 = vmatpush1.msra.mxu0 0.0
        %5149 = vmatprep.subr.mxu0 0.0
        %5150 = vmatpush1.msra.mxu0 0.0
        %5151 = vmatprep.subr.mxu0 0.0
        %5152 = vmatpush1.msra.mxu0 0.0
        %5153 = vmatprep.mubr.f32.mxu0 0.0
        %5154 = vmatmul.mubr.f32.gmra.mrb[0].mxu0 %v5081
        %v5155 = vpop.f32.mrb[0].mxu0
        %v5156 = vadd.f32 0.0, %v5155
        %v5157 = vpop.f32.mrb[0].mxu0
        %5158 = vmatprep.mubr.f32.mxu0 0.0
        %5159 = vmatmul.mubr.f32.gmra.mrb[0].mxu0 %v5084
        %v5160 = vpop.f32.mrb[0].mxu0
        %v5161 = vadd.f32 0.0, %v5160
        %v5162 = vpop.f32.mrb[0].mxu0
        %5163 = vdwg.mxu0
        %v5164 = vadd.f32 %v5074, %v5156
        %v5165 = vadd.f32 %v5075, %v5161
        %s5166 = scalar_lea.vmem [#allocation2], 32
        %v5167 = vld [vmem:[%s5166 + $0x1] sm:$0xff]
        %v5168 = vld [vmem:[%s5166 + $0x11] sm:$0xff]
        %v5169 = vld [vmem:[%s3367] sm:$0xf]
        %v5171 = vsel %vm387, %v5167, 0
        %v5174 = vsel %vm387, %v5168, 0
        %v5177 = vsel %vm400, %v5169, 0
        %5179 = vmatprep.subr.mxu0 0.0
        %5180 = vmatpush1.msra.mxu0 %v5177
        %5181 = vmatprep.subr.mxu0 0.0
        %5182 = vmatpush1.msra.mxu0 0.0
        %5183 = vmatprep.subr.mxu0 0.0
        %5184 = vmatpush1.msra.mxu0 0.0
        %5185 = vmatprep.subr.mxu0 0.0
        %5186 = vmatpush1.msra.mxu0 0.0
        %5187 = vmatprep.subr.mxu0 0.0
        %5188 = vmatpush1.msra.mxu0 0.0
        %5189 = vmatprep.subr.mxu0 0.0
        %5190 = vmatpush1.msra.mxu0 0.0
        %5191 = vmatprep.subr.mxu0 0.0
        %5192 = vmatpush1.msra.mxu0 0.0
        %5193 = vmatprep.subr.mxu0 0.0
        %5194 = vmatpush1.msra.mxu0 0.0
        %5195 = vmatprep.subr.mxu0 0.0
        %5196 = vmatpush1.msra.mxu0 0.0
        %5197 = vmatprep.subr.mxu0 0.0
        %5198 = vmatpush1.msra.mxu0 0.0
        %5199 = vmatprep.subr.mxu0 0.0
        %5200 = vmatpush1.msra.mxu0 0.0
        %5201 = vmatprep.subr.mxu0 0.0
        %5202 = vmatpush1.msra.mxu0 0.0
        %5203 = vmatprep.subr.mxu0 0.0
        %5204 = vmatpush1.msra.mxu0 0.0
        %5205 = vmatprep.subr.mxu0 0.0
        %5206 = vmatpush1.msra.mxu0 0.0
        %5207 = vmatprep.subr.mxu0 0.0
        %5208 = vmatpush1.msra.mxu0 0.0
        %5209 = vmatprep.subr.mxu0 0.0
        %5210 = vmatpush1.msra.mxu0 0.0
        %5211 = vmatprep.subr.mxu0 0.0
        %5212 = vmatpush1.msra.mxu0 0.0
        %5213 = vmatprep.subr.mxu0 0.0
        %5214 = vmatpush1.msra.mxu0 0.0
        %5215 = vmatprep.subr.mxu0 0.0
        %5216 = vmatpush1.msra.mxu0 0.0
        %5217 = vmatprep.subr.mxu0 0.0
        %5218 = vmatpush1.msra.mxu0 0.0
        %5219 = vmatprep.subr.mxu0 0.0
        %5220 = vmatpush1.msra.mxu0 0.0
        %5221 = vmatprep.subr.mxu0 0.0
        %5222 = vmatpush1.msra.mxu0 0.0
        %5223 = vmatprep.subr.mxu0 0.0
        %5224 = vmatpush1.msra.mxu0 0.0
        %5225 = vmatprep.subr.mxu0 0.0
        %5226 = vmatpush1.msra.mxu0 0.0
        %5227 = vmatprep.subr.mxu0 0.0
        %5228 = vmatpush1.msra.mxu0 0.0
        %5229 = vmatprep.subr.mxu0 0.0
        %5230 = vmatpush1.msra.mxu0 0.0
        %5231 = vmatprep.subr.mxu0 0.0
        %5232 = vmatpush1.msra.mxu0 0.0
        %5233 = vmatprep.subr.mxu0 0.0
        %5234 = vmatpush1.msra.mxu0 0.0
        %5235 = vmatprep.subr.mxu0 0.0
        %5236 = vmatpush1.msra.mxu0 0.0
        %5237 = vmatprep.subr.mxu0 0.0
        %5238 = vmatpush1.msra.mxu0 0.0
        %5239 = vmatprep.subr.mxu0 0.0
        %5240 = vmatpush1.msra.mxu0 0.0
        %5241 = vmatprep.subr.mxu0 0.0
        %5242 = vmatpush1.msra.mxu0 0.0
        %5243 = vmatprep.mubr.f32.mxu0 0.0
        %5244 = vmatmul.mubr.f32.gmra.mrb[0].mxu0 %v5171
        %v5245 = vpop.f32.mrb[0].mxu0
        %v5246 = vadd.f32 0.0, %v5245
        %v5247 = vpop.f32.mrb[0].mxu0
        %5248 = vmatprep.mubr.f32.mxu0 0.0
        %5249 = vmatmul.mubr.f32.gmra.mrb[0].mxu0 %v5174
        %v5250 = vpop.f32.mrb[0].mxu0
        %v5251 = vadd.f32 0.0, %v5250
        %v5252 = vpop.f32.mrb[0].mxu0
        %5253 = vdwg.mxu0
        %v5254 = vadd.f32 %v5164, %v5246
        %v5255 = vadd.f32 %v5165, %v5251
        %v5256 = vld [vmem:[%s5076 + $0x1] sm:$0xff]
        %v5257 = vld [vmem:[%s5076 + $0x11] sm:$0xff]
        %v5258 = vld [vmem:[%s3457] sm:$0xf]
        %v5260 = vsel %vm387, %v5256, 0
        %v5263 = vsel %vm387, %v5257, 0
        %v5266 = vsel %vm400, %v5258, 0
        %5268 = vmatprep.subr.mxu0 0.0
        %5269 = vmatpush1.msra.mxu0 %v5266
        %5270 = vmatprep.subr.mxu0 0.0
        %5271 = vmatpush1.msra.mxu0 0.0
        %5272 = vmatprep.subr.mxu0 0.0
        %5273 = vmatpush1.msra.mxu0 0.0
        %5274 = vmatprep.subr.mxu0 0.0
        %5275 = vmatpush1.msra.mxu0 0.0
        %5276 = vmatprep.subr.mxu0 0.0
        %5277 = vmatpush1.msra.mxu0 0.0
        %5278 = vmatprep.subr.mxu0 0.0
        %5279 = vmatpush1.msra.mxu0 0.0
        %5280 = vmatprep.subr.mxu0 0.0
        %5281 = vmatpush1.msra.mxu0 0.0
        %5282 = vmatprep.subr.mxu0 0.0
        %5283 = vmatpush1.msra.mxu0 0.0
        %5284 = vmatprep.subr.mxu0 0.0
        %5285 = vmatpush1.msra.mxu0 0.0
        %5286 = vmatprep.subr.mxu0 0.0
        %5287 = vmatpush1.msra.mxu0 0.0
        %5288 = vmatprep.subr.mxu0 0.0
        %5289 = vmatpush1.msra.mxu0 0.0
        %5290 = vmatprep.subr.mxu0 0.0
        %5291 = vmatpush1.msra.mxu0 0.0
        %5292 = vmatprep.subr.mxu0 0.0
        %5293 = vmatpush1.msra.mxu0 0.0
        %5294 = vmatprep.subr.mxu0 0.0
        %5295 = vmatpush1.msra.mxu0 0.0
        %5296 = vmatprep.subr.mxu0 0.0
        %5297 = vmatpush1.msra.mxu0 0.0
        %5298 = vmatprep.subr.mxu0 0.0
        %5299 = vmatpush1.msra.mxu0 0.0
        %5300 = vmatprep.subr.mxu0 0.0
        %5301 = vmatpush1.msra.mxu0 0.0
        %5302 = vmatprep.subr.mxu0 0.0
        %5303 = vmatpush1.msra.mxu0 0.0
        %5304 = vmatprep.subr.mxu0 0.0
        %5305 = vmatpush1.msra.mxu0 0.0
        %5306 = vmatprep.subr.mxu0 0.0
        %5307 = vmatpush1.msra.mxu0 0.0
        %5308 = vmatprep.subr.mxu0 0.0
        %5309 = vmatpush1.msra.mxu0 0.0
        %5310 = vmatprep.subr.mxu0 0.0
        %5311 = vmatpush1.msra.mxu0 0.0
        %5312 = vmatprep.subr.mxu0 0.0
        %5313 = vmatpush1.msra.mxu0 0.0
        %5314 = vmatprep.subr.mxu0 0.0
        %5315 = vmatpush1.msra.mxu0 0.0
        %5316 = vmatprep.subr.mxu0 0.0
        %5317 = vmatpush1.msra.mxu0 0.0
        %5318 = vmatprep.subr.mxu0 0.0
        %5319 = vmatpush1.msra.mxu0 0.0
        %5320 = vmatprep.subr.mxu0 0.0
        %5321 = vmatpush1.msra.mxu0 0.0
        %5322 = vmatprep.subr.mxu0 0.0
        %5323 = vmatpush1.msra.mxu0 0.0
        %5324 = vmatprep.subr.mxu0 0.0
        %5325 = vmatpush1.msra.mxu0 0.0
        %5326 = vmatprep.subr.mxu0 0.0
        %5327 = vmatpush1.msra.mxu0 0.0
        %5328 = vmatprep.subr.mxu0 0.0
        %5329 = vmatpush1.msra.mxu0 0.0
        %5330 = vmatprep.subr.mxu0 0.0
        %5331 = vmatpush1.msra.mxu0 0.0
        %5332 = vmatprep.mubr.f32.mxu0 0.0
        %5333 = vmatmul.mubr.f32.gmra.mrb[0].mxu0 %v5260
        %v5334 = vpop.f32.mrb[0].mxu0
        %v5335 = vadd.f32 0.0, %v5334
        %v5336 = vpop.f32.mrb[0].mxu0
        %5337 = vmatprep.mubr.f32.mxu0 0.0
        %5338 = vmatmul.mubr.f32.gmra.mrb[0].mxu0 %v5263
        %v5339 = vpop.f32.mrb[0].mxu0
        %v5340 = vadd.f32 0.0, %v5339
        %v5341 = vpop.f32.mrb[0].mxu0
        %5342 = vdwg.mxu0
        %v5343 = vadd.f32 %v5254, %v5335
        %v5344 = vadd.f32 %v5255, %v5340
        %v5345 = vadd.f32 %v5343, %v3549
        %v5346 = vadd.f32 %v5344, %v3549
        %v5347 = vmax.f32 %v5345, 0.0
        %v5348 = vmax.f32 %v5346, 0.0
        %v5350 = vsel %vm387, %v5347, 0
        %v5353 = vsel %vm387, %v5348, 0
        %5355 = vmatprep.subr.mxu0 0.0
        %5356 = vmatpush1.msra.mxu0 %v3568
        %5357 = vmatprep.subr.mxu0 0.0
        %5358 = vmatpush1.msra.mxu0 0.0
        %5359 = vmatprep.subr.mxu0 0.0
        %5360 = vmatpush1.msra.mxu0 0.0
        %5361 = vmatprep.subr.mxu0 0.0
        %5362 = vmatpush1.msra.mxu0 0.0
        %5363 = vmatprep.subr.mxu0 0.0
        %5364 = vmatpush1.msra.mxu0 0.0
        %5365 = vmatprep.subr.mxu0 0.0
        %5366 = vmatpush1.msra.mxu0 0.0
        %5367 = vmatprep.subr.mxu0 0.0
        %5368 = vmatpush1.msra.mxu0 0.0
        %5369 = vmatprep.subr.mxu0 0.0
        %5370 = vmatpush1.msra.mxu0 0.0
        %5371 = vmatprep.subr.mxu0 0.0
        %5372 = vmatpush1.msra.mxu0 0.0
        %5373 = vmatprep.subr.mxu0 0.0
        %5374 = vmatpush1.msra.mxu0 0.0
        %5375 = vmatprep.subr.mxu0 0.0
        %5376 = vmatpush1.msra.mxu0 0.0
        %5377 = vmatprep.subr.mxu0 0.0
        %5378 = vmatpush1.msra.mxu0 0.0
        %5379 = vmatprep.subr.mxu0 0.0
        %5380 = vmatpush1.msra.mxu0 0.0
        %5381 = vmatprep.subr.mxu0 0.0
        %5382 = vmatpush1.msra.mxu0 0.0
        %5383 = vmatprep.subr.mxu0 0.0
        %5384 = vmatpush1.msra.mxu0 0.0
        %5385 = vmatprep.subr.mxu0 0.0
        %5386 = vmatpush1.msra.mxu0 0.0
        %5387 = vmatprep.subr.mxu0 0.0
        %5388 = vmatpush1.msra.mxu0 0.0
        %5389 = vmatprep.subr.mxu0 0.0
        %5390 = vmatpush1.msra.mxu0 0.0
        %5391 = vmatprep.subr.mxu0 0.0
        %5392 = vmatpush1.msra.mxu0 0.0
        %5393 = vmatprep.subr.mxu0 0.0
        %5394 = vmatpush1.msra.mxu0 0.0
        %5395 = vmatprep.subr.mxu0 0.0
        %5396 = vmatpush1.msra.mxu0 0.0
        %5397 = vmatprep.subr.mxu0 0.0
        %5398 = vmatpush1.msra.mxu0 0.0
        %5399 = vmatprep.subr.mxu0 0.0
        %5400 = vmatpush1.msra.mxu0 0.0
        %5401 = vmatprep.subr.mxu0 0.0
        %5402 = vmatpush1.msra.mxu0 0.0
        %5403 = vmatprep.subr.mxu0 0.0
        %5404 = vmatpush1.msra.mxu0 0.0
        %5405 = vmatprep.subr.mxu0 0.0
        %5406 = vmatpush1.msra.mxu0 0.0
        %5407 = vmatprep.subr.mxu0 0.0
        %5408 = vmatpush1.msra.mxu0 0.0
        %5409 = vmatprep.subr.mxu0 0.0
        %5410 = vmatpush1.msra.mxu0 0.0
        %5411 = vmatprep.subr.mxu0 0.0
        %5412 = vmatpush1.msra.mxu0 0.0
        %5413 = vmatprep.subr.mxu0 0.0
        %5414 = vmatpush1.msra.mxu0 0.0
        %5415 = vmatprep.subr.mxu0 0.0
        %5416 = vmatpush1.msra.mxu0 0.0
        %5417 = vmatprep.subr.mxu0 0.0
        %5418 = vmatpush1.msra.mxu0 0.0
        %5419 = vmatprep.mubr.f32.mxu0 0.0
        %5420 = vmatmul.mubr.f32.gmra.mrb[0].mxu0 %v5350
        %v5421 = vpop.f32.mrb[0].mxu0
        %v5422 = vadd.f32 %v3559, %v5421
        %v5423 = vpop.f32.mrb[0].mxu0
        %5424 = vmatprep.mubr.f32.mxu0 0.0
        %5425 = vmatmul.mubr.f32.gmra.mrb[0].mxu0 %v5353
        %v5426 = vpop.f32.mrb[0].mxu0
        %v5427 = vadd.f32 %v3559, %v5426
        %v5428 = vpop.f32.mrb[0].mxu0
        %5429 = vdwg.mxu0
        %s5430 = scalar_lea.vmem [#allocation3], 72
        %v5431 = vld [vmem:[%s5430] sm:$0xff]
        %v5432 = vld [vmem:[%s5430 + $0x8] sm:$0xff]
        %v5433 = vadd.f32 %v5422, %v5431
        %v5434 = vadd.f32 %v5427, %v5432
        %v5435 = vmax.f32 %v5433, 0.0
        %v5436 = vmax.f32 %v5434, 0.0
        %s5437 = scalar_lea.vmem %s323, 32 [#allocation4]
        %5438 = vst.msk [vmem:[%s5437] sm:$0xff] %vm387, %v5435
        %5439 = vst.msk [vmem:[%s5437 + $0x8] sm:$0xff] %vm387, %v5436
        %v5440 = vld [vmem:[%s3092 + $0x1] sm:$0xff]
        %v5441 = vld [vmem:[%s3092 + $0x11] sm:$0xff]
        %v5442 = vld [vmem:[%s4] sm:$0xf]
        %v5443 = vld [vmem:[%s3001 + $0x1] sm:$0xff]
        %v5444 = vld [vmem:[%s3001 + $0x11] sm:$0xff]
        %v5445 = vld [vmem:[%s2741] sm:$0xf]
        %v5447 = vsel %vm387, %v5443, 0
        %v5450 = vsel %vm387, %v5444, 0
        %v5453 = vsel %vm400, %v5445, 0
        %5455 = vmatprep.subr.mxu0 0.0
        %5456 = vmatpush1.msra.mxu0 %v5453
        %5457 = vmatprep.subr.mxu0 0.0
        %5458 = vmatpush1.msra.mxu0 0.0
        %5459 = vmatprep.subr.mxu0 0.0
        %5460 = vmatpush1.msra.mxu0 0.0
        %5461 = vmatprep.subr.mxu0 0.0
        %5462 = vmatpush1.msra.mxu0 0.0
        %5463 = vmatprep.subr.mxu0 0.0
        %5464 = vmatpush1.msra.mxu0 0.0
        %5465 = vmatprep.subr.mxu0 0.0
        %5466 = vmatpush1.msra.mxu0 0.0
        %5467 = vmatprep.subr.mxu0 0.0
        %5468 = vmatpush1.msra.mxu0 0.0
        %5469 = vmatprep.subr.mxu0 0.0
        %5470 = vmatpush1.msra.mxu0 0.0
        %5471 = vmatprep.subr.mxu0 0.0
        %5472 = vmatpush1.msra.mxu0 0.0
        %5473 = vmatprep.subr.mxu0 0.0
        %5474 = vmatpush1.msra.mxu0 0.0
        %5475 = vmatprep.subr.mxu0 0.0
        %5476 = vmatpush1.msra.mxu0 0.0
        %5477 = vmatprep.subr.mxu0 0.0
        %5478 = vmatpush1.msra.mxu0 0.0
        %5479 = vmatprep.subr.mxu0 0.0
        %5480 = vmatpush1.msra.mxu0 0.0
        %5481 = vmatprep.subr.mxu0 0.0
        %5482 = vmatpush1.msra.mxu0 0.0
        %5483 = vmatprep.subr.mxu0 0.0
        %5484 = vmatpush1.msra.mxu0 0.0
        %5485 = vmatprep.subr.mxu0 0.0
        %5486 = vmatpush1.msra.mxu0 0.0
        %5487 = vmatprep.subr.mxu0 0.0
        %5488 = vmatpush1.msra.mxu0 0.0
        %5489 = vmatprep.subr.mxu0 0.0
        %5490 = vmatpush1.msra.mxu0 0.0
        %5491 = vmatprep.subr.mxu0 0.0
        %5492 = vmatpush1.msra.mxu0 0.0
        %5493 = vmatprep.subr.mxu0 0.0
        %5494 = vmatpush1.msra.mxu0 0.0
        %5495 = vmatprep.subr.mxu0 0.0
        %5496 = vmatpush1.msra.mxu0 0.0
        %5497 = vmatprep.subr.mxu0 0.0
        %5498 = vmatpush1.msra.mxu0 0.0
        %5499 = vmatprep.subr.mxu0 0.0
        %5500 = vmatpush1.msra.mxu0 0.0
        %5501 = vmatprep.subr.mxu0 0.0
        %5502 = vmatpush1.msra.mxu0 0.0
        %5503 = vmatprep.subr.mxu0 0.0
        %5504 = vmatpush1.msra.mxu0 0.0
        %5505 = vmatprep.subr.mxu0 0.0
        %5506 = vmatpush1.msra.mxu0 0.0
        %5507 = vmatprep.subr.mxu0 0.0
        %5508 = vmatpush1.msra.mxu0 0.0
        %5509 = vmatprep.subr.mxu0 0.0
        %5510 = vmatpush1.msra.mxu0 0.0
        %5511 = vmatprep.subr.mxu0 0.0
        %5512 = vmatpush1.msra.mxu0 0.0
        %5513 = vmatprep.subr.mxu0 0.0
        %5514 = vmatpush1.msra.mxu0 0.0
        %5515 = vmatprep.subr.mxu0 0.0
        %5516 = vmatpush1.msra.mxu0 0.0
        %5517 = vmatprep.subr.mxu0 0.0
        %5518 = vmatpush1.msra.mxu0 0.0
        %5519 = vmatprep.mubr.f32.mxu0 0.0
        %5520 = vmatmul.mubr.f32.gmra.mrb[0].mxu0 %v5447
        %v5521 = vpop.f32.mrb[0].mxu0
        %v5522 = vadd.f32 0.0, %v5521
        %v5523 = vpop.f32.mrb[0].mxu0
        %5524 = vmatprep.mubr.f32.mxu0 0.0
        %5525 = vmatmul.mubr.f32.gmra.mrb[0].mxu0 %v5450
        %v5526 = vpop.f32.mrb[0].mxu0
        %v5527 = vadd.f32 0.0, %v5526
        %v5528 = vpop.f32.mrb[0].mxu0
        %5529 = vdwg.mxu0
        %v5531 = vsel %vm387, %v5440, 0
        %v5534 = vsel %vm387, %v5441, 0
        %v5537 = vsel %vm400, %v5442, 0
        %5539 = vmatprep.subr.mxu0 0.0
        %5540 = vmatpush1.msra.mxu0 %v5537
        %5541 = vmatprep.subr.mxu0 0.0
        %5542 = vmatpush1.msra.mxu0 0.0
        %5543 = vmatprep.subr.mxu0 0.0
        %5544 = vmatpush1.msra.mxu0 0.0
        %5545 = vmatprep.subr.mxu0 0.0
        %5546 = vmatpush1.msra.mxu0 0.0
        %5547 = vmatprep.subr.mxu0 0.0
        %5548 = vmatpush1.msra.mxu0 0.0
        %5549 = vmatprep.subr.mxu0 0.0
        %5550 = vmatpush1.msra.mxu0 0.0
        %5551 = vmatprep.subr.mxu0 0.0
        %5552 = vmatpush1.msra.mxu0 0.0
        %5553 = vmatprep.subr.mxu0 0.0
        %5554 = vmatpush1.msra.mxu0 0.0
        %5555 = vmatprep.subr.mxu0 0.0
        %5556 = vmatpush1.msra.mxu0 0.0
        %5557 = vmatprep.subr.mxu0 0.0
        %5558 = vmatpush1.msra.mxu0 0.0
        %5559 = vmatprep.subr.mxu0 0.0
        %5560 = vmatpush1.msra.mxu0 0.0
        %5561 = vmatprep.subr.mxu0 0.0
        %5562 = vmatpush1.msra.mxu0 0.0
        %5563 = vmatprep.subr.mxu0 0.0
        %5564 = vmatpush1.msra.mxu0 0.0
        %5565 = vmatprep.subr.mxu0 0.0
        %5566 = vmatpush1.msra.mxu0 0.0
        %5567 = vmatprep.subr.mxu0 0.0
        %5568 = vmatpush1.msra.mxu0 0.0
        %5569 = vmatprep.subr.mxu0 0.0
        %5570 = vmatpush1.msra.mxu0 0.0
        %5571 = vmatprep.subr.mxu0 0.0
        %5572 = vmatpush1.msra.mxu0 0.0
        %5573 = vmatprep.subr.mxu0 0.0
        %5574 = vmatpush1.msra.mxu0 0.0
        %5575 = vmatprep.subr.mxu0 0.0
        %5576 = vmatpush1.msra.mxu0 0.0
        %5577 = vmatprep.subr.mxu0 0.0
        %5578 = vmatpush1.msra.mxu0 0.0
        %5579 = vmatprep.subr.mxu0 0.0
        %5580 = vmatpush1.msra.mxu0 0.0
        %5581 = vmatprep.subr.mxu0 0.0
        %5582 = vmatpush1.msra.mxu0 0.0
        %5583 = vmatprep.subr.mxu0 0.0
        %5584 = vmatpush1.msra.mxu0 0.0
        %5585 = vmatprep.subr.mxu0 0.0
        %5586 = vmatpush1.msra.mxu0 0.0
        %5587 = vmatprep.subr.mxu0 0.0
        %5588 = vmatpush1.msra.mxu0 0.0
        %5589 = vmatprep.subr.mxu0 0.0
        %5590 = vmatpush1.msra.mxu0 0.0
        %5591 = vmatprep.subr.mxu0 0.0
        %5592 = vmatpush1.msra.mxu0 0.0
        %5593 = vmatprep.subr.mxu0 0.0
        %5594 = vmatpush1.msra.mxu0 0.0
        %5595 = vmatprep.subr.mxu0 0.0
        %5596 = vmatpush1.msra.mxu0 0.0
        %5597 = vmatprep.subr.mxu0 0.0
        %5598 = vmatpush1.msra.mxu0 0.0
        %5599 = vmatprep.subr.mxu0 0.0
        %5600 = vmatpush1.msra.mxu0 0.0
        %5601 = vmatprep.subr.mxu0 0.0
        %5602 = vmatpush1.msra.mxu0 0.0
        %5603 = vmatprep.mubr.f32.mxu0 0.0
        %5604 = vmatmul.mubr.f32.gmra.mrb[0].mxu0 %v5531
        %v5605 = vpop.f32.mrb[0].mxu0
        %v5606 = vadd.f32 %v5522, %v5605
        %v5607 = vpop.f32.mrb[0].mxu0
        %5608 = vmatprep.mubr.f32.mxu0 0.0
        %5609 = vmatmul.mubr.f32.gmra.mrb[0].mxu0 %v5534
        %v5610 = vpop.f32.mrb[0].mxu0
        %v5611 = vadd.f32 %v5527, %v5610
        %v5612 = vpop.f32.mrb[0].mxu0
        %5613 = vdwg.mxu0
        %v5614 = vld [vmem:[%s3092 + $0x2] sm:$0xff]
        %v5615 = vld [vmem:[%s3092 + $0x12] sm:$0xff]
        %v5616 = vld [vmem:[%s2913] sm:$0xf]
        %v5618 = vsel %vm387, %v5614, 0
        %v5621 = vsel %vm387, %v5615, 0
        %v5624 = vsel %vm400, %v5616, 0
        %5626 = vmatprep.subr.mxu0 0.0
        %5627 = vmatpush1.msra.mxu0 %v5624
        %5628 = vmatprep.subr.mxu0 0.0
        %5629 = vmatpush1.msra.mxu0 0.0
        %5630 = vmatprep.subr.mxu0 0.0
        %5631 = vmatpush1.msra.mxu0 0.0
        %5632 = vmatprep.subr.mxu0 0.0
        %5633 = vmatpush1.msra.mxu0 0.0
        %5634 = vmatprep.subr.mxu0 0.0
        %5635 = vmatpush1.msra.mxu0 0.0
        %5636 = vmatprep.subr.mxu0 0.0
        %5637 = vmatpush1.msra.mxu0 0.0
        %5638 = vmatprep.subr.mxu0 0.0
        %5639 = vmatpush1.msra.mxu0 0.0
        %5640 = vmatprep.subr.mxu0 0.0
        %5641 = vmatpush1.msra.mxu0 0.0
        %5642 = vmatprep.subr.mxu0 0.0
        %5643 = vmatpush1.msra.mxu0 0.0
        %5644 = vmatprep.subr.mxu0 0.0
        %5645 = vmatpush1.msra.mxu0 0.0
        %5646 = vmatprep.subr.mxu0 0.0
        %5647 = vmatpush1.msra.mxu0 0.0
        %5648 = vmatprep.subr.mxu0 0.0
        %5649 = vmatpush1.msra.mxu0 0.0
        %5650 = vmatprep.subr.mxu0 0.0
        %5651 = vmatpush1.msra.mxu0 0.0
        %5652 = vmatprep.subr.mxu0 0.0
        %5653 = vmatpush1.msra.mxu0 0.0
        %5654 = vmatprep.subr.mxu0 0.0
        %5655 = vmatpush1.msra.mxu0 0.0
        %5656 = vmatprep.subr.mxu0 0.0
        %5657 = vmatpush1.msra.mxu0 0.0
        %5658 = vmatprep.subr.mxu0 0.0
        %5659 = vmatpush1.msra.mxu0 0.0
        %5660 = vmatprep.subr.mxu0 0.0
        %5661 = vmatpush1.msra.mxu0 0.0
        %5662 = vmatprep.subr.mxu0 0.0
        %5663 = vmatpush1.msra.mxu0 0.0
        %5664 = vmatprep.subr.mxu0 0.0
        %5665 = vmatpush1.msra.mxu0 0.0
        %5666 = vmatprep.subr.mxu0 0.0
        %5667 = vmatpush1.msra.mxu0 0.0
        %5668 = vmatprep.subr.mxu0 0.0
        %5669 = vmatpush1.msra.mxu0 0.0
        %5670 = vmatprep.subr.mxu0 0.0
        %5671 = vmatpush1.msra.mxu0 0.0
        %5672 = vmatprep.subr.mxu0 0.0
        %5673 = vmatpush1.msra.mxu0 0.0
        %5674 = vmatprep.subr.mxu0 0.0
        %5675 = vmatpush1.msra.mxu0 0.0
        %5676 = vmatprep.subr.mxu0 0.0
        %5677 = vmatpush1.msra.mxu0 0.0
        %5678 = vmatprep.subr.mxu0 0.0
        %5679 = vmatpush1.msra.mxu0 0.0
        %5680 = vmatprep.subr.mxu0 0.0
        %5681 = vmatpush1.msra.mxu0 0.0
        %5682 = vmatprep.subr.mxu0 0.0
        %5683 = vmatpush1.msra.mxu0 0.0
        %5684 = vmatprep.subr.mxu0 0.0
        %5685 = vmatpush1.msra.mxu0 0.0
        %5686 = vmatprep.subr.mxu0 0.0
        %5687 = vmatpush1.msra.mxu0 0.0
        %5688 = vmatprep.subr.mxu0 0.0
        %5689 = vmatpush1.msra.mxu0 0.0
        %5690 = vmatprep.mubr.f32.mxu0 0.0
        %5691 = vmatmul.mubr.f32.gmra.mrb[0].mxu0 %v5618
        %v5692 = vpop.f32.mrb[0].mxu0
        %v5693 = vadd.f32 0.0, %v5692
        %v5694 = vpop.f32.mrb[0].mxu0
        %5695 = vmatprep.mubr.f32.mxu0 0.0
        %5696 = vmatmul.mubr.f32.gmra.mrb[0].mxu0 %v5621
        %v5697 = vpop.f32.mrb[0].mxu0
        %v5698 = vadd.f32 0.0, %v5697
        %v5699 = vpop.f32.mrb[0].mxu0
        %5700 = vdwg.mxu0
        %v5701 = vadd.f32 %v5606, %v5693
        %v5702 = vadd.f32 %v5611, %v5698
        %v5703 = vld [vmem:[%s3364 + $0x1] sm:$0xff]
        %v5704 = vld [vmem:[%s3364 + $0x11] sm:$0xff]
        %v5705 = vld [vmem:[%s3004] sm:$0xf]
        %v5707 = vsel %vm387, %v5703, 0
        %v5710 = vsel %vm387, %v5704, 0
        %v5713 = vsel %vm400, %v5705, 0
        %5715 = vmatprep.subr.mxu0 0.0
        %5716 = vmatpush1.msra.mxu0 %v5713
        %5717 = vmatprep.subr.mxu0 0.0
        %5718 = vmatpush1.msra.mxu0 0.0
        %5719 = vmatprep.subr.mxu0 0.0
        %5720 = vmatpush1.msra.mxu0 0.0
        %5721 = vmatprep.subr.mxu0 0.0
        %5722 = vmatpush1.msra.mxu0 0.0
        %5723 = vmatprep.subr.mxu0 0.0
        %5724 = vmatpush1.msra.mxu0 0.0
        %5725 = vmatprep.subr.mxu0 0.0
        %5726 = vmatpush1.msra.mxu0 0.0
        %5727 = vmatprep.subr.mxu0 0.0
        %5728 = vmatpush1.msra.mxu0 0.0
        %5729 = vmatprep.subr.mxu0 0.0
        %5730 = vmatpush1.msra.mxu0 0.0
        %5731 = vmatprep.subr.mxu0 0.0
        %5732 = vmatpush1.msra.mxu0 0.0
        %5733 = vmatprep.subr.mxu0 0.0
        %5734 = vmatpush1.msra.mxu0 0.0
        %5735 = vmatprep.subr.mxu0 0.0
        %5736 = vmatpush1.msra.mxu0 0.0
        %5737 = vmatprep.subr.mxu0 0.0
        %5738 = vmatpush1.msra.mxu0 0.0
        %5739 = vmatprep.subr.mxu0 0.0
        %5740 = vmatpush1.msra.mxu0 0.0
        %5741 = vmatprep.subr.mxu0 0.0
        %5742 = vmatpush1.msra.mxu0 0.0
        %5743 = vmatprep.subr.mxu0 0.0
        %5744 = vmatpush1.msra.mxu0 0.0
        %5745 = vmatprep.subr.mxu0 0.0
        %5746 = vmatpush1.msra.mxu0 0.0
        %5747 = vmatprep.subr.mxu0 0.0
        %5748 = vmatpush1.msra.mxu0 0.0
        %5749 = vmatprep.subr.mxu0 0.0
        %5750 = vmatpush1.msra.mxu0 0.0
        %5751 = vmatprep.subr.mxu0 0.0
        %5752 = vmatpush1.msra.mxu0 0.0
        %5753 = vmatprep.subr.mxu0 0.0
        %5754 = vmatpush1.msra.mxu0 0.0
        %5755 = vmatprep.subr.mxu0 0.0
        %5756 = vmatpush1.msra.mxu0 0.0
        %5757 = vmatprep.subr.mxu0 0.0
        %5758 = vmatpush1.msra.mxu0 0.0
        %5759 = vmatprep.subr.mxu0 0.0
        %5760 = vmatpush1.msra.mxu0 0.0
        %5761 = vmatprep.subr.mxu0 0.0
        %5762 = vmatpush1.msra.mxu0 0.0
        %5763 = vmatprep.subr.mxu0 0.0
        %5764 = vmatpush1.msra.mxu0 0.0
        %5765 = vmatprep.subr.mxu0 0.0
        %5766 = vmatpush1.msra.mxu0 0.0
        %5767 = vmatprep.subr.mxu0 0.0
        %5768 = vmatpush1.msra.mxu0 0.0
        %5769 = vmatprep.subr.mxu0 0.0
        %5770 = vmatpush1.msra.mxu0 0.0
        %5771 = vmatprep.subr.mxu0 0.0
        %5772 = vmatpush1.msra.mxu0 0.0
        %5773 = vmatprep.subr.mxu0 0.0
        %5774 = vmatpush1.msra.mxu0 0.0
        %5775 = vmatprep.subr.mxu0 0.0
        %5776 = vmatpush1.msra.mxu0 0.0
        %5777 = vmatprep.subr.mxu0 0.0
        %5778 = vmatpush1.msra.mxu0 0.0
        %5779 = vmatprep.mubr.f32.mxu0 0.0
        %5780 = vmatmul.mubr.f32.gmra.mrb[0].mxu0 %v5707
        %v5781 = vpop.f32.mrb[0].mxu0
        %v5782 = vadd.f32 0.0, %v5781
        %v5783 = vpop.f32.mrb[0].mxu0
        %5784 = vmatprep.mubr.f32.mxu0 0.0
        %5785 = vmatmul.mubr.f32.gmra.mrb[0].mxu0 %v5710
        %v5786 = vpop.f32.mrb[0].mxu0
        %v5787 = vadd.f32 0.0, %v5786
        %v5788 = vpop.f32.mrb[0].mxu0
        %5789 = vdwg.mxu0
        %v5790 = vadd.f32 %v5701, %v5782
        %v5791 = vadd.f32 %v5702, %v5787
        %v5792 = vld [vmem:[%s3273 + $0x1] sm:$0xff]
        %v5793 = vld [vmem:[%s3273 + $0x11] sm:$0xff]
        %v5794 = vld [vmem:[%s3095] sm:$0xf]
        %v5796 = vsel %vm387, %v5792, 0
        %v5799 = vsel %vm387, %v5793, 0
        %v5802 = vsel %vm400, %v5794, 0
        %5804 = vmatprep.subr.mxu0 0.0
        %5805 = vmatpush1.msra.mxu0 %v5802
        %5806 = vmatprep.subr.mxu0 0.0
        %5807 = vmatpush1.msra.mxu0 0.0
        %5808 = vmatprep.subr.mxu0 0.0
        %5809 = vmatpush1.msra.mxu0 0.0
        %5810 = vmatprep.subr.mxu0 0.0
        %5811 = vmatpush1.msra.mxu0 0.0
        %5812 = vmatprep.subr.mxu0 0.0
        %5813 = vmatpush1.msra.mxu0 0.0
        %5814 = vmatprep.subr.mxu0 0.0
        %5815 = vmatpush1.msra.mxu0 0.0
        %5816 = vmatprep.subr.mxu0 0.0
        %5817 = vmatpush1.msra.mxu0 0.0
        %5818 = vmatprep.subr.mxu0 0.0
        %5819 = vmatpush1.msra.mxu0 0.0
        %5820 = vmatprep.subr.mxu0 0.0
        %5821 = vmatpush1.msra.mxu0 0.0
        %5822 = vmatprep.subr.mxu0 0.0
        %5823 = vmatpush1.msra.mxu0 0.0
        %5824 = vmatprep.subr.mxu0 0.0
        %5825 = vmatpush1.msra.mxu0 0.0
        %5826 = vmatprep.subr.mxu0 0.0
        %5827 = vmatpush1.msra.mxu0 0.0
        %5828 = vmatprep.subr.mxu0 0.0
        %5829 = vmatpush1.msra.mxu0 0.0
        %5830 = vmatprep.subr.mxu0 0.0
        %5831 = vmatpush1.msra.mxu0 0.0
        %5832 = vmatprep.subr.mxu0 0.0
        %5833 = vmatpush1.msra.mxu0 0.0
        %5834 = vmatprep.subr.mxu0 0.0
        %5835 = vmatpush1.msra.mxu0 0.0
        %5836 = vmatprep.subr.mxu0 0.0
        %5837 = vmatpush1.msra.mxu0 0.0
        %5838 = vmatprep.subr.mxu0 0.0
        %5839 = vmatpush1.msra.mxu0 0.0
        %5840 = vmatprep.subr.mxu0 0.0
        %5841 = vmatpush1.msra.mxu0 0.0
        %5842 = vmatprep.subr.mxu0 0.0
        %5843 = vmatpush1.msra.mxu0 0.0
        %5844 = vmatprep.subr.mxu0 0.0
        %5845 = vmatpush1.msra.mxu0 0.0
        %5846 = vmatprep.subr.mxu0 0.0
        %5847 = vmatpush1.msra.mxu0 0.0
        %5848 = vmatprep.subr.mxu0 0.0
        %5849 = vmatpush1.msra.mxu0 0.0
        %5850 = vmatprep.subr.mxu0 0.0
        %5851 = vmatpush1.msra.mxu0 0.0
        %5852 = vmatprep.subr.mxu0 0.0
        %5853 = vmatpush1.msra.mxu0 0.0
        %5854 = vmatprep.subr.mxu0 0.0
        %5855 = vmatpush1.msra.mxu0 0.0
        %5856 = vmatprep.subr.mxu0 0.0
        %5857 = vmatpush1.msra.mxu0 0.0
        %5858 = vmatprep.subr.mxu0 0.0
        %5859 = vmatpush1.msra.mxu0 0.0
        %5860 = vmatprep.subr.mxu0 0.0
        %5861 = vmatpush1.msra.mxu0 0.0
        %5862 = vmatprep.subr.mxu0 0.0
        %5863 = vmatpush1.msra.mxu0 0.0
        %5864 = vmatprep.subr.mxu0 0.0
        %5865 = vmatpush1.msra.mxu0 0.0
        %5866 = vmatprep.subr.mxu0 0.0
        %5867 = vmatpush1.msra.mxu0 0.0
        %5868 = vmatprep.mubr.f32.mxu0 0.0
        %5869 = vmatmul.mubr.f32.gmra.mrb[0].mxu0 %v5796
        %v5870 = vpop.f32.mrb[0].mxu0
        %v5871 = vadd.f32 0.0, %v5870
        %v5872 = vpop.f32.mrb[0].mxu0
        %5873 = vmatprep.mubr.f32.mxu0 0.0
        %5874 = vmatmul.mubr.f32.gmra.mrb[0].mxu0 %v5799
        %v5875 = vpop.f32.mrb[0].mxu0
        %v5876 = vadd.f32 0.0, %v5875
        %v5877 = vpop.f32.mrb[0].mxu0
        %5878 = vdwg.mxu0
        %v5879 = vadd.f32 %v5790, %v5871
        %v5880 = vadd.f32 %v5791, %v5876
        %v5881 = vld [vmem:[%s3364 + $0x2] sm:$0xff]
        %v5882 = vld [vmem:[%s3364 + $0x12] sm:$0xff]
        %v5883 = vld [vmem:[%s3185] sm:$0xf]
        %v5885 = vsel %vm387, %v5881, 0
        %v5888 = vsel %vm387, %v5882, 0
        %v5891 = vsel %vm400, %v5883, 0
        %5893 = vmatprep.subr.mxu0 0.0
        %5894 = vmatpush1.msra.mxu0 %v5891
        %5895 = vmatprep.subr.mxu0 0.0
        %5896 = vmatpush1.msra.mxu0 0.0
        %5897 = vmatprep.subr.mxu0 0.0
        %5898 = vmatpush1.msra.mxu0 0.0
        %5899 = vmatprep.subr.mxu0 0.0
        %5900 = vmatpush1.msra.mxu0 0.0
        %5901 = vmatprep.subr.mxu0 0.0
        %5902 = vmatpush1.msra.mxu0 0.0
        %5903 = vmatprep.subr.mxu0 0.0
        %5904 = vmatpush1.msra.mxu0 0.0
        %5905 = vmatprep.subr.mxu0 0.0
        %5906 = vmatpush1.msra.mxu0 0.0
        %5907 = vmatprep.subr.mxu0 0.0
        %5908 = vmatpush1.msra.mxu0 0.0
        %5909 = vmatprep.subr.mxu0 0.0
        %5910 = vmatpush1.msra.mxu0 0.0
        %5911 = vmatprep.subr.mxu0 0.0
        %5912 = vmatpush1.msra.mxu0 0.0
        %5913 = vmatprep.subr.mxu0 0.0
        %5914 = vmatpush1.msra.mxu0 0.0
        %5915 = vmatprep.subr.mxu0 0.0
        %5916 = vmatpush1.msra.mxu0 0.0
        %5917 = vmatprep.subr.mxu0 0.0
        %5918 = vmatpush1.msra.mxu0 0.0
        %5919 = vmatprep.subr.mxu0 0.0
        %5920 = vmatpush1.msra.mxu0 0.0
        %5921 = vmatprep.subr.mxu0 0.0
        %5922 = vmatpush1.msra.mxu0 0.0
        %5923 = vmatprep.subr.mxu0 0.0
        %5924 = vmatpush1.msra.mxu0 0.0
        %5925 = vmatprep.subr.mxu0 0.0
        %5926 = vmatpush1.msra.mxu0 0.0
        %5927 = vmatprep.subr.mxu0 0.0
        %5928 = vmatpush1.msra.mxu0 0.0
        %5929 = vmatprep.subr.mxu0 0.0
        %5930 = vmatpush1.msra.mxu0 0.0
        %5931 = vmatprep.subr.mxu0 0.0
        %5932 = vmatpush1.msra.mxu0 0.0
        %5933 = vmatprep.subr.mxu0 0.0
        %5934 = vmatpush1.msra.mxu0 0.0
        %5935 = vmatprep.subr.mxu0 0.0
        %5936 = vmatpush1.msra.mxu0 0.0
        %5937 = vmatprep.subr.mxu0 0.0
        %5938 = vmatpush1.msra.mxu0 0.0
        %5939 = vmatprep.subr.mxu0 0.0
        %5940 = vmatpush1.msra.mxu0 0.0
        %5941 = vmatprep.subr.mxu0 0.0
        %5942 = vmatpush1.msra.mxu0 0.0
        %5943 = vmatprep.subr.mxu0 0.0
        %5944 = vmatpush1.msra.mxu0 0.0
        %5945 = vmatprep.subr.mxu0 0.0
        %5946 = vmatpush1.msra.mxu0 0.0
        %5947 = vmatprep.subr.mxu0 0.0
        %5948 = vmatpush1.msra.mxu0 0.0
        %5949 = vmatprep.subr.mxu0 0.0
        %5950 = vmatpush1.msra.mxu0 0.0
        %5951 = vmatprep.subr.mxu0 0.0
        %5952 = vmatpush1.msra.mxu0 0.0
        %5953 = vmatprep.subr.mxu0 0.0
        %5954 = vmatpush1.msra.mxu0 0.0
        %5955 = vmatprep.subr.mxu0 0.0
        %5956 = vmatpush1.msra.mxu0 0.0
        %5957 = vmatprep.mubr.f32.mxu0 0.0
        %5958 = vmatmul.mubr.f32.gmra.mrb[0].mxu0 %v5885
        %v5959 = vpop.f32.mrb[0].mxu0
        %v5960 = vadd.f32 0.0, %v5959
        %v5961 = vpop.f32.mrb[0].mxu0
        %5962 = vmatprep.mubr.f32.mxu0 0.0
        %5963 = vmatmul.mubr.f32.gmra.mrb[0].mxu0 %v5888
        %v5964 = vpop.f32.mrb[0].mxu0
        %v5965 = vadd.f32 0.0, %v5964
        %v5966 = vpop.f32.mrb[0].mxu0
        %5967 = vdwg.mxu0
        %v5968 = vadd.f32 %v5879, %v5960
        %v5969 = vadd.f32 %v5880, %v5965
        %v5970 = vld [vmem:[%s5166 + $0x1] sm:$0xff]
        %v5971 = vld [vmem:[%s5166 + $0x11] sm:$0xff]
        %v5972 = vld [vmem:[%s3276] sm:$0xf]
        %v5974 = vsel %vm387, %v5970, 0
        %v5977 = vsel %vm387, %v5971, 0
        %v5980 = vsel %vm400, %v5972, 0
        %5982 = vmatprep.subr.mxu0 0.0
        %5983 = vmatpush1.msra.mxu0 %v5980
        %5984 = vmatprep.subr.mxu0 0.0
        %5985 = vmatpush1.msra.mxu0 0.0
        %5986 = vmatprep.subr.mxu0 0.0
        %5987 = vmatpush1.msra.mxu0 0.0
        %5988 = vmatprep.subr.mxu0 0.0
        %5989 = vmatpush1.msra.mxu0 0.0
        %5990 = vmatprep.subr.mxu0 0.0
        %5991 = vmatpush1.msra.mxu0 0.0
        %5992 = vmatprep.subr.mxu0 0.0
        %5993 = vmatpush1.msra.mxu0 0.0
        %5994 = vmatprep.subr.mxu0 0.0
        %5995 = vmatpush1.msra.mxu0 0.0
        %5996 = vmatprep.subr.mxu0 0.0
        %5997 = vmatpush1.msra.mxu0 0.0
        %5998 = vmatprep.subr.mxu0 0.0
        %5999 = vmatpush1.msra.mxu0 0.0
        %6000 = vmatprep.subr.mxu0 0.0
        %6001 = vmatpush1.msra.mxu0 0.0
        %6002 = vmatprep.subr.mxu0 0.0
        %6003 = vmatpush1.msra.mxu0 0.0
        %6004 = vmatprep.subr.mxu0 0.0
        %6005 = vmatpush1.msra.mxu0 0.0
        %6006 = vmatprep.subr.mxu0 0.0
        %6007 = vmatpush1.msra.mxu0 0.0
        %6008 = vmatprep.subr.mxu0 0.0
        %6009 = vmatpush1.msra.mxu0 0.0
        %6010 = vmatprep.subr.mxu0 0.0
        %6011 = vmatpush1.msra.mxu0 0.0
        %6012 = vmatprep.subr.mxu0 0.0
        %6013 = vmatpush1.msra.mxu0 0.0
        %6014 = vmatprep.subr.mxu0 0.0
        %6015 = vmatpush1.msra.mxu0 0.0
        %6016 = vmatprep.subr.mxu0 0.0
        %6017 = vmatpush1.msra.mxu0 0.0
        %6018 = vmatprep.subr.mxu0 0.0
        %6019 = vmatpush1.msra.mxu0 0.0
        %6020 = vmatprep.subr.mxu0 0.0
        %6021 = vmatpush1.msra.mxu0 0.0
        %6022 = vmatprep.subr.mxu0 0.0
        %6023 = vmatpush1.msra.mxu0 0.0
        %6024 = vmatprep.subr.mxu0 0.0
        %6025 = vmatpush1.msra.mxu0 0.0
        %6026 = vmatprep.subr.mxu0 0.0
        %6027 = vmatpush1.msra.mxu0 0.0
        %6028 = vmatprep.subr.mxu0 0.0
        %6029 = vmatpush1.msra.mxu0 0.0
        %6030 = vmatprep.subr.mxu0 0.0
        %6031 = vmatpush1.msra.mxu0 0.0
        %6032 = vmatprep.subr.mxu0 0.0
        %6033 = vmatpush1.msra.mxu0 0.0
        %6034 = vmatprep.subr.mxu0 0.0
        %6035 = vmatpush1.msra.mxu0 0.0
        %6036 = vmatprep.subr.mxu0 0.0
        %6037 = vmatpush1.msra.mxu0 0.0
        %6038 = vmatprep.subr.mxu0 0.0
        %6039 = vmatpush1.msra.mxu0 0.0
        %6040 = vmatprep.subr.mxu0 0.0
        %6041 = vmatpush1.msra.mxu0 0.0
        %6042 = vmatprep.subr.mxu0 0.0
        %6043 = vmatpush1.msra.mxu0 0.0
        %6044 = vmatprep.subr.mxu0 0.0
        %6045 = vmatpush1.msra.mxu0 0.0
        %6046 = vmatprep.mubr.f32.mxu0 0.0
        %6047 = vmatmul.mubr.f32.gmra.mrb[0].mxu0 %v5974
        %v6048 = vpop.f32.mrb[0].mxu0
        %v6049 = vadd.f32 0.0, %v6048
        %v6050 = vpop.f32.mrb[0].mxu0
        %6051 = vmatprep.mubr.f32.mxu0 0.0
        %6052 = vmatmul.mubr.f32.gmra.mrb[0].mxu0 %v5977
        %v6053 = vpop.f32.mrb[0].mxu0
        %v6054 = vadd.f32 0.0, %v6053
        %v6055 = vpop.f32.mrb[0].mxu0
        %6056 = vdwg.mxu0
        %v6057 = vadd.f32 %v5968, %v6049
        %v6058 = vadd.f32 %v5969, %v6054
        %v6059 = vld [vmem:[%s5076 + $0x1] sm:$0xff]
        %v6060 = vld [vmem:[%s5076 + $0x11] sm:$0xff]
        %v6061 = vld [vmem:[%s3367] sm:$0xf]
        %v6063 = vsel %vm387, %v6059, 0
        %v6066 = vsel %vm387, %v6060, 0
        %v6069 = vsel %vm400, %v6061, 0
        %6071 = vmatprep.subr.mxu0 0.0
        %6072 = vmatpush1.msra.mxu0 %v6069
        %6073 = vmatprep.subr.mxu0 0.0
        %6074 = vmatpush1.msra.mxu0 0.0
        %6075 = vmatprep.subr.mxu0 0.0
        %6076 = vmatpush1.msra.mxu0 0.0
        %6077 = vmatprep.subr.mxu0 0.0
        %6078 = vmatpush1.msra.mxu0 0.0
        %6079 = vmatprep.subr.mxu0 0.0
        %6080 = vmatpush1.msra.mxu0 0.0
        %6081 = vmatprep.subr.mxu0 0.0
        %6082 = vmatpush1.msra.mxu0 0.0
        %6083 = vmatprep.subr.mxu0 0.0
        %6084 = vmatpush1.msra.mxu0 0.0
        %6085 = vmatprep.subr.mxu0 0.0
        %6086 = vmatpush1.msra.mxu0 0.0
        %6087 = vmatprep.subr.mxu0 0.0
        %6088 = vmatpush1.msra.mxu0 0.0
        %6089 = vmatprep.subr.mxu0 0.0
        %6090 = vmatpush1.msra.mxu0 0.0
        %6091 = vmatprep.subr.mxu0 0.0
        %6092 = vmatpush1.msra.mxu0 0.0
        %6093 = vmatprep.subr.mxu0 0.0
        %6094 = vmatpush1.msra.mxu0 0.0
        %6095 = vmatprep.subr.mxu0 0.0
        %6096 = vmatpush1.msra.mxu0 0.0
        %6097 = vmatprep.subr.mxu0 0.0
        %6098 = vmatpush1.msra.mxu0 0.0
        %6099 = vmatprep.subr.mxu0 0.0
        %6100 = vmatpush1.msra.mxu0 0.0
        %6101 = vmatprep.subr.mxu0 0.0
        %6102 = vmatpush1.msra.mxu0 0.0
        %6103 = vmatprep.subr.mxu0 0.0
        %6104 = vmatpush1.msra.mxu0 0.0
        %6105 = vmatprep.subr.mxu0 0.0
        %6106 = vmatpush1.msra.mxu0 0.0
        %6107 = vmatprep.subr.mxu0 0.0
        %6108 = vmatpush1.msra.mxu0 0.0
        %6109 = vmatprep.subr.mxu0 0.0
        %6110 = vmatpush1.msra.mxu0 0.0
        %6111 = vmatprep.subr.mxu0 0.0
        %6112 = vmatpush1.msra.mxu0 0.0
        %6113 = vmatprep.subr.mxu0 0.0
        %6114 = vmatpush1.msra.mxu0 0.0
        %6115 = vmatprep.subr.mxu0 0.0
        %6116 = vmatpush1.msra.mxu0 0.0
        %6117 = vmatprep.subr.mxu0 0.0
        %6118 = vmatpush1.msra.mxu0 0.0
        %6119 = vmatprep.subr.mxu0 0.0
        %6120 = vmatpush1.msra.mxu0 0.0
        %6121 = vmatprep.subr.mxu0 0.0
        %6122 = vmatpush1.msra.mxu0 0.0
        %6123 = vmatprep.subr.mxu0 0.0
        %6124 = vmatpush1.msra.mxu0 0.0
        %6125 = vmatprep.subr.mxu0 0.0
        %6126 = vmatpush1.msra.mxu0 0.0
        %6127 = vmatprep.subr.mxu0 0.0
        %6128 = vmatpush1.msra.mxu0 0.0
        %6129 = vmatprep.subr.mxu0 0.0
        %6130 = vmatpush1.msra.mxu0 0.0
        %6131 = vmatprep.subr.mxu0 0.0
        %6132 = vmatpush1.msra.mxu0 0.0
        %6133 = vmatprep.subr.mxu0 0.0
        %6134 = vmatpush1.msra.mxu0 0.0
        %6135 = vmatprep.mubr.f32.mxu0 0.0
        %6136 = vmatmul.mubr.f32.gmra.mrb[0].mxu0 %v6063
        %v6137 = vpop.f32.mrb[0].mxu0
        %v6138 = vadd.f32 0.0, %v6137
        %v6139 = vpop.f32.mrb[0].mxu0
        %6140 = vmatprep.mubr.f32.mxu0 0.0
        %6141 = vmatmul.mubr.f32.gmra.mrb[0].mxu0 %v6066
        %v6142 = vpop.f32.mrb[0].mxu0
        %v6143 = vadd.f32 0.0, %v6142
        %v6144 = vpop.f32.mrb[0].mxu0
        %6145 = vdwg.mxu0
        %v6146 = vadd.f32 %v6057, %v6138
        %v6147 = vadd.f32 %v6058, %v6143
        %v6148 = vld [vmem:[%s5166 + $0x2] sm:$0xff]
        %v6149 = vld [vmem:[%s5166 + $0x12] sm:$0xff]
        %v6150 = vld [vmem:[%s3457] sm:$0xf]
        %v6152 = vsel %vm387, %v6148, 0
        %v6155 = vsel %vm387, %v6149, 0
        %v6158 = vsel %vm400, %v6150, 0
        %6160 = vmatprep.subr.mxu0 0.0
        %6161 = vmatpush1.msra.mxu0 %v6158
        %6162 = vmatprep.subr.mxu0 0.0
        %6163 = vmatpush1.msra.mxu0 0.0
        %6164 = vmatprep.subr.mxu0 0.0
        %6165 = vmatpush1.msra.mxu0 0.0
        %6166 = vmatprep.subr.mxu0 0.0
        %6167 = vmatpush1.msra.mxu0 0.0
        %6168 = vmatprep.subr.mxu0 0.0
        %6169 = vmatpush1.msra.mxu0 0.0
        %6170 = vmatprep.subr.mxu0 0.0
        %6171 = vmatpush1.msra.mxu0 0.0
        %6172 = vmatprep.subr.mxu0 0.0
        %6173 = vmatpush1.msra.mxu0 0.0
        %6174 = vmatprep.subr.mxu0 0.0
        %6175 = vmatpush1.msra.mxu0 0.0
        %6176 = vmatprep.subr.mxu0 0.0
        %6177 = vmatpush1.msra.mxu0 0.0
        %6178 = vmatprep.subr.mxu0 0.0
        %6179 = vmatpush1.msra.mxu0 0.0
        %6180 = vmatprep.subr.mxu0 0.0
        %6181 = vmatpush1.msra.mxu0 0.0
        %6182 = vmatprep.subr.mxu0 0.0
        %6183 = vmatpush1.msra.mxu0 0.0
        %6184 = vmatprep.subr.mxu0 0.0
        %6185 = vmatpush1.msra.mxu0 0.0
        %6186 = vmatprep.subr.mxu0 0.0
        %6187 = vmatpush1.msra.mxu0 0.0
        %6188 = vmatprep.subr.mxu0 0.0
        %6189 = vmatpush1.msra.mxu0 0.0
        %6190 = vmatprep.subr.mxu0 0.0
        %6191 = vmatpush1.msra.mxu0 0.0
        %6192 = vmatprep.subr.mxu0 0.0
        %6193 = vmatpush1.msra.mxu0 0.0
        %6194 = vmatprep.subr.mxu0 0.0
        %6195 = vmatpush1.msra.mxu0 0.0
        %6196 = vmatprep.subr.mxu0 0.0
        %6197 = vmatpush1.msra.mxu0 0.0
        %6198 = vmatprep.subr.mxu0 0.0
        %6199 = vmatpush1.msra.mxu0 0.0
        %6200 = vmatprep.subr.mxu0 0.0
        %6201 = vmatpush1.msra.mxu0 0.0
        %6202 = vmatprep.subr.mxu0 0.0
        %6203 = vmatpush1.msra.mxu0 0.0
        %6204 = vmatprep.subr.mxu0 0.0
        %6205 = vmatpush1.msra.mxu0 0.0
        %6206 = vmatprep.subr.mxu0 0.0
        %6207 = vmatpush1.msra.mxu0 0.0
        %6208 = vmatprep.subr.mxu0 0.0
        %6209 = vmatpush1.msra.mxu0 0.0
        %6210 = vmatprep.subr.mxu0 0.0
        %6211 = vmatpush1.msra.mxu0 0.0
        %6212 = vmatprep.subr.mxu0 0.0
        %6213 = vmatpush1.msra.mxu0 0.0
        %6214 = vmatprep.subr.mxu0 0.0
        %6215 = vmatpush1.msra.mxu0 0.0
        %6216 = vmatprep.subr.mxu0 0.0
        %6217 = vmatpush1.msra.mxu0 0.0
        %6218 = vmatprep.subr.mxu0 0.0
        %6219 = vmatpush1.msra.mxu0 0.0
        %6220 = vmatprep.subr.mxu0 0.0
        %6221 = vmatpush1.msra.mxu0 0.0
        %6222 = vmatprep.subr.mxu0 0.0
        %6223 = vmatpush1.msra.mxu0 0.0
        %6224 = vmatprep.mubr.f32.mxu0 0.0
        %6225 = vmatmul.mubr.f32.gmra.mrb[0].mxu0 %v6152
        %v6226 = vpop.f32.mrb[0].mxu0
        %v6227 = vadd.f32 0.0, %v6226
        %v6228 = vpop.f32.mrb[0].mxu0
        %6229 = vmatprep.mubr.f32.mxu0 0.0
        %6230 = vmatmul.mubr.f32.gmra.mrb[0].mxu0 %v6155
        %v6231 = vpop.f32.mrb[0].mxu0
        %v6232 = vadd.f32 0.0, %v6231
        %v6233 = vpop.f32.mrb[0].mxu0
        %6234 = vdwg.mxu0
        %v6235 = vadd.f32 %v6146, %v6227
        %v6236 = vadd.f32 %v6147, %v6232
        %v6237 = vadd.f32 %v6235, %v3549
        %v6238 = vadd.f32 %v6236, %v3549
        %v6239 = vmax.f32 %v6237, 0.0
        %v6240 = vmax.f32 %v6238, 0.0
        %v6242 = vsel %vm387, %v6239, 0
        %v6245 = vsel %vm387, %v6240, 0
        %6247 = vmatprep.subr.mxu0 0.0
        %6248 = vmatpush1.msra.mxu0 %v3568
        %6249 = vmatprep.subr.mxu0 0.0
        %6250 = vmatpush1.msra.mxu0 0.0
        %6251 = vmatprep.subr.mxu0 0.0
        %6252 = vmatpush1.msra.mxu0 0.0
        %6253 = vmatprep.subr.mxu0 0.0
        %6254 = vmatpush1.msra.mxu0 0.0
        %6255 = vmatprep.subr.mxu0 0.0
        %6256 = vmatpush1.msra.mxu0 0.0
        %6257 = vmatprep.subr.mxu0 0.0
        %6258 = vmatpush1.msra.mxu0 0.0
        %6259 = vmatprep.subr.mxu0 0.0
        %6260 = vmatpush1.msra.mxu0 0.0
        %6261 = vmatprep.subr.mxu0 0.0
        %6262 = vmatpush1.msra.mxu0 0.0
        %6263 = vmatprep.subr.mxu0 0.0
        %6264 = vmatpush1.msra.mxu0 0.0
        %6265 = vmatprep.subr.mxu0 0.0
        %6266 = vmatpush1.msra.mxu0 0.0
        %6267 = vmatprep.subr.mxu0 0.0
        %6268 = vmatpush1.msra.mxu0 0.0
        %6269 = vmatprep.subr.mxu0 0.0
        %6270 = vmatpush1.msra.mxu0 0.0
        %6271 = vmatprep.subr.mxu0 0.0
        %6272 = vmatpush1.msra.mxu0 0.0
        %6273 = vmatprep.subr.mxu0 0.0
        %6274 = vmatpush1.msra.mxu0 0.0
        %6275 = vmatprep.subr.mxu0 0.0
        %6276 = vmatpush1.msra.mxu0 0.0
        %6277 = vmatprep.subr.mxu0 0.0
        %6278 = vmatpush1.msra.mxu0 0.0
        %6279 = vmatprep.subr.mxu0 0.0
        %6280 = vmatpush1.msra.mxu0 0.0
        %6281 = vmatprep.subr.mxu0 0.0
        %6282 = vmatpush1.msra.mxu0 0.0
        %6283 = vmatprep.subr.mxu0 0.0
        %6284 = vmatpush1.msra.mxu0 0.0
        %6285 = vmatprep.subr.mxu0 0.0
        %6286 = vmatpush1.msra.mxu0 0.0
        %6287 = vmatprep.subr.mxu0 0.0
        %6288 = vmatpush1.msra.mxu0 0.0
        %6289 = vmatprep.subr.mxu0 0.0
        %6290 = vmatpush1.msra.mxu0 0.0
        %6291 = vmatprep.subr.mxu0 0.0
        %6292 = vmatpush1.msra.mxu0 0.0
        %6293 = vmatprep.subr.mxu0 0.0
        %6294 = vmatpush1.msra.mxu0 0.0
        %6295 = vmatprep.subr.mxu0 0.0
        %6296 = vmatpush1.msra.mxu0 0.0
        %6297 = vmatprep.subr.mxu0 0.0
        %6298 = vmatpush1.msra.mxu0 0.0
        %6299 = vmatprep.subr.mxu0 0.0
        %6300 = vmatpush1.msra.mxu0 0.0
        %6301 = vmatprep.subr.mxu0 0.0
        %6302 = vmatpush1.msra.mxu0 0.0
        %6303 = vmatprep.subr.mxu0 0.0
        %6304 = vmatpush1.msra.mxu0 0.0
        %6305 = vmatprep.subr.mxu0 0.0
        %6306 = vmatpush1.msra.mxu0 0.0
        %6307 = vmatprep.subr.mxu0 0.0
        %6308 = vmatpush1.msra.mxu0 0.0
        %6309 = vmatprep.subr.mxu0 0.0
        %6310 = vmatpush1.msra.mxu0 0.0
        %6311 = vmatprep.mubr.f32.mxu0 0.0
        %6312 = vmatmul.mubr.f32.gmra.mrb[0].mxu0 %v6242
        %v6313 = vpop.f32.mrb[0].mxu0
        %v6314 = vadd.f32 %v3559, %v6313
        %v6315 = vpop.f32.mrb[0].mxu0
        %6316 = vmatprep.mubr.f32.mxu0 0.0
        %6317 = vmatmul.mubr.f32.gmra.mrb[0].mxu0 %v6245
        %v6318 = vpop.f32.mrb[0].mxu0
        %v6319 = vadd.f32 %v3559, %v6318
        %v6320 = vpop.f32.mrb[0].mxu0
        %6321 = vdwg.mxu0
        %s6322 = scalar_lea.vmem [#allocation3], 104
        %v6323 = vld [vmem:[%s6322] sm:$0xff]
        %v6324 = vld [vmem:[%s6322 + $0x8] sm:$0xff]
        %v6325 = vadd.f32 %v6314, %v6323
        %v6326 = vadd.f32 %v6319, %v6324
        %v6327 = vmax.f32 %v6325, 0.0
        %v6328 = vmax.f32 %v6326, 0.0
        %s6329 = scalar_lea.vmem %s323, 48 [#allocation4]
        %6330 = vst.msk [vmem:[%s6329] sm:$0xff] %vm387, %v6327
        %6331 = vst.msk [vmem:[%s6329 + $0x8] sm:$0xff] %vm387, %v6328
        %s6332 = sand.u32 %s219, 1
        %s6333 = sand.u32 %s219, 1
        %s6334 = smul.addr %s6333, 64
        %s6335 = scalar_lea.vmem [#allocation4], %s6334
        // Predicated region
        $region61: #{tpu_custom_call.1} parent=51 // pred_check
          %p6336 = pneg %p229
        $region62: #{tpu_custom_call.1} parent=51 // pred_check_branch
          %6338 = sbr.rel (%p6336) target = $region64
        $region63: #{tpu_custom_call.1} parent=51 // pred_region
          %s6339 = smul.u32 2, %s24
          %s6340 = smul.addr %s23, 32
          %s6341 = sadd.s32 %s6339, %s6340
          %s6342 = smul.addr %s6341, 8
          %s6343 = scalar_lea.vmem %s8, %s6342
          // Predicated region
          $region65: #{tpu_custom_call.1} parent=63 // pred_check
            _
          $region66: #{tpu_custom_call.1} parent=63 // pred_check_branch
            %6345 = sbr.rel (0) target = $region68
          $region67: #{tpu_custom_call.1} parent=63 // pred_region
            // Predicated region
            $region69: #{tpu_custom_call.1} parent=67 // pred_check
              _
            $region70: #{tpu_custom_call.1} parent=67 // pred_check_branch
              %6347 = sbr.rel (0) target = $region72
            $region71: #{tpu_custom_call.1} parent=67 // pred_region
              // Predicated region
              $region84: #{tpu_custom_call.1} parent=71 // pred_check
                _
              $region85: #{tpu_custom_call.1} parent=71 // pred_check_branch
                %6376 = sbr.rel (0) target = $region87
              $region86: #{tpu_custom_call.1} parent=71 // pred_region
                loop: start=0, step=1, limit=1
                $region88: #{tpu_custom_call.1} parent=86 // loop_pre_header
                  _
                $region89: #{tpu_custom_call.1} parent=86 // loop_header
                  %s6378 = sphi 0, %s6382
                  %p6379 = scmp.ge.s32.totalorder %s6378, 1
                  %s6383 = sphi %s6335, %s6335
                  %s6384 = sphi %s6343, %s6343
                $region90: #{tpu_custom_call.1} parent=86 // loop_header_branch
                  %6381 = sbr.rel (%p6379) target = $region94
                $region91: #{tpu_custom_call.1} parent=86 // loop_body
                  %v6385 = vld [vmem:[%s6383] sm:$0xff]
                  %6386 = vst [vmem:[%s6384] sm:$0xff] %v6385
                  %v6387 = vld [vmem:[%s6383 + $0x8] sm:$0xff]
                  %6388 = vst [vmem:[%s6384 + $0x8] sm:$0xff] %v6387
                  %v6389 = vld [vmem:[%s6383 + $0x10] sm:$0xff]
                  %6390 = vst [vmem:[%s6384 + $0x40] sm:$0xff] %v6389
                  %v6391 = vld [vmem:[%s6383 + $0x18] sm:$0xff]
                  %6392 = vst [vmem:[%s6384 + $0x48] sm:$0xff] %v6391
                  %v6393 = vld [vmem:[%s6383 + $0x20] sm:$0xff]
                  %6394 = vst [vmem:[%s6384 + $0x80] sm:$0xff] %v6393
                  %v6395 = vld [vmem:[%s6383 + $0x28] sm:$0xff]
                  %6396 = vst [vmem:[%s6384 + $0x88] sm:$0xff] %v6395
                  %v6397 = vld [vmem:[%s6383 + $0x30] sm:$0xff]
                  %6398 = vst [vmem:[%s6384 + $0xc0] sm:$0xff] %v6397
                  %v6399 = vld [vmem:[%s6383 + $0x38] sm:$0xff]
                  %6400 = vst [vmem:[%s6384 + $0xc8] sm:$0xff] %v6399
                $region92: #{tpu_custom_call.1} parent=86 // loop_footer
                  %s6382 = sadd.s32 1, %s6378
                $region93: #{tpu_custom_call.1} parent=86 // loop_footer_branch
                  %6377 = sbr.rel target = $region89
                $region94: #{tpu_custom_call.1} parent=86 // loop_exit
                  _
              $region87: #{tpu_custom_call.1} parent=71 // pred_fallthru
                _
              // Predicated region
              $region95: #{tpu_custom_call.1} parent=71 // pred_check
                _
              $region96: #{tpu_custom_call.1} parent=71 // pred_check_branch
                %6402 = sbr.rel target = $region98
              $region97: #{tpu_custom_call.1} parent=71 // pred_region
                _
              $region98: #{tpu_custom_call.1} parent=71 // pred_fallthru
                _
            $region72: #{tpu_custom_call.1} parent=67 // pred_fallthru
              _
            // Predicated region
            $region73: #{tpu_custom_call.1} parent=67 // pred_check
              _
            $region74: #{tpu_custom_call.1} parent=67 // pred_check_branch
              %6349 = sbr.rel target = $region76
            $region75: #{tpu_custom_call.1} parent=67 // pred_region
              loop: start=0, step=1, limit=1
              $region77: #{tpu_custom_call.1} parent=75 // loop_pre_header
                _
              $region78: #{tpu_custom_call.1} parent=75 // loop_header
                %s6352 = sphi 0, %s6356
                %p6353 = scmp.ge.s32.totalorder %s6352, 1
                %s6357 = sphi %s6335, %s6335
                %s6358 = sphi %s6343, %s6343
              $region79: #{tpu_custom_call.1} parent=75 // loop_header_branch
                %6355 = sbr.rel (%p6353) target = $region83
              $region80: #{tpu_custom_call.1} parent=75 // loop_body
                %v6359 = vld [vmem:[%s6357] sm:$0xff]
                %6360 = vst [vmem:[%s6358] sm:$0xff] %v6359
                %v6361 = vld [vmem:[%s6357 + $0x8] sm:$0xff]
                %6362 = vst [vmem:[%s6358 + $0x8] sm:$0xff] %v6361
                %v6363 = vld [vmem:[%s6357 + $0x10] sm:$0xff]
                %6364 = vst [vmem:[%s6358 + $0x40] sm:$0xff] %v6363
                %v6365 = vld [vmem:[%s6357 + $0x18] sm:$0xff]
                %6366 = vst [vmem:[%s6358 + $0x48] sm:$0xff] %v6365
                %v6367 = vld [vmem:[%s6357 + $0x20] sm:$0xff]
                %6368 = vst [vmem:[%s6358 + $0x80] sm:$0xff] %v6367
                %v6369 = vld [vmem:[%s6357 + $0x28] sm:$0xff]
                %6370 = vst [vmem:[%s6358 + $0x88] sm:$0xff] %v6369
                %v6371 = vld [vmem:[%s6357 + $0x30] sm:$0xff]
                %6372 = vst [vmem:[%s6358 + $0xc0] sm:$0xff] %v6371
                %v6373 = vld [vmem:[%s6357 + $0x38] sm:$0xff]
                %6374 = vst [vmem:[%s6358 + $0xc8] sm:$0xff] %v6373
              $region81: #{tpu_custom_call.1} parent=75 // loop_footer
                %s6356 = sadd.s32 1, %s6352
              $region82: #{tpu_custom_call.1} parent=75 // loop_footer_branch
                %6351 = sbr.rel target = $region78
              $region83: #{tpu_custom_call.1} parent=75 // loop_exit
                _
            $region76: #{tpu_custom_call.1} parent=67 // pred_fallthru
              _
          $region68: #{tpu_custom_call.1} parent=63 // pred_fallthru
            _
          %6403 = vnop
        $region64: #{tpu_custom_call.1} parent=51 // pred_fallthru
          _
      $region52: #{tpu_custom_call.1} parent=5 // pred_fallthru
        _
      %p6404 = scmp.le.s32.totalorder 2, %s14
      // Predicated region
      $region99: #{tpu_custom_call.1} parent=5 // pred_check
        %p6405 = pneg %p6404
      $region100: #{tpu_custom_call.1} parent=5 // pred_check_branch
        %6407 = sbr.rel (%p6405) target = $region102
      $region101: #{tpu_custom_call.1} parent=5 // pred_region
        %s6408 = ssub.s32 %s14, 2
        // Predicated region
        $region103: #{tpu_custom_call.1} parent=101 // pred_check
          %p6409 = pneg %p235
        $region104: #{tpu_custom_call.1} parent=101 // pred_check_branch
          %6411 = sbr.rel (%p6409) target = $region106
        $region105: #{tpu_custom_call.1} parent=101 // pred_region
          %s6412 = sand.u32 %s220, 1
          %s6413 = sand.u32 %s220, 1
          %s6414 = smul.addr %s6413, 64
          %s6415 = scalar_lea.vmem [#allocation4], %s6414
        $region106: #{tpu_custom_call.1} parent=101 // pred_fallthru
          _
      $region102: #{tpu_custom_call.1} parent=5 // pred_fallthru
        _
    $region6: #{tpu_custom_call.1} parent=1 // loop_footer
      %s18 = sadd.s32 1, %s14
    $region7: #{tpu_custom_call.1} parent=1 // loop_footer_branch
      %13 = sbr.rel target = $region3
    $region8: #{tpu_custom_call.1} parent=1 // loop_exit
      _

</llo_original>
